<compile_context>
chip_gen: v6e
topology: v6e:2x2x1
jax: 0.10.0
libtpu: 0.0.40
codegen_flags: <defaults>
</compile_context>

<pallas_src>
import math
import numpy as np

import jax
import jax.numpy as jnp
from jax.experimental import pallas as pl
from jax.experimental.pallas import tpu as pltpu


# ----------------------------------------------------------------------------
# DCT filter bank (matches dct_filters(k=3, groups=1, expand_dim=0, level=None, DC=True))
# ----------------------------------------------------------------------------
def dct_filters(k=3, level=None, DC=True, l1_norm=True):
    if level is None:
        nf = k * k - int(not DC)
    elif level <= k:
        nf = level * (level + 1) // 2 - int(not DC)
    else:
        r = 2 * k - 1 - level
        nf = k * k - r * (r + 1) // 2 - int(not DC)
    fb = np.zeros((nf, k, k), dtype=np.float32)
    m = 0
    for i in range(k):
        for j in range(k):
            if (not DC and i == 0 and j == 0) or (level is not None and i + j >= level):
                continue
            for x in range(k):
                for y in range(k):
                    fb[m, x, y] = (math.cos(math.pi * (x + 0.5) * i / k)
                                   * math.cos(math.pi * (y + 0.5) * j / k))
            if l1_norm:
                fb[m] /= np.sum(np.abs(fb[m]))
            else:
                ai = 1.0 if i > 0 else 1.0 / math.sqrt(2.0)
                aj = 1.0 if j > 0 else 1.0 / math.sqrt(2.0)
                fb[m] *= 2.0 / k * ai * aj
            m += 1
    return fb[None]  # (1, nf, k, k) == expand_dim=0, groups=1


# ----------------------------------------------------------------------------
# Fused Pallas kernel: conv1+bn1+relu -> VMEM scratch -> conv2+bn2+residual+relu
# ----------------------------------------------------------------------------
def _basic_block_kernel(x_ref, w1_ref, b1_ref, w2_ref, b2_ref, o_ref, h1_ref):
    # x_ref : (H+2, W+2, Cp) f32  spatially zero-padded input, channels padded to Cp (lane dense)
    # w1_ref: (9, Cp, Cp)    bf16 conv1 weights (bn1 scale folded in), tap-major
    # b1_ref: (1, Cp)        f32  folded bn1 bias
    # w2_ref/b2_ref               same for conv2 / bn2
    # o_ref : (H, W, Cp)     f32  output block
    # h1_ref: (H+2, W+2, Cp) bf16 VMEM scratch: relu(bn1(conv1(x))) with a zero halo
    H, W, Cp = o_ref.shape
    M = H * W

    # Zero the halo scratch every step (cheap); keeps the kernel correct even when the
    # "parallel" grid axis is split across TensorCores (each core has its own scratch).
    h1_ref[...] = jnp.zeros(h1_ref.shape, h1_ref.dtype)

    # ---- conv1 (3x3, pad=1) + folded bn1 + relu -> h1 scratch interior ----
    acc = jnp.zeros((M, Cp), jnp.float32)
    for t in range(9):
        dy, dx = t // 3, t % 3
        tap = x_ref[dy:dy + H, dx:dx + W, :].reshape(M, Cp).astype(jnp.bfloat16)
        acc = acc + jnp.dot(tap, w1_ref[t], preferred_element_type=jnp.float32)
    h1 = jnp.maximum(acc + b1_ref[...], 0.0)
    h1_ref[1:H + 1, 1:W + 1, :] = h1.reshape(H, W, Cp).astype(h1_ref.dtype)

    # ---- conv2 (3x3, pad=1) + folded bn2 + residual + relu -> output ----
    acc = jnp.zeros((M, Cp), jnp.float32)
    for t in range(9):
        dy, dx = t // 3, t % 3
        tap = h1_ref[dy:dy + H, dx:dx + W, :].reshape(M, Cp)
        acc = acc + jnp.dot(tap, w2_ref[t], preferred_element_type=jnp.float32)
    identity = x_ref[1:H + 1, 1:W + 1, :].reshape(M, Cp)   # f32 residual (stride=1, no downsample)
    out = jnp.maximum(acc + b2_ref[...] + identity, 0.0)
    o_ref[...] = out.reshape(H, W, Cp).astype(o_ref.dtype)


# ----------------------------------------------------------------------------
# Parameter construction (kaiming init, DCT combine, BN fold, channel padding)
# ----------------------------------------------------------------------------
def _round_up(x, m):
    return ((x + m - 1) // m) * m


def _kaiming_normal(key, shape):
    # kaiming_normal_(mode='fan_out', nonlinearity='relu') for (no, ni, nf, 1, 1)
    fan_out = shape[0] * int(np.prod(shape[2:]))
    std = math.sqrt(2.0 / fan_out)
    return (std * jax.random.normal(key, shape)).astype(jnp.float32)


def _bn_init(key, c):
    kg, kb, km, kv = jax.random.split(key, 4)
    gamma = 1.0 + 0.1 * jax.random.normal(kg, (c,), dtype=jnp.float32)
    beta = 0.1 * jax.random.normal(kb, (c,), dtype=jnp.float32)
    mean = 0.1 * jax.random.normal(km, (c,), dtype=jnp.float32)
    var = 1.0 + 0.1 * jnp.abs(jax.random.normal(kv, (c,), dtype=jnp.float32))
    return gamma, beta, mean, var


def _fold_bn(gamma, beta, mean, var, eps=1e-5):
    scale = gamma / jnp.sqrt(var + eps)
    bias = beta - mean * scale
    return scale, bias


def init_basic_block(key, inplanes, planes):
    dct = jnp.asarray(dct_filters(3))                       # (1, 9, 3, 3)
    nf = dct.shape[1]
    k1, k2, k3, k4 = jax.random.split(key, 4)
    wraw1 = _kaiming_normal(k1, (planes, inplanes, nf, 1, 1))
    wraw2 = _kaiming_normal(k2, (planes, planes, nf, 1, 1))
    # Harm2d (use_bn=False branch): filt = sum(weight * dct, dim=2) -> (Cout, Cin, 3, 3)
    filt1 = jnp.sum(wraw1 * dct, axis=2)
    filt2 = jnp.sum(wraw2 * dct, axis=2)
    bn1 = _bn_init(k3, planes)
    bn2 = _bn_init(k4, planes)
    s1, b1 = _fold_bn(*bn1)
    s2, b2 = _fold_bn(*bn2)

    # Lane-dense padded channel count (multiple of 128).
    Cp = max(128, _round_up(max(inplanes, planes), 128))

    def pack_weight(filt, scale, cin):
        cout = filt.shape[0]
        # (Cout, Cin, 3, 3) -> (3, 3, Cin, Cout) -> (9, Cin, Cout); fold BN scale per out-channel.
        w = jnp.transpose(filt, (2, 3, 1, 0)).reshape(9, cin, cout) * scale[None, None, :]
        wp = jnp.zeros((9, Cp, Cp), jnp.float32).at[:, :cin, :cout].set(w)
        return wp.astype(jnp.bfloat16)

    def pack_bias(bias):
        return jnp.zeros((1, Cp), jnp.float32).at[0, :bias.shape[0]].set(bias)

    return {
        # kernel-side parameters
        'w1': pack_weight(filt1, s1, inplanes), 'b1': pack_bias(b1),
        'w2': pack_weight(filt2, s2, planes),   'b2': pack_bias(b2),
        # unfolded copies for the pure-JAX reference check
        'filt1': filt1, 'filt2': filt2, 'bn1': bn1, 'bn2': bn2,
    }


# ----------------------------------------------------------------------------
# Forward wrapper (NCHW in/out; NHWC + padded channels inside the kernel)
# ----------------------------------------------------------------------------
def basic_block_forward(x_nchw, params):
    x = jnp.transpose(x_nchw, (0, 2, 3, 1)).astype(jnp.float32)      # NHWC
    N, H, W, Cin = x.shape
    planes = params['filt1'].shape[0]
    Cp = params['w1'].shape[1]
    assert W % 8 == 0, "demo kernel assumes W is a multiple of the 8-sublane tile"

    # Spatial halo of 1 + channel zero-padding (plain-JAX, read once by the kernel).
    xp = jnp.pad(x, ((0, 0), (1, 1), (1, 1), (0, Cp - Cin)))

    flops = 4 * N * H * W * 9 * Cp * Cp                              # two 3x3 convs on the MXU
    bytes_accessed = (xp.size * 4 + N * H * W * Cp * 4
                      + params['w1'].size * 2 + params['w2'].size * 2
                      + params['b1'].size * 4 + params['b2'].size * 4)

    out_padded = pl.pallas_call(
        _basic_block_kernel,
        out_shape=jax.ShapeDtypeStruct((N, H, W, Cp), jnp.float32),
        grid=(N,),
        in_specs=[
            pl.BlockSpec((None, H + 2, W + 2, Cp), lambda n: (n, 0, 0, 0)),
            pl.BlockSpec((9, Cp, Cp), lambda n: (0, 0, 0)),
            pl.BlockSpec((1, Cp), lambda n: (0, 0)),
            pl.BlockSpec((9, Cp, Cp), lambda n: (0, 0, 0)),
            pl.BlockSpec((1, Cp), lambda n: (0, 0)),
        ],
        out_specs=pl.BlockSpec((None, H, W, Cp), lambda n: (n, 0, 0, 0)),
        scratch_shapes=[pltpu.VMEM((H + 2, W + 2, Cp), jnp.bfloat16)],
        compiler_params=pltpu.CompilerParams(dimension_semantics=("parallel",)),
        cost_estimate=pl.CostEstimate(flops=flops, transcendentals=0,
                                      bytes_accessed=bytes_accessed),
    )(xp, params['w1'], params['b1'], params['w2'], params['b2'])

    out = out_padded[..., :planes]
    return jnp.transpose(out, (0, 3, 1, 2))                          # back to NCHW


# ----------------------------------------------------------------------------
# Pure-JAX reference (NCHW, f32) for a correctness check
# ----------------------------------------------------------------------------
def basic_block_reference(x_nchw, params):
    def conv(x, w):
        return jax.lax.conv_general_dilated(
            x, w, window_strides=(1, 1), padding=((1, 1), (1, 1)),
            dimension_numbers=('NCHW', 'OIHW', 'NCHW'))

    def bn(x, stats, eps=1e-5):
        g, b, m, v = stats
        g, b, m, v = (t[None, :, None, None] for t in (g, b, m, v))
        return (x - m) / jnp.sqrt(v + eps) * g + b

    out = jax.nn.relu(bn(conv(x_nchw, params['filt1']), params['bn1']))
    out = bn(conv(out, params['filt2']), params['bn2']) + x_nchw
    return jax.nn.relu(out)


if __name__ == "__main__":
    key = jax.random.PRNGKey(0)
    kx, kp = jax.random.split(key)

    N, C, H, W = 2, 8, 16, 16          # inplanes == planes == 8, stride=1
    x = jax.random.normal(kx, (N, C, H, W), dtype=jnp.float32)

    params = init_basic_block(kp, inplanes=C, planes=C)

    fwd = jax.jit(basic_block_forward)
    out = jax.block_until_ready(fwd(x, params))

    ref = jax.block_until_ready(basic_block_reference(x, params))
    assert out.shape == (N, C, H, W)
    # bf16 MXU inputs / bf16 h1 scratch -> compare against the f32 reference with a
    # correspondingly loose (but still meaningful, outputs are O(1)) tolerance.
    np.testing.assert_allclose(np.asarray(out), np.asarray(ref), rtol=5e-2, atol=7.5e-2)

    print("KERNEL_OK")
</pallas_src>

<mosaic_0001>
module attributes {stable_mosaic.version = 11 : i64} {
  func.func @_basic_block_kernel(%arg0: i32, %arg1: memref<1x18x18x128xf32, #tpu.memory_space<vmem>>, %arg2: memref<9x128x128xbf16, #tpu.memory_space<vmem>>, %arg3: memref<1x128xf32, #tpu.memory_space<vmem>>, %arg4: memref<9x128x128xbf16, #tpu.memory_space<vmem>>, %arg5: memref<1x128xf32, #tpu.memory_space<vmem>>, %arg6: memref<1x16x16x128xf32, #tpu.memory_space<vmem>>, %arg7: memref<18x18x128xbf16, #tpu.memory_space<vmem>>) attributes {dimension_semantics = [#tpu.dimension_semantics<parallel>], iteration_bounds = array<i64: 2>, scalar_prefetch = 0 : i64, scratch_operands = 1 : i64, tpu.core_type = #tpu.core_type<tc>, window_params = [{transform_indices = @transform_0, window_bounds = array<i64: 1, 18, 18, 128>}, {pipeline_mode = #tpu.pipeline_mode<synchronous>, transform_indices = @transform_1, window_bounds = array<i64: 9, 128, 128>}, {pipeline_mode = #tpu.pipeline_mode<synchronous>, transform_indices = @transform_2, window_bounds = array<i64: 1, 128>}, {pipeline_mode = #tpu.pipeline_mode<synchronous>, transform_indices = @transform_3, window_bounds = array<i64: 9, 128, 128>}, {pipeline_mode = #tpu.pipeline_mode<synchronous>, transform_indices = @transform_4, window_bounds = array<i64: 1, 128>}, {transform_indices = @transform_5, window_bounds = array<i64: 1, 16, 16, 128>}]} {
    %cst = arith.constant 0.000000e+00 : bf16
    %0 = vector.broadcast %cst : bf16 to vector<18x18x128xbf16>
    %c0 = arith.constant 0 : index
    %c0_0 = arith.constant 0 : index
    %c0_1 = arith.constant 0 : index
    %1 = vector.load %arg7[%c0, %c0_0, %c0_1] : memref<18x18x128xbf16, #tpu.memory_space<vmem>>, vector<18x18x128xbf16>
    tpu.vector_store %arg7[%c0, %c0_0, %c0_1], %0 {strides = array<i32>} : memref<18x18x128xbf16, #tpu.memory_space<vmem>>, vector<18x18x128xbf16>,
    %cst_2 = arith.constant 0.000000e+00 : f32
    %2 = vector.broadcast %cst_2 : f32 to vector<256x128xf32>
    %c0_3 = arith.constant 0 : index
    %c0_4 = arith.constant 0 : index
    %c0_5 = arith.constant 0 : index
    %c0_6 = arith.constant 0 : index
    %3 = vector.load %arg1[%c0_3, %c0_4, %c0_5, %c0_6] : memref<1x18x18x128xf32, #tpu.memory_space<vmem>>, vector<1x16x16x128xf32>
    %4 = vector.shape_cast %3 : vector<1x16x16x128xf32> to vector<16x16x128xf32>
    %5 = vector.shape_cast %4 : vector<16x16x128xf32> to vector<256x128xf32>
    %6 = arith.truncf %5 : vector<256x128xf32> to vector<256x128xbf16>
    %c0_7 = arith.constant 0 : index
    %c0_8 = arith.constant 0 : index
    %c0_9 = arith.constant 0 : index
    %7 = vector.load %arg2[%c0_7, %c0_8, %c0_9] : memref<9x128x128xbf16, #tpu.memory_space<vmem>>, vector<1x128x128xbf16>
    %8 = vector.shape_cast %7 : vector<1x128x128xbf16> to vector<128x128xbf16>
    %cst_10 = arith.constant dense<0.000000e+00> : vector<256x128xf32>
    %9 = tpu.matmul %6, %8, %cst_10 {dimension_numbers = #tpu.dot_dimension_numbers<[1], [0], [0], [1], [0, 0, 1, 1], [], []>} : vector<256x128xbf16>, vector<128x128xbf16>, vector<256x128xf32> -> vector<256x128xf32>
    %10 = arith.addf %2, %9 : vector<256x128xf32>
    %c0_11 = arith.constant 0 : index
    %c0_12 = arith.constant 0 : index
    %c1 = arith.constant 1 : index
    %c0_13 = arith.constant 0 : index
    %11 = vector.load %arg1[%c0_11, %c0_12, %c1, %c0_13] : memref<1x18x18x128xf32, #tpu.memory_space<vmem>>, vector<1x16x16x128xf32>
    %12 = vector.shape_cast %11 : vector<1x16x16x128xf32> to vector<16x16x128xf32>
    %13 = vector.shape_cast %12 : vector<16x16x128xf32> to vector<256x128xf32>
    %14 = arith.truncf %13 : vector<256x128xf32> to vector<256x128xbf16>
    %c1_14 = arith.constant 1 : index
    %c0_15 = arith.constant 0 : index
    %c0_16 = arith.constant 0 : index
    %15 = vector.load %arg2[%c1_14, %c0_15, %c0_16] : memref<9x128x128xbf16, #tpu.memory_space<vmem>>, vector<1x128x128xbf16>
    %16 = vector.shape_cast %15 : vector<1x128x128xbf16> to vector<128x128xbf16>
    %cst_17 = arith.constant dense<0.000000e+00> : vector<256x128xf32>
    %17 = tpu.matmul %14, %16, %cst_17 {dimension_numbers = #tpu.dot_dimension_numbers<[1], [0], [0], [1], [0, 0, 1, 1], [], []>} : vector<256x128xbf16>, vector<128x128xbf16>, vector<256x128xf32> -> vector<256x128xf32>
    %18 = arith.addf %10, %17 : vector<256x128xf32>
    %c0_18 = arith.constant 0 : index
    %c0_19 = arith.constant 0 : index
    %c2 = arith.constant 2 : index
    %c0_20 = arith.constant 0 : index
    %19 = vector.load %arg1[%c0_18, %c0_19, %c2, %c0_20] : memref<1x18x18x128xf32, #tpu.memory_space<vmem>>, vector<1x16x16x128xf32>
    %20 = vector.shape_cast %19 : vector<1x16x16x128xf32> to vector<16x16x128xf32>
    %21 = vector.shape_cast %20 : vector<16x16x128xf32> to vector<256x128xf32>
    %22 = arith.truncf %21 : vector<256x128xf32> to vector<256x128xbf16>
    %c2_21 = arith.constant 2 : index
    %c0_22 = arith.constant 0 : index
    %c0_23 = arith.constant 0 : index
    %23 = vector.load %arg2[%c2_21, %c0_22, %c0_23] : memref<9x128x128xbf16, #tpu.memory_space<vmem>>, vector<1x128x128xbf16>
    %24 = vector.shape_cast %23 : vector<1x128x128xbf16> to vector<128x128xbf16>
    %cst_24 = arith.constant dense<0.000000e+00> : vector<256x128xf32>
    %25 = tpu.matmul %22, %24, %cst_24 {dimension_numbers = #tpu.dot_dimension_numbers<[1], [0], [0], [1], [0, 0, 1, 1], [], []>} : vector<256x128xbf16>, vector<128x128xbf16>, vector<256x128xf32> -> vector<256x128xf32>
    %26 = arith.addf %18, %25 : vector<256x128xf32>
    %c0_25 = arith.constant 0 : index
    %c1_26 = arith.constant 1 : index
    %c0_27 = arith.constant 0 : index
    %c0_28 = arith.constant 0 : index
    %27 = vector.load %arg1[%c0_25, %c1_26, %c0_27, %c0_28] : memref<1x18x18x128xf32, #tpu.memory_space<vmem>>, vector<1x16x16x128xf32>
    %28 = vector.shape_cast %27 : vector<1x16x16x128xf32> to vector<16x16x128xf32>
    %29 = vector.shape_cast %28 : vector<16x16x128xf32> to vector<256x128xf32>
    %30 = arith.truncf %29 : vector<256x128xf32> to vector<256x128xbf16>
    %c3 = arith.constant 3 : index
    %c0_29 = arith.constant 0 : index
    %c0_30 = arith.constant 0 : index
    %31 = vector.load %arg2[%c3, %c0_29, %c0_30] : memref<9x128x128xbf16, #tpu.memory_space<vmem>>, vector<1x128x128xbf16>
    %32 = vector.shape_cast %31 : vector<1x128x128xbf16> to vector<128x128xbf16>
    %cst_31 = arith.constant dense<0.000000e+00> : vector<256x128xf32>
    %33 = tpu.matmul %30, %32, %cst_31 {dimension_numbers = #tpu.dot_dimension_numbers<[1], [0], [0], [1], [0, 0, 1, 1], [], []>} : vector<256x128xbf16>, vector<128x128xbf16>, vector<256x128xf32> -> vector<256x128xf32>
    %34 = arith.addf %26, %33 : vector<256x128xf32>
    %c0_32 = arith.constant 0 : index
    %c1_33 = arith.constant 1 : index
    %c1_34 = arith.constant 1 : index
    %c0_35 = arith.constant 0 : index
    %35 = vector.load %arg1[%c0_32, %c1_33, %c1_34, %c0_35] : memref<1x18x18x128xf32, #tpu.memory_space<vmem>>, vector<1x16x16x128xf32>
    %36 = vector.shape_cast %35 : vector<1x16x16x128xf32> to vector<16x16x128xf32>
    %37 = vector.shape_cast %36 : vector<16x16x128xf32> to vector<256x128xf32>
    %38 = arith.truncf %37 : vector<256x128xf32> to vector<256x128xbf16>
    %c4 = arith.constant 4 : index
    %c0_36 = arith.constant 0 : index
    %c0_37 = arith.constant 0 : index
    %39 = vector.load %arg2[%c4, %c0_36, %c0_37] : memref<9x128x128xbf16, #tpu.memory_space<vmem>>, vector<1x128x128xbf16>
    %40 = vector.shape_cast %39 : vector<1x128x128xbf16> to vector<128x128xbf16>
    %cst_38 = arith.constant dense<0.000000e+00> : vector<256x128xf32>
    %41 = tpu.matmul %38, %40, %cst_38 {dimension_numbers = #tpu.dot_dimension_numbers<[1], [0], [0], [1], [0, 0, 1, 1], [], []>} : vector<256x128xbf16>, vector<128x128xbf16>, vector<256x128xf32> -> vector<256x128xf32>
    %42 = arith.addf %34, %41 : vector<256x128xf32>
    %c0_39 = arith.constant 0 : index
    %c1_40 = arith.constant 1 : index
    %c2_41 = arith.constant 2 : index
    %c0_42 = arith.constant 0 : index
    %43 = vector.load %arg1[%c0_39, %c1_40, %c2_41, %c0_42] : memref<1x18x18x128xf32, #tpu.memory_space<vmem>>, vector<1x16x16x128xf32>
    %44 = vector.shape_cast %43 : vector<1x16x16x128xf32> to vector<16x16x128xf32>
    %45 = vector.shape_cast %44 : vector<16x16x128xf32> to vector<256x128xf32>
    %46 = arith.truncf %45 : vector<256x128xf32> to vector<256x128xbf16>
    %c5 = arith.constant 5 : index
    %c0_43 = arith.constant 0 : index
    %c0_44 = arith.constant 0 : index
    %47 = vector.load %arg2[%c5, %c0_43, %c0_44] : memref<9x128x128xbf16, #tpu.memory_space<vmem>>, vector<1x128x128xbf16>
    %48 = vector.shape_cast %47 : vector<1x128x128xbf16> to vector<128x128xbf16>
    %cst_45 = arith.constant dense<0.000000e+00> : vector<256x128xf32>
    %49 = tpu.matmul %46, %48, %cst_45 {dimension_numbers = #tpu.dot_dimension_numbers<[1], [0], [0], [1], [0, 0, 1, 1], [], []>} : vector<256x128xbf16>, vector<128x128xbf16>, vector<256x128xf32> -> vector<256x128xf32>
    %50 = arith.addf %42, %49 : vector<256x128xf32>
    %c0_46 = arith.constant 0 : index
    %c2_47 = arith.constant 2 : index
    %c0_48 = arith.constant 0 : index
    %c0_49 = arith.constant 0 : index
    %51 = vector.load %arg1[%c0_46, %c2_47, %c0_48, %c0_49] : memref<1x18x18x128xf32, #tpu.memory_space<vmem>>, vector<1x16x16x128xf32>
    %52 = vector.shape_cast %51 : vector<1x16x16x128xf32> to vector<16x16x128xf32>
    %53 = vector.shape_cast %52 : vector<16x16x128xf32> to vector<256x128xf32>
    %54 = arith.truncf %53 : vector<256x128xf32> to vector<256x128xbf16>
    %c6 = arith.constant 6 : index
    %c0_50 = arith.constant 0 : index
    %c0_51 = arith.constant 0 : index
    %55 = vector.load %arg2[%c6, %c0_50, %c0_51] : memref<9x128x128xbf16, #tpu.memory_space<vmem>>, vector<1x128x128xbf16>
    %56 = vector.shape_cast %55 : vector<1x128x128xbf16> to vector<128x128xbf16>
    %cst_52 = arith.constant dense<0.000000e+00> : vector<256x128xf32>
    %57 = tpu.matmul %54, %56, %cst_52 {dimension_numbers = #tpu.dot_dimension_numbers<[1], [0], [0], [1], [0, 0, 1, 1], [], []>} : vector<256x128xbf16>, vector<128x128xbf16>, vector<256x128xf32> -> vector<256x128xf32>
    %58 = arith.addf %50, %57 : vector<256x128xf32>
    %c0_53 = arith.constant 0 : index
    %c2_54 = arith.constant 2 : index
    %c1_55 = arith.constant 1 : index
    %c0_56 = arith.constant 0 : index
    %59 = vector.load %arg1[%c0_53, %c2_54, %c1_55, %c0_56] : memref<1x18x18x128xf32, #tpu.memory_space<vmem>>, vector<1x16x16x128xf32>
    %60 = vector.shape_cast %59 : vector<1x16x16x128xf32> to vector<16x16x128xf32>
    %61 = vector.shape_cast %60 : vector<16x16x128xf32> to vector<256x128xf32>
    %62 = arith.truncf %61 : vector<256x128xf32> to vector<256x128xbf16>
    %c7 = arith.constant 7 : index
    %c0_57 = arith.constant 0 : index
    %c0_58 = arith.constant 0 : index
    %63 = vector.load %arg2[%c7, %c0_57, %c0_58] : memref<9x128x128xbf16, #tpu.memory_space<vmem>>, vector<1x128x128xbf16>
    %64 = vector.shape_cast %63 : vector<1x128x128xbf16> to vector<128x128xbf16>
    %cst_59 = arith.constant dense<0.000000e+00> : vector<256x128xf32>
    %65 = tpu.matmul %62, %64, %cst_59 {dimension_numbers = #tpu.dot_dimension_numbers<[1], [0], [0], [1], [0, 0, 1, 1], [], []>} : vector<256x128xbf16>, vector<128x128xbf16>, vector<256x128xf32> -> vector<256x128xf32>
    %66 = arith.addf %58, %65 : vector<256x128xf32>
    %c0_60 = arith.constant 0 : index
    %c2_61 = arith.constant 2 : index
    %c2_62 = arith.constant 2 : index
    %c0_63 = arith.constant 0 : index
    %67 = vector.load %arg1[%c0_60, %c2_61, %c2_62, %c0_63] : memref<1x18x18x128xf32, #tpu.memory_space<vmem>>, vector<1x16x16x128xf32>
    %68 = vector.shape_cast %67 : vector<1x16x16x128xf32> to vector<16x16x128xf32>
    %69 = vector.shape_cast %68 : vector<16x16x128xf32> to vector<256x128xf32>
    %70 = arith.truncf %69 : vector<256x128xf32> to vector<256x128xbf16>
    %c8 = arith.constant 8 : index
    %c0_64 = arith.constant 0 : index
    %c0_65 = arith.constant 0 : index
    %71 = vector.load %arg2[%c8, %c0_64, %c0_65] : memref<9x128x128xbf16, #tpu.memory_space<vmem>>, vector<1x128x128xbf16>
    %72 = vector.shape_cast %71 : vector<1x128x128xbf16> to vector<128x128xbf16>
    %cst_66 = arith.constant dense<0.000000e+00> : vector<256x128xf32>
    %73 = tpu.matmul %70, %72, %cst_66 {dimension_numbers = #tpu.dot_dimension_numbers<[1], [0], [0], [1], [0, 0, 1, 1], [], []>} : vector<256x128xbf16>, vector<128x128xbf16>, vector<256x128xf32> -> vector<256x128xf32>
    %74 = arith.addf %66, %73 : vector<256x128xf32>
    %c0_67 = arith.constant 0 : index
    %c0_68 = arith.constant 0 : index
    %75 = vector.load %arg3[%c0_67, %c0_68] : memref<1x128xf32, #tpu.memory_space<vmem>>, vector<1x128xf32>
    %76 = vector.broadcast %75 : vector<1x128xf32> to vector<256x128xf32>
    %77 = arith.addf %74, %76 : vector<256x128xf32>
    %cst_69 = arith.constant 0.000000e+00 : f32
    %78 = vector.broadcast %cst_69 : f32 to vector<256x128xf32>
    %79 = arith.maximumf %77, %78 : vector<256x128xf32>
    %80 = vector.shape_cast %79 : vector<256x128xf32> to vector<16x16x128xf32>
    %81 = arith.truncf %80 : vector<16x16x128xf32> to vector<16x16x128xbf16>
    %c1_70 = arith.constant 1 : index
    %c1_71 = arith.constant 1 : index
    %c0_72 = arith.constant 0 : index
    %82 = vector.load %arg7[%c1_70, %c1_71, %c0_72] : memref<18x18x128xbf16, #tpu.memory_space<vmem>>, vector<16x16x128xbf16>
    tpu.vector_store %arg7[%c1_70, %c1_71, %c0_72], %81 {strides = array<i32>} : memref<18x18x128xbf16, #tpu.memory_space<vmem>>, vector<16x16x128xbf16>,
    %cst_73 = arith.constant 0.000000e+00 : f32
    %83 = vector.broadcast %cst_73 : f32 to vector<256x128xf32>
    %c0_74 = arith.constant 0 : index
    %c0_75 = arith.constant 0 : index
    %c0_76 = arith.constant 0 : index
    %84 = vector.load %arg7[%c0_74, %c0_75, %c0_76] : memref<18x18x128xbf16, #tpu.memory_space<vmem>>, vector<16x16x128xbf16>
    %85 = vector.shape_cast %84 : vector<16x16x128xbf16> to vector<256x128xbf16>
    %c0_77 = arith.constant 0 : index
    %c0_78 = arith.constant 0 : index
    %c0_79 = arith.constant 0 : index
    %86 = vector.load %arg4[%c0_77, %c0_78, %c0_79] : memref<9x128x128xbf16, #tpu.memory_space<vmem>>, vector<1x128x128xbf16>
    %87 = vector.shape_cast %86 : vector<1x128x128xbf16> to vector<128x128xbf16>
    %cst_80 = arith.constant dense<0.000000e+00> : vector<256x128xf32>
    %88 = tpu.matmul %85, %87, %cst_80 {dimension_numbers = #tpu.dot_dimension_numbers<[1], [0], [0], [1], [0, 0, 1, 1], [], []>} : vector<256x128xbf16>, vector<128x128xbf16>, vector<256x128xf32> -> vector<256x128xf32>
    %89 = arith.addf %83, %88 : vector<256x128xf32>
    %c0_81 = arith.constant 0 : index
    %c1_82 = arith.constant 1 : index
    %c0_83 = arith.constant 0 : index
    %90 = vector.load %arg7[%c0_81, %c1_82, %c0_83] : memref<18x18x128xbf16, #tpu.memory_space<vmem>>, vector<16x16x128xbf16>
    %91 = vector.shape_cast %90 : vector<16x16x128xbf16> to vector<256x128xbf16>
    %c1_84 = arith.constant 1 : index
    %c0_85 = arith.constant 0 : index
    %c0_86 = arith.constant 0 : index
    %92 = vector.load %arg4[%c1_84, %c0_85, %c0_86] : memref<9x128x128xbf16, #tpu.memory_space<vmem>>, vector<1x128x128xbf16>
    %93 = vector.shape_cast %92 : vector<1x128x128xbf16> to vector<128x128xbf16>
    %cst_87 = arith.constant dense<0.000000e+00> : vector<256x128xf32>
    %94 = tpu.matmul %91, %93, %cst_87 {dimension_numbers = #tpu.dot_dimension_numbers<[1], [0], [0], [1], [0, 0, 1, 1], [], []>} : vector<256x128xbf16>, vector<128x128xbf16>, vector<256x128xf32> -> vector<256x128xf32>
    %95 = arith.addf %89, %94 : vector<256x128xf32>
    %c0_88 = arith.constant 0 : index
    %c2_89 = arith.constant 2 : index
    %c0_90 = arith.constant 0 : index
    %96 = vector.load %arg7[%c0_88, %c2_89, %c0_90] : memref<18x18x128xbf16, #tpu.memory_space<vmem>>, vector<16x16x128xbf16>
    %97 = vector.shape_cast %96 : vector<16x16x128xbf16> to vector<256x128xbf16>
    %c2_91 = arith.constant 2 : index
    %c0_92 = arith.constant 0 : index
    %c0_93 = arith.constant 0 : index
    %98 = vector.load %arg4[%c2_91, %c0_92, %c0_93] : memref<9x128x128xbf16, #tpu.memory_space<vmem>>, vector<1x128x128xbf16>
    %99 = vector.shape_cast %98 : vector<1x128x128xbf16> to vector<128x128xbf16>
    %cst_94 = arith.constant dense<0.000000e+00> : vector<256x128xf32>
    %100 = tpu.matmul %97, %99, %cst_94 {dimension_numbers = #tpu.dot_dimension_numbers<[1], [0], [0], [1], [0, 0, 1, 1], [], []>} : vector<256x128xbf16>, vector<128x128xbf16>, vector<256x128xf32> -> vector<256x128xf32>
    %101 = arith.addf %95, %100 : vector<256x128xf32>
    %c1_95 = arith.constant 1 : index
    %c0_96 = arith.constant 0 : index
    %c0_97 = arith.constant 0 : index
    %102 = vector.load %arg7[%c1_95, %c0_96, %c0_97] : memref<18x18x128xbf16, #tpu.memory_space<vmem>>, vector<16x16x128xbf16>
    %103 = vector.shape_cast %102 : vector<16x16x128xbf16> to vector<256x128xbf16>
    %c3_98 = arith.constant 3 : index
    %c0_99 = arith.constant 0 : index
    %c0_100 = arith.constant 0 : index
    %104 = vector.load %arg4[%c3_98, %c0_99, %c0_100] : memref<9x128x128xbf16, #tpu.memory_space<vmem>>, vector<1x128x128xbf16>
    %105 = vector.shape_cast %104 : vector<1x128x128xbf16> to vector<128x128xbf16>
    %cst_101 = arith.constant dense<0.000000e+00> : vector<256x128xf32>
    %106 = tpu.matmul %103, %105, %cst_101 {dimension_numbers = #tpu.dot_dimension_numbers<[1], [0], [0], [1], [0, 0, 1, 1], [], []>} : vector<256x128xbf16>, vector<128x128xbf16>, vector<256x128xf32> -> vector<256x128xf32>
    %107 = arith.addf %101, %106 : vector<256x128xf32>
    %c1_102 = arith.constant 1 : index
    %c1_103 = arith.constant 1 : index
    %c0_104 = arith.constant 0 : index
    %108 = vector.load %arg7[%c1_102, %c1_103, %c0_104] : memref<18x18x128xbf16, #tpu.memory_space<vmem>>, vector<16x16x128xbf16>
    %109 = vector.shape_cast %108 : vector<16x16x128xbf16> to vector<256x128xbf16>
    %c4_105 = arith.constant 4 : index
    %c0_106 = arith.constant 0 : index
    %c0_107 = arith.constant 0 : index
    %110 = vector.load %arg4[%c4_105, %c0_106, %c0_107] : memref<9x128x128xbf16, #tpu.memory_space<vmem>>, vector<1x128x128xbf16>
    %111 = vector.shape_cast %110 : vector<1x128x128xbf16> to vector<128x128xbf16>
    %cst_108 = arith.constant dense<0.000000e+00> : vector<256x128xf32>
    %112 = tpu.matmul %109, %111, %cst_108 {dimension_numbers = #tpu.dot_dimension_numbers<[1], [0], [0], [1], [0, 0, 1, 1], [], []>} : vector<256x128xbf16>, vector<128x128xbf16>, vector<256x128xf32> -> vector<256x128xf32>
    %113 = arith.addf %107, %112 : vector<256x128xf32>
    %c1_109 = arith.constant 1 : index
    %c2_110 = arith.constant 2 : index
    %c0_111 = arith.constant 0 : index
    %114 = vector.load %arg7[%c1_109, %c2_110, %c0_111] : memref<18x18x128xbf16, #tpu.memory_space<vmem>>, vector<16x16x128xbf16>
    %115 = vector.shape_cast %114 : vector<16x16x128xbf16> to vector<256x128xbf16>
    %c5_112 = arith.constant 5 : index
    %c0_113 = arith.constant 0 : index
    %c0_114 = arith.constant 0 : index
    %116 = vector.load %arg4[%c5_112, %c0_113, %c0_114] : memref<9x128x128xbf16, #tpu.memory_space<vmem>>, vector<1x128x128xbf16>
    %117 = vector.shape_cast %116 : vector<1x128x128xbf16> to vector<128x128xbf16>
    %cst_115 = arith.constant dense<0.000000e+00> : vector<256x128xf32>
    %118 = tpu.matmul %115, %117, %cst_115 {dimension_numbers = #tpu.dot_dimension_numbers<[1], [0], [0], [1], [0, 0, 1, 1], [], []>} : vector<256x128xbf16>, vector<128x128xbf16>, vector<256x128xf32> -> vector<256x128xf32>
    %119 = arith.addf %113, %118 : vector<256x128xf32>
    %c2_116 = arith.constant 2 : index
    %c0_117 = arith.constant 0 : index
    %c0_118 = arith.constant 0 : index
    %120 = vector.load %arg7[%c2_116, %c0_117, %c0_118] : memref<18x18x128xbf16, #tpu.memory_space<vmem>>, vector<16x16x128xbf16>
    %121 = vector.shape_cast %120 : vector<16x16x128xbf16> to vector<256x128xbf16>
    %c6_119 = arith.constant 6 : index
    %c0_120 = arith.constant 0 : index
    %c0_121 = arith.constant 0 : index
    %122 = vector.load %arg4[%c6_119, %c0_120, %c0_121] : memref<9x128x128xbf16, #tpu.memory_space<vmem>>, vector<1x128x128xbf16>
    %123 = vector.shape_cast %122 : vector<1x128x128xbf16> to vector<128x128xbf16>
    %cst_122 = arith.constant dense<0.000000e+00> : vector<256x128xf32>
    %124 = tpu.matmul %121, %123, %cst_122 {dimension_numbers = #tpu.dot_dimension_numbers<[1], [0], [0], [1], [0, 0, 1, 1], [], []>} : vector<256x128xbf16>, vector<128x128xbf16>, vector<256x128xf32> -> vector<256x128xf32>
    %125 = arith.addf %119, %124 : vector<256x128xf32>
    %c2_123 = arith.constant 2 : index
    %c1_124 = arith.constant 1 : index
    %c0_125 = arith.constant 0 : index
    %126 = vector.load %arg7[%c2_123, %c1_124, %c0_125] : memref<18x18x128xbf16, #tpu.memory_space<vmem>>, vector<16x16x128xbf16>
    %127 = vector.shape_cast %126 : vector<16x16x128xbf16> to vector<256x128xbf16>
    %c7_126 = arith.constant 7 : index
    %c0_127 = arith.constant 0 : index
    %c0_128 = arith.constant 0 : index
    %128 = vector.load %arg4[%c7_126, %c0_127, %c0_128] : memref<9x128x128xbf16, #tpu.memory_space<vmem>>, vector<1x128x128xbf16>
    %129 = vector.shape_cast %128 : vector<1x128x128xbf16> to vector<128x128xbf16>
    %cst_129 = arith.constant dense<0.000000e+00> : vector<256x128xf32>
    %130 = tpu.matmul %127, %129, %cst_129 {dimension_numbers = #tpu.dot_dimension_numbers<[1], [0], [0], [1], [0, 0, 1, 1], [], []>} : vector<256x128xbf16>, vector<128x128xbf16>, vector<256x128xf32> -> vector<256x128xf32>
    %131 = arith.addf %125, %130 : vector<256x128xf32>
    %c2_130 = arith.constant 2 : index
    %c2_131 = arith.constant 2 : index
    %c0_132 = arith.constant 0 : index
    %132 = vector.load %arg7[%c2_130, %c2_131, %c0_132] : memref<18x18x128xbf16, #tpu.memory_space<vmem>>, vector<16x16x128xbf16>
    %133 = vector.shape_cast %132 : vector<16x16x128xbf16> to vector<256x128xbf16>
    %c8_133 = arith.constant 8 : index
    %c0_134 = arith.constant 0 : index
    %c0_135 = arith.constant 0 : index
    %134 = vector.load %arg4[%c8_133, %c0_134, %c0_135] : memref<9x128x128xbf16, #tpu.memory_space<vmem>>, vector<1x128x128xbf16>
    %135 = vector.shape_cast %134 : vector<1x128x128xbf16> to vector<128x128xbf16>
    %cst_136 = arith.constant dense<0.000000e+00> : vector<256x128xf32>
    %136 = tpu.matmul %133, %135, %cst_136 {dimension_numbers = #tpu.dot_dimension_numbers<[1], [0], [0], [1], [0, 0, 1, 1], [], []>} : vector<256x128xbf16>, vector<128x128xbf16>, vector<256x128xf32> -> vector<256x128xf32>
    %137 = arith.addf %131, %136 : vector<256x128xf32>
    %c0_137 = arith.constant 0 : index
    %c1_138 = arith.constant 1 : index
    %c1_139 = arith.constant 1 : index
    %c0_140 = arith.constant 0 : index
    %138 = vector.load %arg1[%c0_137, %c1_138, %c1_139, %c0_140] : memref<1x18x18x128xf32, #tpu.memory_space<vmem>>, vector<1x16x16x128xf32>
    %139 = vector.shape_cast %138 : vector<1x16x16x128xf32> to vector<16x16x128xf32>
    %140 = vector.shape_cast %139 : vector<16x16x128xf32> to vector<256x128xf32>
    %c0_141 = arith.constant 0 : index
    %c0_142 = arith.constant 0 : index
    %141 = vector.load %arg5[%c0_141, %c0_142] : memref<1x128xf32, #tpu.memory_space<vmem>>, vector<1x128xf32>
    %142 = vector.broadcast %141 : vector<1x128xf32> to vector<256x128xf32>
    %143 = arith.addf %137, %142 : vector<256x128xf32>
    %144 = arith.addf %143, %140 : vector<256x128xf32>
    %cst_143 = arith.constant 0.000000e+00 : f32
    %145 = vector.broadcast %cst_143 : f32 to vector<256x128xf32>
    %146 = arith.maximumf %144, %145 : vector<256x128xf32>
    %147 = vector.shape_cast %146 : vector<256x128xf32> to vector<16x16x128xf32>
    %c0_144 = arith.constant 0 : index
    %c0_145 = arith.constant 0 : index
    %c0_146 = arith.constant 0 : index
    %c0_147 = arith.constant 0 : index
    %148 = vector.load %arg6[%c0_144, %c0_145, %c0_146, %c0_147] : memref<1x16x16x128xf32, #tpu.memory_space<vmem>>, vector<1x16x16x128xf32>
    %149 = vector.shape_cast %148 : vector<1x16x16x128xf32> to vector<16x16x128xf32>
    %150 = vector.shape_cast %147 : vector<16x16x128xf32> to vector<1x16x16x128xf32>
    tpu.vector_store %arg6[%c0_144, %c0_145, %c0_146, %c0_147], %150 {strides = array<i32>} : memref<1x16x16x128xf32, #tpu.memory_space<vmem>>, vector<1x16x16x128xf32>,
    return
  }
  func.func @transform_0(%arg0: i32) -> (i32, i32, i32, i32) {
    %c0_i32 = arith.constant 0 : i32
    %c0_i32_0 = arith.constant 0 : i32
    %c0_i32_1 = arith.constant 0 : i32
    %c0_i32_2 = arith.constant 0 : i32
    return %arg0, %c0_i32, %c0_i32_0, %c0_i32_1 : i32, i32, i32, i32
  }
  func.func @transform_1(%arg0: i32) -> (i32, i32, i32) {
    %c0_i32 = arith.constant 0 : i32
    %c0_i32_0 = arith.constant 0 : i32
    %c0_i32_1 = arith.constant 0 : i32
    %c0_i32_2 = arith.constant 0 : i32
    return %c0_i32, %c0_i32_0, %c0_i32_1 : i32, i32, i32
  }
  func.func @transform_2(%arg0: i32) -> (i32, i32) {
    %c0_i32 = arith.constant 0 : i32
    %c0_i32_0 = arith.constant 0 : i32
    %c0_i32_1 = arith.constant 0 : i32
    return %c0_i32, %c0_i32_0 : i32, i32
  }
  func.func @transform_3(%arg0: i32) -> (i32, i32, i32) {
    %c0_i32 = arith.constant 0 : i32
    %c0_i32_0 = arith.constant 0 : i32
    %c0_i32_1 = arith.constant 0 : i32
    %c0_i32_2 = arith.constant 0 : i32
    return %c0_i32, %c0_i32_0, %c0_i32_1 : i32, i32, i32
  }
  func.func @transform_4(%arg0: i32) -> (i32, i32) {
    %c0_i32 = arith.constant 0 : i32
    %c0_i32_0 = arith.constant 0 : i32
    %c0_i32_1 = arith.constant 0 : i32
    return %c0_i32, %c0_i32_0 : i32, i32
  }
  func.func @transform_5(%arg0: i32) -> (i32, i32, i32, i32) {
    %c0_i32 = arith.constant 0 : i32
    %c0_i32_0 = arith.constant 0 : i32
    %c0_i32_1 = arith.constant 0 : i32
    %c0_i32_2 = arith.constant 0 : i32
    return %arg0, %c0_i32, %c0_i32_0, %c0_i32_1 : i32, i32, i32, i32
  }
}

</mosaic_0001>

<llo_original>
// kernel: basic_block_forward.1
$region0: #{basic_block_forward.1}
  #allocation0 [shape = 'u32[]', space=smem, size = 0x4, offset = 0x4, fixed_abs, tag = 'smem constant byte address 0x4 - core index']
  #allocation1 [shape = 'u32[144,128]{1,0:T(1,128)}', space=vmem, size = 0x12000, scoped, tag = 'internal scratch']
  #allocation2 [shape = 'bf16[18,18,128]{2,1,0:T(8,128)(2,1)}', space=vmem, size = 0x1b000, scoped, tag = 'scratch operand']
  %s0 = inlined_call_operand.vmem [shape: f32[2,18,18,128], index: 0, kind: input, shape index: {}]
  %s1 = inlined_call_operand.vmem [shape: bf16[9,128,128], index: 1, kind: input, shape index: {}]
  %s2 = inlined_call_operand.vmem [shape: f32[1,128], index: 2, kind: input, shape index: {}]
  %s3 = inlined_call_operand.vmem [shape: bf16[9,128,128], index: 3, kind: input, shape index: {}]
  %s4 = inlined_call_operand.vmem [shape: f32[1,128], index: 4, kind: input, shape index: {}]
  %s5 = inlined_call_operand.vmem [shape: f32[2,16,16,128], index: 5, kind: output, shape index: {}]
  %s6 = sld [smem:[#allocation0]]
  $region53: #{basic_block_forward.1} parent=0
    _
  %s8 = ssub.s32 1, %s6
  %s9 = scalar_select 0, %s8, %s6
  loop: start=0, step=1, limit=4
  $region2: #{basic_block_forward.1} parent=0 // loop_pre_header
    _
  $region3: #{basic_block_forward.1} parent=0 // loop_header
    %s11 = sphi 0, %s15
    %p12 = scmp.ge.s32.totalorder %s11, 4
    %s21 = sphi 0, %s23
    %s24 = sphi 0, %s21
    %s25 = sphi 0, %s24
    %s41 = sphi 0, %s25
    %s45 = sphi 0, %s45
    %s47 = sphi 0, %s45
    %s48 = sphi 0, %s47
    %s62 = sphi 0, %s48
    %s66 = sphi 0, %s66
    %s68 = sphi 0, %s66
    %s69 = sphi 0, %s68
    %s83 = sphi 0, %s69
    %s87 = sphi 0, %s87
    %s89 = sphi 0, %s87
    %s90 = sphi 0, %s89
    %s104 = sphi 0, %s90
    %s108 = sphi 0, %s108
    %s110 = sphi 0, %s108
    %s111 = sphi 0, %s110
    %s125 = sphi 0, %s111
    %s131 = sphi 0, %s133
    %s134 = sphi 0, %s131
    %s135 = sphi 0, %s134
    %s151 = sphi 0, %s135
  $region4: #{basic_block_forward.1} parent=0 // loop_header_branch
    %14 = sbr.rel (%p12) target = $region8
  $region5: #{basic_block_forward.1} parent=0 // loop_body
    %s16 = ssub.s32 %s11, 1
    %s17 = ssub.s32 %s11, 2
    %s18 = sadd.s32 %s11, 1
    %s19 = ssub.s32 %s11, %s18
    %p20 = scmp.eq.s32.totalorder %s19, 0
    %s22 = sadd.s32 %s21, 1
    %s23 = scalar_select %p20, %s21, %s22
    %p26 = pneg %p20
    %p27 = scmp.eq.s32.totalorder %s11, 1
    %p28 = por %p26, %p27
    %p29 = scmp.ne.s32.totalorder %s21, %s24
    %p30 = scmp.eq.s32.totalorder %s11, 0
    %p31 = por %p29, %p30
    %p32 = scmp.ne.s32.totalorder %s21, %s24
    %p33 = scmp.eq.s32.totalorder %s16, 1
    %p34 = por %p32, %p33
    %p35 = scmp.ne.s32.totalorder %s24, %s25
    %p36 = scmp.eq.s32.totalorder %s16, 0
    %p37 = por %p35, %p36
    %p38 = scmp.ne.s32.totalorder %s24, %s25
    %p39 = scmp.eq.s32.totalorder %s17, 1
    %p40 = por %p38, %p39
    %p42 = scmp.ne.s32.totalorder %s25, %s41
    %p43 = scmp.eq.s32.totalorder %s17, 0
    %p44 = por %p42, %p43
    %s46 = sadd.s32 %s45, 1
    %p49 = scmp.eq.s32.totalorder %s11, 1
    %p50 = scmp.ne.s32.totalorder %s45, %s47
    %p51 = scmp.eq.s32.totalorder %s11, 0
    %p52 = por %p50, %p51
    %p53 = scmp.ne.s32.totalorder %s45, %s47
    %p54 = scmp.eq.s32.totalorder %s16, 1
    %p55 = por %p53, %p54
    %p56 = scmp.ne.s32.totalorder %s47, %s48
    %p57 = scmp.eq.s32.totalorder %s16, 0
    %p58 = por %p56, %p57
    %p59 = scmp.ne.s32.totalorder %s47, %s48
    %p60 = scmp.eq.s32.totalorder %s17, 1
    %p61 = por %p59, %p60
    %p63 = scmp.ne.s32.totalorder %s48, %s62
    %p64 = scmp.eq.s32.totalorder %s17, 0
    %p65 = por %p63, %p64
    %s67 = sadd.s32 %s66, 1
    %p70 = scmp.eq.s32.totalorder %s11, 1
    %p71 = scmp.ne.s32.totalorder %s66, %s68
    %p72 = scmp.eq.s32.totalorder %s11, 0
    %p73 = por %p71, %p72
    %p74 = scmp.ne.s32.totalorder %s66, %s68
    %p75 = scmp.eq.s32.totalorder %s16, 1
    %p76 = por %p74, %p75
    %p77 = scmp.ne.s32.totalorder %s68, %s69
    %p78 = scmp.eq.s32.totalorder %s16, 0
    %p79 = por %p77, %p78
    %p80 = scmp.ne.s32.totalorder %s68, %s69
    %p81 = scmp.eq.s32.totalorder %s17, 1
    %p82 = por %p80, %p81
    %p84 = scmp.ne.s32.totalorder %s69, %s83
    %p85 = scmp.eq.s32.totalorder %s17, 0
    %p86 = por %p84, %p85
    %s88 = sadd.s32 %s87, 1
    %p91 = scmp.eq.s32.totalorder %s11, 1
    %p92 = scmp.ne.s32.totalorder %s87, %s89
    %p93 = scmp.eq.s32.totalorder %s11, 0
    %p94 = por %p92, %p93
    %p95 = scmp.ne.s32.totalorder %s87, %s89
    %p96 = scmp.eq.s32.totalorder %s16, 1
    %p97 = por %p95, %p96
    %p98 = scmp.ne.s32.totalorder %s89, %s90
    %p99 = scmp.eq.s32.totalorder %s16, 0
    %p100 = por %p98, %p99
    %p101 = scmp.ne.s32.totalorder %s89, %s90
    %p102 = scmp.eq.s32.totalorder %s17, 1
    %p103 = por %p101, %p102
    %p105 = scmp.ne.s32.totalorder %s90, %s104
    %p106 = scmp.eq.s32.totalorder %s17, 0
    %p107 = por %p105, %p106
    %s109 = sadd.s32 %s108, 1
    %p112 = scmp.eq.s32.totalorder %s11, 1
    %p113 = scmp.ne.s32.totalorder %s108, %s110
    %p114 = scmp.eq.s32.totalorder %s11, 0
    %p115 = por %p113, %p114
    %p116 = scmp.ne.s32.totalorder %s108, %s110
    %p117 = scmp.eq.s32.totalorder %s16, 1
    %p118 = por %p116, %p117
    %p119 = scmp.ne.s32.totalorder %s110, %s111
    %p120 = scmp.eq.s32.totalorder %s16, 0
    %p121 = por %p119, %p120
    %p122 = scmp.ne.s32.totalorder %s110, %s111
    %p123 = scmp.eq.s32.totalorder %s17, 1
    %p124 = por %p122, %p123
    %p126 = scmp.ne.s32.totalorder %s111, %s125
    %p127 = scmp.eq.s32.totalorder %s17, 0
    %p128 = por %p126, %p127
    %s129 = ssub.s32 %s11, %s18
    %p130 = scmp.eq.s32.totalorder %s129, 0
    %s132 = sadd.s32 %s131, 1
    %s133 = scalar_select %p130, %s131, %s132
    %p136 = pneg %p130
    %p137 = scmp.eq.s32.totalorder %s11, 1
    %p138 = por %p136, %p137
    %p139 = scmp.ne.s32.totalorder %s131, %s134
    %p140 = scmp.eq.s32.totalorder %s11, 0
    %p141 = por %p139, %p140
    %p142 = scmp.ne.s32.totalorder %s131, %s134
    %p143 = scmp.eq.s32.totalorder %s16, 1
    %p144 = por %p142, %p143
    %p145 = scmp.ne.s32.totalorder %s134, %s135
    %p146 = scmp.eq.s32.totalorder %s16, 0
    %p147 = por %p145, %p146
    %p148 = scmp.ne.s32.totalorder %s134, %s135
    %p149 = scmp.eq.s32.totalorder %s17, 1
    %p150 = por %p148, %p149
    %p152 = scmp.ne.s32.totalorder %s135, %s151
    %p153 = scmp.eq.s32.totalorder %s17, 0
    %p154 = por %p152, %p153
    %p155 = scmp.le.s32.totalorder 1, %s11
    %p156 = scmp.lt.s32.totalorder %s11, 3
    %p157 = pnand %p155, %p156
    %p158 = pneg %p157
    // Predicated region
    $region9: #{basic_block_forward.1} parent=5 // pred_check
      _
    $region10: #{basic_block_forward.1} parent=5 // pred_check_branch
      %160 = sbr.rel (%p157) target = $region12
    $region11: #{basic_block_forward.1} parent=5 // pred_region
      %s161 = ssub.s32 %s11, 1
      // Predicated region
      $region13: #{basic_block_forward.1} parent=11 // pred_check
        %p162 = pneg %p58
      $region14: #{basic_block_forward.1} parent=11 // pred_check_branch
        %164 = sbr.rel (%p162) target = $region16
      $region15: #{basic_block_forward.1} parent=11 // pred_region
        _
      $region16: #{basic_block_forward.1} parent=11 // pred_fallthru
        _
      // Predicated region
      $region17: #{basic_block_forward.1} parent=11 // pred_check
        %p165 = pneg %p79
      $region18: #{basic_block_forward.1} parent=11 // pred_check_branch
        %167 = sbr.rel (%p165) target = $region20
      $region19: #{basic_block_forward.1} parent=11 // pred_region
        _
      $region20: #{basic_block_forward.1} parent=11 // pred_fallthru
        _
      // Predicated region
      $region21: #{basic_block_forward.1} parent=11 // pred_check
        %p168 = pneg %p100
      $region22: #{basic_block_forward.1} parent=11 // pred_check_branch
        %170 = sbr.rel (%p168) target = $region24
      $region23: #{basic_block_forward.1} parent=11 // pred_region
        _
      $region24: #{basic_block_forward.1} parent=11 // pred_fallthru
        _
      // Predicated region
      $region25: #{basic_block_forward.1} parent=11 // pred_check
        %p171 = pneg %p121
      $region26: #{basic_block_forward.1} parent=11 // pred_check_branch
        %173 = sbr.rel (%p171) target = $region28
      $region27: #{basic_block_forward.1} parent=11 // pred_region
        _
      $region28: #{basic_block_forward.1} parent=11 // pred_fallthru
        _
    $region12: #{basic_block_forward.1} parent=5 // pred_fallthru
      _
    %p174 = scmp.lt.s32.totalorder %s11, 2
    // Predicated region
    $region29: #{basic_block_forward.1} parent=5 // pred_check
      %p175 = pneg %p174
    $region30: #{basic_block_forward.1} parent=5 // pred_check_branch
      %177 = sbr.rel (%p175) target = $region32
    $region31: #{basic_block_forward.1} parent=5 // pred_region
      // Predicated region
      $region33: #{basic_block_forward.1} parent=31 // pred_check
        %p178 = pneg %p31
      $region34: #{basic_block_forward.1} parent=31 // pred_check_branch
        %180 = sbr.rel (%p178) target = $region36
      $region35: #{basic_block_forward.1} parent=31 // pred_region
        %p181 = scmp.lt.s32.totalorder %s11, 1
        %s182 = scalar_select %p181, %s11, 1
        %s183 = smul.addr %s182, 54
        %s184 = smul.addr %s183, 8
        %s185 = scalar_lea.vmem %s0, %s184
      $region36: #{basic_block_forward.1} parent=31 // pred_fallthru
        _
    $region32: #{basic_block_forward.1} parent=5 // pred_fallthru
      _
    %p186 = scmp.le.s32.totalorder 1, %s11
    %p187 = scmp.lt.s32.totalorder %s11, 3
    %p188 = pnand %p186, %p187
    %p189 = pneg %p188
    // Predicated region
    $region37: #{basic_block_forward.1} parent=5 // pred_check
      _
    $region38: #{basic_block_forward.1} parent=5 // pred_check_branch
      %191 = sbr.rel (%p188) target = $region40
    $region39: #{basic_block_forward.1} parent=5 // pred_region
      %s192 = ssub.s32 %s11, 1
      %p193 = scmp.lt.s32.totalorder %s16, 1
      %s194 = scalar_select %p193, %s16, 1
      %s195 = smul.addr %s194, 54
      %s196 = smul.addr %s195, 8
      %s197 = scalar_lea.vmem %s0, %s196
      %p198 = pneg %p37
      %p199 = pneg %p34
      %p200 = pneg %p58
      %p201 = pneg %p55
      %p202 = pneg %p79
      %p203 = pneg %p76
      %p204 = pneg %p100
      %p205 = pneg %p97
      %p206 = pneg %p121
      %p207 = pneg %p118
      %p208 = pneg %p147
      %p209 = pneg %p144
      %p210 = scmp.lt.s32.totalorder %s16, 1
      %s211 = scalar_select %p210, %s16, 1
      %s212 = smul.addr %s211, 32
      %s213 = smul.addr %s212, 8
      %s214 = scalar_lea.vmem %s5, %s213
      %p215 = scmp.lt.s32.totalorder %s16, 1
      %s216 = scalar_select %p215, %s16, 1
      %s217 = smul.addr %s216, 54
      %s218 = smul.addr %s217, 8
      %s219 = scalar_lea.vmem %s0, %s218
      %p220 = scmp.lt.s32.totalorder %s16, 1
      %s221 = scalar_select %p220, %s16, 1
      %s222 = smul.addr %s221, 32
      %s223 = smul.addr %s222, 8
      %s224 = scalar_lea.vmem %s5, %s223
      %226 = vst [vmem:[#allocation2] sm:$0xf] 0
      %227 = vst [vmem:[#allocation2 + $0x4] sm:$0xf] 0
      %228 = vst [vmem:[#allocation2 + $0x8] sm:$0x1] 0
      %229 = vst [vmem:[#allocation2 + $0xc] sm:$0xf] 0
      %230 = vst [vmem:[#allocation2 + $0x10] sm:$0xf] 0
      %231 = vst [vmem:[#allocation2 + $0x14] sm:$0x1] 0
      %232 = vst [vmem:[#allocation2 + $0x18] sm:$0xf] 0
      %233 = vst [vmem:[#allocation2 + $0x1c] sm:$0xf] 0
      %234 = vst [vmem:[#allocation2 + $0x20] sm:$0x1] 0
      %235 = vst [vmem:[#allocation2 + $0x24] sm:$0xf] 0
      %236 = vst [vmem:[#allocation2 + $0x28] sm:$0xf] 0
      %237 = vst [vmem:[#allocation2 + $0x2c] sm:$0x1] 0
      %238 = vst [vmem:[#allocation2 + $0x30] sm:$0xf] 0
      %239 = vst [vmem:[#allocation2 + $0x34] sm:$0xf] 0
      %240 = vst [vmem:[#allocation2 + $0x38] sm:$0x1] 0
      %241 = vst [vmem:[#allocation2 + $0x3c] sm:$0xf] 0
      %242 = vst [vmem:[#allocation2 + $0x40] sm:$0xf] 0
      %243 = vst [vmem:[#allocation2 + $0x44] sm:$0x1] 0
      %244 = vst [vmem:[#allocation2 + $0x48] sm:$0xf] 0
      %245 = vst [vmem:[#allocation2 + $0x4c] sm:$0xf] 0
      %246 = vst [vmem:[#allocation2 + $0x50] sm:$0x1] 0
      %247 = vst [vmem:[#allocation2 + $0x54] sm:$0xf] 0
      %248 = vst [vmem:[#allocation2 + $0x58] sm:$0xf] 0
      %249 = vst [vmem:[#allocation2 + $0x5c] sm:$0x1] 0
      %250 = vst [vmem:[#allocation2 + $0x60] sm:$0xf] 0
      %251 = vst [vmem:[#allocation2 + $0x64] sm:$0xf] 0
      %252 = vst [vmem:[#allocation2 + $0x68] sm:$0x1] 0
      %253 = vst [vmem:[#allocation2 + $0x6c] sm:$0xf] 0
      %254 = vst [vmem:[#allocation2 + $0x70] sm:$0xf] 0
      %255 = vst [vmem:[#allocation2 + $0x74] sm:$0x1] 0
      %256 = vst [vmem:[#allocation2 + $0x78] sm:$0xf] 0
      %257 = vst [vmem:[#allocation2 + $0x7c] sm:$0xf] 0
      %258 = vst [vmem:[#allocation2 + $0x80] sm:$0x1] 0
      %259 = vst [vmem:[#allocation2 + $0x84] sm:$0xf] 0
      %260 = vst [vmem:[#allocation2 + $0x88] sm:$0xf] 0
      %261 = vst [vmem:[#allocation2 + $0x8c] sm:$0x1] 0
      %262 = vst [vmem:[#allocation2 + $0x90] sm:$0xf] 0
      %263 = vst [vmem:[#allocation2 + $0x94] sm:$0xf] 0
      %264 = vst [vmem:[#allocation2 + $0x98] sm:$0x1] 0
      %265 = vst [vmem:[#allocation2 + $0x9c] sm:$0xf] 0
      %266 = vst [vmem:[#allocation2 + $0xa0] sm:$0xf] 0
      %267 = vst [vmem:[#allocation2 + $0xa4] sm:$0x1] 0
      %268 = vst [vmem:[#allocation2 + $0xa8] sm:$0xf] 0
      %269 = vst [vmem:[#allocation2 + $0xac] sm:$0xf] 0
      %270 = vst [vmem:[#allocation2 + $0xb0] sm:$0x1] 0
      %271 = vst [vmem:[#allocation2 + $0xb4] sm:$0xf] 0
      %272 = vst [vmem:[#allocation2 + $0xb8] sm:$0xf] 0
      %273 = vst [vmem:[#allocation2 + $0xbc] sm:$0x1] 0
      %274 = vst [vmem:[#allocation2 + $0xc0] sm:$0xf] 0
      %275 = vst [vmem:[#allocation2 + $0xc4] sm:$0xf] 0
      %276 = vst [vmem:[#allocation2 + $0xc8] sm:$0x1] 0
      %277 = vst [vmem:[#allocation2 + $0xcc] sm:$0xf] 0
      %278 = vst [vmem:[#allocation2 + $0xd0] sm:$0xf] 0
      %279 = vst [vmem:[#allocation2 + $0xd4] sm:$0x1] 0
      %v280 = vld [vmem:[%s219] sm:$0xff]
      %v281 = vld [vmem:[%s219 + $0x8] sm:$0xff]
      %v282 = vld [vmem:[%s219 + $0x18] sm:$0xff]
      %v283 = vld [vmem:[%s219 + $0x20] sm:$0xff]
      %v284 = vld [vmem:[%s219 + $0x30] sm:$0xff]
      %v285 = vld [vmem:[%s219 + $0x38] sm:$0xff]
      %v286 = vld [vmem:[%s219 + $0x48] sm:$0xff]
      %v287 = vld [vmem:[%s219 + $0x50] sm:$0xff]
      %v288 = vld [vmem:[%s219 + $0x60] sm:$0xff]
      %v289 = vld [vmem:[%s219 + $0x68] sm:$0xff]
      %v290 = vld [vmem:[%s219 + $0x78] sm:$0xff]
      %v291 = vld [vmem:[%s219 + $0x80] sm:$0xff]
      %v292 = vld [vmem:[%s219 + $0x90] sm:$0xff]
      %v293 = vld [vmem:[%s219 + $0x98] sm:$0xff]
      %v294 = vld [vmem:[%s219 + $0xa8] sm:$0xff]
      %v295 = vld [vmem:[%s219 + $0xb0] sm:$0xff]
      %v296 = vld [vmem:[%s219 + $0xc0] sm:$0xff]
      %v297 = vld [vmem:[%s219 + $0xc8] sm:$0xff]
      %v298 = vld [vmem:[%s219 + $0xd8] sm:$0xff]
      %v299 = vld [vmem:[%s219 + $0xe0] sm:$0xff]
      %v300 = vld [vmem:[%s219 + $0xf0] sm:$0xff]
      %v301 = vld [vmem:[%s219 + $0xf8] sm:$0xff]
      %v302 = vld [vmem:[%s219 + $0x108] sm:$0xff]
      %v303 = vld [vmem:[%s219 + $0x110] sm:$0xff]
      %v304 = vld [vmem:[%s219 + $0x120] sm:$0xff]
      %v305 = vld [vmem:[%s219 + $0x128] sm:$0xff]
      %v306 = vld [vmem:[%s219 + $0x138] sm:$0xff]
      %v307 = vld [vmem:[%s219 + $0x140] sm:$0xff]
      %v308 = vld [vmem:[%s219 + $0x150] sm:$0xff]
      %v309 = vld [vmem:[%s219 + $0x158] sm:$0xff]
      %v310 = vld [vmem:[%s219 + $0x168] sm:$0xff]
      %v311 = vld [vmem:[%s219 + $0x170] sm:$0xff]
      %v312 = vpack.c.bf16 %v281, %v280
      %v313 = vpack.c.bf16 %v283, %v282
      %v314 = vpack.c.bf16 %v285, %v284
      %v315 = vpack.c.bf16 %v287, %v286
      %v316 = vpack.c.bf16 %v289, %v288
      %v317 = vpack.c.bf16 %v291, %v290
      %v318 = vpack.c.bf16 %v293, %v292
      %v319 = vpack.c.bf16 %v295, %v294
      %v320 = vpack.c.bf16 %v297, %v296
      %v321 = vpack.c.bf16 %v299, %v298
      %v322 = vpack.c.bf16 %v301, %v300
      %v323 = vpack.c.bf16 %v303, %v302
      %v324 = vpack.c.bf16 %v305, %v304
      %v325 = vpack.c.bf16 %v307, %v306
      %v326 = vpack.c.bf16 %v309, %v308
      %v327 = vpack.c.bf16 %v311, %v310
      %v328 = vld [vmem:[%s1] sm:$0xf]
      %v329 = vld [vmem:[%s1 + $0x4] sm:$0xf]
      %v330 = vld [vmem:[%s1 + $0x8] sm:$0xf]
      %v331 = vld [vmem:[%s1 + $0xc] sm:$0xf]
      %v332 = vld [vmem:[%s1 + $0x10] sm:$0xf]
      %v333 = vld [vmem:[%s1 + $0x14] sm:$0xf]
      %v334 = vld [vmem:[%s1 + $0x18] sm:$0xf]
      %v335 = vld [vmem:[%s1 + $0x1c] sm:$0xf]
      %v336 = vld [vmem:[%s1 + $0x20] sm:$0xf]
      %v337 = vld [vmem:[%s1 + $0x24] sm:$0xf]
      %v338 = vld [vmem:[%s1 + $0x28] sm:$0xf]
      %v339 = vld [vmem:[%s1 + $0x2c] sm:$0xf]
      %v340 = vld [vmem:[%s1 + $0x30] sm:$0xf]
      %v341 = vld [vmem:[%s1 + $0x34] sm:$0xf]
      %v342 = vld [vmem:[%s1 + $0x38] sm:$0xf]
      %v343 = vld [vmem:[%s1 + $0x3c] sm:$0xf]
      %v344 = vld [vmem:[%s219 + $0x1] sm:$0xff]
      %v345 = vld [vmem:[%s219 + $0x9] sm:$0xff]
      %v346 = vld [vmem:[%s219 + $0x19] sm:$0xff]
      %v347 = vld [vmem:[%s219 + $0x21] sm:$0xff]
      %v348 = vld [vmem:[%s219 + $0x31] sm:$0xff]
      %v349 = vld [vmem:[%s219 + $0x39] sm:$0xff]
      %v350 = vld [vmem:[%s219 + $0x49] sm:$0xff]
      %v351 = vld [vmem:[%s219 + $0x51] sm:$0xff]
      %v352 = vld [vmem:[%s219 + $0x61] sm:$0xff]
      %v353 = vld [vmem:[%s219 + $0x69] sm:$0xff]
      %v354 = vld [vmem:[%s219 + $0x79] sm:$0xff]
      %v355 = vld [vmem:[%s219 + $0x81] sm:$0xff]
      %v356 = vld [vmem:[%s219 + $0x91] sm:$0xff]
      %v357 = vld [vmem:[%s219 + $0x99] sm:$0xff]
      %v358 = vld [vmem:[%s219 + $0xa9] sm:$0xff]
      %v359 = vld [vmem:[%s219 + $0xb1] sm:$0xff]
      %v360 = vld [vmem:[%s219 + $0xc1] sm:$0xff]
      %v361 = vld [vmem:[%s219 + $0xc9] sm:$0xff]
      %v362 = vld [vmem:[%s219 + $0xd9] sm:$0xff]
      %v363 = vld [vmem:[%s219 + $0xe1] sm:$0xff]
      %v364 = vld [vmem:[%s219 + $0xf1] sm:$0xff]
      %v365 = vld [vmem:[%s219 + $0xf9] sm:$0xff]
      %v366 = vld [vmem:[%s219 + $0x109] sm:$0xff]
      %v367 = vld [vmem:[%s219 + $0x111] sm:$0xff]
      %v368 = vld [vmem:[%s219 + $0x121] sm:$0xff]
      %v369 = vld [vmem:[%s219 + $0x129] sm:$0xff]
      %v370 = vld [vmem:[%s219 + $0x139] sm:$0xff]
      %v371 = vld [vmem:[%s219 + $0x141] sm:$0xff]
      %v372 = vld [vmem:[%s219 + $0x151] sm:$0xff]
      %v373 = vld [vmem:[%s219 + $0x159] sm:$0xff]
      %v374 = vld [vmem:[%s219 + $0x169] sm:$0xff]
      %v375 = vld [vmem:[%s219 + $0x171] sm:$0xff]
      %v376 = vpack.c.bf16 %v345, %v344
      %v377 = vpack.c.bf16 %v347, %v346
      %v378 = vpack.c.bf16 %v349, %v348
      %v379 = vpack.c.bf16 %v351, %v350
      %v380 = vpack.c.bf16 %v353, %v352
      %v381 = vpack.c.bf16 %v355, %v354
      %v382 = vpack.c.bf16 %v357, %v356
      %v383 = vpack.c.bf16 %v359, %v358
      %v384 = vpack.c.bf16 %v361, %v360
      %v385 = vpack.c.bf16 %v363, %v362
      %v386 = vpack.c.bf16 %v365, %v364
      %v387 = vpack.c.bf16 %v367, %v366
      %v388 = vpack.c.bf16 %v369, %v368
      %v389 = vpack.c.bf16 %v371, %v370
      %v390 = vpack.c.bf16 %v373, %v372
      %v391 = vpack.c.bf16 %v375, %v374
      %s392 = scalar_lea.vmem %s1, 64
      %v393 = vld [vmem:[%s392] sm:$0xf]
      %v394 = vld [vmem:[%s392 + $0x4] sm:$0xf]
      %v395 = vld [vmem:[%s392 + $0x8] sm:$0xf]
      %v396 = vld [vmem:[%s392 + $0xc] sm:$0xf]
      %v397 = vld [vmem:[%s392 + $0x10] sm:$0xf]
      %v398 = vld [vmem:[%s392 + $0x14] sm:$0xf]
      %v399 = vld [vmem:[%s392 + $0x18] sm:$0xf]
      %v400 = vld [vmem:[%s392 + $0x1c] sm:$0xf]
      %v401 = vld [vmem:[%s392 + $0x20] sm:$0xf]
      %v402 = vld [vmem:[%s392 + $0x24] sm:$0xf]
      %v403 = vld [vmem:[%s392 + $0x28] sm:$0xf]
      %v404 = vld [vmem:[%s392 + $0x2c] sm:$0xf]
      %v405 = vld [vmem:[%s392 + $0x30] sm:$0xf]
      %v406 = vld [vmem:[%s392 + $0x34] sm:$0xf]
      %v407 = vld [vmem:[%s392 + $0x38] sm:$0xf]
      %v408 = vld [vmem:[%s392 + $0x3c] sm:$0xf]
      %v425 = vunpack.c.l.b16 %v393
      %v426 = vunpack.c.l.b16 %v394
      %v427 = vunpack.c.l.b16 %v395
      %v428 = vunpack.c.l.b16 %v396
      %v429 = vunpack.c.l.b16 %v397
      %v430 = vunpack.c.l.b16 %v398
      %v431 = vunpack.c.l.b16 %v399
      %v432 = vunpack.c.l.b16 %v400
      %v433 = vunpack.c.l.b16 %v401
      %v434 = vunpack.c.l.b16 %v402
      %v435 = vunpack.c.l.b16 %v403
      %v436 = vunpack.c.l.b16 %v404
      %v437 = vunpack.c.l.b16 %v405
      %v438 = vunpack.c.l.b16 %v406
      %v439 = vunpack.c.l.b16 %v407
      %v440 = vunpack.c.l.b16 %v408
      %v441 = vpack.c.b16 %v426, %v425
      %v442 = vpack.c.b16 %v428, %v427
      %v443 = vpack.c.b16 %v430, %v429
      %v444 = vpack.c.b16 %v432, %v431
      %v445 = vpack.c.b16 %v434, %v433
      %v446 = vpack.c.b16 %v436, %v435
      %v447 = vpack.c.b16 %v438, %v437
      %v448 = vpack.c.b16 %v440, %v439
      %457 = vmatprep.subr.bf16.mxu0 0
      %458 = vmatpush1.bf16.msra.mxu0 %v448
      %459 = vmatprep.subr.bf16.mxu0 0
      %460 = vmatpush1.bf16.msra.mxu0 %v447
      %461 = vmatprep.subr.bf16.mxu0 0
      %462 = vmatpush1.bf16.msra.mxu0 %v446
      %463 = vmatprep.subr.bf16.mxu0 0
      %464 = vmatpush1.bf16.msra.mxu0 %v445
      %465 = vmatprep.subr.bf16.mxu0 0
      %466 = vmatpush1.bf16.msra.mxu0 %v444
      %467 = vmatprep.subr.bf16.mxu0 0
      %468 = vmatpush1.bf16.msra.mxu0 %v443
      %469 = vmatprep.subr.bf16.mxu0 0
      %470 = vmatpush1.bf16.msra.mxu0 %v442
      %471 = vmatprep.subr.bf16.mxu0 0
      %472 = vmatpush1.bf16.msra.mxu0 %v441
      %473 = vmatprep.subr.bf16.mxu0 0
      %474 = vmatpush2.bf16.msra.mxu0 0
      %475 = vmatprep.subr.bf16.mxu0 0
      %476 = vmatpush2.bf16.msra.mxu0 0
      %477 = vmatprep.subr.bf16.mxu0 0
      %478 = vmatpush2.bf16.msra.mxu0 0
      %479 = vmatprep.subr.bf16.mxu0 0
      %480 = vmatpush2.bf16.msra.mxu0 0
      %481 = vmatprep.subr.bf16.mxu0 0
      %482 = vmatpush2.bf16.msra.mxu0 0
      %483 = vmatprep.subr.bf16.mxu0 0
      %484 = vmatpush2.bf16.msra.mxu0 0
      %485 = vmatprep.subr.bf16.mxu0 0
      %486 = vmatpush2.bf16.msra.mxu0 0
      %487 = vmatprep.subr.bf16.mxu0 0
      %488 = vmatpush2.bf16.msra.mxu0 0
      %489 = vmatprep.mubr.bf16.mxu0 0
      %490 = vmatmul.mubr.bf16.gmra.mxu0 %v376
      %v491 = vpop.f32.mrf.mxu0
      %v492 = vadd.f32 0.0, %v491
      %v493 = vpop.f32.mrf.mxu0
      %v494 = vpop.f32.mrf.mxu0
      %v495 = vadd.f32 0.0, %v494
      %v496 = vpop.f32.mrf.mxu0
      %497 = vmatprep.mubr.bf16.mxu0 0
      %498 = vmatmul.mubr.bf16.gmra.mxu0 %v377
      %v499 = vpop.f32.mrf.mxu0
      %v500 = vadd.f32 0.0, %v499
      %v501 = vpop.f32.mrf.mxu0
      %v502 = vpop.f32.mrf.mxu0
      %v503 = vadd.f32 0.0, %v502
      %v504 = vpop.f32.mrf.mxu0
      %505 = vmatprep.mubr.bf16.mxu0 0
      %506 = vmatmul.mubr.bf16.gmra.mxu0 %v378
      %v507 = vpop.f32.mrf.mxu0
      %v508 = vadd.f32 0.0, %v507
      %v509 = vpop.f32.mrf.mxu0
      %v510 = vpop.f32.mrf.mxu0
      %v511 = vadd.f32 0.0, %v510
      %v512 = vpop.f32.mrf.mxu0
      %513 = vmatprep.mubr.bf16.mxu0 0
      %514 = vmatmul.mubr.bf16.gmra.mxu0 %v379
      %v515 = vpop.f32.mrf.mxu0
      %v516 = vadd.f32 0.0, %v515
      %v517 = vpop.f32.mrf.mxu0
      %v518 = vpop.f32.mrf.mxu0
      %v519 = vadd.f32 0.0, %v518
      %v520 = vpop.f32.mrf.mxu0
      %521 = vmatprep.mubr.bf16.mxu0 0
      %522 = vmatmul.mubr.bf16.gmra.mxu0 %v380
      %v523 = vpop.f32.mrf.mxu0
      %v524 = vadd.f32 0.0, %v523
      %v525 = vpop.f32.mrf.mxu0
      %v526 = vpop.f32.mrf.mxu0
      %v527 = vadd.f32 0.0, %v526
      %v528 = vpop.f32.mrf.mxu0
      %529 = vmatprep.mubr.bf16.mxu0 0
      %530 = vmatmul.mubr.bf16.gmra.mxu0 %v381
      %v531 = vpop.f32.mrf.mxu0
      %v532 = vadd.f32 0.0, %v531
      %v533 = vpop.f32.mrf.mxu0
      %v534 = vpop.f32.mrf.mxu0
      %v535 = vadd.f32 0.0, %v534
      %v536 = vpop.f32.mrf.mxu0
      %537 = vmatprep.mubr.bf16.mxu0 0
      %538 = vmatmul.mubr.bf16.gmra.mxu0 %v382
      %v539 = vpop.f32.mrf.mxu0
      %v540 = vadd.f32 0.0, %v539
      %v541 = vpop.f32.mrf.mxu0
      %v542 = vpop.f32.mrf.mxu0
      %v543 = vadd.f32 0.0, %v542
      %v544 = vpop.f32.mrf.mxu0
      %545 = vmatprep.mubr.bf16.mxu0 0
      %546 = vmatmul.mubr.bf16.gmra.mxu0 %v383
      %v547 = vpop.f32.mrf.mxu0
      %v548 = vadd.f32 0.0, %v547
      %v549 = vpop.f32.mrf.mxu0
      %v550 = vpop.f32.mrf.mxu0
      %v551 = vadd.f32 0.0, %v550
      %v552 = vpop.f32.mrf.mxu0
      %553 = vmatprep.mubr.bf16.mxu0 0
      %554 = vmatmul.mubr.bf16.gmra.mxu0 %v384
      %v555 = vpop.f32.mrf.mxu0
      %v556 = vadd.f32 0.0, %v555
      %v557 = vpop.f32.mrf.mxu0
      %v558 = vpop.f32.mrf.mxu0
      %v559 = vadd.f32 0.0, %v558
      %v560 = vpop.f32.mrf.mxu0
      %561 = vmatprep.mubr.bf16.mxu0 0
      %562 = vmatmul.mubr.bf16.gmra.mxu0 %v385
      %v563 = vpop.f32.mrf.mxu0
      %v564 = vadd.f32 0.0, %v563
      %v565 = vpop.f32.mrf.mxu0
      %v566 = vpop.f32.mrf.mxu0
      %v567 = vadd.f32 0.0, %v566
      %v568 = vpop.f32.mrf.mxu0
      %569 = vmatprep.mubr.bf16.mxu0 0
      %570 = vmatmul.mubr.bf16.gmra.mxu0 %v386
      %v571 = vpop.f32.mrf.mxu0
      %v572 = vadd.f32 0.0, %v571
      %v573 = vpop.f32.mrf.mxu0
      %v574 = vpop.f32.mrf.mxu0
      %v575 = vadd.f32 0.0, %v574
      %v576 = vpop.f32.mrf.mxu0
      %577 = vmatprep.mubr.bf16.mxu0 0
      %578 = vmatmul.mubr.bf16.gmra.mxu0 %v387
      %v579 = vpop.f32.mrf.mxu0
      %v580 = vadd.f32 0.0, %v579
      %v581 = vpop.f32.mrf.mxu0
      %v582 = vpop.f32.mrf.mxu0
      %v583 = vadd.f32 0.0, %v582
      %v584 = vpop.f32.mrf.mxu0
      %585 = vmatprep.mubr.bf16.mxu0 0
      %586 = vmatmul.mubr.bf16.gmra.mxu0 %v388
      %v587 = vpop.f32.mrf.mxu0
      %v588 = vadd.f32 0.0, %v587
      %v589 = vpop.f32.mrf.mxu0
      %v590 = vpop.f32.mrf.mxu0
      %v591 = vadd.f32 0.0, %v590
      %v592 = vpop.f32.mrf.mxu0
      %593 = vmatprep.mubr.bf16.mxu0 0
      %594 = vmatmul.mubr.bf16.gmra.mxu0 %v389
      %v595 = vpop.f32.mrf.mxu0
      %v596 = vadd.f32 0.0, %v595
      %v597 = vpop.f32.mrf.mxu0
      %v598 = vpop.f32.mrf.mxu0
      %v599 = vadd.f32 0.0, %v598
      %v600 = vpop.f32.mrf.mxu0
      %601 = vmatprep.mubr.bf16.mxu0 0
      %602 = vmatmul.mubr.bf16.gmra.mxu0 %v390
      %v603 = vpop.f32.mrf.mxu0
      %v604 = vadd.f32 0.0, %v603
      %v605 = vpop.f32.mrf.mxu0
      %v606 = vpop.f32.mrf.mxu0
      %v607 = vadd.f32 0.0, %v606
      %v608 = vpop.f32.mrf.mxu0
      %609 = vmatprep.mubr.bf16.mxu0 0
      %610 = vmatmul.mubr.bf16.gmra.mxu0 %v391
      %v611 = vpop.f32.mrf.mxu0
      %v612 = vadd.f32 0.0, %v611
      %v613 = vpop.f32.mrf.mxu0
      %v614 = vpop.f32.mrf.mxu0
      %v615 = vadd.f32 0.0, %v614
      %v616 = vpop.f32.mrf.mxu0
      %617 = vdwg.mxu0
      %v634 = vunpack.c.l.b16 %v328
      %v635 = vunpack.c.l.b16 %v329
      %v636 = vunpack.c.l.b16 %v330
      %v637 = vunpack.c.l.b16 %v331
      %v638 = vunpack.c.l.b16 %v332
      %v639 = vunpack.c.l.b16 %v333
      %v640 = vunpack.c.l.b16 %v334
      %v641 = vunpack.c.l.b16 %v335
      %v642 = vunpack.c.l.b16 %v336
      %v643 = vunpack.c.l.b16 %v337
      %v644 = vunpack.c.l.b16 %v338
      %v645 = vunpack.c.l.b16 %v339
      %v646 = vunpack.c.l.b16 %v340
      %v647 = vunpack.c.l.b16 %v341
      %v648 = vunpack.c.l.b16 %v342
      %v649 = vunpack.c.l.b16 %v343
      %v650 = vpack.c.b16 %v635, %v634
      %v651 = vpack.c.b16 %v637, %v636
      %v652 = vpack.c.b16 %v639, %v638
      %v653 = vpack.c.b16 %v641, %v640
      %v654 = vpack.c.b16 %v643, %v642
      %v655 = vpack.c.b16 %v645, %v644
      %v656 = vpack.c.b16 %v647, %v646
      %v657 = vpack.c.b16 %v649, %v648
      %666 = vmatprep.subr.bf16.mxu0 0
      %667 = vmatpush1.bf16.msra.mxu0 %v657
      %668 = vmatprep.subr.bf16.mxu0 0
      %669 = vmatpush1.bf16.msra.mxu0 %v656
      %670 = vmatprep.subr.bf16.mxu0 0
      %671 = vmatpush1.bf16.msra.mxu0 %v655
      %672 = vmatprep.subr.bf16.mxu0 0
      %673 = vmatpush1.bf16.msra.mxu0 %v654
      %674 = vmatprep.subr.bf16.mxu0 0
      %675 = vmatpush1.bf16.msra.mxu0 %v653
      %676 = vmatprep.subr.bf16.mxu0 0
      %677 = vmatpush1.bf16.msra.mxu0 %v652
      %678 = vmatprep.subr.bf16.mxu0 0
      %679 = vmatpush1.bf16.msra.mxu0 %v651
      %680 = vmatprep.subr.bf16.mxu0 0
      %681 = vmatpush1.bf16.msra.mxu0 %v650
      %682 = vmatprep.subr.bf16.mxu0 0
      %683 = vmatpush2.bf16.msra.mxu0 0
      %684 = vmatprep.subr.bf16.mxu0 0
      %685 = vmatpush2.bf16.msra.mxu0 0
      %686 = vmatprep.subr.bf16.mxu0 0
      %687 = vmatpush2.bf16.msra.mxu0 0
      %688 = vmatprep.subr.bf16.mxu0 0
      %689 = vmatpush2.bf16.msra.mxu0 0
      %690 = vmatprep.subr.bf16.mxu0 0
      %691 = vmatpush2.bf16.msra.mxu0 0
      %692 = vmatprep.subr.bf16.mxu0 0
      %693 = vmatpush2.bf16.msra.mxu0 0
      %694 = vmatprep.subr.bf16.mxu0 0
      %695 = vmatpush2.bf16.msra.mxu0 0
      %696 = vmatprep.subr.bf16.mxu0 0
      %697 = vmatpush2.bf16.msra.mxu0 0
      %698 = vmatprep.mubr.bf16.mxu0 0
      %699 = vmatmul.mubr.bf16.gmra.mxu0 %v312
      %v700 = vpop.f32.mrf.mxu0
      %v701 = vadd.f32 %v492, %v700
      %v702 = vpop.f32.mrf.mxu0
      %v703 = vpop.f32.mrf.mxu0
      %v704 = vadd.f32 %v495, %v703
      %v705 = vpop.f32.mrf.mxu0
      %706 = vmatprep.mubr.bf16.mxu0 0
      %707 = vmatmul.mubr.bf16.gmra.mxu0 %v313
      %v708 = vpop.f32.mrf.mxu0
      %v709 = vadd.f32 %v500, %v708
      %v710 = vpop.f32.mrf.mxu0
      %v711 = vpop.f32.mrf.mxu0
      %v712 = vadd.f32 %v503, %v711
      %v713 = vpop.f32.mrf.mxu0
      %714 = vmatprep.mubr.bf16.mxu0 0
      %715 = vmatmul.mubr.bf16.gmra.mxu0 %v314
      %v716 = vpop.f32.mrf.mxu0
      %v717 = vadd.f32 %v508, %v716
      %v718 = vpop.f32.mrf.mxu0
      %v719 = vpop.f32.mrf.mxu0
      %v720 = vadd.f32 %v511, %v719
      %v721 = vpop.f32.mrf.mxu0
      %722 = vmatprep.mubr.bf16.mxu0 0
      %723 = vmatmul.mubr.bf16.gmra.mxu0 %v315
      %v724 = vpop.f32.mrf.mxu0
      %v725 = vadd.f32 %v516, %v724
      %v726 = vpop.f32.mrf.mxu0
      %v727 = vpop.f32.mrf.mxu0
      %v728 = vadd.f32 %v519, %v727
      %v729 = vpop.f32.mrf.mxu0
      %730 = vmatprep.mubr.bf16.mxu0 0
      %731 = vmatmul.mubr.bf16.gmra.mxu0 %v316
      %v732 = vpop.f32.mrf.mxu0
      %v733 = vadd.f32 %v524, %v732
      %v734 = vpop.f32.mrf.mxu0
      %v735 = vpop.f32.mrf.mxu0
      %v736 = vadd.f32 %v527, %v735
      %v737 = vpop.f32.mrf.mxu0
      %738 = vmatprep.mubr.bf16.mxu0 0
      %739 = vmatmul.mubr.bf16.gmra.mxu0 %v317
      %v740 = vpop.f32.mrf.mxu0
      %v741 = vadd.f32 %v532, %v740
      %v742 = vpop.f32.mrf.mxu0
      %v743 = vpop.f32.mrf.mxu0
      %v744 = vadd.f32 %v535, %v743
      %v745 = vpop.f32.mrf.mxu0
      %746 = vmatprep.mubr.bf16.mxu0 0
      %747 = vmatmul.mubr.bf16.gmra.mxu0 %v318
      %v748 = vpop.f32.mrf.mxu0
      %v749 = vadd.f32 %v540, %v748
      %v750 = vpop.f32.mrf.mxu0
      %v751 = vpop.f32.mrf.mxu0
      %v752 = vadd.f32 %v543, %v751
      %v753 = vpop.f32.mrf.mxu0
      %754 = vmatprep.mubr.bf16.mxu0 0
      %755 = vmatmul.mubr.bf16.gmra.mxu0 %v319
      %v756 = vpop.f32.mrf.mxu0
      %v757 = vadd.f32 %v548, %v756
      %v758 = vpop.f32.mrf.mxu0
      %v759 = vpop.f32.mrf.mxu0
      %v760 = vadd.f32 %v551, %v759
      %v761 = vpop.f32.mrf.mxu0
      %762 = vmatprep.mubr.bf16.mxu0 0
      %763 = vmatmul.mubr.bf16.gmra.mxu0 %v320
      %v764 = vpop.f32.mrf.mxu0
      %v765 = vadd.f32 %v556, %v764
      %v766 = vpop.f32.mrf.mxu0
      %v767 = vpop.f32.mrf.mxu0
      %v768 = vadd.f32 %v559, %v767
      %v769 = vpop.f32.mrf.mxu0
      %770 = vmatprep.mubr.bf16.mxu0 0
      %771 = vmatmul.mubr.bf16.gmra.mxu0 %v321
      %v772 = vpop.f32.mrf.mxu0
      %v773 = vadd.f32 %v564, %v772
      %v774 = vpop.f32.mrf.mxu0
      %v775 = vpop.f32.mrf.mxu0
      %v776 = vadd.f32 %v567, %v775
      %v777 = vpop.f32.mrf.mxu0
      %778 = vmatprep.mubr.bf16.mxu0 0
      %779 = vmatmul.mubr.bf16.gmra.mxu0 %v322
      %v780 = vpop.f32.mrf.mxu0
      %v781 = vadd.f32 %v572, %v780
      %v782 = vpop.f32.mrf.mxu0
      %v783 = vpop.f32.mrf.mxu0
      %v784 = vadd.f32 %v575, %v783
      %v785 = vpop.f32.mrf.mxu0
      %786 = vmatprep.mubr.bf16.mxu0 0
      %787 = vmatmul.mubr.bf16.gmra.mxu0 %v323
      %v788 = vpop.f32.mrf.mxu0
      %v789 = vadd.f32 %v580, %v788
      %v790 = vpop.f32.mrf.mxu0
      %v791 = vpop.f32.mrf.mxu0
      %v792 = vadd.f32 %v583, %v791
      %v793 = vpop.f32.mrf.mxu0
      %794 = vmatprep.mubr.bf16.mxu0 0
      %795 = vmatmul.mubr.bf16.gmra.mxu0 %v324
      %v796 = vpop.f32.mrf.mxu0
      %v797 = vadd.f32 %v588, %v796
      %v798 = vpop.f32.mrf.mxu0
      %v799 = vpop.f32.mrf.mxu0
      %v800 = vadd.f32 %v591, %v799
      %v801 = vpop.f32.mrf.mxu0
      %802 = vmatprep.mubr.bf16.mxu0 0
      %803 = vmatmul.mubr.bf16.gmra.mxu0 %v325
      %v804 = vpop.f32.mrf.mxu0
      %v805 = vadd.f32 %v596, %v804
      %v806 = vpop.f32.mrf.mxu0
      %v807 = vpop.f32.mrf.mxu0
      %v808 = vadd.f32 %v599, %v807
      %v809 = vpop.f32.mrf.mxu0
      %810 = vmatprep.mubr.bf16.mxu0 0
      %811 = vmatmul.mubr.bf16.gmra.mxu0 %v326
      %v812 = vpop.f32.mrf.mxu0
      %v813 = vadd.f32 %v604, %v812
      %v814 = vpop.f32.mrf.mxu0
      %v815 = vpop.f32.mrf.mxu0
      %v816 = vadd.f32 %v607, %v815
      %v817 = vpop.f32.mrf.mxu0
      %818 = vmatprep.mubr.bf16.mxu0 0
      %819 = vmatmul.mubr.bf16.gmra.mxu0 %v327
      %v820 = vpop.f32.mrf.mxu0
      %v821 = vadd.f32 %v612, %v820
      %v822 = vpop.f32.mrf.mxu0
      %v823 = vpop.f32.mrf.mxu0
      %v824 = vadd.f32 %v615, %v823
      %v825 = vpop.f32.mrf.mxu0
      %826 = vdwg.mxu0
      %v827 = vld [vmem:[%s219 + $0x2] sm:$0xff]
      %v828 = vld [vmem:[%s219 + $0xa] sm:$0xff]
      %v829 = vld [vmem:[%s219 + $0x1a] sm:$0xff]
      %v830 = vld [vmem:[%s219 + $0x22] sm:$0xff]
      %v831 = vld [vmem:[%s219 + $0x32] sm:$0xff]
      %v832 = vld [vmem:[%s219 + $0x3a] sm:$0xff]
      %v833 = vld [vmem:[%s219 + $0x4a] sm:$0xff]
      %v834 = vld [vmem:[%s219 + $0x52] sm:$0xff]
      %v835 = vld [vmem:[%s219 + $0x62] sm:$0xff]
      %v836 = vld [vmem:[%s219 + $0x6a] sm:$0xff]
      %v837 = vld [vmem:[%s219 + $0x7a] sm:$0xff]
      %v838 = vld [vmem:[%s219 + $0x82] sm:$0xff]
      %v839 = vld [vmem:[%s219 + $0x92] sm:$0xff]
      %v840 = vld [vmem:[%s219 + $0x9a] sm:$0xff]
      %v841 = vld [vmem:[%s219 + $0xaa] sm:$0xff]
      %v842 = vld [vmem:[%s219 + $0xb2] sm:$0xff]
      %v843 = vld [vmem:[%s219 + $0xc2] sm:$0xff]
      %v844 = vld [vmem:[%s219 + $0xca] sm:$0xff]
      %v845 = vld [vmem:[%s219 + $0xda] sm:$0xff]
      %v846 = vld [vmem:[%s219 + $0xe2] sm:$0xff]
      %v847 = vld [vmem:[%s219 + $0xf2] sm:$0xff]
      %v848 = vld [vmem:[%s219 + $0xfa] sm:$0xff]
      %v849 = vld [vmem:[%s219 + $0x10a] sm:$0xff]
      %v850 = vld [vmem:[%s219 + $0x112] sm:$0xff]
      %v851 = vld [vmem:[%s219 + $0x122] sm:$0xff]
      %v852 = vld [vmem:[%s219 + $0x12a] sm:$0xff]
      %v853 = vld [vmem:[%s219 + $0x13a] sm:$0xff]
      %v854 = vld [vmem:[%s219 + $0x142] sm:$0xff]
      %v855 = vld [vmem:[%s219 + $0x152] sm:$0xff]
      %v856 = vld [vmem:[%s219 + $0x15a] sm:$0xff]
      %v857 = vld [vmem:[%s219 + $0x16a] sm:$0xff]
      %v858 = vld [vmem:[%s219 + $0x172] sm:$0xff]
      %v859 = vpack.c.bf16 %v828, %v827
      %v860 = vpack.c.bf16 %v830, %v829
      %v861 = vpack.c.bf16 %v832, %v831
      %v862 = vpack.c.bf16 %v834, %v833
      %v863 = vpack.c.bf16 %v836, %v835
      %v864 = vpack.c.bf16 %v838, %v837
      %v865 = vpack.c.bf16 %v840, %v839
      %v866 = vpack.c.bf16 %v842, %v841
      %v867 = vpack.c.bf16 %v844, %v843
      %v868 = vpack.c.bf16 %v846, %v845
      %v869 = vpack.c.bf16 %v848, %v847
      %v870 = vpack.c.bf16 %v850, %v849
      %v871 = vpack.c.bf16 %v852, %v851
      %v872 = vpack.c.bf16 %v854, %v853
      %v873 = vpack.c.bf16 %v856, %v855
      %v874 = vpack.c.bf16 %v858, %v857
      %s875 = scalar_lea.vmem %s1, 128
      %v876 = vld [vmem:[%s875] sm:$0xf]
      %v877 = vld [vmem:[%s875 + $0x4] sm:$0xf]
      %v878 = vld [vmem:[%s875 + $0x8] sm:$0xf]
      %v879 = vld [vmem:[%s875 + $0xc] sm:$0xf]
      %v880 = vld [vmem:[%s875 + $0x10] sm:$0xf]
      %v881 = vld [vmem:[%s875 + $0x14] sm:$0xf]
      %v882 = vld [vmem:[%s875 + $0x18] sm:$0xf]
      %v883 = vld [vmem:[%s875 + $0x1c] sm:$0xf]
      %v884 = vld [vmem:[%s875 + $0x20] sm:$0xf]
      %v885 = vld [vmem:[%s875 + $0x24] sm:$0xf]
      %v886 = vld [vmem:[%s875 + $0x28] sm:$0xf]
      %v887 = vld [vmem:[%s875 + $0x2c] sm:$0xf]
      %v888 = vld [vmem:[%s875 + $0x30] sm:$0xf]
      %v889 = vld [vmem:[%s875 + $0x34] sm:$0xf]
      %v890 = vld [vmem:[%s875 + $0x38] sm:$0xf]
      %v891 = vld [vmem:[%s875 + $0x3c] sm:$0xf]
      %v908 = vunpack.c.l.b16 %v876
      %v909 = vunpack.c.l.b16 %v877
      %v910 = vunpack.c.l.b16 %v878
      %v911 = vunpack.c.l.b16 %v879
      %v912 = vunpack.c.l.b16 %v880
      %v913 = vunpack.c.l.b16 %v881
      %v914 = vunpack.c.l.b16 %v882
      %v915 = vunpack.c.l.b16 %v883
      %v916 = vunpack.c.l.b16 %v884
      %v917 = vunpack.c.l.b16 %v885
      %v918 = vunpack.c.l.b16 %v886
      %v919 = vunpack.c.l.b16 %v887
      %v920 = vunpack.c.l.b16 %v888
      %v921 = vunpack.c.l.b16 %v889
      %v922 = vunpack.c.l.b16 %v890
      %v923 = vunpack.c.l.b16 %v891
      %v924 = vpack.c.b16 %v909, %v908
      %v925 = vpack.c.b16 %v911, %v910
      %v926 = vpack.c.b16 %v913, %v912
      %v927 = vpack.c.b16 %v915, %v914
      %v928 = vpack.c.b16 %v917, %v916
      %v929 = vpack.c.b16 %v919, %v918
      %v930 = vpack.c.b16 %v921, %v920
      %v931 = vpack.c.b16 %v923, %v922
      %940 = vmatprep.subr.bf16.mxu0 0
      %941 = vmatpush1.bf16.msra.mxu0 %v931
      %942 = vmatprep.subr.bf16.mxu0 0
      %943 = vmatpush1.bf16.msra.mxu0 %v930
      %944 = vmatprep.subr.bf16.mxu0 0
      %945 = vmatpush1.bf16.msra.mxu0 %v929
      %946 = vmatprep.subr.bf16.mxu0 0
      %947 = vmatpush1.bf16.msra.mxu0 %v928
      %948 = vmatprep.subr.bf16.mxu0 0
      %949 = vmatpush1.bf16.msra.mxu0 %v927
      %950 = vmatprep.subr.bf16.mxu0 0
      %951 = vmatpush1.bf16.msra.mxu0 %v926
      %952 = vmatprep.subr.bf16.mxu0 0
      %953 = vmatpush1.bf16.msra.mxu0 %v925
      %954 = vmatprep.subr.bf16.mxu0 0
      %955 = vmatpush1.bf16.msra.mxu0 %v924
      %956 = vmatprep.subr.bf16.mxu0 0
      %957 = vmatpush2.bf16.msra.mxu0 0
      %958 = vmatprep.subr.bf16.mxu0 0
      %959 = vmatpush2.bf16.msra.mxu0 0
      %960 = vmatprep.subr.bf16.mxu0 0
      %961 = vmatpush2.bf16.msra.mxu0 0
      %962 = vmatprep.subr.bf16.mxu0 0
      %963 = vmatpush2.bf16.msra.mxu0 0
      %964 = vmatprep.subr.bf16.mxu0 0
      %965 = vmatpush2.bf16.msra.mxu0 0
      %966 = vmatprep.subr.bf16.mxu0 0
      %967 = vmatpush2.bf16.msra.mxu0 0
      %968 = vmatprep.subr.bf16.mxu0 0
      %969 = vmatpush2.bf16.msra.mxu0 0
      %970 = vmatprep.subr.bf16.mxu0 0
      %971 = vmatpush2.bf16.msra.mxu0 0
      %972 = vmatprep.mubr.bf16.mxu0 0
      %973 = vmatmul.mubr.bf16.gmra.mxu0 %v859
      %v974 = vpop.f32.mrf.mxu0
      %v975 = vadd.f32 0.0, %v974
      %v976 = vpop.f32.mrf.mxu0
      %v977 = vpop.f32.mrf.mxu0
      %v978 = vadd.f32 0.0, %v977
      %v979 = vpop.f32.mrf.mxu0
      %980 = vmatprep.mubr.bf16.mxu0 0
      %981 = vmatmul.mubr.bf16.gmra.mxu0 %v860
      %v982 = vpop.f32.mrf.mxu0
      %v983 = vadd.f32 0.0, %v982
      %v984 = vpop.f32.mrf.mxu0
      %v985 = vpop.f32.mrf.mxu0
      %v986 = vadd.f32 0.0, %v985
      %v987 = vpop.f32.mrf.mxu0
      %988 = vmatprep.mubr.bf16.mxu0 0
      %989 = vmatmul.mubr.bf16.gmra.mxu0 %v861
      %v990 = vpop.f32.mrf.mxu0
      %v991 = vadd.f32 0.0, %v990
      %v992 = vpop.f32.mrf.mxu0
      %v993 = vpop.f32.mrf.mxu0
      %v994 = vadd.f32 0.0, %v993
      %v995 = vpop.f32.mrf.mxu0
      %996 = vmatprep.mubr.bf16.mxu0 0
      %997 = vmatmul.mubr.bf16.gmra.mxu0 %v862
      %v998 = vpop.f32.mrf.mxu0
      %v999 = vadd.f32 0.0, %v998
      %v1000 = vpop.f32.mrf.mxu0
      %v1001 = vpop.f32.mrf.mxu0
      %v1002 = vadd.f32 0.0, %v1001
      %v1003 = vpop.f32.mrf.mxu0
      %1004 = vmatprep.mubr.bf16.mxu0 0
      %1005 = vmatmul.mubr.bf16.gmra.mxu0 %v863
      %v1006 = vpop.f32.mrf.mxu0
      %v1007 = vadd.f32 0.0, %v1006
      %v1008 = vpop.f32.mrf.mxu0
      %v1009 = vpop.f32.mrf.mxu0
      %v1010 = vadd.f32 0.0, %v1009
      %v1011 = vpop.f32.mrf.mxu0
      %1012 = vmatprep.mubr.bf16.mxu0 0
      %1013 = vmatmul.mubr.bf16.gmra.mxu0 %v864
      %v1014 = vpop.f32.mrf.mxu0
      %v1015 = vadd.f32 0.0, %v1014
      %v1016 = vpop.f32.mrf.mxu0
      %v1017 = vpop.f32.mrf.mxu0
      %v1018 = vadd.f32 0.0, %v1017
      %v1019 = vpop.f32.mrf.mxu0
      %1020 = vmatprep.mubr.bf16.mxu0 0
      %1021 = vmatmul.mubr.bf16.gmra.mxu0 %v865
      %v1022 = vpop.f32.mrf.mxu0
      %v1023 = vadd.f32 0.0, %v1022
      %v1024 = vpop.f32.mrf.mxu0
      %v1025 = vpop.f32.mrf.mxu0
      %v1026 = vadd.f32 0.0, %v1025
      %v1027 = vpop.f32.mrf.mxu0
      %1028 = vmatprep.mubr.bf16.mxu0 0
      %1029 = vmatmul.mubr.bf16.gmra.mxu0 %v866
      %v1030 = vpop.f32.mrf.mxu0
      %v1031 = vadd.f32 0.0, %v1030
      %v1032 = vpop.f32.mrf.mxu0
      %v1033 = vpop.f32.mrf.mxu0
      %v1034 = vadd.f32 0.0, %v1033
      %v1035 = vpop.f32.mrf.mxu0
      %1036 = vmatprep.mubr.bf16.mxu0 0
      %1037 = vmatmul.mubr.bf16.gmra.mxu0 %v867
      %v1038 = vpop.f32.mrf.mxu0
      %v1039 = vadd.f32 0.0, %v1038
      %v1040 = vpop.f32.mrf.mxu0
      %v1041 = vpop.f32.mrf.mxu0
      %v1042 = vadd.f32 0.0, %v1041
      %v1043 = vpop.f32.mrf.mxu0
      %1044 = vmatprep.mubr.bf16.mxu0 0
      %1045 = vmatmul.mubr.bf16.gmra.mxu0 %v868
      %v1046 = vpop.f32.mrf.mxu0
      %v1047 = vadd.f32 0.0, %v1046
      %v1048 = vpop.f32.mrf.mxu0
      %v1049 = vpop.f32.mrf.mxu0
      %v1050 = vadd.f32 0.0, %v1049
      %v1051 = vpop.f32.mrf.mxu0
      %1052 = vmatprep.mubr.bf16.mxu0 0
      %1053 = vmatmul.mubr.bf16.gmra.mxu0 %v869
      %v1054 = vpop.f32.mrf.mxu0
      %v1055 = vadd.f32 0.0, %v1054
      %v1056 = vpop.f32.mrf.mxu0
      %v1057 = vpop.f32.mrf.mxu0
      %v1058 = vadd.f32 0.0, %v1057
      %v1059 = vpop.f32.mrf.mxu0
      %1060 = vmatprep.mubr.bf16.mxu0 0
      %1061 = vmatmul.mubr.bf16.gmra.mxu0 %v870
      %v1062 = vpop.f32.mrf.mxu0
      %v1063 = vadd.f32 0.0, %v1062
      %v1064 = vpop.f32.mrf.mxu0
      %v1065 = vpop.f32.mrf.mxu0
      %v1066 = vadd.f32 0.0, %v1065
      %v1067 = vpop.f32.mrf.mxu0
      %1068 = vmatprep.mubr.bf16.mxu0 0
      %1069 = vmatmul.mubr.bf16.gmra.mxu0 %v871
      %v1070 = vpop.f32.mrf.mxu0
      %v1071 = vadd.f32 0.0, %v1070
      %v1072 = vpop.f32.mrf.mxu0
      %v1073 = vpop.f32.mrf.mxu0
      %v1074 = vadd.f32 0.0, %v1073
      %v1075 = vpop.f32.mrf.mxu0
      %1076 = vmatprep.mubr.bf16.mxu0 0
      %1077 = vmatmul.mubr.bf16.gmra.mxu0 %v872
      %v1078 = vpop.f32.mrf.mxu0
      %v1079 = vadd.f32 0.0, %v1078
      %v1080 = vpop.f32.mrf.mxu0
      %v1081 = vpop.f32.mrf.mxu0
      %v1082 = vadd.f32 0.0, %v1081
      %v1083 = vpop.f32.mrf.mxu0
      %1084 = vmatprep.mubr.bf16.mxu0 0
      %1085 = vmatmul.mubr.bf16.gmra.mxu0 %v873
      %v1086 = vpop.f32.mrf.mxu0
      %v1087 = vadd.f32 0.0, %v1086
      %v1088 = vpop.f32.mrf.mxu0
      %v1089 = vpop.f32.mrf.mxu0
      %v1090 = vadd.f32 0.0, %v1089
      %v1091 = vpop.f32.mrf.mxu0
      %1092 = vmatprep.mubr.bf16.mxu0 0
      %1093 = vmatmul.mubr.bf16.gmra.mxu0 %v874
      %v1094 = vpop.f32.mrf.mxu0
      %v1095 = vadd.f32 0.0, %v1094
      %v1096 = vpop.f32.mrf.mxu0
      %v1097 = vpop.f32.mrf.mxu0
      %v1098 = vadd.f32 0.0, %v1097
      %v1099 = vpop.f32.mrf.mxu0
      %1100 = vdwg.mxu0
      %v1101 = vadd.f32 %v701, %v975
      %v1102 = vadd.f32 %v704, %v978
      %v1103 = vadd.f32 %v709, %v983
      %v1104 = vadd.f32 %v712, %v986
      %v1105 = vadd.f32 %v717, %v991
      %v1106 = vadd.f32 %v720, %v994
      %v1107 = vadd.f32 %v725, %v999
      %v1108 = vadd.f32 %v728, %v1002
      %v1109 = vadd.f32 %v733, %v1007
      %v1110 = vadd.f32 %v736, %v1010
      %v1111 = vadd.f32 %v741, %v1015
      %v1112 = vadd.f32 %v744, %v1018
      %v1113 = vadd.f32 %v749, %v1023
      %v1114 = vadd.f32 %v752, %v1026
      %v1115 = vadd.f32 %v757, %v1031
      %v1116 = vadd.f32 %v760, %v1034
      %v1117 = vadd.f32 %v765, %v1039
      %v1118 = vadd.f32 %v768, %v1042
      %v1119 = vadd.f32 %v773, %v1047
      %v1120 = vadd.f32 %v776, %v1050
      %v1121 = vadd.f32 %v781, %v1055
      %v1122 = vadd.f32 %v784, %v1058
      %v1123 = vadd.f32 %v789, %v1063
      %v1124 = vadd.f32 %v792, %v1066
      %v1125 = vadd.f32 %v797, %v1071
      %v1126 = vadd.f32 %v800, %v1074
      %v1127 = vadd.f32 %v805, %v1079
      %v1128 = vadd.f32 %v808, %v1082
      %v1129 = vadd.f32 %v813, %v1087
      %v1130 = vadd.f32 %v816, %v1090
      %v1131 = vadd.f32 %v821, %v1095
      %v1132 = vadd.f32 %v824, %v1098
      %s1133 = scalar_lea.vmem %s219, 24
      %v1134 = vld [vmem:[%s1133] sm:$0xff]
      %v1135 = vld [vmem:[%s1133 + $0x8] sm:$0xff]
      %v1136 = vld [vmem:[%s1133 + $0x18] sm:$0xff]
      %v1137 = vld [vmem:[%s1133 + $0x20] sm:$0xff]
      %v1138 = vld [vmem:[%s1133 + $0x30] sm:$0xff]
      %v1139 = vld [vmem:[%s1133 + $0x38] sm:$0xff]
      %v1140 = vld [vmem:[%s1133 + $0x48] sm:$0xff]
      %v1141 = vld [vmem:[%s1133 + $0x50] sm:$0xff]
      %v1142 = vld [vmem:[%s1133 + $0x60] sm:$0xff]
      %v1143 = vld [vmem:[%s1133 + $0x68] sm:$0xff]
      %v1144 = vld [vmem:[%s1133 + $0x78] sm:$0xff]
      %v1145 = vld [vmem:[%s1133 + $0x80] sm:$0xff]
      %v1146 = vld [vmem:[%s1133 + $0x90] sm:$0xff]
      %v1147 = vld [vmem:[%s1133 + $0x98] sm:$0xff]
      %v1148 = vld [vmem:[%s1133 + $0xa8] sm:$0xff]
      %v1149 = vld [vmem:[%s1133 + $0xb0] sm:$0xff]
      %v1150 = vld [vmem:[%s1133 + $0xc0] sm:$0xff]
      %v1151 = vld [vmem:[%s1133 + $0xc8] sm:$0xff]
      %v1152 = vld [vmem:[%s1133 + $0xd8] sm:$0xff]
      %v1153 = vld [vmem:[%s1133 + $0xe0] sm:$0xff]
      %v1154 = vld [vmem:[%s1133 + $0xf0] sm:$0xff]
      %v1155 = vld [vmem:[%s1133 + $0xf8] sm:$0xff]
      %v1156 = vld [vmem:[%s1133 + $0x108] sm:$0xff]
      %v1157 = vld [vmem:[%s1133 + $0x110] sm:$0xff]
      %v1158 = vld [vmem:[%s1133 + $0x120] sm:$0xff]
      %v1159 = vld [vmem:[%s1133 + $0x128] sm:$0xff]
      %v1160 = vld [vmem:[%s1133 + $0x138] sm:$0xff]
      %v1161 = vld [vmem:[%s1133 + $0x140] sm:$0xff]
      %v1162 = vld [vmem:[%s1133 + $0x150] sm:$0xff]
      %v1163 = vld [vmem:[%s1133 + $0x158] sm:$0xff]
      %v1164 = vld [vmem:[%s1133 + $0x168] sm:$0xff]
      %v1165 = vld [vmem:[%s1133 + $0x170] sm:$0xff]
      %v1166 = vpack.c.bf16 %v1135, %v1134
      %v1167 = vpack.c.bf16 %v1137, %v1136
      %v1168 = vpack.c.bf16 %v1139, %v1138
      %v1169 = vpack.c.bf16 %v1141, %v1140
      %v1170 = vpack.c.bf16 %v1143, %v1142
      %v1171 = vpack.c.bf16 %v1145, %v1144
      %v1172 = vpack.c.bf16 %v1147, %v1146
      %v1173 = vpack.c.bf16 %v1149, %v1148
      %v1174 = vpack.c.bf16 %v1151, %v1150
      %v1175 = vpack.c.bf16 %v1153, %v1152
      %v1176 = vpack.c.bf16 %v1155, %v1154
      %v1177 = vpack.c.bf16 %v1157, %v1156
      %v1178 = vpack.c.bf16 %v1159, %v1158
      %v1179 = vpack.c.bf16 %v1161, %v1160
      %v1180 = vpack.c.bf16 %v1163, %v1162
      %v1181 = vpack.c.bf16 %v1165, %v1164
      %s1182 = scalar_lea.vmem %s1, 192
      %v1183 = vld [vmem:[%s1182] sm:$0xf]
      %v1184 = vld [vmem:[%s1182 + $0x4] sm:$0xf]
      %v1185 = vld [vmem:[%s1182 + $0x8] sm:$0xf]
      %v1186 = vld [vmem:[%s1182 + $0xc] sm:$0xf]
      %v1187 = vld [vmem:[%s1182 + $0x10] sm:$0xf]
      %v1188 = vld [vmem:[%s1182 + $0x14] sm:$0xf]
      %v1189 = vld [vmem:[%s1182 + $0x18] sm:$0xf]
      %v1190 = vld [vmem:[%s1182 + $0x1c] sm:$0xf]
      %v1191 = vld [vmem:[%s1182 + $0x20] sm:$0xf]
      %v1192 = vld [vmem:[%s1182 + $0x24] sm:$0xf]
      %v1193 = vld [vmem:[%s1182 + $0x28] sm:$0xf]
      %v1194 = vld [vmem:[%s1182 + $0x2c] sm:$0xf]
      %v1195 = vld [vmem:[%s1182 + $0x30] sm:$0xf]
      %v1196 = vld [vmem:[%s1182 + $0x34] sm:$0xf]
      %v1197 = vld [vmem:[%s1182 + $0x38] sm:$0xf]
      %v1198 = vld [vmem:[%s1182 + $0x3c] sm:$0xf]
      %v1215 = vunpack.c.l.b16 %v1183
      %v1216 = vunpack.c.l.b16 %v1184
      %v1217 = vunpack.c.l.b16 %v1185
      %v1218 = vunpack.c.l.b16 %v1186
      %v1219 = vunpack.c.l.b16 %v1187
      %v1220 = vunpack.c.l.b16 %v1188
      %v1221 = vunpack.c.l.b16 %v1189
      %v1222 = vunpack.c.l.b16 %v1190
      %v1223 = vunpack.c.l.b16 %v1191
      %v1224 = vunpack.c.l.b16 %v1192
      %v1225 = vunpack.c.l.b16 %v1193
      %v1226 = vunpack.c.l.b16 %v1194
      %v1227 = vunpack.c.l.b16 %v1195
      %v1228 = vunpack.c.l.b16 %v1196
      %v1229 = vunpack.c.l.b16 %v1197
      %v1230 = vunpack.c.l.b16 %v1198
      %v1231 = vpack.c.b16 %v1216, %v1215
      %v1232 = vpack.c.b16 %v1218, %v1217
      %v1233 = vpack.c.b16 %v1220, %v1219
      %v1234 = vpack.c.b16 %v1222, %v1221
      %v1235 = vpack.c.b16 %v1224, %v1223
      %v1236 = vpack.c.b16 %v1226, %v1225
      %v1237 = vpack.c.b16 %v1228, %v1227
      %v1238 = vpack.c.b16 %v1230, %v1229
      %1247 = vmatprep.subr.bf16.mxu0 0
      %1248 = vmatpush1.bf16.msra.mxu0 %v1238
      %1249 = vmatprep.subr.bf16.mxu0 0
      %1250 = vmatpush1.bf16.msra.mxu0 %v1237
      %1251 = vmatprep.subr.bf16.mxu0 0
      %1252 = vmatpush1.bf16.msra.mxu0 %v1236
      %1253 = vmatprep.subr.bf16.mxu0 0
      %1254 = vmatpush1.bf16.msra.mxu0 %v1235
      %1255 = vmatprep.subr.bf16.mxu0 0
      %1256 = vmatpush1.bf16.msra.mxu0 %v1234
      %1257 = vmatprep.subr.bf16.mxu0 0
      %1258 = vmatpush1.bf16.msra.mxu0 %v1233
      %1259 = vmatprep.subr.bf16.mxu0 0
      %1260 = vmatpush1.bf16.msra.mxu0 %v1232
      %1261 = vmatprep.subr.bf16.mxu0 0
      %1262 = vmatpush1.bf16.msra.mxu0 %v1231
      %1263 = vmatprep.subr.bf16.mxu0 0
      %1264 = vmatpush2.bf16.msra.mxu0 0
      %1265 = vmatprep.subr.bf16.mxu0 0
      %1266 = vmatpush2.bf16.msra.mxu0 0
      %1267 = vmatprep.subr.bf16.mxu0 0
      %1268 = vmatpush2.bf16.msra.mxu0 0
      %1269 = vmatprep.subr.bf16.mxu0 0
      %1270 = vmatpush2.bf16.msra.mxu0 0
      %1271 = vmatprep.subr.bf16.mxu0 0
      %1272 = vmatpush2.bf16.msra.mxu0 0
      %1273 = vmatprep.subr.bf16.mxu0 0
      %1274 = vmatpush2.bf16.msra.mxu0 0
      %1275 = vmatprep.subr.bf16.mxu0 0
      %1276 = vmatpush2.bf16.msra.mxu0 0
      %1277 = vmatprep.subr.bf16.mxu0 0
      %1278 = vmatpush2.bf16.msra.mxu0 0
      %1279 = vmatprep.mubr.bf16.mxu0 0
      %1280 = vmatmul.mubr.bf16.gmra.mxu0 %v1166
      %v1281 = vpop.f32.mrf.mxu0
      %v1282 = vadd.f32 0.0, %v1281
      %v1283 = vpop.f32.mrf.mxu0
      %v1284 = vpop.f32.mrf.mxu0
      %v1285 = vadd.f32 0.0, %v1284
      %v1286 = vpop.f32.mrf.mxu0
      %1287 = vmatprep.mubr.bf16.mxu0 0
      %1288 = vmatmul.mubr.bf16.gmra.mxu0 %v1167
      %v1289 = vpop.f32.mrf.mxu0
      %v1290 = vadd.f32 0.0, %v1289
      %v1291 = vpop.f32.mrf.mxu0
      %v1292 = vpop.f32.mrf.mxu0
      %v1293 = vadd.f32 0.0, %v1292
      %v1294 = vpop.f32.mrf.mxu0
      %1295 = vmatprep.mubr.bf16.mxu0 0
      %1296 = vmatmul.mubr.bf16.gmra.mxu0 %v1168
      %v1297 = vpop.f32.mrf.mxu0
      %v1298 = vadd.f32 0.0, %v1297
      %v1299 = vpop.f32.mrf.mxu0
      %v1300 = vpop.f32.mrf.mxu0
      %v1301 = vadd.f32 0.0, %v1300
      %v1302 = vpop.f32.mrf.mxu0
      %1303 = vmatprep.mubr.bf16.mxu0 0
      %1304 = vmatmul.mubr.bf16.gmra.mxu0 %v1169
      %v1305 = vpop.f32.mrf.mxu0
      %v1306 = vadd.f32 0.0, %v1305
      %v1307 = vpop.f32.mrf.mxu0
      %v1308 = vpop.f32.mrf.mxu0
      %v1309 = vadd.f32 0.0, %v1308
      %v1310 = vpop.f32.mrf.mxu0
      %1311 = vmatprep.mubr.bf16.mxu0 0
      %1312 = vmatmul.mubr.bf16.gmra.mxu0 %v1170
      %v1313 = vpop.f32.mrf.mxu0
      %v1314 = vadd.f32 0.0, %v1313
      %v1315 = vpop.f32.mrf.mxu0
      %v1316 = vpop.f32.mrf.mxu0
      %v1317 = vadd.f32 0.0, %v1316
      %v1318 = vpop.f32.mrf.mxu0
      %1319 = vmatprep.mubr.bf16.mxu0 0
      %1320 = vmatmul.mubr.bf16.gmra.mxu0 %v1171
      %v1321 = vpop.f32.mrf.mxu0
      %v1322 = vadd.f32 0.0, %v1321
      %v1323 = vpop.f32.mrf.mxu0
      %v1324 = vpop.f32.mrf.mxu0
      %v1325 = vadd.f32 0.0, %v1324
      %v1326 = vpop.f32.mrf.mxu0
      %1327 = vmatprep.mubr.bf16.mxu0 0
      %1328 = vmatmul.mubr.bf16.gmra.mxu0 %v1172
      %v1329 = vpop.f32.mrf.mxu0
      %v1330 = vadd.f32 0.0, %v1329
      %v1331 = vpop.f32.mrf.mxu0
      %v1332 = vpop.f32.mrf.mxu0
      %v1333 = vadd.f32 0.0, %v1332
      %v1334 = vpop.f32.mrf.mxu0
      %1335 = vmatprep.mubr.bf16.mxu0 0
      %1336 = vmatmul.mubr.bf16.gmra.mxu0 %v1173
      %v1337 = vpop.f32.mrf.mxu0
      %v1338 = vadd.f32 0.0, %v1337
      %v1339 = vpop.f32.mrf.mxu0
      %v1340 = vpop.f32.mrf.mxu0
      %v1341 = vadd.f32 0.0, %v1340
      %v1342 = vpop.f32.mrf.mxu0
      %1343 = vmatprep.mubr.bf16.mxu0 0
      %1344 = vmatmul.mubr.bf16.gmra.mxu0 %v1174
      %v1345 = vpop.f32.mrf.mxu0
      %v1346 = vadd.f32 0.0, %v1345
      %v1347 = vpop.f32.mrf.mxu0
      %v1348 = vpop.f32.mrf.mxu0
      %v1349 = vadd.f32 0.0, %v1348
      %v1350 = vpop.f32.mrf.mxu0
      %1351 = vmatprep.mubr.bf16.mxu0 0
      %1352 = vmatmul.mubr.bf16.gmra.mxu0 %v1175
      %v1353 = vpop.f32.mrf.mxu0
      %v1354 = vadd.f32 0.0, %v1353
      %v1355 = vpop.f32.mrf.mxu0
      %v1356 = vpop.f32.mrf.mxu0
      %v1357 = vadd.f32 0.0, %v1356
      %v1358 = vpop.f32.mrf.mxu0
      %1359 = vmatprep.mubr.bf16.mxu0 0
      %1360 = vmatmul.mubr.bf16.gmra.mxu0 %v1176
      %v1361 = vpop.f32.mrf.mxu0
      %v1362 = vadd.f32 0.0, %v1361
      %v1363 = vpop.f32.mrf.mxu0
      %v1364 = vpop.f32.mrf.mxu0
      %v1365 = vadd.f32 0.0, %v1364
      %v1366 = vpop.f32.mrf.mxu0
      %1367 = vmatprep.mubr.bf16.mxu0 0
      %1368 = vmatmul.mubr.bf16.gmra.mxu0 %v1177
      %v1369 = vpop.f32.mrf.mxu0
      %v1370 = vadd.f32 0.0, %v1369
      %v1371 = vpop.f32.mrf.mxu0
      %v1372 = vpop.f32.mrf.mxu0
      %v1373 = vadd.f32 0.0, %v1372
      %v1374 = vpop.f32.mrf.mxu0
      %1375 = vmatprep.mubr.bf16.mxu0 0
      %1376 = vmatmul.mubr.bf16.gmra.mxu0 %v1178
      %v1377 = vpop.f32.mrf.mxu0
      %v1378 = vadd.f32 0.0, %v1377
      %v1379 = vpop.f32.mrf.mxu0
      %v1380 = vpop.f32.mrf.mxu0
      %v1381 = vadd.f32 0.0, %v1380
      %v1382 = vpop.f32.mrf.mxu0
      %1383 = vmatprep.mubr.bf16.mxu0 0
      %1384 = vmatmul.mubr.bf16.gmra.mxu0 %v1179
      %v1385 = vpop.f32.mrf.mxu0
      %v1386 = vadd.f32 0.0, %v1385
      %v1387 = vpop.f32.mrf.mxu0
      %v1388 = vpop.f32.mrf.mxu0
      %v1389 = vadd.f32 0.0, %v1388
      %v1390 = vpop.f32.mrf.mxu0
      %1391 = vmatprep.mubr.bf16.mxu0 0
      %1392 = vmatmul.mubr.bf16.gmra.mxu0 %v1180
      %v1393 = vpop.f32.mrf.mxu0
      %v1394 = vadd.f32 0.0, %v1393
      %v1395 = vpop.f32.mrf.mxu0
      %v1396 = vpop.f32.mrf.mxu0
      %v1397 = vadd.f32 0.0, %v1396
      %v1398 = vpop.f32.mrf.mxu0
      %1399 = vmatprep.mubr.bf16.mxu0 0
      %1400 = vmatmul.mubr.bf16.gmra.mxu0 %v1181
      %v1401 = vpop.f32.mrf.mxu0
      %v1402 = vadd.f32 0.0, %v1401
      %v1403 = vpop.f32.mrf.mxu0
      %v1404 = vpop.f32.mrf.mxu0
      %v1405 = vadd.f32 0.0, %v1404
      %v1406 = vpop.f32.mrf.mxu0
      %1407 = vdwg.mxu0
      %v1408 = vadd.f32 %v1101, %v1282
      %v1409 = vadd.f32 %v1102, %v1285
      %v1410 = vadd.f32 %v1103, %v1290
      %v1411 = vadd.f32 %v1104, %v1293
      %v1412 = vadd.f32 %v1105, %v1298
      %v1413 = vadd.f32 %v1106, %v1301
      %v1414 = vadd.f32 %v1107, %v1306
      %v1415 = vadd.f32 %v1108, %v1309
      %v1416 = vadd.f32 %v1109, %v1314
      %v1417 = vadd.f32 %v1110, %v1317
      %v1418 = vadd.f32 %v1111, %v1322
      %v1419 = vadd.f32 %v1112, %v1325
      %v1420 = vadd.f32 %v1113, %v1330
      %v1421 = vadd.f32 %v1114, %v1333
      %v1422 = vadd.f32 %v1115, %v1338
      %v1423 = vadd.f32 %v1116, %v1341
      %v1424 = vadd.f32 %v1117, %v1346
      %v1425 = vadd.f32 %v1118, %v1349
      %v1426 = vadd.f32 %v1119, %v1354
      %v1427 = vadd.f32 %v1120, %v1357
      %v1428 = vadd.f32 %v1121, %v1362
      %v1429 = vadd.f32 %v1122, %v1365
      %v1430 = vadd.f32 %v1123, %v1370
      %v1431 = vadd.f32 %v1124, %v1373
      %v1432 = vadd.f32 %v1125, %v1378
      %v1433 = vadd.f32 %v1126, %v1381
      %v1434 = vadd.f32 %v1127, %v1386
      %v1435 = vadd.f32 %v1128, %v1389
      %v1436 = vadd.f32 %v1129, %v1394
      %v1437 = vadd.f32 %v1130, %v1397
      %v1438 = vadd.f32 %v1131, %v1402
      %v1439 = vadd.f32 %v1132, %v1405
      %v1440 = vld [vmem:[%s1133 + $0x1] sm:$0xff]
      %v1441 = vld [vmem:[%s1133 + $0x9] sm:$0xff]
      %v1442 = vld [vmem:[%s1133 + $0x19] sm:$0xff]
      %v1443 = vld [vmem:[%s1133 + $0x21] sm:$0xff]
      %v1444 = vld [vmem:[%s1133 + $0x31] sm:$0xff]
      %v1445 = vld [vmem:[%s1133 + $0x39] sm:$0xff]
      %v1446 = vld [vmem:[%s1133 + $0x49] sm:$0xff]
      %v1447 = vld [vmem:[%s1133 + $0x51] sm:$0xff]
      %v1448 = vld [vmem:[%s1133 + $0x61] sm:$0xff]
      %v1449 = vld [vmem:[%s1133 + $0x69] sm:$0xff]
      %v1450 = vld [vmem:[%s1133 + $0x79] sm:$0xff]
      %v1451 = vld [vmem:[%s1133 + $0x81] sm:$0xff]
      %v1452 = vld [vmem:[%s1133 + $0x91] sm:$0xff]
      %v1453 = vld [vmem:[%s1133 + $0x99] sm:$0xff]
      %v1454 = vld [vmem:[%s1133 + $0xa9] sm:$0xff]
      %v1455 = vld [vmem:[%s1133 + $0xb1] sm:$0xff]
      %v1456 = vld [vmem:[%s1133 + $0xc1] sm:$0xff]
      %v1457 = vld [vmem:[%s1133 + $0xc9] sm:$0xff]
      %v1458 = vld [vmem:[%s1133 + $0xd9] sm:$0xff]
      %v1459 = vld [vmem:[%s1133 + $0xe1] sm:$0xff]
      %v1460 = vld [vmem:[%s1133 + $0xf1] sm:$0xff]
      %v1461 = vld [vmem:[%s1133 + $0xf9] sm:$0xff]
      %v1462 = vld [vmem:[%s1133 + $0x109] sm:$0xff]
      %v1463 = vld [vmem:[%s1133 + $0x111] sm:$0xff]
      %v1464 = vld [vmem:[%s1133 + $0x121] sm:$0xff]
      %v1465 = vld [vmem:[%s1133 + $0x129] sm:$0xff]
      %v1466 = vld [vmem:[%s1133 + $0x139] sm:$0xff]
      %v1467 = vld [vmem:[%s1133 + $0x141] sm:$0xff]
      %v1468 = vld [vmem:[%s1133 + $0x151] sm:$0xff]
      %v1469 = vld [vmem:[%s1133 + $0x159] sm:$0xff]
      %v1470 = vld [vmem:[%s1133 + $0x169] sm:$0xff]
      %v1471 = vld [vmem:[%s1133 + $0x171] sm:$0xff]
      %v1472 = vpack.c.bf16 %v1441, %v1440
      %v1473 = vpack.c.bf16 %v1443, %v1442
      %v1474 = vpack.c.bf16 %v1445, %v1444
      %v1475 = vpack.c.bf16 %v1447, %v1446
      %v1476 = vpack.c.bf16 %v1449, %v1448
      %v1477 = vpack.c.bf16 %v1451, %v1450
      %v1478 = vpack.c.bf16 %v1453, %v1452
      %v1479 = vpack.c.bf16 %v1455, %v1454
      %v1480 = vpack.c.bf16 %v1457, %v1456
      %v1481 = vpack.c.bf16 %v1459, %v1458
      %v1482 = vpack.c.bf16 %v1461, %v1460
      %v1483 = vpack.c.bf16 %v1463, %v1462
      %v1484 = vpack.c.bf16 %v1465, %v1464
      %v1485 = vpack.c.bf16 %v1467, %v1466
      %v1486 = vpack.c.bf16 %v1469, %v1468
      %v1487 = vpack.c.bf16 %v1471, %v1470
      %s1488 = scalar_lea.vmem %s1, 256
      %v1489 = vld [vmem:[%s1488] sm:$0xf]
      %v1490 = vld [vmem:[%s1488 + $0x4] sm:$0xf]
      %v1491 = vld [vmem:[%s1488 + $0x8] sm:$0xf]
      %v1492 = vld [vmem:[%s1488 + $0xc] sm:$0xf]
      %v1493 = vld [vmem:[%s1488 + $0x10] sm:$0xf]
      %v1494 = vld [vmem:[%s1488 + $0x14] sm:$0xf]
      %v1495 = vld [vmem:[%s1488 + $0x18] sm:$0xf]
      %v1496 = vld [vmem:[%s1488 + $0x1c] sm:$0xf]
      %v1497 = vld [vmem:[%s1488 + $0x20] sm:$0xf]
      %v1498 = vld [vmem:[%s1488 + $0x24] sm:$0xf]
      %v1499 = vld [vmem:[%s1488 + $0x28] sm:$0xf]
      %v1500 = vld [vmem:[%s1488 + $0x2c] sm:$0xf]
      %v1501 = vld [vmem:[%s1488 + $0x30] sm:$0xf]
      %v1502 = vld [vmem:[%s1488 + $0x34] sm:$0xf]
      %v1503 = vld [vmem:[%s1488 + $0x38] sm:$0xf]
      %v1504 = vld [vmem:[%s1488 + $0x3c] sm:$0xf]
      %v1521 = vunpack.c.l.b16 %v1489
      %v1522 = vunpack.c.l.b16 %v1490
      %v1523 = vunpack.c.l.b16 %v1491
      %v1524 = vunpack.c.l.b16 %v1492
      %v1525 = vunpack.c.l.b16 %v1493
      %v1526 = vunpack.c.l.b16 %v1494
      %v1527 = vunpack.c.l.b16 %v1495
      %v1528 = vunpack.c.l.b16 %v1496
      %v1529 = vunpack.c.l.b16 %v1497
      %v1530 = vunpack.c.l.b16 %v1498
      %v1531 = vunpack.c.l.b16 %v1499
      %v1532 = vunpack.c.l.b16 %v1500
      %v1533 = vunpack.c.l.b16 %v1501
      %v1534 = vunpack.c.l.b16 %v1502
      %v1535 = vunpack.c.l.b16 %v1503
      %v1536 = vunpack.c.l.b16 %v1504
      %v1537 = vpack.c.b16 %v1522, %v1521
      %v1538 = vpack.c.b16 %v1524, %v1523
      %v1539 = vpack.c.b16 %v1526, %v1525
      %v1540 = vpack.c.b16 %v1528, %v1527
      %v1541 = vpack.c.b16 %v1530, %v1529
      %v1542 = vpack.c.b16 %v1532, %v1531
      %v1543 = vpack.c.b16 %v1534, %v1533
      %v1544 = vpack.c.b16 %v1536, %v1535
      %1553 = vmatprep.subr.bf16.mxu0 0
      %1554 = vmatpush1.bf16.msra.mxu0 %v1544
      %1555 = vmatprep.subr.bf16.mxu0 0
      %1556 = vmatpush1.bf16.msra.mxu0 %v1543
      %1557 = vmatprep.subr.bf16.mxu0 0
      %1558 = vmatpush1.bf16.msra.mxu0 %v1542
      %1559 = vmatprep.subr.bf16.mxu0 0
      %1560 = vmatpush1.bf16.msra.mxu0 %v1541
      %1561 = vmatprep.subr.bf16.mxu0 0
      %1562 = vmatpush1.bf16.msra.mxu0 %v1540
      %1563 = vmatprep.subr.bf16.mxu0 0
      %1564 = vmatpush1.bf16.msra.mxu0 %v1539
      %1565 = vmatprep.subr.bf16.mxu0 0
      %1566 = vmatpush1.bf16.msra.mxu0 %v1538
      %1567 = vmatprep.subr.bf16.mxu0 0
      %1568 = vmatpush1.bf16.msra.mxu0 %v1537
      %1569 = vmatprep.subr.bf16.mxu0 0
      %1570 = vmatpush2.bf16.msra.mxu0 0
      %1571 = vmatprep.subr.bf16.mxu0 0
      %1572 = vmatpush2.bf16.msra.mxu0 0
      %1573 = vmatprep.subr.bf16.mxu0 0
      %1574 = vmatpush2.bf16.msra.mxu0 0
      %1575 = vmatprep.subr.bf16.mxu0 0
      %1576 = vmatpush2.bf16.msra.mxu0 0
      %1577 = vmatprep.subr.bf16.mxu0 0
      %1578 = vmatpush2.bf16.msra.mxu0 0
      %1579 = vmatprep.subr.bf16.mxu0 0
      %1580 = vmatpush2.bf16.msra.mxu0 0
      %1581 = vmatprep.subr.bf16.mxu0 0
      %1582 = vmatpush2.bf16.msra.mxu0 0
      %1583 = vmatprep.subr.bf16.mxu0 0
      %1584 = vmatpush2.bf16.msra.mxu0 0
      %1585 = vmatprep.mubr.bf16.mxu0 0
      %1586 = vmatmul.mubr.bf16.gmra.mxu0 %v1472
      %v1587 = vpop.f32.mrf.mxu0
      %v1588 = vadd.f32 0.0, %v1587
      %v1589 = vpop.f32.mrf.mxu0
      %v1590 = vpop.f32.mrf.mxu0
      %v1591 = vadd.f32 0.0, %v1590
      %v1592 = vpop.f32.mrf.mxu0
      %1593 = vmatprep.mubr.bf16.mxu0 0
      %1594 = vmatmul.mubr.bf16.gmra.mxu0 %v1473
      %v1595 = vpop.f32.mrf.mxu0
      %v1596 = vadd.f32 0.0, %v1595
      %v1597 = vpop.f32.mrf.mxu0
      %v1598 = vpop.f32.mrf.mxu0
      %v1599 = vadd.f32 0.0, %v1598
      %v1600 = vpop.f32.mrf.mxu0
      %1601 = vmatprep.mubr.bf16.mxu0 0
      %1602 = vmatmul.mubr.bf16.gmra.mxu0 %v1474
      %v1603 = vpop.f32.mrf.mxu0
      %v1604 = vadd.f32 0.0, %v1603
      %v1605 = vpop.f32.mrf.mxu0
      %v1606 = vpop.f32.mrf.mxu0
      %v1607 = vadd.f32 0.0, %v1606
      %v1608 = vpop.f32.mrf.mxu0
      %1609 = vmatprep.mubr.bf16.mxu0 0
      %1610 = vmatmul.mubr.bf16.gmra.mxu0 %v1475
      %v1611 = vpop.f32.mrf.mxu0
      %v1612 = vadd.f32 0.0, %v1611
      %v1613 = vpop.f32.mrf.mxu0
      %v1614 = vpop.f32.mrf.mxu0
      %v1615 = vadd.f32 0.0, %v1614
      %v1616 = vpop.f32.mrf.mxu0
      %1617 = vmatprep.mubr.bf16.mxu0 0
      %1618 = vmatmul.mubr.bf16.gmra.mxu0 %v1476
      %v1619 = vpop.f32.mrf.mxu0
      %v1620 = vadd.f32 0.0, %v1619
      %v1621 = vpop.f32.mrf.mxu0
      %v1622 = vpop.f32.mrf.mxu0
      %v1623 = vadd.f32 0.0, %v1622
      %v1624 = vpop.f32.mrf.mxu0
      %1625 = vmatprep.mubr.bf16.mxu0 0
      %1626 = vmatmul.mubr.bf16.gmra.mxu0 %v1477
      %v1627 = vpop.f32.mrf.mxu0
      %v1628 = vadd.f32 0.0, %v1627
      %v1629 = vpop.f32.mrf.mxu0
      %v1630 = vpop.f32.mrf.mxu0
      %v1631 = vadd.f32 0.0, %v1630
      %v1632 = vpop.f32.mrf.mxu0
      %1633 = vmatprep.mubr.bf16.mxu0 0
      %1634 = vmatmul.mubr.bf16.gmra.mxu0 %v1478
      %v1635 = vpop.f32.mrf.mxu0
      %v1636 = vadd.f32 0.0, %v1635
      %v1637 = vpop.f32.mrf.mxu0
      %v1638 = vpop.f32.mrf.mxu0
      %v1639 = vadd.f32 0.0, %v1638
      %v1640 = vpop.f32.mrf.mxu0
      %1641 = vmatprep.mubr.bf16.mxu0 0
      %1642 = vmatmul.mubr.bf16.gmra.mxu0 %v1479
      %v1643 = vpop.f32.mrf.mxu0
      %v1644 = vadd.f32 0.0, %v1643
      %v1645 = vpop.f32.mrf.mxu0
      %v1646 = vpop.f32.mrf.mxu0
      %v1647 = vadd.f32 0.0, %v1646
      %v1648 = vpop.f32.mrf.mxu0
      %1649 = vmatprep.mubr.bf16.mxu0 0
      %1650 = vmatmul.mubr.bf16.gmra.mxu0 %v1480
      %v1651 = vpop.f32.mrf.mxu0
      %v1652 = vadd.f32 0.0, %v1651
      %v1653 = vpop.f32.mrf.mxu0
      %v1654 = vpop.f32.mrf.mxu0
      %v1655 = vadd.f32 0.0, %v1654
      %v1656 = vpop.f32.mrf.mxu0
      %1657 = vmatprep.mubr.bf16.mxu0 0
      %1658 = vmatmul.mubr.bf16.gmra.mxu0 %v1481
      %v1659 = vpop.f32.mrf.mxu0
      %v1660 = vadd.f32 0.0, %v1659
      %v1661 = vpop.f32.mrf.mxu0
      %v1662 = vpop.f32.mrf.mxu0
      %v1663 = vadd.f32 0.0, %v1662
      %v1664 = vpop.f32.mrf.mxu0
      %1665 = vmatprep.mubr.bf16.mxu0 0
      %1666 = vmatmul.mubr.bf16.gmra.mxu0 %v1482
      %v1667 = vpop.f32.mrf.mxu0
      %v1668 = vadd.f32 0.0, %v1667
      %v1669 = vpop.f32.mrf.mxu0
      %v1670 = vpop.f32.mrf.mxu0
      %v1671 = vadd.f32 0.0, %v1670
      %v1672 = vpop.f32.mrf.mxu0
      %1673 = vmatprep.mubr.bf16.mxu0 0
      %1674 = vmatmul.mubr.bf16.gmra.mxu0 %v1483
      %v1675 = vpop.f32.mrf.mxu0
      %v1676 = vadd.f32 0.0, %v1675
      %v1677 = vpop.f32.mrf.mxu0
      %v1678 = vpop.f32.mrf.mxu0
      %v1679 = vadd.f32 0.0, %v1678
      %v1680 = vpop.f32.mrf.mxu0
      %1681 = vmatprep.mubr.bf16.mxu0 0
      %1682 = vmatmul.mubr.bf16.gmra.mxu0 %v1484
      %v1683 = vpop.f32.mrf.mxu0
      %v1684 = vadd.f32 0.0, %v1683
      %v1685 = vpop.f32.mrf.mxu0
      %v1686 = vpop.f32.mrf.mxu0
      %v1687 = vadd.f32 0.0, %v1686
      %v1688 = vpop.f32.mrf.mxu0
      %1689 = vmatprep.mubr.bf16.mxu0 0
      %1690 = vmatmul.mubr.bf16.gmra.mxu0 %v1485
      %v1691 = vpop.f32.mrf.mxu0
      %v1692 = vadd.f32 0.0, %v1691
      %v1693 = vpop.f32.mrf.mxu0
      %v1694 = vpop.f32.mrf.mxu0
      %v1695 = vadd.f32 0.0, %v1694
      %v1696 = vpop.f32.mrf.mxu0
      %1697 = vmatprep.mubr.bf16.mxu0 0
      %1698 = vmatmul.mubr.bf16.gmra.mxu0 %v1486
      %v1699 = vpop.f32.mrf.mxu0
      %v1700 = vadd.f32 0.0, %v1699
      %v1701 = vpop.f32.mrf.mxu0
      %v1702 = vpop.f32.mrf.mxu0
      %v1703 = vadd.f32 0.0, %v1702
      %v1704 = vpop.f32.mrf.mxu0
      %1705 = vmatprep.mubr.bf16.mxu0 0
      %1706 = vmatmul.mubr.bf16.gmra.mxu0 %v1487
      %v1707 = vpop.f32.mrf.mxu0
      %v1708 = vadd.f32 0.0, %v1707
      %v1709 = vpop.f32.mrf.mxu0
      %v1710 = vpop.f32.mrf.mxu0
      %v1711 = vadd.f32 0.0, %v1710
      %v1712 = vpop.f32.mrf.mxu0
      %1713 = vdwg.mxu0
      %v1714 = vadd.f32 %v1408, %v1588
      %v1715 = vadd.f32 %v1409, %v1591
      %v1716 = vadd.f32 %v1410, %v1596
      %v1717 = vadd.f32 %v1411, %v1599
      %v1718 = vadd.f32 %v1412, %v1604
      %v1719 = vadd.f32 %v1413, %v1607
      %v1720 = vadd.f32 %v1414, %v1612
      %v1721 = vadd.f32 %v1415, %v1615
      %v1722 = vadd.f32 %v1416, %v1620
      %v1723 = vadd.f32 %v1417, %v1623
      %v1724 = vadd.f32 %v1418, %v1628
      %v1725 = vadd.f32 %v1419, %v1631
      %v1726 = vadd.f32 %v1420, %v1636
      %v1727 = vadd.f32 %v1421, %v1639
      %v1728 = vadd.f32 %v1422, %v1644
      %v1729 = vadd.f32 %v1423, %v1647
      %v1730 = vadd.f32 %v1424, %v1652
      %v1731 = vadd.f32 %v1425, %v1655
      %v1732 = vadd.f32 %v1426, %v1660
      %v1733 = vadd.f32 %v1427, %v1663
      %v1734 = vadd.f32 %v1428, %v1668
      %v1735 = vadd.f32 %v1429, %v1671
      %v1736 = vadd.f32 %v1430, %v1676
      %v1737 = vadd.f32 %v1431, %v1679
      %v1738 = vadd.f32 %v1432, %v1684
      %v1739 = vadd.f32 %v1433, %v1687
      %v1740 = vadd.f32 %v1434, %v1692
      %v1741 = vadd.f32 %v1435, %v1695
      %v1742 = vadd.f32 %v1436, %v1700
      %v1743 = vadd.f32 %v1437, %v1703
      %v1744 = vadd.f32 %v1438, %v1708
      %v1745 = vadd.f32 %v1439, %v1711
      %v1746 = vld [vmem:[%s1133 + $0x2] sm:$0xff]
      %v1747 = vld [vmem:[%s1133 + $0xa] sm:$0xff]
      %v1748 = vld [vmem:[%s1133 + $0x1a] sm:$0xff]
      %v1749 = vld [vmem:[%s1133 + $0x22] sm:$0xff]
      %v1750 = vld [vmem:[%s1133 + $0x32] sm:$0xff]
      %v1751 = vld [vmem:[%s1133 + $0x3a] sm:$0xff]
      %v1752 = vld [vmem:[%s1133 + $0x4a] sm:$0xff]
      %v1753 = vld [vmem:[%s1133 + $0x52] sm:$0xff]
      %v1754 = vld [vmem:[%s1133 + $0x62] sm:$0xff]
      %v1755 = vld [vmem:[%s1133 + $0x6a] sm:$0xff]
      %v1756 = vld [vmem:[%s1133 + $0x7a] sm:$0xff]
      %v1757 = vld [vmem:[%s1133 + $0x82] sm:$0xff]
      %v1758 = vld [vmem:[%s1133 + $0x92] sm:$0xff]
      %v1759 = vld [vmem:[%s1133 + $0x9a] sm:$0xff]
      %v1760 = vld [vmem:[%s1133 + $0xaa] sm:$0xff]
      %v1761 = vld [vmem:[%s1133 + $0xb2] sm:$0xff]
      %v1762 = vld [vmem:[%s1133 + $0xc2] sm:$0xff]
      %v1763 = vld [vmem:[%s1133 + $0xca] sm:$0xff]
      %v1764 = vld [vmem:[%s1133 + $0xda] sm:$0xff]
      %v1765 = vld [vmem:[%s1133 + $0xe2] sm:$0xff]
      %v1766 = vld [vmem:[%s1133 + $0xf2] sm:$0xff]
      %v1767 = vld [vmem:[%s1133 + $0xfa] sm:$0xff]
      %v1768 = vld [vmem:[%s1133 + $0x10a] sm:$0xff]
      %v1769 = vld [vmem:[%s1133 + $0x112] sm:$0xff]
      %v1770 = vld [vmem:[%s1133 + $0x122] sm:$0xff]
      %v1771 = vld [vmem:[%s1133 + $0x12a] sm:$0xff]
      %v1772 = vld [vmem:[%s1133 + $0x13a] sm:$0xff]
      %v1773 = vld [vmem:[%s1133 + $0x142] sm:$0xff]
      %v1774 = vld [vmem:[%s1133 + $0x152] sm:$0xff]
      %v1775 = vld [vmem:[%s1133 + $0x15a] sm:$0xff]
      %v1776 = vld [vmem:[%s1133 + $0x16a] sm:$0xff]
      %v1777 = vld [vmem:[%s1133 + $0x172] sm:$0xff]
      %v1778 = vpack.c.bf16 %v1747, %v1746
      %v1779 = vpack.c.bf16 %v1749, %v1748
      %v1780 = vpack.c.bf16 %v1751, %v1750
      %v1781 = vpack.c.bf16 %v1753, %v1752
      %v1782 = vpack.c.bf16 %v1755, %v1754
      %v1783 = vpack.c.bf16 %v1757, %v1756
      %v1784 = vpack.c.bf16 %v1759, %v1758
      %v1785 = vpack.c.bf16 %v1761, %v1760
      %v1786 = vpack.c.bf16 %v1763, %v1762
      %v1787 = vpack.c.bf16 %v1765, %v1764
      %v1788 = vpack.c.bf16 %v1767, %v1766
      %v1789 = vpack.c.bf16 %v1769, %v1768
      %v1790 = vpack.c.bf16 %v1771, %v1770
      %v1791 = vpack.c.bf16 %v1773, %v1772
      %v1792 = vpack.c.bf16 %v1775, %v1774
      %v1793 = vpack.c.bf16 %v1777, %v1776
      %s1794 = scalar_lea.vmem %s1, 320
      %v1795 = vld [vmem:[%s1794] sm:$0xf]
      %v1796 = vld [vmem:[%s1794 + $0x4] sm:$0xf]
      %v1797 = vld [vmem:[%s1794 + $0x8] sm:$0xf]
      %v1798 = vld [vmem:[%s1794 + $0xc] sm:$0xf]
      %v1799 = vld [vmem:[%s1794 + $0x10] sm:$0xf]
      %v1800 = vld [vmem:[%s1794 + $0x14] sm:$0xf]
      %v1801 = vld [vmem:[%s1794 + $0x18] sm:$0xf]
      %v1802 = vld [vmem:[%s1794 + $0x1c] sm:$0xf]
      %v1803 = vld [vmem:[%s1794 + $0x20] sm:$0xf]
      %v1804 = vld [vmem:[%s1794 + $0x24] sm:$0xf]
      %v1805 = vld [vmem:[%s1794 + $0x28] sm:$0xf]
      %v1806 = vld [vmem:[%s1794 + $0x2c] sm:$0xf]
      %v1807 = vld [vmem:[%s1794 + $0x30] sm:$0xf]
      %v1808 = vld [vmem:[%s1794 + $0x34] sm:$0xf]
      %v1809 = vld [vmem:[%s1794 + $0x38] sm:$0xf]
      %v1810 = vld [vmem:[%s1794 + $0x3c] sm:$0xf]
      %v1827 = vunpack.c.l.b16 %v1795
      %v1828 = vunpack.c.l.b16 %v1796
      %v1829 = vunpack.c.l.b16 %v1797
      %v1830 = vunpack.c.l.b16 %v1798
      %v1831 = vunpack.c.l.b16 %v1799
      %v1832 = vunpack.c.l.b16 %v1800
      %v1833 = vunpack.c.l.b16 %v1801
      %v1834 = vunpack.c.l.b16 %v1802
      %v1835 = vunpack.c.l.b16 %v1803
      %v1836 = vunpack.c.l.b16 %v1804
      %v1837 = vunpack.c.l.b16 %v1805
      %v1838 = vunpack.c.l.b16 %v1806
      %v1839 = vunpack.c.l.b16 %v1807
      %v1840 = vunpack.c.l.b16 %v1808
      %v1841 = vunpack.c.l.b16 %v1809
      %v1842 = vunpack.c.l.b16 %v1810
      %v1843 = vpack.c.b16 %v1828, %v1827
      %v1844 = vpack.c.b16 %v1830, %v1829
      %v1845 = vpack.c.b16 %v1832, %v1831
      %v1846 = vpack.c.b16 %v1834, %v1833
      %v1847 = vpack.c.b16 %v1836, %v1835
      %v1848 = vpack.c.b16 %v1838, %v1837
      %v1849 = vpack.c.b16 %v1840, %v1839
      %v1850 = vpack.c.b16 %v1842, %v1841
      %1859 = vmatprep.subr.bf16.mxu0 0
      %1860 = vmatpush1.bf16.msra.mxu0 %v1850
      %1861 = vmatprep.subr.bf16.mxu0 0
      %1862 = vmatpush1.bf16.msra.mxu0 %v1849
      %1863 = vmatprep.subr.bf16.mxu0 0
      %1864 = vmatpush1.bf16.msra.mxu0 %v1848
      %1865 = vmatprep.subr.bf16.mxu0 0
      %1866 = vmatpush1.bf16.msra.mxu0 %v1847
      %1867 = vmatprep.subr.bf16.mxu0 0
      %1868 = vmatpush1.bf16.msra.mxu0 %v1846
      %1869 = vmatprep.subr.bf16.mxu0 0
      %1870 = vmatpush1.bf16.msra.mxu0 %v1845
      %1871 = vmatprep.subr.bf16.mxu0 0
      %1872 = vmatpush1.bf16.msra.mxu0 %v1844
      %1873 = vmatprep.subr.bf16.mxu0 0
      %1874 = vmatpush1.bf16.msra.mxu0 %v1843
      %1875 = vmatprep.subr.bf16.mxu0 0
      %1876 = vmatpush2.bf16.msra.mxu0 0
      %1877 = vmatprep.subr.bf16.mxu0 0
      %1878 = vmatpush2.bf16.msra.mxu0 0
      %1879 = vmatprep.subr.bf16.mxu0 0
      %1880 = vmatpush2.bf16.msra.mxu0 0
      %1881 = vmatprep.subr.bf16.mxu0 0
      %1882 = vmatpush2.bf16.msra.mxu0 0
      %1883 = vmatprep.subr.bf16.mxu0 0
      %1884 = vmatpush2.bf16.msra.mxu0 0
      %1885 = vmatprep.subr.bf16.mxu0 0
      %1886 = vmatpush2.bf16.msra.mxu0 0
      %1887 = vmatprep.subr.bf16.mxu0 0
      %1888 = vmatpush2.bf16.msra.mxu0 0
      %1889 = vmatprep.subr.bf16.mxu0 0
      %1890 = vmatpush2.bf16.msra.mxu0 0
      %1891 = vmatprep.mubr.bf16.mxu0 0
      %1892 = vmatmul.mubr.bf16.gmra.mxu0 %v1778
      %v1893 = vpop.f32.mrf.mxu0
      %v1894 = vadd.f32 0.0, %v1893
      %v1895 = vpop.f32.mrf.mxu0
      %v1896 = vpop.f32.mrf.mxu0
      %v1897 = vadd.f32 0.0, %v1896
      %v1898 = vpop.f32.mrf.mxu0
      %1899 = vmatprep.mubr.bf16.mxu0 0
      %1900 = vmatmul.mubr.bf16.gmra.mxu0 %v1779
      %v1901 = vpop.f32.mrf.mxu0
      %v1902 = vadd.f32 0.0, %v1901
      %v1903 = vpop.f32.mrf.mxu0
      %v1904 = vpop.f32.mrf.mxu0
      %v1905 = vadd.f32 0.0, %v1904
      %v1906 = vpop.f32.mrf.mxu0
      %1907 = vmatprep.mubr.bf16.mxu0 0
      %1908 = vmatmul.mubr.bf16.gmra.mxu0 %v1780
      %v1909 = vpop.f32.mrf.mxu0
      %v1910 = vadd.f32 0.0, %v1909
      %v1911 = vpop.f32.mrf.mxu0
      %v1912 = vpop.f32.mrf.mxu0
      %v1913 = vadd.f32 0.0, %v1912
      %v1914 = vpop.f32.mrf.mxu0
      %1915 = vmatprep.mubr.bf16.mxu0 0
      %1916 = vmatmul.mubr.bf16.gmra.mxu0 %v1781
      %v1917 = vpop.f32.mrf.mxu0
      %v1918 = vadd.f32 0.0, %v1917
      %v1919 = vpop.f32.mrf.mxu0
      %v1920 = vpop.f32.mrf.mxu0
      %v1921 = vadd.f32 0.0, %v1920
      %v1922 = vpop.f32.mrf.mxu0
      %1923 = vmatprep.mubr.bf16.mxu0 0
      %1924 = vmatmul.mubr.bf16.gmra.mxu0 %v1782
      %v1925 = vpop.f32.mrf.mxu0
      %v1926 = vadd.f32 0.0, %v1925
      %v1927 = vpop.f32.mrf.mxu0
      %v1928 = vpop.f32.mrf.mxu0
      %v1929 = vadd.f32 0.0, %v1928
      %v1930 = vpop.f32.mrf.mxu0
      %1931 = vmatprep.mubr.bf16.mxu0 0
      %1932 = vmatmul.mubr.bf16.gmra.mxu0 %v1783
      %v1933 = vpop.f32.mrf.mxu0
      %v1934 = vadd.f32 0.0, %v1933
      %v1935 = vpop.f32.mrf.mxu0
      %v1936 = vpop.f32.mrf.mxu0
      %v1937 = vadd.f32 0.0, %v1936
      %v1938 = vpop.f32.mrf.mxu0
      %1939 = vmatprep.mubr.bf16.mxu0 0
      %1940 = vmatmul.mubr.bf16.gmra.mxu0 %v1784
      %v1941 = vpop.f32.mrf.mxu0
      %v1942 = vadd.f32 0.0, %v1941
      %v1943 = vpop.f32.mrf.mxu0
      %v1944 = vpop.f32.mrf.mxu0
      %v1945 = vadd.f32 0.0, %v1944
      %v1946 = vpop.f32.mrf.mxu0
      %1947 = vmatprep.mubr.bf16.mxu0 0
      %1948 = vmatmul.mubr.bf16.gmra.mxu0 %v1785
      %v1949 = vpop.f32.mrf.mxu0
      %v1950 = vadd.f32 0.0, %v1949
      %v1951 = vpop.f32.mrf.mxu0
      %v1952 = vpop.f32.mrf.mxu0
      %v1953 = vadd.f32 0.0, %v1952
      %v1954 = vpop.f32.mrf.mxu0
      %1955 = vmatprep.mubr.bf16.mxu0 0
      %1956 = vmatmul.mubr.bf16.gmra.mxu0 %v1786
      %v1957 = vpop.f32.mrf.mxu0
      %v1958 = vadd.f32 0.0, %v1957
      %v1959 = vpop.f32.mrf.mxu0
      %v1960 = vpop.f32.mrf.mxu0
      %v1961 = vadd.f32 0.0, %v1960
      %v1962 = vpop.f32.mrf.mxu0
      %1963 = vmatprep.mubr.bf16.mxu0 0
      %1964 = vmatmul.mubr.bf16.gmra.mxu0 %v1787
      %v1965 = vpop.f32.mrf.mxu0
      %v1966 = vadd.f32 0.0, %v1965
      %v1967 = vpop.f32.mrf.mxu0
      %v1968 = vpop.f32.mrf.mxu0
      %v1969 = vadd.f32 0.0, %v1968
      %v1970 = vpop.f32.mrf.mxu0
      %1971 = vmatprep.mubr.bf16.mxu0 0
      %1972 = vmatmul.mubr.bf16.gmra.mxu0 %v1788
      %v1973 = vpop.f32.mrf.mxu0
      %v1974 = vadd.f32 0.0, %v1973
      %v1975 = vpop.f32.mrf.mxu0
      %v1976 = vpop.f32.mrf.mxu0
      %v1977 = vadd.f32 0.0, %v1976
      %v1978 = vpop.f32.mrf.mxu0
      %1979 = vmatprep.mubr.bf16.mxu0 0
      %1980 = vmatmul.mubr.bf16.gmra.mxu0 %v1789
      %v1981 = vpop.f32.mrf.mxu0
      %v1982 = vadd.f32 0.0, %v1981
      %v1983 = vpop.f32.mrf.mxu0
      %v1984 = vpop.f32.mrf.mxu0
      %v1985 = vadd.f32 0.0, %v1984
      %v1986 = vpop.f32.mrf.mxu0
      %1987 = vmatprep.mubr.bf16.mxu0 0
      %1988 = vmatmul.mubr.bf16.gmra.mxu0 %v1790
      %v1989 = vpop.f32.mrf.mxu0
      %v1990 = vadd.f32 0.0, %v1989
      %v1991 = vpop.f32.mrf.mxu0
      %v1992 = vpop.f32.mrf.mxu0
      %v1993 = vadd.f32 0.0, %v1992
      %v1994 = vpop.f32.mrf.mxu0
      %1995 = vmatprep.mubr.bf16.mxu0 0
      %1996 = vmatmul.mubr.bf16.gmra.mxu0 %v1791
      %v1997 = vpop.f32.mrf.mxu0
      %v1998 = vadd.f32 0.0, %v1997
      %v1999 = vpop.f32.mrf.mxu0
      %v2000 = vpop.f32.mrf.mxu0
      %v2001 = vadd.f32 0.0, %v2000
      %v2002 = vpop.f32.mrf.mxu0
      %2003 = vmatprep.mubr.bf16.mxu0 0
      %2004 = vmatmul.mubr.bf16.gmra.mxu0 %v1792
      %v2005 = vpop.f32.mrf.mxu0
      %v2006 = vadd.f32 0.0, %v2005
      %v2007 = vpop.f32.mrf.mxu0
      %v2008 = vpop.f32.mrf.mxu0
      %v2009 = vadd.f32 0.0, %v2008
      %v2010 = vpop.f32.mrf.mxu0
      %2011 = vmatprep.mubr.bf16.mxu0 0
      %2012 = vmatmul.mubr.bf16.gmra.mxu0 %v1793
      %v2013 = vpop.f32.mrf.mxu0
      %v2014 = vadd.f32 0.0, %v2013
      %v2015 = vpop.f32.mrf.mxu0
      %v2016 = vpop.f32.mrf.mxu0
      %v2017 = vadd.f32 0.0, %v2016
      %v2018 = vpop.f32.mrf.mxu0
      %2019 = vdwg.mxu0
      %v2020 = vadd.f32 %v1714, %v1894
      %v2021 = vadd.f32 %v1715, %v1897
      %v2022 = vadd.f32 %v1716, %v1902
      %v2023 = vadd.f32 %v1717, %v1905
      %v2024 = vadd.f32 %v1718, %v1910
      %v2025 = vadd.f32 %v1719, %v1913
      %v2026 = vadd.f32 %v1720, %v1918
      %v2027 = vadd.f32 %v1721, %v1921
      %v2028 = vadd.f32 %v1722, %v1926
      %v2029 = vadd.f32 %v1723, %v1929
      %v2030 = vadd.f32 %v1724, %v1934
      %v2031 = vadd.f32 %v1725, %v1937
      %v2032 = vadd.f32 %v1726, %v1942
      %v2033 = vadd.f32 %v1727, %v1945
      %v2034 = vadd.f32 %v1728, %v1950
      %v2035 = vadd.f32 %v1729, %v1953
      %v2036 = vadd.f32 %v1730, %v1958
      %v2037 = vadd.f32 %v1731, %v1961
      %v2038 = vadd.f32 %v1732, %v1966
      %v2039 = vadd.f32 %v1733, %v1969
      %v2040 = vadd.f32 %v1734, %v1974
      %v2041 = vadd.f32 %v1735, %v1977
      %v2042 = vadd.f32 %v1736, %v1982
      %v2043 = vadd.f32 %v1737, %v1985
      %v2044 = vadd.f32 %v1738, %v1990
      %v2045 = vadd.f32 %v1739, %v1993
      %v2046 = vadd.f32 %v1740, %v1998
      %v2047 = vadd.f32 %v1741, %v2001
      %v2048 = vadd.f32 %v1742, %v2006
      %v2049 = vadd.f32 %v1743, %v2009
      %v2050 = vadd.f32 %v1744, %v2014
      %v2051 = vadd.f32 %v1745, %v2017
      %s2052 = scalar_lea.vmem %s219, 48
      %v2053 = vld [vmem:[%s2052] sm:$0xff]
      %v2054 = vld [vmem:[%s2052 + $0x8] sm:$0xff]
      %v2055 = vld [vmem:[%s2052 + $0x18] sm:$0xff]
      %v2056 = vld [vmem:[%s2052 + $0x20] sm:$0xff]
      %v2057 = vld [vmem:[%s2052 + $0x30] sm:$0xff]
      %v2058 = vld [vmem:[%s2052 + $0x38] sm:$0xff]
      %v2059 = vld [vmem:[%s2052 + $0x48] sm:$0xff]
      %v2060 = vld [vmem:[%s2052 + $0x50] sm:$0xff]
      %v2061 = vld [vmem:[%s2052 + $0x60] sm:$0xff]
      %v2062 = vld [vmem:[%s2052 + $0x68] sm:$0xff]
      %v2063 = vld [vmem:[%s2052 + $0x78] sm:$0xff]
      %v2064 = vld [vmem:[%s2052 + $0x80] sm:$0xff]
      %v2065 = vld [vmem:[%s2052 + $0x90] sm:$0xff]
      %v2066 = vld [vmem:[%s2052 + $0x98] sm:$0xff]
      %v2067 = vld [vmem:[%s2052 + $0xa8] sm:$0xff]
      %v2068 = vld [vmem:[%s2052 + $0xb0] sm:$0xff]
      %v2069 = vld [vmem:[%s2052 + $0xc0] sm:$0xff]
      %v2070 = vld [vmem:[%s2052 + $0xc8] sm:$0xff]
      %v2071 = vld [vmem:[%s2052 + $0xd8] sm:$0xff]
      %v2072 = vld [vmem:[%s2052 + $0xe0] sm:$0xff]
      %v2073 = vld [vmem:[%s2052 + $0xf0] sm:$0xff]
      %v2074 = vld [vmem:[%s2052 + $0xf8] sm:$0xff]
      %v2075 = vld [vmem:[%s2052 + $0x108] sm:$0xff]
      %v2076 = vld [vmem:[%s2052 + $0x110] sm:$0xff]
      %v2077 = vld [vmem:[%s2052 + $0x120] sm:$0xff]
      %v2078 = vld [vmem:[%s2052 + $0x128] sm:$0xff]
      %v2079 = vld [vmem:[%s2052 + $0x138] sm:$0xff]
      %v2080 = vld [vmem:[%s2052 + $0x140] sm:$0xff]
      %v2081 = vld [vmem:[%s2052 + $0x150] sm:$0xff]
      %v2082 = vld [vmem:[%s2052 + $0x158] sm:$0xff]
      %v2083 = vld [vmem:[%s2052 + $0x168] sm:$0xff]
      %v2084 = vld [vmem:[%s2052 + $0x170] sm:$0xff]
      %v2085 = vpack.c.bf16 %v2054, %v2053
      %v2086 = vpack.c.bf16 %v2056, %v2055
      %v2087 = vpack.c.bf16 %v2058, %v2057
      %v2088 = vpack.c.bf16 %v2060, %v2059
      %v2089 = vpack.c.bf16 %v2062, %v2061
      %v2090 = vpack.c.bf16 %v2064, %v2063
      %v2091 = vpack.c.bf16 %v2066, %v2065
      %v2092 = vpack.c.bf16 %v2068, %v2067
      %v2093 = vpack.c.bf16 %v2070, %v2069
      %v2094 = vpack.c.bf16 %v2072, %v2071
      %v2095 = vpack.c.bf16 %v2074, %v2073
      %v2096 = vpack.c.bf16 %v2076, %v2075
      %v2097 = vpack.c.bf16 %v2078, %v2077
      %v2098 = vpack.c.bf16 %v2080, %v2079
      %v2099 = vpack.c.bf16 %v2082, %v2081
      %v2100 = vpack.c.bf16 %v2084, %v2083
      %s2101 = scalar_lea.vmem %s1, 384
      %v2102 = vld [vmem:[%s2101] sm:$0xf]
      %v2103 = vld [vmem:[%s2101 + $0x4] sm:$0xf]
      %v2104 = vld [vmem:[%s2101 + $0x8] sm:$0xf]
      %v2105 = vld [vmem:[%s2101 + $0xc] sm:$0xf]
      %v2106 = vld [vmem:[%s2101 + $0x10] sm:$0xf]
      %v2107 = vld [vmem:[%s2101 + $0x14] sm:$0xf]
      %v2108 = vld [vmem:[%s2101 + $0x18] sm:$0xf]
      %v2109 = vld [vmem:[%s2101 + $0x1c] sm:$0xf]
      %v2110 = vld [vmem:[%s2101 + $0x20] sm:$0xf]
      %v2111 = vld [vmem:[%s2101 + $0x24] sm:$0xf]
      %v2112 = vld [vmem:[%s2101 + $0x28] sm:$0xf]
      %v2113 = vld [vmem:[%s2101 + $0x2c] sm:$0xf]
      %v2114 = vld [vmem:[%s2101 + $0x30] sm:$0xf]
      %v2115 = vld [vmem:[%s2101 + $0x34] sm:$0xf]
      %v2116 = vld [vmem:[%s2101 + $0x38] sm:$0xf]
      %v2117 = vld [vmem:[%s2101 + $0x3c] sm:$0xf]
      %v2134 = vunpack.c.l.b16 %v2102
      %v2135 = vunpack.c.l.b16 %v2103
      %v2136 = vunpack.c.l.b16 %v2104
      %v2137 = vunpack.c.l.b16 %v2105
      %v2138 = vunpack.c.l.b16 %v2106
      %v2139 = vunpack.c.l.b16 %v2107
      %v2140 = vunpack.c.l.b16 %v2108
      %v2141 = vunpack.c.l.b16 %v2109
      %v2142 = vunpack.c.l.b16 %v2110
      %v2143 = vunpack.c.l.b16 %v2111
      %v2144 = vunpack.c.l.b16 %v2112
      %v2145 = vunpack.c.l.b16 %v2113
      %v2146 = vunpack.c.l.b16 %v2114
      %v2147 = vunpack.c.l.b16 %v2115
      %v2148 = vunpack.c.l.b16 %v2116
      %v2149 = vunpack.c.l.b16 %v2117
      %v2150 = vpack.c.b16 %v2135, %v2134
      %v2151 = vpack.c.b16 %v2137, %v2136
      %v2152 = vpack.c.b16 %v2139, %v2138
      %v2153 = vpack.c.b16 %v2141, %v2140
      %v2154 = vpack.c.b16 %v2143, %v2142
      %v2155 = vpack.c.b16 %v2145, %v2144
      %v2156 = vpack.c.b16 %v2147, %v2146
      %v2157 = vpack.c.b16 %v2149, %v2148
      %2166 = vmatprep.subr.bf16.mxu0 0
      %2167 = vmatpush1.bf16.msra.mxu0 %v2157
      %2168 = vmatprep.subr.bf16.mxu0 0
      %2169 = vmatpush1.bf16.msra.mxu0 %v2156
      %2170 = vmatprep.subr.bf16.mxu0 0
      %2171 = vmatpush1.bf16.msra.mxu0 %v2155
      %2172 = vmatprep.subr.bf16.mxu0 0
      %2173 = vmatpush1.bf16.msra.mxu0 %v2154
      %2174 = vmatprep.subr.bf16.mxu0 0
      %2175 = vmatpush1.bf16.msra.mxu0 %v2153
      %2176 = vmatprep.subr.bf16.mxu0 0
      %2177 = vmatpush1.bf16.msra.mxu0 %v2152
      %2178 = vmatprep.subr.bf16.mxu0 0
      %2179 = vmatpush1.bf16.msra.mxu0 %v2151
      %2180 = vmatprep.subr.bf16.mxu0 0
      %2181 = vmatpush1.bf16.msra.mxu0 %v2150
      %2182 = vmatprep.subr.bf16.mxu0 0
      %2183 = vmatpush2.bf16.msra.mxu0 0
      %2184 = vmatprep.subr.bf16.mxu0 0
      %2185 = vmatpush2.bf16.msra.mxu0 0
      %2186 = vmatprep.subr.bf16.mxu0 0
      %2187 = vmatpush2.bf16.msra.mxu0 0
      %2188 = vmatprep.subr.bf16.mxu0 0
      %2189 = vmatpush2.bf16.msra.mxu0 0
      %2190 = vmatprep.subr.bf16.mxu0 0
      %2191 = vmatpush2.bf16.msra.mxu0 0
      %2192 = vmatprep.subr.bf16.mxu0 0
      %2193 = vmatpush2.bf16.msra.mxu0 0
      %2194 = vmatprep.subr.bf16.mxu0 0
      %2195 = vmatpush2.bf16.msra.mxu0 0
      %2196 = vmatprep.subr.bf16.mxu0 0
      %2197 = vmatpush2.bf16.msra.mxu0 0
      %2198 = vmatprep.mubr.bf16.mxu0 0
      %2199 = vmatmul.mubr.bf16.gmra.mxu0 %v2085
      %v2200 = vpop.f32.mrf.mxu0
      %v2201 = vadd.f32 0.0, %v2200
      %v2202 = vpop.f32.mrf.mxu0
      %v2203 = vpop.f32.mrf.mxu0
      %v2204 = vadd.f32 0.0, %v2203
      %v2205 = vpop.f32.mrf.mxu0
      %2206 = vmatprep.mubr.bf16.mxu0 0
      %2207 = vmatmul.mubr.bf16.gmra.mxu0 %v2086
      %v2208 = vpop.f32.mrf.mxu0
      %v2209 = vadd.f32 0.0, %v2208
      %v2210 = vpop.f32.mrf.mxu0
      %v2211 = vpop.f32.mrf.mxu0
      %v2212 = vadd.f32 0.0, %v2211
      %v2213 = vpop.f32.mrf.mxu0
      %2214 = vmatprep.mubr.bf16.mxu0 0
      %2215 = vmatmul.mubr.bf16.gmra.mxu0 %v2087
      %v2216 = vpop.f32.mrf.mxu0
      %v2217 = vadd.f32 0.0, %v2216
      %v2218 = vpop.f32.mrf.mxu0
      %v2219 = vpop.f32.mrf.mxu0
      %v2220 = vadd.f32 0.0, %v2219
      %v2221 = vpop.f32.mrf.mxu0
      %2222 = vmatprep.mubr.bf16.mxu0 0
      %2223 = vmatmul.mubr.bf16.gmra.mxu0 %v2088
      %v2224 = vpop.f32.mrf.mxu0
      %v2225 = vadd.f32 0.0, %v2224
      %v2226 = vpop.f32.mrf.mxu0
      %v2227 = vpop.f32.mrf.mxu0
      %v2228 = vadd.f32 0.0, %v2227
      %v2229 = vpop.f32.mrf.mxu0
      %2230 = vmatprep.mubr.bf16.mxu0 0
      %2231 = vmatmul.mubr.bf16.gmra.mxu0 %v2089
      %v2232 = vpop.f32.mrf.mxu0
      %v2233 = vadd.f32 0.0, %v2232
      %v2234 = vpop.f32.mrf.mxu0
      %v2235 = vpop.f32.mrf.mxu0
      %v2236 = vadd.f32 0.0, %v2235
      %v2237 = vpop.f32.mrf.mxu0
      %2238 = vmatprep.mubr.bf16.mxu0 0
      %2239 = vmatmul.mubr.bf16.gmra.mxu0 %v2090
      %v2240 = vpop.f32.mrf.mxu0
      %v2241 = vadd.f32 0.0, %v2240
      %v2242 = vpop.f32.mrf.mxu0
      %v2243 = vpop.f32.mrf.mxu0
      %v2244 = vadd.f32 0.0, %v2243
      %v2245 = vpop.f32.mrf.mxu0
      %2246 = vmatprep.mubr.bf16.mxu0 0
      %2247 = vmatmul.mubr.bf16.gmra.mxu0 %v2091
      %v2248 = vpop.f32.mrf.mxu0
      %v2249 = vadd.f32 0.0, %v2248
      %v2250 = vpop.f32.mrf.mxu0
      %v2251 = vpop.f32.mrf.mxu0
      %v2252 = vadd.f32 0.0, %v2251
      %v2253 = vpop.f32.mrf.mxu0
      %2254 = vmatprep.mubr.bf16.mxu0 0
      %2255 = vmatmul.mubr.bf16.gmra.mxu0 %v2092
      %v2256 = vpop.f32.mrf.mxu0
      %v2257 = vadd.f32 0.0, %v2256
      %v2258 = vpop.f32.mrf.mxu0
      %v2259 = vpop.f32.mrf.mxu0
      %v2260 = vadd.f32 0.0, %v2259
      %v2261 = vpop.f32.mrf.mxu0
      %2262 = vmatprep.mubr.bf16.mxu0 0
      %2263 = vmatmul.mubr.bf16.gmra.mxu0 %v2093
      %v2264 = vpop.f32.mrf.mxu0
      %v2265 = vadd.f32 0.0, %v2264
      %v2266 = vpop.f32.mrf.mxu0
      %v2267 = vpop.f32.mrf.mxu0
      %v2268 = vadd.f32 0.0, %v2267
      %v2269 = vpop.f32.mrf.mxu0
      %2270 = vmatprep.mubr.bf16.mxu0 0
      %2271 = vmatmul.mubr.bf16.gmra.mxu0 %v2094
      %v2272 = vpop.f32.mrf.mxu0
      %v2273 = vadd.f32 0.0, %v2272
      %v2274 = vpop.f32.mrf.mxu0
      %v2275 = vpop.f32.mrf.mxu0
      %v2276 = vadd.f32 0.0, %v2275
      %v2277 = vpop.f32.mrf.mxu0
      %2278 = vmatprep.mubr.bf16.mxu0 0
      %2279 = vmatmul.mubr.bf16.gmra.mxu0 %v2095
      %v2280 = vpop.f32.mrf.mxu0
      %v2281 = vadd.f32 0.0, %v2280
      %v2282 = vpop.f32.mrf.mxu0
      %v2283 = vpop.f32.mrf.mxu0
      %v2284 = vadd.f32 0.0, %v2283
      %v2285 = vpop.f32.mrf.mxu0
      %2286 = vmatprep.mubr.bf16.mxu0 0
      %2287 = vmatmul.mubr.bf16.gmra.mxu0 %v2096
      %v2288 = vpop.f32.mrf.mxu0
      %v2289 = vadd.f32 0.0, %v2288
      %v2290 = vpop.f32.mrf.mxu0
      %v2291 = vpop.f32.mrf.mxu0
      %v2292 = vadd.f32 0.0, %v2291
      %v2293 = vpop.f32.mrf.mxu0
      %2294 = vmatprep.mubr.bf16.mxu0 0
      %2295 = vmatmul.mubr.bf16.gmra.mxu0 %v2097
      %v2296 = vpop.f32.mrf.mxu0
      %v2297 = vadd.f32 0.0, %v2296
      %v2298 = vpop.f32.mrf.mxu0
      %v2299 = vpop.f32.mrf.mxu0
      %v2300 = vadd.f32 0.0, %v2299
      %v2301 = vpop.f32.mrf.mxu0
      %2302 = vmatprep.mubr.bf16.mxu0 0
      %2303 = vmatmul.mubr.bf16.gmra.mxu0 %v2098
      %v2304 = vpop.f32.mrf.mxu0
      %v2305 = vadd.f32 0.0, %v2304
      %v2306 = vpop.f32.mrf.mxu0
      %v2307 = vpop.f32.mrf.mxu0
      %v2308 = vadd.f32 0.0, %v2307
      %v2309 = vpop.f32.mrf.mxu0
      %2310 = vmatprep.mubr.bf16.mxu0 0
      %2311 = vmatmul.mubr.bf16.gmra.mxu0 %v2099
      %v2312 = vpop.f32.mrf.mxu0
      %v2313 = vadd.f32 0.0, %v2312
      %v2314 = vpop.f32.mrf.mxu0
      %v2315 = vpop.f32.mrf.mxu0
      %v2316 = vadd.f32 0.0, %v2315
      %v2317 = vpop.f32.mrf.mxu0
      %2318 = vmatprep.mubr.bf16.mxu0 0
      %2319 = vmatmul.mubr.bf16.gmra.mxu0 %v2100
      %v2320 = vpop.f32.mrf.mxu0
      %v2321 = vadd.f32 0.0, %v2320
      %v2322 = vpop.f32.mrf.mxu0
      %v2323 = vpop.f32.mrf.mxu0
      %v2324 = vadd.f32 0.0, %v2323
      %v2325 = vpop.f32.mrf.mxu0
      %2326 = vdwg.mxu0
      %v2327 = vadd.f32 %v2020, %v2201
      %v2328 = vadd.f32 %v2021, %v2204
      %v2329 = vadd.f32 %v2022, %v2209
      %v2330 = vadd.f32 %v2023, %v2212
      %v2331 = vadd.f32 %v2024, %v2217
      %v2332 = vadd.f32 %v2025, %v2220
      %v2333 = vadd.f32 %v2026, %v2225
      %v2334 = vadd.f32 %v2027, %v2228
      %v2335 = vadd.f32 %v2028, %v2233
      %v2336 = vadd.f32 %v2029, %v2236
      %v2337 = vadd.f32 %v2030, %v2241
      %v2338 = vadd.f32 %v2031, %v2244
      %v2339 = vadd.f32 %v2032, %v2249
      %v2340 = vadd.f32 %v2033, %v2252
      %v2341 = vadd.f32 %v2034, %v2257
      %v2342 = vadd.f32 %v2035, %v2260
      %v2343 = vadd.f32 %v2036, %v2265
      %v2344 = vadd.f32 %v2037, %v2268
      %v2345 = vadd.f32 %v2038, %v2273
      %v2346 = vadd.f32 %v2039, %v2276
      %v2347 = vadd.f32 %v2040, %v2281
      %v2348 = vadd.f32 %v2041, %v2284
      %v2349 = vadd.f32 %v2042, %v2289
      %v2350 = vadd.f32 %v2043, %v2292
      %v2351 = vadd.f32 %v2044, %v2297
      %v2352 = vadd.f32 %v2045, %v2300
      %v2353 = vadd.f32 %v2046, %v2305
      %v2354 = vadd.f32 %v2047, %v2308
      %v2355 = vadd.f32 %v2048, %v2313
      %v2356 = vadd.f32 %v2049, %v2316
      %v2357 = vadd.f32 %v2050, %v2321
      %v2358 = vadd.f32 %v2051, %v2324
      %v2359 = vld [vmem:[%s2052 + $0x1] sm:$0xff]
      %v2360 = vld [vmem:[%s2052 + $0x9] sm:$0xff]
      %v2361 = vld [vmem:[%s2052 + $0x19] sm:$0xff]
      %v2362 = vld [vmem:[%s2052 + $0x21] sm:$0xff]
      %v2363 = vld [vmem:[%s2052 + $0x31] sm:$0xff]
      %v2364 = vld [vmem:[%s2052 + $0x39] sm:$0xff]
      %v2365 = vld [vmem:[%s2052 + $0x49] sm:$0xff]
      %v2366 = vld [vmem:[%s2052 + $0x51] sm:$0xff]
      %v2367 = vld [vmem:[%s2052 + $0x61] sm:$0xff]
      %v2368 = vld [vmem:[%s2052 + $0x69] sm:$0xff]
      %v2369 = vld [vmem:[%s2052 + $0x79] sm:$0xff]
      %v2370 = vld [vmem:[%s2052 + $0x81] sm:$0xff]
      %v2371 = vld [vmem:[%s2052 + $0x91] sm:$0xff]
      %v2372 = vld [vmem:[%s2052 + $0x99] sm:$0xff]
      %v2373 = vld [vmem:[%s2052 + $0xa9] sm:$0xff]
      %v2374 = vld [vmem:[%s2052 + $0xb1] sm:$0xff]
      %v2375 = vld [vmem:[%s2052 + $0xc1] sm:$0xff]
      %v2376 = vld [vmem:[%s2052 + $0xc9] sm:$0xff]
      %v2377 = vld [vmem:[%s2052 + $0xd9] sm:$0xff]
      %v2378 = vld [vmem:[%s2052 + $0xe1] sm:$0xff]
      %v2379 = vld [vmem:[%s2052 + $0xf1] sm:$0xff]
      %v2380 = vld [vmem:[%s2052 + $0xf9] sm:$0xff]
      %v2381 = vld [vmem:[%s2052 + $0x109] sm:$0xff]
      %v2382 = vld [vmem:[%s2052 + $0x111] sm:$0xff]
      %v2383 = vld [vmem:[%s2052 + $0x121] sm:$0xff]
      %v2384 = vld [vmem:[%s2052 + $0x129] sm:$0xff]
      %v2385 = vld [vmem:[%s2052 + $0x139] sm:$0xff]
      %v2386 = vld [vmem:[%s2052 + $0x141] sm:$0xff]
      %v2387 = vld [vmem:[%s2052 + $0x151] sm:$0xff]
      %v2388 = vld [vmem:[%s2052 + $0x159] sm:$0xff]
      %v2389 = vld [vmem:[%s2052 + $0x169] sm:$0xff]
      %v2390 = vld [vmem:[%s2052 + $0x171] sm:$0xff]
      %v2391 = vpack.c.bf16 %v2360, %v2359
      %v2392 = vpack.c.bf16 %v2362, %v2361
      %v2393 = vpack.c.bf16 %v2364, %v2363
      %v2394 = vpack.c.bf16 %v2366, %v2365
      %v2395 = vpack.c.bf16 %v2368, %v2367
      %v2396 = vpack.c.bf16 %v2370, %v2369
      %v2397 = vpack.c.bf16 %v2372, %v2371
      %v2398 = vpack.c.bf16 %v2374, %v2373
      %v2399 = vpack.c.bf16 %v2376, %v2375
      %v2400 = vpack.c.bf16 %v2378, %v2377
      %v2401 = vpack.c.bf16 %v2380, %v2379
      %v2402 = vpack.c.bf16 %v2382, %v2381
      %v2403 = vpack.c.bf16 %v2384, %v2383
      %v2404 = vpack.c.bf16 %v2386, %v2385
      %v2405 = vpack.c.bf16 %v2388, %v2387
      %v2406 = vpack.c.bf16 %v2390, %v2389
      %s2407 = scalar_lea.vmem %s1, 448
      %v2408 = vld [vmem:[%s2407] sm:$0xf]
      %v2409 = vld [vmem:[%s2407 + $0x4] sm:$0xf]
      %v2410 = vld [vmem:[%s2407 + $0x8] sm:$0xf]
      %v2411 = vld [vmem:[%s2407 + $0xc] sm:$0xf]
      %v2412 = vld [vmem:[%s2407 + $0x10] sm:$0xf]
      %v2413 = vld [vmem:[%s2407 + $0x14] sm:$0xf]
      %v2414 = vld [vmem:[%s2407 + $0x18] sm:$0xf]
      %v2415 = vld [vmem:[%s2407 + $0x1c] sm:$0xf]
      %v2416 = vld [vmem:[%s2407 + $0x20] sm:$0xf]
      %v2417 = vld [vmem:[%s2407 + $0x24] sm:$0xf]
      %v2418 = vld [vmem:[%s2407 + $0x28] sm:$0xf]
      %v2419 = vld [vmem:[%s2407 + $0x2c] sm:$0xf]
      %v2420 = vld [vmem:[%s2407 + $0x30] sm:$0xf]
      %v2421 = vld [vmem:[%s2407 + $0x34] sm:$0xf]
      %v2422 = vld [vmem:[%s2407 + $0x38] sm:$0xf]
      %v2423 = vld [vmem:[%s2407 + $0x3c] sm:$0xf]
      %v2440 = vunpack.c.l.b16 %v2408
      %v2441 = vunpack.c.l.b16 %v2409
      %v2442 = vunpack.c.l.b16 %v2410
      %v2443 = vunpack.c.l.b16 %v2411
      %v2444 = vunpack.c.l.b16 %v2412
      %v2445 = vunpack.c.l.b16 %v2413
      %v2446 = vunpack.c.l.b16 %v2414
      %v2447 = vunpack.c.l.b16 %v2415
      %v2448 = vunpack.c.l.b16 %v2416
      %v2449 = vunpack.c.l.b16 %v2417
      %v2450 = vunpack.c.l.b16 %v2418
      %v2451 = vunpack.c.l.b16 %v2419
      %v2452 = vunpack.c.l.b16 %v2420
      %v2453 = vunpack.c.l.b16 %v2421
      %v2454 = vunpack.c.l.b16 %v2422
      %v2455 = vunpack.c.l.b16 %v2423
      %v2456 = vpack.c.b16 %v2441, %v2440
      %v2457 = vpack.c.b16 %v2443, %v2442
      %v2458 = vpack.c.b16 %v2445, %v2444
      %v2459 = vpack.c.b16 %v2447, %v2446
      %v2460 = vpack.c.b16 %v2449, %v2448
      %v2461 = vpack.c.b16 %v2451, %v2450
      %v2462 = vpack.c.b16 %v2453, %v2452
      %v2463 = vpack.c.b16 %v2455, %v2454
      %2472 = vmatprep.subr.bf16.mxu0 0
      %2473 = vmatpush1.bf16.msra.mxu0 %v2463
      %2474 = vmatprep.subr.bf16.mxu0 0
      %2475 = vmatpush1.bf16.msra.mxu0 %v2462
      %2476 = vmatprep.subr.bf16.mxu0 0
      %2477 = vmatpush1.bf16.msra.mxu0 %v2461
      %2478 = vmatprep.subr.bf16.mxu0 0
      %2479 = vmatpush1.bf16.msra.mxu0 %v2460
      %2480 = vmatprep.subr.bf16.mxu0 0
      %2481 = vmatpush1.bf16.msra.mxu0 %v2459
      %2482 = vmatprep.subr.bf16.mxu0 0
      %2483 = vmatpush1.bf16.msra.mxu0 %v2458
      %2484 = vmatprep.subr.bf16.mxu0 0
      %2485 = vmatpush1.bf16.msra.mxu0 %v2457
      %2486 = vmatprep.subr.bf16.mxu0 0
      %2487 = vmatpush1.bf16.msra.mxu0 %v2456
      %2488 = vmatprep.subr.bf16.mxu0 0
      %2489 = vmatpush2.bf16.msra.mxu0 0
      %2490 = vmatprep.subr.bf16.mxu0 0
      %2491 = vmatpush2.bf16.msra.mxu0 0
      %2492 = vmatprep.subr.bf16.mxu0 0
      %2493 = vmatpush2.bf16.msra.mxu0 0
      %2494 = vmatprep.subr.bf16.mxu0 0
      %2495 = vmatpush2.bf16.msra.mxu0 0
      %2496 = vmatprep.subr.bf16.mxu0 0
      %2497 = vmatpush2.bf16.msra.mxu0 0
      %2498 = vmatprep.subr.bf16.mxu0 0
      %2499 = vmatpush2.bf16.msra.mxu0 0
      %2500 = vmatprep.subr.bf16.mxu0 0
      %2501 = vmatpush2.bf16.msra.mxu0 0
      %2502 = vmatprep.subr.bf16.mxu0 0
      %2503 = vmatpush2.bf16.msra.mxu0 0
      %2504 = vmatprep.mubr.bf16.mxu0 0
      %2505 = vmatmul.mubr.bf16.gmra.mxu0 %v2391
      %v2506 = vpop.f32.mrf.mxu0
      %v2507 = vadd.f32 0.0, %v2506
      %v2508 = vpop.f32.mrf.mxu0
      %v2509 = vpop.f32.mrf.mxu0
      %v2510 = vadd.f32 0.0, %v2509
      %v2511 = vpop.f32.mrf.mxu0
      %2512 = vmatprep.mubr.bf16.mxu0 0
      %2513 = vmatmul.mubr.bf16.gmra.mxu0 %v2392
      %v2514 = vpop.f32.mrf.mxu0
      %v2515 = vadd.f32 0.0, %v2514
      %v2516 = vpop.f32.mrf.mxu0
      %v2517 = vpop.f32.mrf.mxu0
      %v2518 = vadd.f32 0.0, %v2517
      %v2519 = vpop.f32.mrf.mxu0
      %2520 = vmatprep.mubr.bf16.mxu0 0
      %2521 = vmatmul.mubr.bf16.gmra.mxu0 %v2393
      %v2522 = vpop.f32.mrf.mxu0
      %v2523 = vadd.f32 0.0, %v2522
      %v2524 = vpop.f32.mrf.mxu0
      %v2525 = vpop.f32.mrf.mxu0
      %v2526 = vadd.f32 0.0, %v2525
      %v2527 = vpop.f32.mrf.mxu0
      %2528 = vmatprep.mubr.bf16.mxu0 0
      %2529 = vmatmul.mubr.bf16.gmra.mxu0 %v2394
      %v2530 = vpop.f32.mrf.mxu0
      %v2531 = vadd.f32 0.0, %v2530
      %v2532 = vpop.f32.mrf.mxu0
      %v2533 = vpop.f32.mrf.mxu0
      %v2534 = vadd.f32 0.0, %v2533
      %v2535 = vpop.f32.mrf.mxu0
      %2536 = vmatprep.mubr.bf16.mxu0 0
      %2537 = vmatmul.mubr.bf16.gmra.mxu0 %v2395
      %v2538 = vpop.f32.mrf.mxu0
      %v2539 = vadd.f32 0.0, %v2538
      %v2540 = vpop.f32.mrf.mxu0
      %v2541 = vpop.f32.mrf.mxu0
      %v2542 = vadd.f32 0.0, %v2541
      %v2543 = vpop.f32.mrf.mxu0
      %2544 = vmatprep.mubr.bf16.mxu0 0
      %2545 = vmatmul.mubr.bf16.gmra.mxu0 %v2396
      %v2546 = vpop.f32.mrf.mxu0
      %v2547 = vadd.f32 0.0, %v2546
      %v2548 = vpop.f32.mrf.mxu0
      %v2549 = vpop.f32.mrf.mxu0
      %v2550 = vadd.f32 0.0, %v2549
      %v2551 = vpop.f32.mrf.mxu0
      %2552 = vmatprep.mubr.bf16.mxu0 0
      %2553 = vmatmul.mubr.bf16.gmra.mxu0 %v2397
      %v2554 = vpop.f32.mrf.mxu0
      %v2555 = vadd.f32 0.0, %v2554
      %v2556 = vpop.f32.mrf.mxu0
      %v2557 = vpop.f32.mrf.mxu0
      %v2558 = vadd.f32 0.0, %v2557
      %v2559 = vpop.f32.mrf.mxu0
      %2560 = vmatprep.mubr.bf16.mxu0 0
      %2561 = vmatmul.mubr.bf16.gmra.mxu0 %v2398
      %v2562 = vpop.f32.mrf.mxu0
      %v2563 = vadd.f32 0.0, %v2562
      %v2564 = vpop.f32.mrf.mxu0
      %v2565 = vpop.f32.mrf.mxu0
      %v2566 = vadd.f32 0.0, %v2565
      %v2567 = vpop.f32.mrf.mxu0
      %2568 = vmatprep.mubr.bf16.mxu0 0
      %2569 = vmatmul.mubr.bf16.gmra.mxu0 %v2399
      %v2570 = vpop.f32.mrf.mxu0
      %v2571 = vadd.f32 0.0, %v2570
      %v2572 = vpop.f32.mrf.mxu0
      %v2573 = vpop.f32.mrf.mxu0
      %v2574 = vadd.f32 0.0, %v2573
      %v2575 = vpop.f32.mrf.mxu0
      %2576 = vmatprep.mubr.bf16.mxu0 0
      %2577 = vmatmul.mubr.bf16.gmra.mxu0 %v2400
      %v2578 = vpop.f32.mrf.mxu0
      %v2579 = vadd.f32 0.0, %v2578
      %v2580 = vpop.f32.mrf.mxu0
      %v2581 = vpop.f32.mrf.mxu0
      %v2582 = vadd.f32 0.0, %v2581
      %v2583 = vpop.f32.mrf.mxu0
      %2584 = vmatprep.mubr.bf16.mxu0 0
      %2585 = vmatmul.mubr.bf16.gmra.mxu0 %v2401
      %v2586 = vpop.f32.mrf.mxu0
      %v2587 = vadd.f32 0.0, %v2586
      %v2588 = vpop.f32.mrf.mxu0
      %v2589 = vpop.f32.mrf.mxu0
      %v2590 = vadd.f32 0.0, %v2589
      %v2591 = vpop.f32.mrf.mxu0
      %2592 = vmatprep.mubr.bf16.mxu0 0
      %2593 = vmatmul.mubr.bf16.gmra.mxu0 %v2402
      %v2594 = vpop.f32.mrf.mxu0
      %v2595 = vadd.f32 0.0, %v2594
      %v2596 = vpop.f32.mrf.mxu0
      %v2597 = vpop.f32.mrf.mxu0
      %v2598 = vadd.f32 0.0, %v2597
      %v2599 = vpop.f32.mrf.mxu0
      %2600 = vmatprep.mubr.bf16.mxu0 0
      %2601 = vmatmul.mubr.bf16.gmra.mxu0 %v2403
      %v2602 = vpop.f32.mrf.mxu0
      %v2603 = vadd.f32 0.0, %v2602
      %v2604 = vpop.f32.mrf.mxu0
      %v2605 = vpop.f32.mrf.mxu0
      %v2606 = vadd.f32 0.0, %v2605
      %v2607 = vpop.f32.mrf.mxu0
      %2608 = vmatprep.mubr.bf16.mxu0 0
      %2609 = vmatmul.mubr.bf16.gmra.mxu0 %v2404
      %v2610 = vpop.f32.mrf.mxu0
      %v2611 = vadd.f32 0.0, %v2610
      %v2612 = vpop.f32.mrf.mxu0
      %v2613 = vpop.f32.mrf.mxu0
      %v2614 = vadd.f32 0.0, %v2613
      %v2615 = vpop.f32.mrf.mxu0
      %2616 = vmatprep.mubr.bf16.mxu0 0
      %2617 = vmatmul.mubr.bf16.gmra.mxu0 %v2405
      %v2618 = vpop.f32.mrf.mxu0
      %v2619 = vadd.f32 0.0, %v2618
      %v2620 = vpop.f32.mrf.mxu0
      %v2621 = vpop.f32.mrf.mxu0
      %v2622 = vadd.f32 0.0, %v2621
      %v2623 = vpop.f32.mrf.mxu0
      %2624 = vmatprep.mubr.bf16.mxu0 0
      %2625 = vmatmul.mubr.bf16.gmra.mxu0 %v2406
      %v2626 = vpop.f32.mrf.mxu0
      %v2627 = vadd.f32 0.0, %v2626
      %v2628 = vpop.f32.mrf.mxu0
      %v2629 = vpop.f32.mrf.mxu0
      %v2630 = vadd.f32 0.0, %v2629
      %v2631 = vpop.f32.mrf.mxu0
      %2632 = vdwg.mxu0
      %v2633 = vadd.f32 %v2327, %v2507
      %v2634 = vadd.f32 %v2328, %v2510
      %v2635 = vadd.f32 %v2329, %v2515
      %v2636 = vadd.f32 %v2330, %v2518
      %v2637 = vadd.f32 %v2331, %v2523
      %v2638 = vadd.f32 %v2332, %v2526
      %v2639 = vadd.f32 %v2333, %v2531
      %v2640 = vadd.f32 %v2334, %v2534
      %v2641 = vadd.f32 %v2335, %v2539
      %v2642 = vadd.f32 %v2336, %v2542
      %v2643 = vadd.f32 %v2337, %v2547
      %v2644 = vadd.f32 %v2338, %v2550
      %v2645 = vadd.f32 %v2339, %v2555
      %v2646 = vadd.f32 %v2340, %v2558
      %v2647 = vadd.f32 %v2341, %v2563
      %v2648 = vadd.f32 %v2342, %v2566
      %v2649 = vadd.f32 %v2343, %v2571
      %v2650 = vadd.f32 %v2344, %v2574
      %v2651 = vadd.f32 %v2345, %v2579
      %v2652 = vadd.f32 %v2346, %v2582
      %v2653 = vadd.f32 %v2347, %v2587
      %v2654 = vadd.f32 %v2348, %v2590
      %v2655 = vadd.f32 %v2349, %v2595
      %v2656 = vadd.f32 %v2350, %v2598
      %v2657 = vadd.f32 %v2351, %v2603
      %v2658 = vadd.f32 %v2352, %v2606
      %v2659 = vadd.f32 %v2353, %v2611
      %v2660 = vadd.f32 %v2354, %v2614
      %v2661 = vadd.f32 %v2355, %v2619
      %v2662 = vadd.f32 %v2356, %v2622
      %v2663 = vadd.f32 %v2357, %v2627
      %v2664 = vadd.f32 %v2358, %v2630
      %v2665 = vld [vmem:[%s2052 + $0x2] sm:$0xff]
      %v2666 = vld [vmem:[%s2052 + $0xa] sm:$0xff]
      %v2667 = vld [vmem:[%s2052 + $0x1a] sm:$0xff]
      %v2668 = vld [vmem:[%s2052 + $0x22] sm:$0xff]
      %v2669 = vld [vmem:[%s2052 + $0x32] sm:$0xff]
      %v2670 = vld [vmem:[%s2052 + $0x3a] sm:$0xff]
      %v2671 = vld [vmem:[%s2052 + $0x4a] sm:$0xff]
      %v2672 = vld [vmem:[%s2052 + $0x52] sm:$0xff]
      %v2673 = vld [vmem:[%s2052 + $0x62] sm:$0xff]
      %v2674 = vld [vmem:[%s2052 + $0x6a] sm:$0xff]
      %v2675 = vld [vmem:[%s2052 + $0x7a] sm:$0xff]
      %v2676 = vld [vmem:[%s2052 + $0x82] sm:$0xff]
      %v2677 = vld [vmem:[%s2052 + $0x92] sm:$0xff]
      %v2678 = vld [vmem:[%s2052 + $0x9a] sm:$0xff]
      %v2679 = vld [vmem:[%s2052 + $0xaa] sm:$0xff]
      %v2680 = vld [vmem:[%s2052 + $0xb2] sm:$0xff]
      %v2681 = vld [vmem:[%s2052 + $0xc2] sm:$0xff]
      %v2682 = vld [vmem:[%s2052 + $0xca] sm:$0xff]
      %v2683 = vld [vmem:[%s2052 + $0xda] sm:$0xff]
      %v2684 = vld [vmem:[%s2052 + $0xe2] sm:$0xff]
      %v2685 = vld [vmem:[%s2052 + $0xf2] sm:$0xff]
      %v2686 = vld [vmem:[%s2052 + $0xfa] sm:$0xff]
      %v2687 = vld [vmem:[%s2052 + $0x10a] sm:$0xff]
      %v2688 = vld [vmem:[%s2052 + $0x112] sm:$0xff]
      %v2689 = vld [vmem:[%s2052 + $0x122] sm:$0xff]
      %v2690 = vld [vmem:[%s2052 + $0x12a] sm:$0xff]
      %v2691 = vld [vmem:[%s2052 + $0x13a] sm:$0xff]
      %v2692 = vld [vmem:[%s2052 + $0x142] sm:$0xff]
      %v2693 = vld [vmem:[%s2052 + $0x152] sm:$0xff]
      %v2694 = vld [vmem:[%s2052 + $0x15a] sm:$0xff]
      %v2695 = vld [vmem:[%s2052 + $0x16a] sm:$0xff]
      %v2696 = vld [vmem:[%s2052 + $0x172] sm:$0xff]
      %v2697 = vpack.c.bf16 %v2666, %v2665
      %v2698 = vpack.c.bf16 %v2668, %v2667
      %v2699 = vpack.c.bf16 %v2670, %v2669
      %v2700 = vpack.c.bf16 %v2672, %v2671
      %v2701 = vpack.c.bf16 %v2674, %v2673
      %v2702 = vpack.c.bf16 %v2676, %v2675
      %v2703 = vpack.c.bf16 %v2678, %v2677
      %v2704 = vpack.c.bf16 %v2680, %v2679
      %v2705 = vpack.c.bf16 %v2682, %v2681
      %v2706 = vpack.c.bf16 %v2684, %v2683
      %v2707 = vpack.c.bf16 %v2686, %v2685
      %v2708 = vpack.c.bf16 %v2688, %v2687
      %v2709 = vpack.c.bf16 %v2690, %v2689
      %v2710 = vpack.c.bf16 %v2692, %v2691
      %v2711 = vpack.c.bf16 %v2694, %v2693
      %v2712 = vpack.c.bf16 %v2696, %v2695
      %s2713 = scalar_lea.vmem %s1, 512
      %v2714 = vld [vmem:[%s2713] sm:$0xf]
      %v2715 = vld [vmem:[%s2713 + $0x4] sm:$0xf]
      %v2716 = vld [vmem:[%s2713 + $0x8] sm:$0xf]
      %v2717 = vld [vmem:[%s2713 + $0xc] sm:$0xf]
      %v2718 = vld [vmem:[%s2713 + $0x10] sm:$0xf]
      %v2719 = vld [vmem:[%s2713 + $0x14] sm:$0xf]
      %v2720 = vld [vmem:[%s2713 + $0x18] sm:$0xf]
      %v2721 = vld [vmem:[%s2713 + $0x1c] sm:$0xf]
      %v2722 = vld [vmem:[%s2713 + $0x20] sm:$0xf]
      %v2723 = vld [vmem:[%s2713 + $0x24] sm:$0xf]
      %v2724 = vld [vmem:[%s2713 + $0x28] sm:$0xf]
      %v2725 = vld [vmem:[%s2713 + $0x2c] sm:$0xf]
      %v2726 = vld [vmem:[%s2713 + $0x30] sm:$0xf]
      %v2727 = vld [vmem:[%s2713 + $0x34] sm:$0xf]
      %v2728 = vld [vmem:[%s2713 + $0x38] sm:$0xf]
      %v2729 = vld [vmem:[%s2713 + $0x3c] sm:$0xf]
      %v2746 = vunpack.c.l.b16 %v2714
      %v2747 = vunpack.c.l.b16 %v2715
      %v2748 = vunpack.c.l.b16 %v2716
      %v2749 = vunpack.c.l.b16 %v2717
      %v2750 = vunpack.c.l.b16 %v2718
      %v2751 = vunpack.c.l.b16 %v2719
      %v2752 = vunpack.c.l.b16 %v2720
      %v2753 = vunpack.c.l.b16 %v2721
      %v2754 = vunpack.c.l.b16 %v2722
      %v2755 = vunpack.c.l.b16 %v2723
      %v2756 = vunpack.c.l.b16 %v2724
      %v2757 = vunpack.c.l.b16 %v2725
      %v2758 = vunpack.c.l.b16 %v2726
      %v2759 = vunpack.c.l.b16 %v2727
      %v2760 = vunpack.c.l.b16 %v2728
      %v2761 = vunpack.c.l.b16 %v2729
      %v2762 = vpack.c.b16 %v2747, %v2746
      %v2763 = vpack.c.b16 %v2749, %v2748
      %v2764 = vpack.c.b16 %v2751, %v2750
      %v2765 = vpack.c.b16 %v2753, %v2752
      %v2766 = vpack.c.b16 %v2755, %v2754
      %v2767 = vpack.c.b16 %v2757, %v2756
      %v2768 = vpack.c.b16 %v2759, %v2758
      %v2769 = vpack.c.b16 %v2761, %v2760
      %2778 = vmatprep.subr.bf16.mxu0 0
      %2779 = vmatpush1.bf16.msra.mxu0 %v2769
      %2780 = vmatprep.subr.bf16.mxu0 0
      %2781 = vmatpush1.bf16.msra.mxu0 %v2768
      %2782 = vmatprep.subr.bf16.mxu0 0
      %2783 = vmatpush1.bf16.msra.mxu0 %v2767
      %2784 = vmatprep.subr.bf16.mxu0 0
      %2785 = vmatpush1.bf16.msra.mxu0 %v2766
      %2786 = vmatprep.subr.bf16.mxu0 0
      %2787 = vmatpush1.bf16.msra.mxu0 %v2765
      %2788 = vmatprep.subr.bf16.mxu0 0
      %2789 = vmatpush1.bf16.msra.mxu0 %v2764
      %2790 = vmatprep.subr.bf16.mxu0 0
      %2791 = vmatpush1.bf16.msra.mxu0 %v2763
      %2792 = vmatprep.subr.bf16.mxu0 0
      %2793 = vmatpush1.bf16.msra.mxu0 %v2762
      %2794 = vmatprep.subr.bf16.mxu0 0
      %2795 = vmatpush2.bf16.msra.mxu0 0
      %2796 = vmatprep.subr.bf16.mxu0 0
      %2797 = vmatpush2.bf16.msra.mxu0 0
      %2798 = vmatprep.subr.bf16.mxu0 0
      %2799 = vmatpush2.bf16.msra.mxu0 0
      %2800 = vmatprep.subr.bf16.mxu0 0
      %2801 = vmatpush2.bf16.msra.mxu0 0
      %2802 = vmatprep.subr.bf16.mxu0 0
      %2803 = vmatpush2.bf16.msra.mxu0 0
      %2804 = vmatprep.subr.bf16.mxu0 0
      %2805 = vmatpush2.bf16.msra.mxu0 0
      %2806 = vmatprep.subr.bf16.mxu0 0
      %2807 = vmatpush2.bf16.msra.mxu0 0
      %2808 = vmatprep.subr.bf16.mxu0 0
      %2809 = vmatpush2.bf16.msra.mxu0 0
      %2810 = vmatprep.mubr.bf16.mxu0 0
      %2811 = vmatmul.mubr.bf16.gmra.mxu0 %v2697
      %v2812 = vpop.f32.mrf.mxu0
      %v2813 = vadd.f32 0.0, %v2812
      %v2814 = vpop.f32.mrf.mxu0
      %v2815 = vpop.f32.mrf.mxu0
      %v2816 = vadd.f32 0.0, %v2815
      %v2817 = vpop.f32.mrf.mxu0
      %2818 = vmatprep.mubr.bf16.mxu0 0
      %2819 = vmatmul.mubr.bf16.gmra.mxu0 %v2698
      %v2820 = vpop.f32.mrf.mxu0
      %v2821 = vadd.f32 0.0, %v2820
      %v2822 = vpop.f32.mrf.mxu0
      %v2823 = vpop.f32.mrf.mxu0
      %v2824 = vadd.f32 0.0, %v2823
      %v2825 = vpop.f32.mrf.mxu0
      %2826 = vmatprep.mubr.bf16.mxu0 0
      %2827 = vmatmul.mubr.bf16.gmra.mxu0 %v2699
      %v2828 = vpop.f32.mrf.mxu0
      %v2829 = vadd.f32 0.0, %v2828
      %v2830 = vpop.f32.mrf.mxu0
      %v2831 = vpop.f32.mrf.mxu0
      %v2832 = vadd.f32 0.0, %v2831
      %v2833 = vpop.f32.mrf.mxu0
      %2834 = vmatprep.mubr.bf16.mxu0 0
      %2835 = vmatmul.mubr.bf16.gmra.mxu0 %v2700
      %v2836 = vpop.f32.mrf.mxu0
      %v2837 = vadd.f32 0.0, %v2836
      %v2838 = vpop.f32.mrf.mxu0
      %v2839 = vpop.f32.mrf.mxu0
      %v2840 = vadd.f32 0.0, %v2839
      %v2841 = vpop.f32.mrf.mxu0
      %2842 = vmatprep.mubr.bf16.mxu0 0
      %2843 = vmatmul.mubr.bf16.gmra.mxu0 %v2701
      %v2844 = vpop.f32.mrf.mxu0
      %v2845 = vadd.f32 0.0, %v2844
      %v2846 = vpop.f32.mrf.mxu0
      %v2847 = vpop.f32.mrf.mxu0
      %v2848 = vadd.f32 0.0, %v2847
      %v2849 = vpop.f32.mrf.mxu0
      %2850 = vmatprep.mubr.bf16.mxu0 0
      %2851 = vmatmul.mubr.bf16.gmra.mxu0 %v2702
      %v2852 = vpop.f32.mrf.mxu0
      %v2853 = vadd.f32 0.0, %v2852
      %v2854 = vpop.f32.mrf.mxu0
      %v2855 = vpop.f32.mrf.mxu0
      %v2856 = vadd.f32 0.0, %v2855
      %v2857 = vpop.f32.mrf.mxu0
      %2858 = vmatprep.mubr.bf16.mxu0 0
      %2859 = vmatmul.mubr.bf16.gmra.mxu0 %v2703
      %v2860 = vpop.f32.mrf.mxu0
      %v2861 = vadd.f32 0.0, %v2860
      %v2862 = vpop.f32.mrf.mxu0
      %v2863 = vpop.f32.mrf.mxu0
      %v2864 = vadd.f32 0.0, %v2863
      %v2865 = vpop.f32.mrf.mxu0
      %2866 = vmatprep.mubr.bf16.mxu0 0
      %2867 = vmatmul.mubr.bf16.gmra.mxu0 %v2704
      %v2868 = vpop.f32.mrf.mxu0
      %v2869 = vadd.f32 0.0, %v2868
      %v2870 = vpop.f32.mrf.mxu0
      %v2871 = vpop.f32.mrf.mxu0
      %v2872 = vadd.f32 0.0, %v2871
      %v2873 = vpop.f32.mrf.mxu0
      %2874 = vmatprep.mubr.bf16.mxu0 0
      %2875 = vmatmul.mubr.bf16.gmra.mxu0 %v2705
      %v2876 = vpop.f32.mrf.mxu0
      %v2877 = vadd.f32 0.0, %v2876
      %v2878 = vpop.f32.mrf.mxu0
      %v2879 = vpop.f32.mrf.mxu0
      %v2880 = vadd.f32 0.0, %v2879
      %v2881 = vpop.f32.mrf.mxu0
      %2882 = vmatprep.mubr.bf16.mxu0 0
      %2883 = vmatmul.mubr.bf16.gmra.mxu0 %v2706
      %v2884 = vpop.f32.mrf.mxu0
      %v2885 = vadd.f32 0.0, %v2884
      %v2886 = vpop.f32.mrf.mxu0
      %v2887 = vpop.f32.mrf.mxu0
      %v2888 = vadd.f32 0.0, %v2887
      %v2889 = vpop.f32.mrf.mxu0
      %2890 = vmatprep.mubr.bf16.mxu0 0
      %2891 = vmatmul.mubr.bf16.gmra.mxu0 %v2707
      %v2892 = vpop.f32.mrf.mxu0
      %v2893 = vadd.f32 0.0, %v2892
      %v2894 = vpop.f32.mrf.mxu0
      %v2895 = vpop.f32.mrf.mxu0
      %v2896 = vadd.f32 0.0, %v2895
      %v2897 = vpop.f32.mrf.mxu0
      %2898 = vmatprep.mubr.bf16.mxu0 0
      %2899 = vmatmul.mubr.bf16.gmra.mxu0 %v2708
      %v2900 = vpop.f32.mrf.mxu0
      %v2901 = vadd.f32 0.0, %v2900
      %v2902 = vpop.f32.mrf.mxu0
      %v2903 = vpop.f32.mrf.mxu0
      %v2904 = vadd.f32 0.0, %v2903
      %v2905 = vpop.f32.mrf.mxu0
      %2906 = vmatprep.mubr.bf16.mxu0 0
      %2907 = vmatmul.mubr.bf16.gmra.mxu0 %v2709
      %v2908 = vpop.f32.mrf.mxu0
      %v2909 = vadd.f32 0.0, %v2908
      %v2910 = vpop.f32.mrf.mxu0
      %v2911 = vpop.f32.mrf.mxu0
      %v2912 = vadd.f32 0.0, %v2911
      %v2913 = vpop.f32.mrf.mxu0
      %2914 = vmatprep.mubr.bf16.mxu0 0
      %2915 = vmatmul.mubr.bf16.gmra.mxu0 %v2710
      %v2916 = vpop.f32.mrf.mxu0
      %v2917 = vadd.f32 0.0, %v2916
      %v2918 = vpop.f32.mrf.mxu0
      %v2919 = vpop.f32.mrf.mxu0
      %v2920 = vadd.f32 0.0, %v2919
      %v2921 = vpop.f32.mrf.mxu0
      %2922 = vmatprep.mubr.bf16.mxu0 0
      %2923 = vmatmul.mubr.bf16.gmra.mxu0 %v2711
      %v2924 = vpop.f32.mrf.mxu0
      %v2925 = vadd.f32 0.0, %v2924
      %v2926 = vpop.f32.mrf.mxu0
      %v2927 = vpop.f32.mrf.mxu0
      %v2928 = vadd.f32 0.0, %v2927
      %v2929 = vpop.f32.mrf.mxu0
      %2930 = vmatprep.mubr.bf16.mxu0 0
      %2931 = vmatmul.mubr.bf16.gmra.mxu0 %v2712
      %v2932 = vpop.f32.mrf.mxu0
      %v2933 = vadd.f32 0.0, %v2932
      %v2934 = vpop.f32.mrf.mxu0
      %v2935 = vpop.f32.mrf.mxu0
      %v2936 = vadd.f32 0.0, %v2935
      %v2937 = vpop.f32.mrf.mxu0
      %2938 = vdwg.mxu0
      %v2939 = vadd.f32 %v2633, %v2813
      %v2940 = vadd.f32 %v2634, %v2816
      %v2941 = vadd.f32 %v2635, %v2821
      %v2942 = vadd.f32 %v2636, %v2824
      %v2943 = vadd.f32 %v2637, %v2829
      %v2944 = vadd.f32 %v2638, %v2832
      %v2945 = vadd.f32 %v2639, %v2837
      %v2946 = vadd.f32 %v2640, %v2840
      %v2947 = vadd.f32 %v2641, %v2845
      %v2948 = vadd.f32 %v2642, %v2848
      %v2949 = vadd.f32 %v2643, %v2853
      %v2950 = vadd.f32 %v2644, %v2856
      %v2951 = vadd.f32 %v2645, %v2861
      %v2952 = vadd.f32 %v2646, %v2864
      %v2953 = vadd.f32 %v2647, %v2869
      %v2954 = vadd.f32 %v2648, %v2872
      %v2955 = vadd.f32 %v2649, %v2877
      %v2956 = vadd.f32 %v2650, %v2880
      %v2957 = vadd.f32 %v2651, %v2885
      %v2958 = vadd.f32 %v2652, %v2888
      %v2959 = vadd.f32 %v2653, %v2893
      %v2960 = vadd.f32 %v2654, %v2896
      %v2961 = vadd.f32 %v2655, %v2901
      %v2962 = vadd.f32 %v2656, %v2904
      %v2963 = vadd.f32 %v2657, %v2909
      %v2964 = vadd.f32 %v2658, %v2912
      %v2965 = vadd.f32 %v2659, %v2917
      %v2966 = vadd.f32 %v2660, %v2920
      %v2967 = vadd.f32 %v2661, %v2925
      %v2968 = vadd.f32 %v2662, %v2928
      %v2969 = vadd.f32 %v2663, %v2933
      %v2970 = vadd.f32 %v2664, %v2936
      %v2971 = vld [vmem:[%s2] sm:$0x1]
      %v2973 = vlaneseq
      %v2974 = vshrl.u32 %v2973, 7
      %v2975 = vsub.s32 0, %v2974
      %v2976 = vrot.slane %v2971, %v2975
      %v2978 = vadd.f32 %v2939, %v2976
      %v2979 = vadd.f32 %v2940, %v2976
      %v2980 = vadd.f32 %v2941, %v2976
      %v2981 = vadd.f32 %v2942, %v2976
      %v2982 = vadd.f32 %v2943, %v2976
      %v2983 = vadd.f32 %v2944, %v2976
      %v2984 = vadd.f32 %v2945, %v2976
      %v2985 = vadd.f32 %v2946, %v2976
      %v2986 = vadd.f32 %v2947, %v2976
      %v2987 = vadd.f32 %v2948, %v2976
      %v2988 = vadd.f32 %v2949, %v2976
      %v2989 = vadd.f32 %v2950, %v2976
      %v2990 = vadd.f32 %v2951, %v2976
      %v2991 = vadd.f32 %v2952, %v2976
      %v2992 = vadd.f32 %v2953, %v2976
      %v2993 = vadd.f32 %v2954, %v2976
      %v2994 = vadd.f32 %v2955, %v2976
      %v2995 = vadd.f32 %v2956, %v2976
      %v2996 = vadd.f32 %v2957, %v2976
      %v2997 = vadd.f32 %v2958, %v2976
      %v2998 = vadd.f32 %v2959, %v2976
      %v2999 = vadd.f32 %v2960, %v2976
      %v3000 = vadd.f32 %v2961, %v2976
      %v3001 = vadd.f32 %v2962, %v2976
      %v3002 = vadd.f32 %v2963, %v2976
      %v3003 = vadd.f32 %v2964, %v2976
      %v3004 = vadd.f32 %v2965, %v2976
      %v3005 = vadd.f32 %v2966, %v2976
      %v3006 = vadd.f32 %v2967, %v2976
      %v3007 = vadd.f32 %v2968, %v2976
      %v3008 = vadd.f32 %v2969, %v2976
      %v3009 = vadd.f32 %v2970, %v2976
      %v3010 = vmax.f32 %v2978, 0.0
      %v3011 = vmax.f32 %v2979, 0.0
      %v3012 = vmax.f32 %v2980, 0.0
      %v3013 = vmax.f32 %v2981, 0.0
      %v3014 = vmax.f32 %v2982, 0.0
      %v3015 = vmax.f32 %v2983, 0.0
      %v3016 = vmax.f32 %v2984, 0.0
      %v3017 = vmax.f32 %v2985, 0.0
      %v3018 = vmax.f32 %v2986, 0.0
      %v3019 = vmax.f32 %v2987, 0.0
      %v3020 = vmax.f32 %v2988, 0.0
      %v3021 = vmax.f32 %v2989, 0.0
      %v3022 = vmax.f32 %v2990, 0.0
      %v3023 = vmax.f32 %v2991, 0.0
      %v3024 = vmax.f32 %v2992, 0.0
      %v3025 = vmax.f32 %v2993, 0.0
      %v3026 = vmax.f32 %v2994, 0.0
      %v3027 = vmax.f32 %v2995, 0.0
      %v3028 = vmax.f32 %v2996, 0.0
      %v3029 = vmax.f32 %v2997, 0.0
      %v3030 = vmax.f32 %v2998, 0.0
      %v3031 = vmax.f32 %v2999, 0.0
      %v3032 = vmax.f32 %v3000, 0.0
      %v3033 = vmax.f32 %v3001, 0.0
      %v3034 = vmax.f32 %v3002, 0.0
      %v3035 = vmax.f32 %v3003, 0.0
      %v3036 = vmax.f32 %v3004, 0.0
      %v3037 = vmax.f32 %v3005, 0.0
      %v3038 = vmax.f32 %v3006, 0.0
      %v3039 = vmax.f32 %v3007, 0.0
      %v3040 = vmax.f32 %v3008, 0.0
      %v3041 = vmax.f32 %v3009, 0.0
      %v3042 = vpack.c.bf16 %v3011, %v3010
      %v3043 = vpack.c.bf16 %v3013, %v3012
      %v3044 = vpack.c.bf16 %v3015, %v3014
      %v3045 = vpack.c.bf16 %v3017, %v3016
      %v3046 = vpack.c.bf16 %v3019, %v3018
      %v3047 = vpack.c.bf16 %v3021, %v3020
      %v3048 = vpack.c.bf16 %v3023, %v3022
      %v3049 = vpack.c.bf16 %v3025, %v3024
      %v3050 = vpack.c.bf16 %v3027, %v3026
      %v3051 = vpack.c.bf16 %v3029, %v3028
      %v3052 = vpack.c.bf16 %v3031, %v3030
      %v3053 = vpack.c.bf16 %v3033, %v3032
      %v3054 = vpack.c.bf16 %v3035, %v3034
      %v3055 = vpack.c.bf16 %v3037, %v3036
      %v3056 = vpack.c.bf16 %v3039, %v3038
      %v3057 = vpack.c.bf16 %v3041, %v3040
      %v3074 = vunpack.c.l.b16 %v3042
      %v3075 = vunpack.c.h.b16 %v3042
      %v3076 = vunpack.c.l.b16 %v3043
      %v3077 = vunpack.c.h.b16 %v3043
      %v3078 = vunpack.c.l.b16 %v3044
      %v3079 = vunpack.c.h.b16 %v3044
      %v3080 = vunpack.c.l.b16 %v3045
      %v3081 = vunpack.c.h.b16 %v3045
      %v3082 = vunpack.c.l.b16 %v3046
      %v3083 = vunpack.c.h.b16 %v3046
      %v3084 = vunpack.c.l.b16 %v3047
      %v3085 = vunpack.c.h.b16 %v3047
      %v3086 = vunpack.c.l.b16 %v3048
      %v3087 = vunpack.c.h.b16 %v3048
      %v3088 = vunpack.c.l.b16 %v3049
      %v3089 = vunpack.c.h.b16 %v3049
      %v3090 = vunpack.c.l.b16 %v3050
      %v3091 = vunpack.c.h.b16 %v3050
      %v3092 = vunpack.c.l.b16 %v3051
      %v3093 = vunpack.c.h.b16 %v3051
      %v3094 = vunpack.c.l.b16 %v3052
      %v3095 = vunpack.c.h.b16 %v3052
      %v3096 = vunpack.c.l.b16 %v3053
      %v3097 = vunpack.c.h.b16 %v3053
      %v3098 = vunpack.c.l.b16 %v3054
      %v3099 = vunpack.c.h.b16 %v3054
      %v3100 = vunpack.c.l.b16 %v3055
      %v3101 = vunpack.c.h.b16 %v3055
      %v3102 = vunpack.c.l.b16 %v3056
      %v3103 = vunpack.c.h.b16 %v3056
      %v3104 = vunpack.c.l.b16 %v3057
      %v3105 = vunpack.c.h.b16 %v3057
      %v3106 = vpack.c.b16 %v3074, %v3074
      %v3107 = vpack.c.b16 %v3075, %v3075
      %v3108 = vpack.c.b16 %v3076, %v3076
      %v3109 = vpack.c.b16 %v3077, %v3077
      %v3110 = vpack.c.b16 %v3078, %v3078
      %v3111 = vpack.c.b16 %v3079, %v3079
      %v3112 = vpack.c.b16 %v3080, %v3080
      %v3113 = vpack.c.b16 %v3081, %v3081
      %v3114 = vpack.c.b16 %v3082, %v3082
      %v3115 = vpack.c.b16 %v3083, %v3083
      %v3116 = vpack.c.b16 %v3084, %v3084
      %v3117 = vpack.c.b16 %v3085, %v3085
      %v3118 = vpack.c.b16 %v3086, %v3086
      %v3119 = vpack.c.b16 %v3087, %v3087
      %v3120 = vpack.c.b16 %v3088, %v3088
      %v3121 = vpack.c.b16 %v3089, %v3089
      %v3122 = vpack.c.b16 %v3090, %v3090
      %v3123 = vpack.c.b16 %v3091, %v3091
      %v3124 = vpack.c.b16 %v3092, %v3092
      %v3125 = vpack.c.b16 %v3093, %v3093
      %v3126 = vpack.c.b16 %v3094, %v3094
      %v3127 = vpack.c.b16 %v3095, %v3095
      %v3128 = vpack.c.b16 %v3096, %v3096
      %v3129 = vpack.c.b16 %v3097, %v3097
      %v3130 = vpack.c.b16 %v3098, %v3098
      %v3131 = vpack.c.b16 %v3099, %v3099
      %v3132 = vpack.c.b16 %v3100, %v3100
      %v3133 = vpack.c.b16 %v3101, %v3101
      %v3134 = vpack.c.b16 %v3102, %v3102
      %v3135 = vpack.c.b16 %v3103, %v3103
      %v3136 = vpack.c.b16 %v3104, %v3104
      %v3137 = vpack.c.b16 %v3105, %v3105
      %vm3138 = vsmask.f32 256
      %vm3139 = vsmask.f32 4368
      %vm3140 = vmor %vm3138, %vm3139
      %v3142 = vshrl.u32 %v3106, 16
      %v3144 = vrot.slane %v3142, 7
      %v3145 = vshll.u32 %v3106, 16
      %v3147 = vor.u32 %v3144, %v3145
      %v3148 = vrot.slane %v3144, 4
      %v3150 = vshrl.u32 %v3107, 16
      %v3152 = vrot.slane %v3150, 7
      %v3153 = vshll.u32 %v3107, 16
      %v3155 = vor.u32 %v3152, %v3153
      %v3156 = vsel %vm3140, %v3148, %v3155
      %v3157 = vrot.slane %v3152, 4
      %v3159 = vshrl.u32 %v3108, 16
      %v3161 = vrot.slane %v3159, 7
      %v3162 = vshll.u32 %v3108, 16
      %v3164 = vor.u32 %v3161, %v3162
      %v3165 = vrot.slane %v3161, 4
      %v3167 = vshrl.u32 %v3109, 16
      %v3169 = vrot.slane %v3167, 7
      %v3170 = vshll.u32 %v3109, 16
      %v3172 = vor.u32 %v3169, %v3170
      %v3173 = vsel %vm3140, %v3165, %v3172
      %v3174 = vrot.slane %v3169, 4
      %v3176 = vshrl.u32 %v3110, 16
      %v3178 = vrot.slane %v3176, 7
      %v3179 = vshll.u32 %v3110, 16
      %v3181 = vor.u32 %v3178, %v3179
      %v3182 = vrot.slane %v3178, 4
      %v3184 = vshrl.u32 %v3111, 16
      %v3186 = vrot.slane %v3184, 7
      %v3187 = vshll.u32 %v3111, 16
      %v3189 = vor.u32 %v3186, %v3187
      %v3190 = vsel %vm3140, %v3182, %v3189
      %v3191 = vrot.slane %v3186, 4
      %v3193 = vshrl.u32 %v3112, 16
      %v3195 = vrot.slane %v3193, 7
      %v3196 = vshll.u32 %v3112, 16
      %v3198 = vor.u32 %v3195, %v3196
      %v3199 = vrot.slane %v3195, 4
      %v3201 = vshrl.u32 %v3113, 16
      %v3203 = vrot.slane %v3201, 7
      %v3204 = vshll.u32 %v3113, 16
      %v3206 = vor.u32 %v3203, %v3204
      %v3207 = vsel %vm3140, %v3199, %v3206
      %v3208 = vrot.slane %v3203, 4
      %v3210 = vshrl.u32 %v3114, 16
      %v3212 = vrot.slane %v3210, 7
      %v3213 = vshll.u32 %v3114, 16
      %v3215 = vor.u32 %v3212, %v3213
      %v3216 = vrot.slane %v3212, 4
      %v3218 = vshrl.u32 %v3115, 16
      %v3220 = vrot.slane %v3218, 7
      %v3221 = vshll.u32 %v3115, 16
      %v3223 = vor.u32 %v3220, %v3221
      %v3224 = vsel %vm3140, %v3216, %v3223
      %v3225 = vrot.slane %v3220, 4
      %v3227 = vshrl.u32 %v3116, 16
      %v3229 = vrot.slane %v3227, 7
      %v3230 = vshll.u32 %v3116, 16
      %v3232 = vor.u32 %v3229, %v3230
      %v3233 = vrot.slane %v3229, 4
      %v3235 = vshrl.u32 %v3117, 16
      %v3237 = vrot.slane %v3235, 7
      %v3238 = vshll.u32 %v3117, 16
      %v3240 = vor.u32 %v3237, %v3238
      %v3241 = vsel %vm3140, %v3233, %v3240
      %v3242 = vrot.slane %v3237, 4
      %v3244 = vshrl.u32 %v3118, 16
      %v3246 = vrot.slane %v3244, 7
      %v3247 = vshll.u32 %v3118, 16
      %v3249 = vor.u32 %v3246, %v3247
      %v3250 = vrot.slane %v3246, 4
      %v3252 = vshrl.u32 %v3119, 16
      %v3254 = vrot.slane %v3252, 7
      %v3255 = vshll.u32 %v3119, 16
      %v3257 = vor.u32 %v3254, %v3255
      %v3258 = vsel %vm3140, %v3250, %v3257
      %v3259 = vrot.slane %v3254, 4
      %v3261 = vshrl.u32 %v3120, 16
      %v3263 = vrot.slane %v3261, 7
      %v3264 = vshll.u32 %v3120, 16
      %v3266 = vor.u32 %v3263, %v3264
      %v3267 = vrot.slane %v3263, 4
      %v3269 = vshrl.u32 %v3121, 16
      %v3271 = vrot.slane %v3269, 7
      %v3272 = vshll.u32 %v3121, 16
      %v3274 = vor.u32 %v3271, %v3272
      %v3275 = vsel %vm3140, %v3267, %v3274
      %v3276 = vrot.slane %v3271, 4
      %v3278 = vshrl.u32 %v3122, 16
      %v3280 = vrot.slane %v3278, 7
      %v3281 = vshll.u32 %v3122, 16
      %v3283 = vor.u32 %v3280, %v3281
      %v3284 = vrot.slane %v3280, 4
      %v3286 = vshrl.u32 %v3123, 16
      %v3288 = vrot.slane %v3286, 7
      %v3289 = vshll.u32 %v3123, 16
      %v3291 = vor.u32 %v3288, %v3289
      %v3292 = vsel %vm3140, %v3284, %v3291
      %v3293 = vrot.slane %v3288, 4
      %v3295 = vshrl.u32 %v3124, 16
      %v3297 = vrot.slane %v3295, 7
      %v3298 = vshll.u32 %v3124, 16
      %v3300 = vor.u32 %v3297, %v3298
      %v3301 = vrot.slane %v3297, 4
      %v3303 = vshrl.u32 %v3125, 16
      %v3305 = vrot.slane %v3303, 7
      %v3306 = vshll.u32 %v3125, 16
      %v3308 = vor.u32 %v3305, %v3306
      %v3309 = vsel %vm3140, %v3301, %v3308
      %v3310 = vrot.slane %v3305, 4
      %v3312 = vshrl.u32 %v3126, 16
      %v3314 = vrot.slane %v3312, 7
      %v3315 = vshll.u32 %v3126, 16
      %v3317 = vor.u32 %v3314, %v3315
      %v3318 = vrot.slane %v3314, 4
      %v3320 = vshrl.u32 %v3127, 16
      %v3322 = vrot.slane %v3320, 7
      %v3323 = vshll.u32 %v3127, 16
      %v3325 = vor.u32 %v3322, %v3323
      %v3326 = vsel %vm3140, %v3318, %v3325
      %v3327 = vrot.slane %v3322, 4
      %v3329 = vshrl.u32 %v3128, 16
      %v3331 = vrot.slane %v3329, 7
      %v3332 = vshll.u32 %v3128, 16
      %v3334 = vor.u32 %v3331, %v3332
      %v3335 = vrot.slane %v3331, 4
      %v3337 = vshrl.u32 %v3129, 16
      %v3339 = vrot.slane %v3337, 7
      %v3340 = vshll.u32 %v3129, 16
      %v3342 = vor.u32 %v3339, %v3340
      %v3343 = vsel %vm3140, %v3335, %v3342
      %v3344 = vrot.slane %v3339, 4
      %v3346 = vshrl.u32 %v3130, 16
      %v3348 = vrot.slane %v3346, 7
      %v3349 = vshll.u32 %v3130, 16
      %v3351 = vor.u32 %v3348, %v3349
      %v3352 = vrot.slane %v3348, 4
      %v3354 = vshrl.u32 %v3131, 16
      %v3356 = vrot.slane %v3354, 7
      %v3357 = vshll.u32 %v3131, 16
      %v3359 = vor.u32 %v3356, %v3357
      %v3360 = vsel %vm3140, %v3352, %v3359
      %v3361 = vrot.slane %v3356, 4
      %v3363 = vshrl.u32 %v3132, 16
      %v3365 = vrot.slane %v3363, 7
      %v3366 = vshll.u32 %v3132, 16
      %v3368 = vor.u32 %v3365, %v3366
      %v3369 = vrot.slane %v3365, 4
      %v3371 = vshrl.u32 %v3133, 16
      %v3373 = vrot.slane %v3371, 7
      %v3374 = vshll.u32 %v3133, 16
      %v3376 = vor.u32 %v3373, %v3374
      %v3377 = vsel %vm3140, %v3369, %v3376
      %v3378 = vrot.slane %v3373, 4
      %v3380 = vshrl.u32 %v3134, 16
      %v3382 = vrot.slane %v3380, 7
      %v3383 = vshll.u32 %v3134, 16
      %v3385 = vor.u32 %v3382, %v3383
      %v3386 = vrot.slane %v3382, 4
      %v3388 = vshrl.u32 %v3135, 16
      %v3390 = vrot.slane %v3388, 7
      %v3391 = vshll.u32 %v3135, 16
      %v3393 = vor.u32 %v3390, %v3391
      %v3394 = vsel %vm3140, %v3386, %v3393
      %v3395 = vrot.slane %v3390, 4
      %v3397 = vshrl.u32 %v3136, 16
      %v3399 = vrot.slane %v3397, 7
      %v3400 = vshll.u32 %v3136, 16
      %v3402 = vor.u32 %v3399, %v3400
      %v3403 = vrot.slane %v3399, 4
      %v3405 = vshrl.u32 %v3137, 16
      %v3407 = vrot.slane %v3405, 7
      %v3408 = vshll.u32 %v3137, 16
      %v3410 = vor.u32 %v3407, %v3408
      %v3411 = vsel %vm3140, %v3403, %v3410
      %v3412 = vrot.slane %v3407, 4
      %s3461 = scalar_lea.vmem [#allocation2], 12
      %vm3462 = vcmask 1043456
      %vm3463 = vsmask.f32 7938
      %vm3464 = vmand %vm3462, %vm3463
      %v3465 = vld [vmem:[%s3461] sm:$0xf]
      %v3466 = vsel %vm3464, %v3147, %v3465
      %3467 = vst [vmem:[%s3461] sm:$0xf] %v3466
      %3468 = vst [vmem:[%s3461 + $0x4] sm:$0xf] %v3156
      %vm3469 = vcmask 1040384
      %vm3470 = vmand %vm3469, %vm3138
      %v3471 = vld [vmem:[%s3461 + $0x8] sm:$0x1]
      %v3472 = vsel %vm3470, %v3157, %v3471
      %3473 = vst [vmem:[%s3461 + $0x8] sm:$0x1] %v3472
      %v3474 = vld [vmem:[%s3461 + $0xc] sm:$0xf]
      %v3475 = vsel %vm3464, %v3164, %v3474
      %3476 = vst [vmem:[%s3461 + $0xc] sm:$0xf] %v3475
      %3477 = vst [vmem:[%s3461 + $0x10] sm:$0xf] %v3173
      %v3478 = vld [vmem:[%s3461 + $0x14] sm:$0x1]
      %v3479 = vsel %vm3470, %v3174, %v3478
      %3480 = vst [vmem:[%s3461 + $0x14] sm:$0x1] %v3479
      %v3481 = vld [vmem:[%s3461 + $0x18] sm:$0xf]
      %v3482 = vsel %vm3464, %v3181, %v3481
      %3483 = vst [vmem:[%s3461 + $0x18] sm:$0xf] %v3482
      %3484 = vst [vmem:[%s3461 + $0x1c] sm:$0xf] %v3190
      %v3485 = vld [vmem:[%s3461 + $0x20] sm:$0x1]
      %v3486 = vsel %vm3470, %v3191, %v3485
      %3487 = vst [vmem:[%s3461 + $0x20] sm:$0x1] %v3486
      %v3488 = vld [vmem:[%s3461 + $0x24] sm:$0xf]
      %v3489 = vsel %vm3464, %v3198, %v3488
      %3490 = vst [vmem:[%s3461 + $0x24] sm:$0xf] %v3489
      %3491 = vst [vmem:[%s3461 + $0x28] sm:$0xf] %v3207
      %v3492 = vld [vmem:[%s3461 + $0x2c] sm:$0x1]
      %v3493 = vsel %vm3470, %v3208, %v3492
      %3494 = vst [vmem:[%s3461 + $0x2c] sm:$0x1] %v3493
      %v3495 = vld [vmem:[%s3461 + $0x30] sm:$0xf]
      %v3496 = vsel %vm3464, %v3215, %v3495
      %3497 = vst [vmem:[%s3461 + $0x30] sm:$0xf] %v3496
      %3498 = vst [vmem:[%s3461 + $0x34] sm:$0xf] %v3224
      %v3499 = vld [vmem:[%s3461 + $0x38] sm:$0x1]
      %v3500 = vsel %vm3470, %v3225, %v3499
      %3501 = vst [vmem:[%s3461 + $0x38] sm:$0x1] %v3500
      %v3502 = vld [vmem:[%s3461 + $0x3c] sm:$0xf]
      %v3503 = vsel %vm3464, %v3232, %v3502
      %3504 = vst [vmem:[%s3461 + $0x3c] sm:$0xf] %v3503
      %3505 = vst [vmem:[%s3461 + $0x40] sm:$0xf] %v3241
      %v3506 = vld [vmem:[%s3461 + $0x44] sm:$0x1]
      %v3507 = vsel %vm3470, %v3242, %v3506
      %3508 = vst [vmem:[%s3461 + $0x44] sm:$0x1] %v3507
      %v3509 = vld [vmem:[%s3461 + $0x48] sm:$0xf]
      %v3510 = vsel %vm3464, %v3249, %v3509
      %3511 = vst [vmem:[%s3461 + $0x48] sm:$0xf] %v3510
      %3512 = vst [vmem:[%s3461 + $0x4c] sm:$0xf] %v3258
      %v3513 = vld [vmem:[%s3461 + $0x50] sm:$0x1]
      %v3514 = vsel %vm3470, %v3259, %v3513
      %3515 = vst [vmem:[%s3461 + $0x50] sm:$0x1] %v3514
      %v3516 = vld [vmem:[%s3461 + $0x54] sm:$0xf]
      %v3517 = vsel %vm3464, %v3266, %v3516
      %3518 = vst [vmem:[%s3461 + $0x54] sm:$0xf] %v3517
      %3519 = vst [vmem:[%s3461 + $0x58] sm:$0xf] %v3275
      %v3520 = vld [vmem:[%s3461 + $0x5c] sm:$0x1]
      %v3521 = vsel %vm3470, %v3276, %v3520
      %3522 = vst [vmem:[%s3461 + $0x5c] sm:$0x1] %v3521
      %v3523 = vld [vmem:[%s3461 + $0x60] sm:$0xf]
      %v3524 = vsel %vm3464, %v3283, %v3523
      %3525 = vst [vmem:[%s3461 + $0x60] sm:$0xf] %v3524
      %3526 = vst [vmem:[%s3461 + $0x64] sm:$0xf] %v3292
      %v3527 = vld [vmem:[%s3461 + $0x68] sm:$0x1]
      %v3528 = vsel %vm3470, %v3293, %v3527
      %3529 = vst [vmem:[%s3461 + $0x68] sm:$0x1] %v3528
      %v3530 = vld [vmem:[%s3461 + $0x6c] sm:$0xf]
      %v3531 = vsel %vm3464, %v3300, %v3530
      %3532 = vst [vmem:[%s3461 + $0x6c] sm:$0xf] %v3531
      %3533 = vst [vmem:[%s3461 + $0x70] sm:$0xf] %v3309
      %v3534 = vld [vmem:[%s3461 + $0x74] sm:$0x1]
      %v3535 = vsel %vm3470, %v3310, %v3534
      %3536 = vst [vmem:[%s3461 + $0x74] sm:$0x1] %v3535
      %v3537 = vld [vmem:[%s3461 + $0x78] sm:$0xf]
      %v3538 = vsel %vm3464, %v3317, %v3537
      %3539 = vst [vmem:[%s3461 + $0x78] sm:$0xf] %v3538
      %3540 = vst [vmem:[%s3461 + $0x7c] sm:$0xf] %v3326
      %v3541 = vld [vmem:[%s3461 + $0x80] sm:$0x1]
      %v3542 = vsel %vm3470, %v3327, %v3541
      %3543 = vst [vmem:[%s3461 + $0x80] sm:$0x1] %v3542
      %v3544 = vld [vmem:[%s3461 + $0x84] sm:$0xf]
      %v3545 = vsel %vm3464, %v3334, %v3544
      %3546 = vst [vmem:[%s3461 + $0x84] sm:$0xf] %v3545
      %3547 = vst [vmem:[%s3461 + $0x88] sm:$0xf] %v3343
      %v3548 = vld [vmem:[%s3461 + $0x8c] sm:$0x1]
      %v3549 = vsel %vm3470, %v3344, %v3548
      %3550 = vst [vmem:[%s3461 + $0x8c] sm:$0x1] %v3549
      %v3551 = vld [vmem:[%s3461 + $0x90] sm:$0xf]
      %v3552 = vsel %vm3464, %v3351, %v3551
      %3553 = vst [vmem:[%s3461 + $0x90] sm:$0xf] %v3552
      %3554 = vst [vmem:[%s3461 + $0x94] sm:$0xf] %v3360
      %v3555 = vld [vmem:[%s3461 + $0x98] sm:$0x1]
      %v3556 = vsel %vm3470, %v3361, %v3555
      %3557 = vst [vmem:[%s3461 + $0x98] sm:$0x1] %v3556
      %v3558 = vld [vmem:[%s3461 + $0x9c] sm:$0xf]
      %v3559 = vsel %vm3464, %v3368, %v3558
      %3560 = vst [vmem:[%s3461 + $0x9c] sm:$0xf] %v3559
      %3561 = vst [vmem:[%s3461 + $0xa0] sm:$0xf] %v3377
      %v3562 = vld [vmem:[%s3461 + $0xa4] sm:$0x1]
      %v3563 = vsel %vm3470, %v3378, %v3562
      %3564 = vst [vmem:[%s3461 + $0xa4] sm:$0x1] %v3563
      %v3565 = vld [vmem:[%s3461 + $0xa8] sm:$0xf]
      %v3566 = vsel %vm3464, %v3385, %v3565
      %3567 = vst [vmem:[%s3461 + $0xa8] sm:$0xf] %v3566
      %3568 = vst [vmem:[%s3461 + $0xac] sm:$0xf] %v3394
      %v3569 = vld [vmem:[%s3461 + $0xb0] sm:$0x1]
      %v3570 = vsel %vm3470, %v3395, %v3569
      %3571 = vst [vmem:[%s3461 + $0xb0] sm:$0x1] %v3570
      %v3572 = vld [vmem:[%s3461 + $0xb4] sm:$0xf]
      %v3573 = vsel %vm3464, %v3402, %v3572
      %3574 = vst [vmem:[%s3461 + $0xb4] sm:$0xf] %v3573
      %3575 = vst [vmem:[%s3461 + $0xb8] sm:$0xf] %v3411
      %v3576 = vld [vmem:[%s3461 + $0xbc] sm:$0x1]
      %v3577 = vsel %vm3470, %v3412, %v3576
      %3578 = vst [vmem:[%s3461 + $0xbc] sm:$0x1] %v3577
      %v3579 = vld [vmem:[#allocation2] sm:$0xf]
      %v3580 = vld [vmem:[#allocation2 + $0x4] sm:$0xf]
      %v3581 = vld [vmem:[#allocation2 + $0xc] sm:$0xf]
      %v3582 = vld [vmem:[#allocation2 + $0x10] sm:$0xf]
      %v3583 = vld [vmem:[#allocation2 + $0x18] sm:$0xf]
      %v3584 = vld [vmem:[#allocation2 + $0x1c] sm:$0xf]
      %v3585 = vld [vmem:[#allocation2 + $0x24] sm:$0xf]
      %v3586 = vld [vmem:[#allocation2 + $0x28] sm:$0xf]
      %v3587 = vld [vmem:[#allocation2 + $0x30] sm:$0xf]
      %v3588 = vld [vmem:[#allocation2 + $0x34] sm:$0xf]
      %v3589 = vld [vmem:[#allocation2 + $0x3c] sm:$0xf]
      %v3590 = vld [vmem:[#allocation2 + $0x40] sm:$0xf]
      %v3591 = vld [vmem:[#allocation2 + $0x48] sm:$0xf]
      %v3592 = vld [vmem:[#allocation2 + $0x4c] sm:$0xf]
      %v3593 = vld [vmem:[#allocation2 + $0x54] sm:$0xf]
      %v3594 = vld [vmem:[#allocation2 + $0x58] sm:$0xf]
      %v3595 = vld [vmem:[#allocation2 + $0x60] sm:$0xf]
      %v3596 = vld [vmem:[#allocation2 + $0x64] sm:$0xf]
      %v3597 = vld [vmem:[#allocation2 + $0x6c] sm:$0xf]
      %v3598 = vld [vmem:[#allocation2 + $0x70] sm:$0xf]
      %v3599 = vld [vmem:[#allocation2 + $0x78] sm:$0xf]
      %v3600 = vld [vmem:[#allocation2 + $0x7c] sm:$0xf]
      %v3601 = vld [vmem:[#allocation2 + $0x84] sm:$0xf]
      %v3602 = vld [vmem:[#allocation2 + $0x88] sm:$0xf]
      %v3603 = vld [vmem:[#allocation2 + $0x90] sm:$0xf]
      %v3604 = vld [vmem:[#allocation2 + $0x94] sm:$0xf]
      %v3605 = vld [vmem:[#allocation2 + $0x9c] sm:$0xf]
      %v3606 = vld [vmem:[#allocation2 + $0xa0] sm:$0xf]
      %v3607 = vld [vmem:[#allocation2 + $0xa8] sm:$0xf]
      %v3608 = vld [vmem:[#allocation2 + $0xac] sm:$0xf]
      %v3609 = vld [vmem:[#allocation2 + $0xb4] sm:$0xf]
      %v3610 = vld [vmem:[#allocation2 + $0xb8] sm:$0xf]
      %v3611 = vld [vmem:[%s3] sm:$0xf]
      %v3612 = vld [vmem:[%s3 + $0x4] sm:$0xf]
      %v3613 = vld [vmem:[%s3 + $0x8] sm:$0xf]
      %v3614 = vld [vmem:[%s3 + $0xc] sm:$0xf]
      %v3615 = vld [vmem:[%s3 + $0x10] sm:$0xf]
      %v3616 = vld [vmem:[%s3 + $0x14] sm:$0xf]
      %v3617 = vld [vmem:[%s3 + $0x18] sm:$0xf]
      %v3618 = vld [vmem:[%s3 + $0x1c] sm:$0xf]
      %v3619 = vld [vmem:[%s3 + $0x20] sm:$0xf]
      %v3620 = vld [vmem:[%s3 + $0x24] sm:$0xf]
      %v3621 = vld [vmem:[%s3 + $0x28] sm:$0xf]
      %v3622 = vld [vmem:[%s3 + $0x2c] sm:$0xf]
      %v3623 = vld [vmem:[%s3 + $0x30] sm:$0xf]
      %v3624 = vld [vmem:[%s3 + $0x34] sm:$0xf]
      %v3625 = vld [vmem:[%s3 + $0x38] sm:$0xf]
      %v3626 = vld [vmem:[%s3 + $0x3c] sm:$0xf]
      %v3627 = vld [vmem:[#allocation2 + $0x8] sm:$0x1]
      %v3628 = vld [vmem:[#allocation2 + $0x14] sm:$0x1]
      %v3629 = vld [vmem:[#allocation2 + $0x20] sm:$0x1]
      %v3630 = vld [vmem:[#allocation2 + $0x2c] sm:$0x1]
      %v3631 = vld [vmem:[#allocation2 + $0x38] sm:$0x1]
      %v3632 = vld [vmem:[#allocation2 + $0x44] sm:$0x1]
      %v3633 = vld [vmem:[#allocation2 + $0x50] sm:$0x1]
      %v3634 = vld [vmem:[#allocation2 + $0x5c] sm:$0x1]
      %v3635 = vld [vmem:[#allocation2 + $0x68] sm:$0x1]
      %v3636 = vld [vmem:[#allocation2 + $0x74] sm:$0x1]
      %v3637 = vld [vmem:[#allocation2 + $0x80] sm:$0x1]
      %v3638 = vld [vmem:[#allocation2 + $0x8c] sm:$0x1]
      %v3639 = vld [vmem:[#allocation2 + $0x98] sm:$0x1]
      %v3640 = vld [vmem:[#allocation2 + $0xa4] sm:$0x1]
      %v3641 = vld [vmem:[#allocation2 + $0xb0] sm:$0x1]
      %v3642 = vld [vmem:[#allocation2 + $0xbc] sm:$0x1]
      %vm3643 = vsmask.f32 3328
      %vm3644 = vsmask.f32 7440
      %vm3645 = vmor %vm3643, %vm3644
      %v3647 = vshrl.u32 %v3579, 16
      %v3649 = vrot.slane %v3647, 4
      %v3650 = vshll.u32 %v3579, 16
      %v3652 = vrot.slane %v3650, 5
      %v3653 = vor.u32 %v3649, %v3652
      %v3654 = vrot.slane %v3653, 4
      %v3656 = vshll.u32 %v3580, 16
      %v3658 = vrot.slane %v3656, 5
      %v3659 = vsel %vm3645, %v3654, %v3658
      %v3660 = vshrl.u32 %v3580, 16
      %v3662 = vrot.slane %v3660, 4
      %v3663 = vor.u32 %v3662, %v3658
      %v3664 = vrot.slane %v3663, 4
      %v3666 = vshll.u32 %v3627, 16
      %v3668 = vrot.slane %v3666, 5
      %v3669 = vsel %vm3645, %v3664, %v3668
      %v3671 = vshrl.u32 %v3581, 16
      %v3673 = vrot.slane %v3671, 4
      %v3674 = vshll.u32 %v3581, 16
      %v3676 = vrot.slane %v3674, 5
      %v3677 = vor.u32 %v3673, %v3676
      %v3678 = vrot.slane %v3677, 4
      %v3680 = vshll.u32 %v3582, 16
      %v3682 = vrot.slane %v3680, 5
      %v3683 = vsel %vm3645, %v3678, %v3682
      %v3684 = vshrl.u32 %v3582, 16
      %v3686 = vrot.slane %v3684, 4
      %v3687 = vor.u32 %v3686, %v3682
      %v3688 = vrot.slane %v3687, 4
      %v3690 = vshll.u32 %v3628, 16
      %v3692 = vrot.slane %v3690, 5
      %v3693 = vsel %vm3645, %v3688, %v3692
      %v3695 = vshrl.u32 %v3583, 16
      %v3697 = vrot.slane %v3695, 4
      %v3698 = vshll.u32 %v3583, 16
      %v3700 = vrot.slane %v3698, 5
      %v3701 = vor.u32 %v3697, %v3700
      %v3702 = vrot.slane %v3701, 4
      %v3704 = vshll.u32 %v3584, 16
      %v3706 = vrot.slane %v3704, 5
      %v3707 = vsel %vm3645, %v3702, %v3706
      %v3708 = vshrl.u32 %v3584, 16
      %v3710 = vrot.slane %v3708, 4
      %v3711 = vor.u32 %v3710, %v3706
      %v3712 = vrot.slane %v3711, 4
      %v3714 = vshll.u32 %v3629, 16
      %v3716 = vrot.slane %v3714, 5
      %v3717 = vsel %vm3645, %v3712, %v3716
      %v3719 = vshrl.u32 %v3585, 16
      %v3721 = vrot.slane %v3719, 4
      %v3722 = vshll.u32 %v3585, 16
      %v3724 = vrot.slane %v3722, 5
      %v3725 = vor.u32 %v3721, %v3724
      %v3726 = vrot.slane %v3725, 4
      %v3728 = vshll.u32 %v3586, 16
      %v3730 = vrot.slane %v3728, 5
      %v3731 = vsel %vm3645, %v3726, %v3730
      %v3732 = vshrl.u32 %v3586, 16
      %v3734 = vrot.slane %v3732, 4
      %v3735 = vor.u32 %v3734, %v3730
      %v3736 = vrot.slane %v3735, 4
      %v3738 = vshll.u32 %v3630, 16
      %v3740 = vrot.slane %v3738, 5
      %v3741 = vsel %vm3645, %v3736, %v3740
      %v3743 = vshrl.u32 %v3587, 16
      %v3745 = vrot.slane %v3743, 4
      %v3746 = vshll.u32 %v3587, 16
      %v3748 = vrot.slane %v3746, 5
      %v3749 = vor.u32 %v3745, %v3748
      %v3750 = vrot.slane %v3749, 4
      %v3752 = vshll.u32 %v3588, 16
      %v3754 = vrot.slane %v3752, 5
      %v3755 = vsel %vm3645, %v3750, %v3754
      %v3756 = vshrl.u32 %v3588, 16
      %v3758 = vrot.slane %v3756, 4
      %v3759 = vor.u32 %v3758, %v3754
      %v3760 = vrot.slane %v3759, 4
      %v3762 = vshll.u32 %v3631, 16
      %v3764 = vrot.slane %v3762, 5
      %v3765 = vsel %vm3645, %v3760, %v3764
      %v3767 = vshrl.u32 %v3589, 16
      %v3769 = vrot.slane %v3767, 4
      %v3770 = vshll.u32 %v3589, 16
      %v3772 = vrot.slane %v3770, 5
      %v3773 = vor.u32 %v3769, %v3772
      %v3774 = vrot.slane %v3773, 4
      %v3776 = vshll.u32 %v3590, 16
      %v3778 = vrot.slane %v3776, 5
      %v3779 = vsel %vm3645, %v3774, %v3778
      %v3780 = vshrl.u32 %v3590, 16
      %v3782 = vrot.slane %v3780, 4
      %v3783 = vor.u32 %v3782, %v3778
      %v3784 = vrot.slane %v3783, 4
      %v3786 = vshll.u32 %v3632, 16
      %v3788 = vrot.slane %v3786, 5
      %v3789 = vsel %vm3645, %v3784, %v3788
      %v3791 = vshrl.u32 %v3591, 16
      %v3793 = vrot.slane %v3791, 4
      %v3794 = vshll.u32 %v3591, 16
      %v3796 = vrot.slane %v3794, 5
      %v3797 = vor.u32 %v3793, %v3796
      %v3798 = vrot.slane %v3797, 4
      %v3800 = vshll.u32 %v3592, 16
      %v3802 = vrot.slane %v3800, 5
      %v3803 = vsel %vm3645, %v3798, %v3802
      %v3804 = vshrl.u32 %v3592, 16
      %v3806 = vrot.slane %v3804, 4
      %v3807 = vor.u32 %v3806, %v3802
      %v3808 = vrot.slane %v3807, 4
      %v3810 = vshll.u32 %v3633, 16
      %v3812 = vrot.slane %v3810, 5
      %v3813 = vsel %vm3645, %v3808, %v3812
      %v3815 = vshrl.u32 %v3593, 16
      %v3817 = vrot.slane %v3815, 4
      %v3818 = vshll.u32 %v3593, 16
      %v3820 = vrot.slane %v3818, 5
      %v3821 = vor.u32 %v3817, %v3820
      %v3822 = vrot.slane %v3821, 4
      %v3824 = vshll.u32 %v3594, 16
      %v3826 = vrot.slane %v3824, 5
      %v3827 = vsel %vm3645, %v3822, %v3826
      %v3828 = vshrl.u32 %v3594, 16
      %v3830 = vrot.slane %v3828, 4
      %v3831 = vor.u32 %v3830, %v3826
      %v3832 = vrot.slane %v3831, 4
      %v3834 = vshll.u32 %v3634, 16
      %v3836 = vrot.slane %v3834, 5
      %v3837 = vsel %vm3645, %v3832, %v3836
      %v3839 = vshrl.u32 %v3595, 16
      %v3841 = vrot.slane %v3839, 4
      %v3842 = vshll.u32 %v3595, 16
      %v3844 = vrot.slane %v3842, 5
      %v3845 = vor.u32 %v3841, %v3844
      %v3846 = vrot.slane %v3845, 4
      %v3848 = vshll.u32 %v3596, 16
      %v3850 = vrot.slane %v3848, 5
      %v3851 = vsel %vm3645, %v3846, %v3850
      %v3852 = vshrl.u32 %v3596, 16
      %v3854 = vrot.slane %v3852, 4
      %v3855 = vor.u32 %v3854, %v3850
      %v3856 = vrot.slane %v3855, 4
      %v3858 = vshll.u32 %v3635, 16
      %v3860 = vrot.slane %v3858, 5
      %v3861 = vsel %vm3645, %v3856, %v3860
      %v3863 = vshrl.u32 %v3597, 16
      %v3865 = vrot.slane %v3863, 4
      %v3866 = vshll.u32 %v3597, 16
      %v3868 = vrot.slane %v3866, 5
      %v3869 = vor.u32 %v3865, %v3868
      %v3870 = vrot.slane %v3869, 4
      %v3872 = vshll.u32 %v3598, 16
      %v3874 = vrot.slane %v3872, 5
      %v3875 = vsel %vm3645, %v3870, %v3874
      %v3876 = vshrl.u32 %v3598, 16
      %v3878 = vrot.slane %v3876, 4
      %v3879 = vor.u32 %v3878, %v3874
      %v3880 = vrot.slane %v3879, 4
      %v3882 = vshll.u32 %v3636, 16
      %v3884 = vrot.slane %v3882, 5
      %v3885 = vsel %vm3645, %v3880, %v3884
      %v3887 = vshrl.u32 %v3599, 16
      %v3889 = vrot.slane %v3887, 4
      %v3890 = vshll.u32 %v3599, 16
      %v3892 = vrot.slane %v3890, 5
      %v3893 = vor.u32 %v3889, %v3892
      %v3894 = vrot.slane %v3893, 4
      %v3896 = vshll.u32 %v3600, 16
      %v3898 = vrot.slane %v3896, 5
      %v3899 = vsel %vm3645, %v3894, %v3898
      %v3900 = vshrl.u32 %v3600, 16
      %v3902 = vrot.slane %v3900, 4
      %v3903 = vor.u32 %v3902, %v3898
      %v3904 = vrot.slane %v3903, 4
      %v3906 = vshll.u32 %v3637, 16
      %v3908 = vrot.slane %v3906, 5
      %v3909 = vsel %vm3645, %v3904, %v3908
      %v3911 = vshrl.u32 %v3601, 16
      %v3913 = vrot.slane %v3911, 4
      %v3914 = vshll.u32 %v3601, 16
      %v3916 = vrot.slane %v3914, 5
      %v3917 = vor.u32 %v3913, %v3916
      %v3918 = vrot.slane %v3917, 4
      %v3920 = vshll.u32 %v3602, 16
      %v3922 = vrot.slane %v3920, 5
      %v3923 = vsel %vm3645, %v3918, %v3922
      %v3924 = vshrl.u32 %v3602, 16
      %v3926 = vrot.slane %v3924, 4
      %v3927 = vor.u32 %v3926, %v3922
      %v3928 = vrot.slane %v3927, 4
      %v3930 = vshll.u32 %v3638, 16
      %v3932 = vrot.slane %v3930, 5
      %v3933 = vsel %vm3645, %v3928, %v3932
      %v3935 = vshrl.u32 %v3603, 16
      %v3937 = vrot.slane %v3935, 4
      %v3938 = vshll.u32 %v3603, 16
      %v3940 = vrot.slane %v3938, 5
      %v3941 = vor.u32 %v3937, %v3940
      %v3942 = vrot.slane %v3941, 4
      %v3944 = vshll.u32 %v3604, 16
      %v3946 = vrot.slane %v3944, 5
      %v3947 = vsel %vm3645, %v3942, %v3946
      %v3948 = vshrl.u32 %v3604, 16
      %v3950 = vrot.slane %v3948, 4
      %v3951 = vor.u32 %v3950, %v3946
      %v3952 = vrot.slane %v3951, 4
      %v3954 = vshll.u32 %v3639, 16
      %v3956 = vrot.slane %v3954, 5
      %v3957 = vsel %vm3645, %v3952, %v3956
      %v3959 = vshrl.u32 %v3605, 16
      %v3961 = vrot.slane %v3959, 4
      %v3962 = vshll.u32 %v3605, 16
      %v3964 = vrot.slane %v3962, 5
      %v3965 = vor.u32 %v3961, %v3964
      %v3966 = vrot.slane %v3965, 4
      %v3968 = vshll.u32 %v3606, 16
      %v3970 = vrot.slane %v3968, 5
      %v3971 = vsel %vm3645, %v3966, %v3970
      %v3972 = vshrl.u32 %v3606, 16
      %v3974 = vrot.slane %v3972, 4
      %v3975 = vor.u32 %v3974, %v3970
      %v3976 = vrot.slane %v3975, 4
      %v3978 = vshll.u32 %v3640, 16
      %v3980 = vrot.slane %v3978, 5
      %v3981 = vsel %vm3645, %v3976, %v3980
      %v3983 = vshrl.u32 %v3607, 16
      %v3985 = vrot.slane %v3983, 4
      %v3986 = vshll.u32 %v3607, 16
      %v3988 = vrot.slane %v3986, 5
      %v3989 = vor.u32 %v3985, %v3988
      %v3990 = vrot.slane %v3989, 4
      %v3992 = vshll.u32 %v3608, 16
      %v3994 = vrot.slane %v3992, 5
      %v3995 = vsel %vm3645, %v3990, %v3994
      %v3996 = vshrl.u32 %v3608, 16
      %v3998 = vrot.slane %v3996, 4
      %v3999 = vor.u32 %v3998, %v3994
      %v4000 = vrot.slane %v3999, 4
      %v4002 = vshll.u32 %v3641, 16
      %v4004 = vrot.slane %v4002, 5
      %v4005 = vsel %vm3645, %v4000, %v4004
      %v4007 = vshrl.u32 %v3609, 16
      %v4009 = vrot.slane %v4007, 4
      %v4010 = vshll.u32 %v3609, 16
      %v4012 = vrot.slane %v4010, 5
      %v4013 = vor.u32 %v4009, %v4012
      %v4014 = vrot.slane %v4013, 4
      %v4016 = vshll.u32 %v3610, 16
      %v4018 = vrot.slane %v4016, 5
      %v4019 = vsel %vm3645, %v4014, %v4018
      %v4020 = vshrl.u32 %v3610, 16
      %v4022 = vrot.slane %v4020, 4
      %v4023 = vor.u32 %v4022, %v4018
      %v4024 = vrot.slane %v4023, 4
      %v4026 = vshll.u32 %v3642, 16
      %v4028 = vrot.slane %v4026, 5
      %v4029 = vsel %vm3645, %v4024, %v4028
      %s4030 = scalar_lea.vmem %s3, 64
      %v4031 = vld [vmem:[%s4030] sm:$0xf]
      %v4032 = vld [vmem:[%s4030 + $0x4] sm:$0xf]
      %v4033 = vld [vmem:[%s4030 + $0x8] sm:$0xf]
      %v4034 = vld [vmem:[%s4030 + $0xc] sm:$0xf]
      %v4035 = vld [vmem:[%s4030 + $0x10] sm:$0xf]
      %v4036 = vld [vmem:[%s4030 + $0x14] sm:$0xf]
      %v4037 = vld [vmem:[%s4030 + $0x18] sm:$0xf]
      %v4038 = vld [vmem:[%s4030 + $0x1c] sm:$0xf]
      %v4039 = vld [vmem:[%s4030 + $0x20] sm:$0xf]
      %v4040 = vld [vmem:[%s4030 + $0x24] sm:$0xf]
      %v4041 = vld [vmem:[%s4030 + $0x28] sm:$0xf]
      %v4042 = vld [vmem:[%s4030 + $0x2c] sm:$0xf]
      %v4043 = vld [vmem:[%s4030 + $0x30] sm:$0xf]
      %v4044 = vld [vmem:[%s4030 + $0x34] sm:$0xf]
      %v4045 = vld [vmem:[%s4030 + $0x38] sm:$0xf]
      %v4046 = vld [vmem:[%s4030 + $0x3c] sm:$0xf]
      %v4047 = vunpack.c.l.b16 %v3659
      %v4048 = vunpack.c.l.b16 %v3669
      %v4049 = vunpack.c.l.b16 %v3683
      %v4050 = vunpack.c.l.b16 %v3693
      %v4051 = vunpack.c.l.b16 %v3707
      %v4052 = vunpack.c.l.b16 %v3717
      %v4053 = vunpack.c.l.b16 %v3731
      %v4054 = vunpack.c.l.b16 %v3741
      %v4055 = vunpack.c.l.b16 %v3755
      %v4056 = vunpack.c.l.b16 %v3765
      %v4057 = vunpack.c.l.b16 %v3779
      %v4058 = vunpack.c.l.b16 %v3789
      %v4059 = vunpack.c.l.b16 %v3803
      %v4060 = vunpack.c.l.b16 %v3813
      %v4061 = vunpack.c.l.b16 %v3827
      %v4062 = vunpack.c.l.b16 %v3837
      %v4063 = vunpack.c.l.b16 %v3851
      %v4064 = vunpack.c.l.b16 %v3861
      %v4065 = vunpack.c.l.b16 %v3875
      %v4066 = vunpack.c.l.b16 %v3885
      %v4067 = vunpack.c.l.b16 %v3899
      %v4068 = vunpack.c.l.b16 %v3909
      %v4069 = vunpack.c.l.b16 %v3923
      %v4070 = vunpack.c.l.b16 %v3933
      %v4071 = vunpack.c.l.b16 %v3947
      %v4072 = vunpack.c.l.b16 %v3957
      %v4073 = vunpack.c.l.b16 %v3971
      %v4074 = vunpack.c.l.b16 %v3981
      %v4075 = vunpack.c.l.b16 %v3995
      %v4076 = vunpack.c.l.b16 %v4005
      %v4077 = vunpack.c.l.b16 %v4019
      %v4078 = vunpack.c.l.b16 %v4029
      %v4079 = vpack.c.b16 %v4048, %v4047
      %v4080 = vpack.c.b16 %v4050, %v4049
      %v4081 = vpack.c.b16 %v4052, %v4051
      %v4082 = vpack.c.b16 %v4054, %v4053
      %v4083 = vpack.c.b16 %v4056, %v4055
      %v4084 = vpack.c.b16 %v4058, %v4057
      %v4085 = vpack.c.b16 %v4060, %v4059
      %v4086 = vpack.c.b16 %v4062, %v4061
      %v4087 = vpack.c.b16 %v4064, %v4063
      %v4088 = vpack.c.b16 %v4066, %v4065
      %v4089 = vpack.c.b16 %v4068, %v4067
      %v4090 = vpack.c.b16 %v4070, %v4069
      %v4091 = vpack.c.b16 %v4072, %v4071
      %v4092 = vpack.c.b16 %v4074, %v4073
      %v4093 = vpack.c.b16 %v4076, %v4075
      %v4094 = vpack.c.b16 %v4078, %v4077
      %v4127 = vunpack.c.l.b16 %v4031
      %v4128 = vunpack.c.l.b16 %v4032
      %v4129 = vunpack.c.l.b16 %v4033
      %v4130 = vunpack.c.l.b16 %v4034
      %v4131 = vunpack.c.l.b16 %v4035
      %v4132 = vunpack.c.l.b16 %v4036
      %v4133 = vunpack.c.l.b16 %v4037
      %v4134 = vunpack.c.l.b16 %v4038
      %v4135 = vunpack.c.l.b16 %v4039
      %v4136 = vunpack.c.l.b16 %v4040
      %v4137 = vunpack.c.l.b16 %v4041
      %v4138 = vunpack.c.l.b16 %v4042
      %v4139 = vunpack.c.l.b16 %v4043
      %v4140 = vunpack.c.l.b16 %v4044
      %v4141 = vunpack.c.l.b16 %v4045
      %v4142 = vunpack.c.l.b16 %v4046
      %v4143 = vpack.c.b16 %v4128, %v4127
      %v4144 = vpack.c.b16 %v4130, %v4129
      %v4145 = vpack.c.b16 %v4132, %v4131
      %v4146 = vpack.c.b16 %v4134, %v4133
      %v4147 = vpack.c.b16 %v4136, %v4135
      %v4148 = vpack.c.b16 %v4138, %v4137
      %v4149 = vpack.c.b16 %v4140, %v4139
      %v4150 = vpack.c.b16 %v4142, %v4141
      %4159 = vmatprep.subr.bf16.mxu0 0
      %4160 = vmatpush1.bf16.msra.mxu0 %v4150
      %4161 = vmatprep.subr.bf16.mxu0 0
      %4162 = vmatpush1.bf16.msra.mxu0 %v4149
      %4163 = vmatprep.subr.bf16.mxu0 0
      %4164 = vmatpush1.bf16.msra.mxu0 %v4148
      %4165 = vmatprep.subr.bf16.mxu0 0
      %4166 = vmatpush1.bf16.msra.mxu0 %v4147
      %4167 = vmatprep.subr.bf16.mxu0 0
      %4168 = vmatpush1.bf16.msra.mxu0 %v4146
      %4169 = vmatprep.subr.bf16.mxu0 0
      %4170 = vmatpush1.bf16.msra.mxu0 %v4145
      %4171 = vmatprep.subr.bf16.mxu0 0
      %4172 = vmatpush1.bf16.msra.mxu0 %v4144
      %4173 = vmatprep.subr.bf16.mxu0 0
      %4174 = vmatpush1.bf16.msra.mxu0 %v4143
      %4175 = vmatprep.subr.bf16.mxu0 0
      %4176 = vmatpush2.bf16.msra.mxu0 0
      %4177 = vmatprep.subr.bf16.mxu0 0
      %4178 = vmatpush2.bf16.msra.mxu0 0
      %4179 = vmatprep.subr.bf16.mxu0 0
      %4180 = vmatpush2.bf16.msra.mxu0 0
      %4181 = vmatprep.subr.bf16.mxu0 0
      %4182 = vmatpush2.bf16.msra.mxu0 0
      %4183 = vmatprep.subr.bf16.mxu0 0
      %4184 = vmatpush2.bf16.msra.mxu0 0
      %4185 = vmatprep.subr.bf16.mxu0 0
      %4186 = vmatpush2.bf16.msra.mxu0 0
      %4187 = vmatprep.subr.bf16.mxu0 0
      %4188 = vmatpush2.bf16.msra.mxu0 0
      %4189 = vmatprep.subr.bf16.mxu0 0
      %4190 = vmatpush2.bf16.msra.mxu0 0
      %4191 = vmatprep.mubr.bf16.mxu0 0
      %4192 = vmatmul.mubr.bf16.gmra.mxu0 %v4079
      %v4193 = vpop.f32.mrf.mxu0
      %v4194 = vadd.f32 0.0, %v4193
      %v4195 = vpop.f32.mrf.mxu0
      %v4196 = vpop.f32.mrf.mxu0
      %v4197 = vadd.f32 0.0, %v4196
      %v4198 = vpop.f32.mrf.mxu0
      %4199 = vmatprep.mubr.bf16.mxu0 0
      %4200 = vmatmul.mubr.bf16.gmra.mxu0 %v4080
      %v4201 = vpop.f32.mrf.mxu0
      %v4202 = vadd.f32 0.0, %v4201
      %v4203 = vpop.f32.mrf.mxu0
      %v4204 = vpop.f32.mrf.mxu0
      %v4205 = vadd.f32 0.0, %v4204
      %v4206 = vpop.f32.mrf.mxu0
      %4207 = vmatprep.mubr.bf16.mxu0 0
      %4208 = vmatmul.mubr.bf16.gmra.mxu0 %v4081
      %v4209 = vpop.f32.mrf.mxu0
      %v4210 = vadd.f32 0.0, %v4209
      %v4211 = vpop.f32.mrf.mxu0
      %v4212 = vpop.f32.mrf.mxu0
      %v4213 = vadd.f32 0.0, %v4212
      %v4214 = vpop.f32.mrf.mxu0
      %4215 = vmatprep.mubr.bf16.mxu0 0
      %4216 = vmatmul.mubr.bf16.gmra.mxu0 %v4082
      %v4217 = vpop.f32.mrf.mxu0
      %v4218 = vadd.f32 0.0, %v4217
      %v4219 = vpop.f32.mrf.mxu0
      %v4220 = vpop.f32.mrf.mxu0
      %v4221 = vadd.f32 0.0, %v4220
      %v4222 = vpop.f32.mrf.mxu0
      %4223 = vmatprep.mubr.bf16.mxu0 0
      %4224 = vmatmul.mubr.bf16.gmra.mxu0 %v4083
      %v4225 = vpop.f32.mrf.mxu0
      %v4226 = vadd.f32 0.0, %v4225
      %v4227 = vpop.f32.mrf.mxu0
      %v4228 = vpop.f32.mrf.mxu0
      %v4229 = vadd.f32 0.0, %v4228
      %v4230 = vpop.f32.mrf.mxu0
      %4231 = vmatprep.mubr.bf16.mxu0 0
      %4232 = vmatmul.mubr.bf16.gmra.mxu0 %v4084
      %v4233 = vpop.f32.mrf.mxu0
      %v4234 = vadd.f32 0.0, %v4233
      %v4235 = vpop.f32.mrf.mxu0
      %v4236 = vpop.f32.mrf.mxu0
      %v4237 = vadd.f32 0.0, %v4236
      %v4238 = vpop.f32.mrf.mxu0
      %4239 = vmatprep.mubr.bf16.mxu0 0
      %4240 = vmatmul.mubr.bf16.gmra.mxu0 %v4085
      %v4241 = vpop.f32.mrf.mxu0
      %v4242 = vadd.f32 0.0, %v4241
      %v4243 = vpop.f32.mrf.mxu0
      %v4244 = vpop.f32.mrf.mxu0
      %v4245 = vadd.f32 0.0, %v4244
      %v4246 = vpop.f32.mrf.mxu0
      %4247 = vmatprep.mubr.bf16.mxu0 0
      %4248 = vmatmul.mubr.bf16.gmra.mxu0 %v4086
      %v4249 = vpop.f32.mrf.mxu0
      %v4250 = vadd.f32 0.0, %v4249
      %v4251 = vpop.f32.mrf.mxu0
      %v4252 = vpop.f32.mrf.mxu0
      %v4253 = vadd.f32 0.0, %v4252
      %v4254 = vpop.f32.mrf.mxu0
      %4255 = vmatprep.mubr.bf16.mxu0 0
      %4256 = vmatmul.mubr.bf16.gmra.mxu0 %v4087
      %v4257 = vpop.f32.mrf.mxu0
      %v4258 = vadd.f32 0.0, %v4257
      %v4259 = vpop.f32.mrf.mxu0
      %v4260 = vpop.f32.mrf.mxu0
      %v4261 = vadd.f32 0.0, %v4260
      %v4262 = vpop.f32.mrf.mxu0
      %4263 = vmatprep.mubr.bf16.mxu0 0
      %4264 = vmatmul.mubr.bf16.gmra.mxu0 %v4088
      %v4265 = vpop.f32.mrf.mxu0
      %v4266 = vadd.f32 0.0, %v4265
      %v4267 = vpop.f32.mrf.mxu0
      %v4268 = vpop.f32.mrf.mxu0
      %v4269 = vadd.f32 0.0, %v4268
      %v4270 = vpop.f32.mrf.mxu0
      %4271 = vmatprep.mubr.bf16.mxu0 0
      %4272 = vmatmul.mubr.bf16.gmra.mxu0 %v4089
      %v4273 = vpop.f32.mrf.mxu0
      %v4274 = vadd.f32 0.0, %v4273
      %v4275 = vpop.f32.mrf.mxu0
      %v4276 = vpop.f32.mrf.mxu0
      %v4277 = vadd.f32 0.0, %v4276
      %v4278 = vpop.f32.mrf.mxu0
      %4279 = vmatprep.mubr.bf16.mxu0 0
      %4280 = vmatmul.mubr.bf16.gmra.mxu0 %v4090
      %v4281 = vpop.f32.mrf.mxu0
      %v4282 = vadd.f32 0.0, %v4281
      %v4283 = vpop.f32.mrf.mxu0
      %v4284 = vpop.f32.mrf.mxu0
      %v4285 = vadd.f32 0.0, %v4284
      %v4286 = vpop.f32.mrf.mxu0
      %4287 = vmatprep.mubr.bf16.mxu0 0
      %4288 = vmatmul.mubr.bf16.gmra.mxu0 %v4091
      %v4289 = vpop.f32.mrf.mxu0
      %v4290 = vadd.f32 0.0, %v4289
      %v4291 = vpop.f32.mrf.mxu0
      %v4292 = vpop.f32.mrf.mxu0
      %v4293 = vadd.f32 0.0, %v4292
      %v4294 = vpop.f32.mrf.mxu0
      %4295 = vmatprep.mubr.bf16.mxu0 0
      %4296 = vmatmul.mubr.bf16.gmra.mxu0 %v4092
      %v4297 = vpop.f32.mrf.mxu0
      %v4298 = vadd.f32 0.0, %v4297
      %v4299 = vpop.f32.mrf.mxu0
      %v4300 = vpop.f32.mrf.mxu0
      %v4301 = vadd.f32 0.0, %v4300
      %v4302 = vpop.f32.mrf.mxu0
      %4303 = vmatprep.mubr.bf16.mxu0 0
      %4304 = vmatmul.mubr.bf16.gmra.mxu0 %v4093
      %v4305 = vpop.f32.mrf.mxu0
      %v4306 = vadd.f32 0.0, %v4305
      %v4307 = vpop.f32.mrf.mxu0
      %v4308 = vpop.f32.mrf.mxu0
      %v4309 = vadd.f32 0.0, %v4308
      %v4310 = vpop.f32.mrf.mxu0
      %4311 = vmatprep.mubr.bf16.mxu0 0
      %4312 = vmatmul.mubr.bf16.gmra.mxu0 %v4094
      %v4313 = vpop.f32.mrf.mxu0
      %v4314 = vadd.f32 0.0, %v4313
      %v4315 = vpop.f32.mrf.mxu0
      %v4316 = vpop.f32.mrf.mxu0
      %v4317 = vadd.f32 0.0, %v4316
      %v4318 = vpop.f32.mrf.mxu0
      %4319 = vdwg.mxu0
      %v4352 = vunpack.c.l.b16 %v3579
      %v4353 = vunpack.c.l.b16 %v3580
      %v4354 = vunpack.c.l.b16 %v3581
      %v4355 = vunpack.c.l.b16 %v3582
      %v4356 = vunpack.c.l.b16 %v3583
      %v4357 = vunpack.c.l.b16 %v3584
      %v4358 = vunpack.c.l.b16 %v3585
      %v4359 = vunpack.c.l.b16 %v3586
      %v4360 = vunpack.c.l.b16 %v3587
      %v4361 = vunpack.c.l.b16 %v3588
      %v4362 = vunpack.c.l.b16 %v3589
      %v4363 = vunpack.c.l.b16 %v3590
      %v4364 = vunpack.c.l.b16 %v3591
      %v4365 = vunpack.c.l.b16 %v3592
      %v4366 = vunpack.c.l.b16 %v3593
      %v4367 = vunpack.c.l.b16 %v3594
      %v4368 = vunpack.c.l.b16 %v3595
      %v4369 = vunpack.c.l.b16 %v3596
      %v4370 = vunpack.c.l.b16 %v3597
      %v4371 = vunpack.c.l.b16 %v3598
      %v4372 = vunpack.c.l.b16 %v3599
      %v4373 = vunpack.c.l.b16 %v3600
      %v4374 = vunpack.c.l.b16 %v3601
      %v4375 = vunpack.c.l.b16 %v3602
      %v4376 = vunpack.c.l.b16 %v3603
      %v4377 = vunpack.c.l.b16 %v3604
      %v4378 = vunpack.c.l.b16 %v3605
      %v4379 = vunpack.c.l.b16 %v3606
      %v4380 = vunpack.c.l.b16 %v3607
      %v4381 = vunpack.c.l.b16 %v3608
      %v4382 = vunpack.c.l.b16 %v3609
      %v4383 = vunpack.c.l.b16 %v3610
      %v4384 = vpack.c.b16 %v4353, %v4352
      %v4385 = vpack.c.b16 %v4355, %v4354
      %v4386 = vpack.c.b16 %v4357, %v4356
      %v4387 = vpack.c.b16 %v4359, %v4358
      %v4388 = vpack.c.b16 %v4361, %v4360
      %v4389 = vpack.c.b16 %v4363, %v4362
      %v4390 = vpack.c.b16 %v4365, %v4364
      %v4391 = vpack.c.b16 %v4367, %v4366
      %v4392 = vpack.c.b16 %v4369, %v4368
      %v4393 = vpack.c.b16 %v4371, %v4370
      %v4394 = vpack.c.b16 %v4373, %v4372
      %v4395 = vpack.c.b16 %v4375, %v4374
      %v4396 = vpack.c.b16 %v4377, %v4376
      %v4397 = vpack.c.b16 %v4379, %v4378
      %v4398 = vpack.c.b16 %v4381, %v4380
      %v4399 = vpack.c.b16 %v4383, %v4382
      %v4432 = vunpack.c.l.b16 %v3611
      %v4433 = vunpack.c.l.b16 %v3612
      %v4434 = vunpack.c.l.b16 %v3613
      %v4435 = vunpack.c.l.b16 %v3614
      %v4436 = vunpack.c.l.b16 %v3615
      %v4437 = vunpack.c.l.b16 %v3616
      %v4438 = vunpack.c.l.b16 %v3617
      %v4439 = vunpack.c.l.b16 %v3618
      %v4440 = vunpack.c.l.b16 %v3619
      %v4441 = vunpack.c.l.b16 %v3620
      %v4442 = vunpack.c.l.b16 %v3621
      %v4443 = vunpack.c.l.b16 %v3622
      %v4444 = vunpack.c.l.b16 %v3623
      %v4445 = vunpack.c.l.b16 %v3624
      %v4446 = vunpack.c.l.b16 %v3625
      %v4447 = vunpack.c.l.b16 %v3626
      %v4448 = vpack.c.b16 %v4433, %v4432
      %v4449 = vpack.c.b16 %v4435, %v4434
      %v4450 = vpack.c.b16 %v4437, %v4436
      %v4451 = vpack.c.b16 %v4439, %v4438
      %v4452 = vpack.c.b16 %v4441, %v4440
      %v4453 = vpack.c.b16 %v4443, %v4442
      %v4454 = vpack.c.b16 %v4445, %v4444
      %v4455 = vpack.c.b16 %v4447, %v4446
      %4464 = vmatprep.subr.bf16.mxu0 0
      %4465 = vmatpush1.bf16.msra.mxu0 %v4455
      %4466 = vmatprep.subr.bf16.mxu0 0
      %4467 = vmatpush1.bf16.msra.mxu0 %v4454
      %4468 = vmatprep.subr.bf16.mxu0 0
      %4469 = vmatpush1.bf16.msra.mxu0 %v4453
      %4470 = vmatprep.subr.bf16.mxu0 0
      %4471 = vmatpush1.bf16.msra.mxu0 %v4452
      %4472 = vmatprep.subr.bf16.mxu0 0
      %4473 = vmatpush1.bf16.msra.mxu0 %v4451
      %4474 = vmatprep.subr.bf16.mxu0 0
      %4475 = vmatpush1.bf16.msra.mxu0 %v4450
      %4476 = vmatprep.subr.bf16.mxu0 0
      %4477 = vmatpush1.bf16.msra.mxu0 %v4449
      %4478 = vmatprep.subr.bf16.mxu0 0
      %4479 = vmatpush1.bf16.msra.mxu0 %v4448
      %4480 = vmatprep.subr.bf16.mxu0 0
      %4481 = vmatpush2.bf16.msra.mxu0 0
      %4482 = vmatprep.subr.bf16.mxu0 0
      %4483 = vmatpush2.bf16.msra.mxu0 0
      %4484 = vmatprep.subr.bf16.mxu0 0
      %4485 = vmatpush2.bf16.msra.mxu0 0
      %4486 = vmatprep.subr.bf16.mxu0 0
      %4487 = vmatpush2.bf16.msra.mxu0 0
      %4488 = vmatprep.subr.bf16.mxu0 0
      %4489 = vmatpush2.bf16.msra.mxu0 0
      %4490 = vmatprep.subr.bf16.mxu0 0
      %4491 = vmatpush2.bf16.msra.mxu0 0
      %4492 = vmatprep.subr.bf16.mxu0 0
      %4493 = vmatpush2.bf16.msra.mxu0 0
      %4494 = vmatprep.subr.bf16.mxu0 0
      %4495 = vmatpush2.bf16.msra.mxu0 0
      %4496 = vmatprep.mubr.bf16.mxu0 0
      %4497 = vmatmul.mubr.bf16.gmra.mxu0 %v4384
      %v4498 = vpop.f32.mrf.mxu0
      %v4499 = vadd.f32 %v4194, %v4498
      %v4500 = vpop.f32.mrf.mxu0
      %v4501 = vpop.f32.mrf.mxu0
      %v4502 = vadd.f32 %v4197, %v4501
      %v4503 = vpop.f32.mrf.mxu0
      %4504 = vmatprep.mubr.bf16.mxu0 0
      %4505 = vmatmul.mubr.bf16.gmra.mxu0 %v4385
      %v4506 = vpop.f32.mrf.mxu0
      %v4507 = vadd.f32 %v4202, %v4506
      %v4508 = vpop.f32.mrf.mxu0
      %v4509 = vpop.f32.mrf.mxu0
      %v4510 = vadd.f32 %v4205, %v4509
      %v4511 = vpop.f32.mrf.mxu0
      %4512 = vmatprep.mubr.bf16.mxu0 0
      %4513 = vmatmul.mubr.bf16.gmra.mxu0 %v4386
      %v4514 = vpop.f32.mrf.mxu0
      %v4515 = vadd.f32 %v4210, %v4514
      %v4516 = vpop.f32.mrf.mxu0
      %v4517 = vpop.f32.mrf.mxu0
      %v4518 = vadd.f32 %v4213, %v4517
      %v4519 = vpop.f32.mrf.mxu0
      %4520 = vmatprep.mubr.bf16.mxu0 0
      %4521 = vmatmul.mubr.bf16.gmra.mxu0 %v4387
      %v4522 = vpop.f32.mrf.mxu0
      %v4523 = vadd.f32 %v4218, %v4522
      %v4524 = vpop.f32.mrf.mxu0
      %v4525 = vpop.f32.mrf.mxu0
      %v4526 = vadd.f32 %v4221, %v4525
      %v4527 = vpop.f32.mrf.mxu0
      %4528 = vmatprep.mubr.bf16.mxu0 0
      %4529 = vmatmul.mubr.bf16.gmra.mxu0 %v4388
      %v4530 = vpop.f32.mrf.mxu0
      %v4531 = vadd.f32 %v4226, %v4530
      %v4532 = vpop.f32.mrf.mxu0
      %v4533 = vpop.f32.mrf.mxu0
      %v4534 = vadd.f32 %v4229, %v4533
      %v4535 = vpop.f32.mrf.mxu0
      %4536 = vmatprep.mubr.bf16.mxu0 0
      %4537 = vmatmul.mubr.bf16.gmra.mxu0 %v4389
      %v4538 = vpop.f32.mrf.mxu0
      %v4539 = vadd.f32 %v4234, %v4538
      %v4540 = vpop.f32.mrf.mxu0
      %v4541 = vpop.f32.mrf.mxu0
      %v4542 = vadd.f32 %v4237, %v4541
      %v4543 = vpop.f32.mrf.mxu0
      %4544 = vmatprep.mubr.bf16.mxu0 0
      %4545 = vmatmul.mubr.bf16.gmra.mxu0 %v4390
      %v4546 = vpop.f32.mrf.mxu0
      %v4547 = vadd.f32 %v4242, %v4546
      %v4548 = vpop.f32.mrf.mxu0
      %v4549 = vpop.f32.mrf.mxu0
      %v4550 = vadd.f32 %v4245, %v4549
      %v4551 = vpop.f32.mrf.mxu0
      %4552 = vmatprep.mubr.bf16.mxu0 0
      %4553 = vmatmul.mubr.bf16.gmra.mxu0 %v4391
      %v4554 = vpop.f32.mrf.mxu0
      %v4555 = vadd.f32 %v4250, %v4554
      %v4556 = vpop.f32.mrf.mxu0
      %v4557 = vpop.f32.mrf.mxu0
      %v4558 = vadd.f32 %v4253, %v4557
      %v4559 = vpop.f32.mrf.mxu0
      %4560 = vmatprep.mubr.bf16.mxu0 0
      %4561 = vmatmul.mubr.bf16.gmra.mxu0 %v4392
      %v4562 = vpop.f32.mrf.mxu0
      %v4563 = vadd.f32 %v4258, %v4562
      %v4564 = vpop.f32.mrf.mxu0
      %v4565 = vpop.f32.mrf.mxu0
      %v4566 = vadd.f32 %v4261, %v4565
      %v4567 = vpop.f32.mrf.mxu0
      %4568 = vmatprep.mubr.bf16.mxu0 0
      %4569 = vmatmul.mubr.bf16.gmra.mxu0 %v4393
      %v4570 = vpop.f32.mrf.mxu0
      %v4571 = vadd.f32 %v4266, %v4570
      %v4572 = vpop.f32.mrf.mxu0
      %v4573 = vpop.f32.mrf.mxu0
      %v4574 = vadd.f32 %v4269, %v4573
      %v4575 = vpop.f32.mrf.mxu0
      %4576 = vmatprep.mubr.bf16.mxu0 0
      %4577 = vmatmul.mubr.bf16.gmra.mxu0 %v4394
      %v4578 = vpop.f32.mrf.mxu0
      %v4579 = vadd.f32 %v4274, %v4578
      %v4580 = vpop.f32.mrf.mxu0
      %v4581 = vpop.f32.mrf.mxu0
      %v4582 = vadd.f32 %v4277, %v4581
      %v4583 = vpop.f32.mrf.mxu0
      %4584 = vmatprep.mubr.bf16.mxu0 0
      %4585 = vmatmul.mubr.bf16.gmra.mxu0 %v4395
      %v4586 = vpop.f32.mrf.mxu0
      %v4587 = vadd.f32 %v4282, %v4586
      %v4588 = vpop.f32.mrf.mxu0
      %v4589 = vpop.f32.mrf.mxu0
      %v4590 = vadd.f32 %v4285, %v4589
      %v4591 = vpop.f32.mrf.mxu0
      %4592 = vmatprep.mubr.bf16.mxu0 0
      %4593 = vmatmul.mubr.bf16.gmra.mxu0 %v4396
      %v4594 = vpop.f32.mrf.mxu0
      %v4595 = vadd.f32 %v4290, %v4594
      %v4596 = vpop.f32.mrf.mxu0
      %v4597 = vpop.f32.mrf.mxu0
      %v4598 = vadd.f32 %v4293, %v4597
      %v4599 = vpop.f32.mrf.mxu0
      %4600 = vmatprep.mubr.bf16.mxu0 0
      %4601 = vmatmul.mubr.bf16.gmra.mxu0 %v4397
      %v4602 = vpop.f32.mrf.mxu0
      %v4603 = vadd.f32 %v4298, %v4602
      %v4604 = vpop.f32.mrf.mxu0
      %v4605 = vpop.f32.mrf.mxu0
      %v4606 = vadd.f32 %v4301, %v4605
      %v4607 = vpop.f32.mrf.mxu0
      %4608 = vmatprep.mubr.bf16.mxu0 0
      %4609 = vmatmul.mubr.bf16.gmra.mxu0 %v4398
      %v4610 = vpop.f32.mrf.mxu0
      %v4611 = vadd.f32 %v4306, %v4610
      %v4612 = vpop.f32.mrf.mxu0
      %v4613 = vpop.f32.mrf.mxu0
      %v4614 = vadd.f32 %v4309, %v4613
      %v4615 = vpop.f32.mrf.mxu0
      %4616 = vmatprep.mubr.bf16.mxu0 0
      %4617 = vmatmul.mubr.bf16.gmra.mxu0 %v4399
      %v4618 = vpop.f32.mrf.mxu0
      %v4619 = vadd.f32 %v4314, %v4618
      %v4620 = vpop.f32.mrf.mxu0
      %v4621 = vpop.f32.mrf.mxu0
      %v4622 = vadd.f32 %v4317, %v4621
      %v4623 = vpop.f32.mrf.mxu0
      %4624 = vdwg.mxu0
      %v4625 = vld [vmem:[#allocation2] sm:$0xe]
      %v4626 = vld [vmem:[#allocation2 + $0xc] sm:$0xe]
      %v4627 = vld [vmem:[#allocation2 + $0x18] sm:$0xe]
      %v4628 = vld [vmem:[#allocation2 + $0x24] sm:$0xe]
      %v4629 = vld [vmem:[#allocation2 + $0x30] sm:$0xe]
      %v4630 = vld [vmem:[#allocation2 + $0x3c] sm:$0xe]
      %v4631 = vld [vmem:[#allocation2 + $0x48] sm:$0xe]
      %v4632 = vld [vmem:[#allocation2 + $0x54] sm:$0xe]
      %v4633 = vld [vmem:[#allocation2 + $0x60] sm:$0xe]
      %v4634 = vld [vmem:[#allocation2 + $0x6c] sm:$0xe]
      %v4635 = vld [vmem:[#allocation2 + $0x78] sm:$0xe]
      %v4636 = vld [vmem:[#allocation2 + $0x84] sm:$0xe]
      %v4637 = vld [vmem:[#allocation2 + $0x90] sm:$0xe]
      %v4638 = vld [vmem:[#allocation2 + $0x9c] sm:$0xe]
      %v4639 = vld [vmem:[#allocation2 + $0xa8] sm:$0xe]
      %v4640 = vld [vmem:[#allocation2 + $0xb4] sm:$0xe]
      %vm4673 = vcmask 1042432
      %vm4674 = vcmask 1046532
      %vm4675 = vmor %vm4673, %vm4674
      %v4676 = vrot.slane %v4625, 5
      %v4677 = vrot.slane %v4676, 4
      %v4678 = vrot.slane %v3580, 5
      %v4679 = vsel %vm4675, %v4677, %v4678
      %v4680 = vrot.slane %v4678, 4
      %v4681 = vrot.slane %v3627, 5
      %v4682 = vsel %vm4675, %v4680, %v4681
      %v4683 = vrot.slane %v4626, 5
      %v4684 = vrot.slane %v4683, 4
      %v4685 = vrot.slane %v3582, 5
      %v4686 = vsel %vm4675, %v4684, %v4685
      %v4687 = vrot.slane %v4685, 4
      %v4688 = vrot.slane %v3628, 5
      %v4689 = vsel %vm4675, %v4687, %v4688
      %v4690 = vrot.slane %v4627, 5
      %v4691 = vrot.slane %v4690, 4
      %v4692 = vrot.slane %v3584, 5
      %v4693 = vsel %vm4675, %v4691, %v4692
      %v4694 = vrot.slane %v4692, 4
      %v4695 = vrot.slane %v3629, 5
      %v4696 = vsel %vm4675, %v4694, %v4695
      %v4697 = vrot.slane %v4628, 5
      %v4698 = vrot.slane %v4697, 4
      %v4699 = vrot.slane %v3586, 5
      %v4700 = vsel %vm4675, %v4698, %v4699
      %v4701 = vrot.slane %v4699, 4
      %v4702 = vrot.slane %v3630, 5
      %v4703 = vsel %vm4675, %v4701, %v4702
      %v4704 = vrot.slane %v4629, 5
      %v4705 = vrot.slane %v4704, 4
      %v4706 = vrot.slane %v3588, 5
      %v4707 = vsel %vm4675, %v4705, %v4706
      %v4708 = vrot.slane %v4706, 4
      %v4709 = vrot.slane %v3631, 5
      %v4710 = vsel %vm4675, %v4708, %v4709
      %v4711 = vrot.slane %v4630, 5
      %v4712 = vrot.slane %v4711, 4
      %v4713 = vrot.slane %v3590, 5
      %v4714 = vsel %vm4675, %v4712, %v4713
      %v4715 = vrot.slane %v4713, 4
      %v4716 = vrot.slane %v3632, 5
      %v4717 = vsel %vm4675, %v4715, %v4716
      %v4718 = vrot.slane %v4631, 5
      %v4719 = vrot.slane %v4718, 4
      %v4720 = vrot.slane %v3592, 5
      %v4721 = vsel %vm4675, %v4719, %v4720
      %v4722 = vrot.slane %v4720, 4
      %v4723 = vrot.slane %v3633, 5
      %v4724 = vsel %vm4675, %v4722, %v4723
      %v4725 = vrot.slane %v4632, 5
      %v4726 = vrot.slane %v4725, 4
      %v4727 = vrot.slane %v3594, 5
      %v4728 = vsel %vm4675, %v4726, %v4727
      %v4729 = vrot.slane %v4727, 4
      %v4730 = vrot.slane %v3634, 5
      %v4731 = vsel %vm4675, %v4729, %v4730
      %v4732 = vrot.slane %v4633, 5
      %v4733 = vrot.slane %v4732, 4
      %v4734 = vrot.slane %v3596, 5
      %v4735 = vsel %vm4675, %v4733, %v4734
      %v4736 = vrot.slane %v4734, 4
      %v4737 = vrot.slane %v3635, 5
      %v4738 = vsel %vm4675, %v4736, %v4737
      %v4739 = vrot.slane %v4634, 5
      %v4740 = vrot.slane %v4739, 4
      %v4741 = vrot.slane %v3598, 5
      %v4742 = vsel %vm4675, %v4740, %v4741
      %v4743 = vrot.slane %v4741, 4
      %v4744 = vrot.slane %v3636, 5
      %v4745 = vsel %vm4675, %v4743, %v4744
      %v4746 = vrot.slane %v4635, 5
      %v4747 = vrot.slane %v4746, 4
      %v4748 = vrot.slane %v3600, 5
      %v4749 = vsel %vm4675, %v4747, %v4748
      %v4750 = vrot.slane %v4748, 4
      %v4751 = vrot.slane %v3637, 5
      %v4752 = vsel %vm4675, %v4750, %v4751
      %v4753 = vrot.slane %v4636, 5
      %v4754 = vrot.slane %v4753, 4
      %v4755 = vrot.slane %v3602, 5
      %v4756 = vsel %vm4675, %v4754, %v4755
      %v4757 = vrot.slane %v4755, 4
      %v4758 = vrot.slane %v3638, 5
      %v4759 = vsel %vm4675, %v4757, %v4758
      %v4760 = vrot.slane %v4637, 5
      %v4761 = vrot.slane %v4760, 4
      %v4762 = vrot.slane %v3604, 5
      %v4763 = vsel %vm4675, %v4761, %v4762
      %v4764 = vrot.slane %v4762, 4
      %v4765 = vrot.slane %v3639, 5
      %v4766 = vsel %vm4675, %v4764, %v4765
      %v4767 = vrot.slane %v4638, 5
      %v4768 = vrot.slane %v4767, 4
      %v4769 = vrot.slane %v3606, 5
      %v4770 = vsel %vm4675, %v4768, %v4769
      %v4771 = vrot.slane %v4769, 4
      %v4772 = vrot.slane %v3640, 5
      %v4773 = vsel %vm4675, %v4771, %v4772
      %v4774 = vrot.slane %v4639, 5
      %v4775 = vrot.slane %v4774, 4
      %v4776 = vrot.slane %v3608, 5
      %v4777 = vsel %vm4675, %v4775, %v4776
      %v4778 = vrot.slane %v4776, 4
      %v4779 = vrot.slane %v3641, 5
      %v4780 = vsel %vm4675, %v4778, %v4779
      %v4781 = vrot.slane %v4640, 5
      %v4782 = vrot.slane %v4781, 4
      %v4783 = vrot.slane %v3610, 5
      %v4784 = vsel %vm4675, %v4782, %v4783
      %v4785 = vrot.slane %v4783, 4
      %v4786 = vrot.slane %v3642, 5
      %v4787 = vsel %vm4675, %v4785, %v4786
      %s4788 = scalar_lea.vmem %s3, 128
      %v4789 = vld [vmem:[%s4788] sm:$0xf]
      %v4790 = vld [vmem:[%s4788 + $0x4] sm:$0xf]
      %v4791 = vld [vmem:[%s4788 + $0x8] sm:$0xf]
      %v4792 = vld [vmem:[%s4788 + $0xc] sm:$0xf]
      %v4793 = vld [vmem:[%s4788 + $0x10] sm:$0xf]
      %v4794 = vld [vmem:[%s4788 + $0x14] sm:$0xf]
      %v4795 = vld [vmem:[%s4788 + $0x18] sm:$0xf]
      %v4796 = vld [vmem:[%s4788 + $0x1c] sm:$0xf]
      %v4797 = vld [vmem:[%s4788 + $0x20] sm:$0xf]
      %v4798 = vld [vmem:[%s4788 + $0x24] sm:$0xf]
      %v4799 = vld [vmem:[%s4788 + $0x28] sm:$0xf]
      %v4800 = vld [vmem:[%s4788 + $0x2c] sm:$0xf]
      %v4801 = vld [vmem:[%s4788 + $0x30] sm:$0xf]
      %v4802 = vld [vmem:[%s4788 + $0x34] sm:$0xf]
      %v4803 = vld [vmem:[%s4788 + $0x38] sm:$0xf]
      %v4804 = vld [vmem:[%s4788 + $0x3c] sm:$0xf]
      %v4805 = vunpack.c.l.b16 %v4679
      %v4806 = vunpack.c.l.b16 %v4682
      %v4807 = vunpack.c.l.b16 %v4686
      %v4808 = vunpack.c.l.b16 %v4689
      %v4809 = vunpack.c.l.b16 %v4693
      %v4810 = vunpack.c.l.b16 %v4696
      %v4811 = vunpack.c.l.b16 %v4700
      %v4812 = vunpack.c.l.b16 %v4703
      %v4813 = vunpack.c.l.b16 %v4707
      %v4814 = vunpack.c.l.b16 %v4710
      %v4815 = vunpack.c.l.b16 %v4714
      %v4816 = vunpack.c.l.b16 %v4717
      %v4817 = vunpack.c.l.b16 %v4721
      %v4818 = vunpack.c.l.b16 %v4724
      %v4819 = vunpack.c.l.b16 %v4728
      %v4820 = vunpack.c.l.b16 %v4731
      %v4821 = vunpack.c.l.b16 %v4735
      %v4822 = vunpack.c.l.b16 %v4738
      %v4823 = vunpack.c.l.b16 %v4742
      %v4824 = vunpack.c.l.b16 %v4745
      %v4825 = vunpack.c.l.b16 %v4749
      %v4826 = vunpack.c.l.b16 %v4752
      %v4827 = vunpack.c.l.b16 %v4756
      %v4828 = vunpack.c.l.b16 %v4759
      %v4829 = vunpack.c.l.b16 %v4763
      %v4830 = vunpack.c.l.b16 %v4766
      %v4831 = vunpack.c.l.b16 %v4770
      %v4832 = vunpack.c.l.b16 %v4773
      %v4833 = vunpack.c.l.b16 %v4777
      %v4834 = vunpack.c.l.b16 %v4780
      %v4835 = vunpack.c.l.b16 %v4784
      %v4836 = vunpack.c.l.b16 %v4787
      %v4837 = vpack.c.b16 %v4806, %v4805
      %v4838 = vpack.c.b16 %v4808, %v4807
      %v4839 = vpack.c.b16 %v4810, %v4809
      %v4840 = vpack.c.b16 %v4812, %v4811
      %v4841 = vpack.c.b16 %v4814, %v4813
      %v4842 = vpack.c.b16 %v4816, %v4815
      %v4843 = vpack.c.b16 %v4818, %v4817
      %v4844 = vpack.c.b16 %v4820, %v4819
      %v4845 = vpack.c.b16 %v4822, %v4821
      %v4846 = vpack.c.b16 %v4824, %v4823
      %v4847 = vpack.c.b16 %v4826, %v4825
      %v4848 = vpack.c.b16 %v4828, %v4827
      %v4849 = vpack.c.b16 %v4830, %v4829
      %v4850 = vpack.c.b16 %v4832, %v4831
      %v4851 = vpack.c.b16 %v4834, %v4833
      %v4852 = vpack.c.b16 %v4836, %v4835
      %v4885 = vunpack.c.l.b16 %v4789
      %v4886 = vunpack.c.l.b16 %v4790
      %v4887 = vunpack.c.l.b16 %v4791
      %v4888 = vunpack.c.l.b16 %v4792
      %v4889 = vunpack.c.l.b16 %v4793
      %v4890 = vunpack.c.l.b16 %v4794
      %v4891 = vunpack.c.l.b16 %v4795
      %v4892 = vunpack.c.l.b16 %v4796
      %v4893 = vunpack.c.l.b16 %v4797
      %v4894 = vunpack.c.l.b16 %v4798
      %v4895 = vunpack.c.l.b16 %v4799
      %v4896 = vunpack.c.l.b16 %v4800
      %v4897 = vunpack.c.l.b16 %v4801
      %v4898 = vunpack.c.l.b16 %v4802
      %v4899 = vunpack.c.l.b16 %v4803
      %v4900 = vunpack.c.l.b16 %v4804
      %v4901 = vpack.c.b16 %v4886, %v4885
      %v4902 = vpack.c.b16 %v4888, %v4887
      %v4903 = vpack.c.b16 %v4890, %v4889
      %v4904 = vpack.c.b16 %v4892, %v4891
      %v4905 = vpack.c.b16 %v4894, %v4893
      %v4906 = vpack.c.b16 %v4896, %v4895
      %v4907 = vpack.c.b16 %v4898, %v4897
      %v4908 = vpack.c.b16 %v4900, %v4899
      %4917 = vmatprep.subr.bf16.mxu0 0
      %4918 = vmatpush1.bf16.msra.mxu0 %v4908
      %4919 = vmatprep.subr.bf16.mxu0 0
      %4920 = vmatpush1.bf16.msra.mxu0 %v4907
      %4921 = vmatprep.subr.bf16.mxu0 0
      %4922 = vmatpush1.bf16.msra.mxu0 %v4906
      %4923 = vmatprep.subr.bf16.mxu0 0
      %4924 = vmatpush1.bf16.msra.mxu0 %v4905
      %4925 = vmatprep.subr.bf16.mxu0 0
      %4926 = vmatpush1.bf16.msra.mxu0 %v4904
      %4927 = vmatprep.subr.bf16.mxu0 0
      %4928 = vmatpush1.bf16.msra.mxu0 %v4903
      %4929 = vmatprep.subr.bf16.mxu0 0
      %4930 = vmatpush1.bf16.msra.mxu0 %v4902
      %4931 = vmatprep.subr.bf16.mxu0 0
      %4932 = vmatpush1.bf16.msra.mxu0 %v4901
      %4933 = vmatprep.subr.bf16.mxu0 0
      %4934 = vmatpush2.bf16.msra.mxu0 0
      %4935 = vmatprep.subr.bf16.mxu0 0
      %4936 = vmatpush2.bf16.msra.mxu0 0
      %4937 = vmatprep.subr.bf16.mxu0 0
      %4938 = vmatpush2.bf16.msra.mxu0 0
      %4939 = vmatprep.subr.bf16.mxu0 0
      %4940 = vmatpush2.bf16.msra.mxu0 0
      %4941 = vmatprep.subr.bf16.mxu0 0
      %4942 = vmatpush2.bf16.msra.mxu0 0
      %4943 = vmatprep.subr.bf16.mxu0 0
      %4944 = vmatpush2.bf16.msra.mxu0 0
      %4945 = vmatprep.subr.bf16.mxu0 0
      %4946 = vmatpush2.bf16.msra.mxu0 0
      %4947 = vmatprep.subr.bf16.mxu0 0
      %4948 = vmatpush2.bf16.msra.mxu0 0
      %4949 = vmatprep.mubr.bf16.mxu0 0
      %4950 = vmatmul.mubr.bf16.gmra.mxu0 %v4837
      %v4951 = vpop.f32.mrf.mxu0
      %v4952 = vadd.f32 0.0, %v4951
      %v4953 = vpop.f32.mrf.mxu0
      %v4954 = vpop.f32.mrf.mxu0
      %v4955 = vadd.f32 0.0, %v4954
      %v4956 = vpop.f32.mrf.mxu0
      %4957 = vmatprep.mubr.bf16.mxu0 0
      %4958 = vmatmul.mubr.bf16.gmra.mxu0 %v4838
      %v4959 = vpop.f32.mrf.mxu0
      %v4960 = vadd.f32 0.0, %v4959
      %v4961 = vpop.f32.mrf.mxu0
      %v4962 = vpop.f32.mrf.mxu0
      %v4963 = vadd.f32 0.0, %v4962
      %v4964 = vpop.f32.mrf.mxu0
      %4965 = vmatprep.mubr.bf16.mxu0 0
      %4966 = vmatmul.mubr.bf16.gmra.mxu0 %v4839
      %v4967 = vpop.f32.mrf.mxu0
      %v4968 = vadd.f32 0.0, %v4967
      %v4969 = vpop.f32.mrf.mxu0
      %v4970 = vpop.f32.mrf.mxu0
      %v4971 = vadd.f32 0.0, %v4970
      %v4972 = vpop.f32.mrf.mxu0
      %4973 = vmatprep.mubr.bf16.mxu0 0
      %4974 = vmatmul.mubr.bf16.gmra.mxu0 %v4840
      %v4975 = vpop.f32.mrf.mxu0
      %v4976 = vadd.f32 0.0, %v4975
      %v4977 = vpop.f32.mrf.mxu0
      %v4978 = vpop.f32.mrf.mxu0
      %v4979 = vadd.f32 0.0, %v4978
      %v4980 = vpop.f32.mrf.mxu0
      %4981 = vmatprep.mubr.bf16.mxu0 0
      %4982 = vmatmul.mubr.bf16.gmra.mxu0 %v4841
      %v4983 = vpop.f32.mrf.mxu0
      %v4984 = vadd.f32 0.0, %v4983
      %v4985 = vpop.f32.mrf.mxu0
      %v4986 = vpop.f32.mrf.mxu0
      %v4987 = vadd.f32 0.0, %v4986
      %v4988 = vpop.f32.mrf.mxu0
      %4989 = vmatprep.mubr.bf16.mxu0 0
      %4990 = vmatmul.mubr.bf16.gmra.mxu0 %v4842
      %v4991 = vpop.f32.mrf.mxu0
      %v4992 = vadd.f32 0.0, %v4991
      %v4993 = vpop.f32.mrf.mxu0
      %v4994 = vpop.f32.mrf.mxu0
      %v4995 = vadd.f32 0.0, %v4994
      %v4996 = vpop.f32.mrf.mxu0
      %4997 = vmatprep.mubr.bf16.mxu0 0
      %4998 = vmatmul.mubr.bf16.gmra.mxu0 %v4843
      %v4999 = vpop.f32.mrf.mxu0
      %v5000 = vadd.f32 0.0, %v4999
      %v5001 = vpop.f32.mrf.mxu0
      %v5002 = vpop.f32.mrf.mxu0
      %v5003 = vadd.f32 0.0, %v5002
      %v5004 = vpop.f32.mrf.mxu0
      %5005 = vmatprep.mubr.bf16.mxu0 0
      %5006 = vmatmul.mubr.bf16.gmra.mxu0 %v4844
      %v5007 = vpop.f32.mrf.mxu0
      %v5008 = vadd.f32 0.0, %v5007
      %v5009 = vpop.f32.mrf.mxu0
      %v5010 = vpop.f32.mrf.mxu0
      %v5011 = vadd.f32 0.0, %v5010
      %v5012 = vpop.f32.mrf.mxu0
      %5013 = vmatprep.mubr.bf16.mxu0 0
      %5014 = vmatmul.mubr.bf16.gmra.mxu0 %v4845
      %v5015 = vpop.f32.mrf.mxu0
      %v5016 = vadd.f32 0.0, %v5015
      %v5017 = vpop.f32.mrf.mxu0
      %v5018 = vpop.f32.mrf.mxu0
      %v5019 = vadd.f32 0.0, %v5018
      %v5020 = vpop.f32.mrf.mxu0
      %5021 = vmatprep.mubr.bf16.mxu0 0
      %5022 = vmatmul.mubr.bf16.gmra.mxu0 %v4846
      %v5023 = vpop.f32.mrf.mxu0
      %v5024 = vadd.f32 0.0, %v5023
      %v5025 = vpop.f32.mrf.mxu0
      %v5026 = vpop.f32.mrf.mxu0
      %v5027 = vadd.f32 0.0, %v5026
      %v5028 = vpop.f32.mrf.mxu0
      %5029 = vmatprep.mubr.bf16.mxu0 0
      %5030 = vmatmul.mubr.bf16.gmra.mxu0 %v4847
      %v5031 = vpop.f32.mrf.mxu0
      %v5032 = vadd.f32 0.0, %v5031
      %v5033 = vpop.f32.mrf.mxu0
      %v5034 = vpop.f32.mrf.mxu0
      %v5035 = vadd.f32 0.0, %v5034
      %v5036 = vpop.f32.mrf.mxu0
      %5037 = vmatprep.mubr.bf16.mxu0 0
      %5038 = vmatmul.mubr.bf16.gmra.mxu0 %v4848
      %v5039 = vpop.f32.mrf.mxu0
      %v5040 = vadd.f32 0.0, %v5039
      %v5041 = vpop.f32.mrf.mxu0
      %v5042 = vpop.f32.mrf.mxu0
      %v5043 = vadd.f32 0.0, %v5042
      %v5044 = vpop.f32.mrf.mxu0
      %5045 = vmatprep.mubr.bf16.mxu0 0
      %5046 = vmatmul.mubr.bf16.gmra.mxu0 %v4849
      %v5047 = vpop.f32.mrf.mxu0
      %v5048 = vadd.f32 0.0, %v5047
      %v5049 = vpop.f32.mrf.mxu0
      %v5050 = vpop.f32.mrf.mxu0
      %v5051 = vadd.f32 0.0, %v5050
      %v5052 = vpop.f32.mrf.mxu0
      %5053 = vmatprep.mubr.bf16.mxu0 0
      %5054 = vmatmul.mubr.bf16.gmra.mxu0 %v4850
      %v5055 = vpop.f32.mrf.mxu0
      %v5056 = vadd.f32 0.0, %v5055
      %v5057 = vpop.f32.mrf.mxu0
      %v5058 = vpop.f32.mrf.mxu0
      %v5059 = vadd.f32 0.0, %v5058
      %v5060 = vpop.f32.mrf.mxu0
      %5061 = vmatprep.mubr.bf16.mxu0 0
      %5062 = vmatmul.mubr.bf16.gmra.mxu0 %v4851
      %v5063 = vpop.f32.mrf.mxu0
      %v5064 = vadd.f32 0.0, %v5063
      %v5065 = vpop.f32.mrf.mxu0
      %v5066 = vpop.f32.mrf.mxu0
      %v5067 = vadd.f32 0.0, %v5066
      %v5068 = vpop.f32.mrf.mxu0
      %5069 = vmatprep.mubr.bf16.mxu0 0
      %5070 = vmatmul.mubr.bf16.gmra.mxu0 %v4852
      %v5071 = vpop.f32.mrf.mxu0
      %v5072 = vadd.f32 0.0, %v5071
      %v5073 = vpop.f32.mrf.mxu0
      %v5074 = vpop.f32.mrf.mxu0
      %v5075 = vadd.f32 0.0, %v5074
      %v5076 = vpop.f32.mrf.mxu0
      %5077 = vdwg.mxu0
      %v5078 = vadd.f32 %v4499, %v4952
      %v5079 = vadd.f32 %v4502, %v4955
      %v5080 = vadd.f32 %v4507, %v4960
      %v5081 = vadd.f32 %v4510, %v4963
      %v5082 = vadd.f32 %v4515, %v4968
      %v5083 = vadd.f32 %v4518, %v4971
      %v5084 = vadd.f32 %v4523, %v4976
      %v5085 = vadd.f32 %v4526, %v4979
      %v5086 = vadd.f32 %v4531, %v4984
      %v5087 = vadd.f32 %v4534, %v4987
      %v5088 = vadd.f32 %v4539, %v4992
      %v5089 = vadd.f32 %v4542, %v4995
      %v5090 = vadd.f32 %v4547, %v5000
      %v5091 = vadd.f32 %v4550, %v5003
      %v5092 = vadd.f32 %v4555, %v5008
      %v5093 = vadd.f32 %v4558, %v5011
      %v5094 = vadd.f32 %v4563, %v5016
      %v5095 = vadd.f32 %v4566, %v5019
      %v5096 = vadd.f32 %v4571, %v5024
      %v5097 = vadd.f32 %v4574, %v5027
      %v5098 = vadd.f32 %v4579, %v5032
      %v5099 = vadd.f32 %v4582, %v5035
      %v5100 = vadd.f32 %v4587, %v5040
      %v5101 = vadd.f32 %v4590, %v5043
      %v5102 = vadd.f32 %v4595, %v5048
      %v5103 = vadd.f32 %v4598, %v5051
      %v5104 = vadd.f32 %v4603, %v5056
      %v5105 = vadd.f32 %v4606, %v5059
      %v5106 = vadd.f32 %v4611, %v5064
      %v5107 = vadd.f32 %v4614, %v5067
      %v5108 = vadd.f32 %v4619, %v5072
      %v5109 = vadd.f32 %v4622, %v5075
      %v5110 = vld [vmem:[%s3461] sm:$0xf]
      %v5111 = vld [vmem:[%s3461 + $0x4] sm:$0xf]
      %v5112 = vld [vmem:[%s3461 + $0xc] sm:$0xf]
      %v5113 = vld [vmem:[%s3461 + $0x10] sm:$0xf]
      %v5114 = vld [vmem:[%s3461 + $0x18] sm:$0xf]
      %v5115 = vld [vmem:[%s3461 + $0x1c] sm:$0xf]
      %v5116 = vld [vmem:[%s3461 + $0x24] sm:$0xf]
      %v5117 = vld [vmem:[%s3461 + $0x28] sm:$0xf]
      %v5118 = vld [vmem:[%s3461 + $0x30] sm:$0xf]
      %v5119 = vld [vmem:[%s3461 + $0x34] sm:$0xf]
      %v5120 = vld [vmem:[%s3461 + $0x3c] sm:$0xf]
      %v5121 = vld [vmem:[%s3461 + $0x40] sm:$0xf]
      %v5122 = vld [vmem:[%s3461 + $0x48] sm:$0xf]
      %v5123 = vld [vmem:[%s3461 + $0x4c] sm:$0xf]
      %v5124 = vld [vmem:[%s3461 + $0x54] sm:$0xf]
      %v5125 = vld [vmem:[%s3461 + $0x58] sm:$0xf]
      %v5126 = vld [vmem:[%s3461 + $0x60] sm:$0xf]
      %v5127 = vld [vmem:[%s3461 + $0x64] sm:$0xf]
      %v5128 = vld [vmem:[%s3461 + $0x6c] sm:$0xf]
      %v5129 = vld [vmem:[%s3461 + $0x70] sm:$0xf]
      %v5130 = vld [vmem:[%s3461 + $0x78] sm:$0xf]
      %v5131 = vld [vmem:[%s3461 + $0x7c] sm:$0xf]
      %v5132 = vld [vmem:[%s3461 + $0x84] sm:$0xf]
      %v5133 = vld [vmem:[%s3461 + $0x88] sm:$0xf]
      %v5134 = vld [vmem:[%s3461 + $0x90] sm:$0xf]
      %v5135 = vld [vmem:[%s3461 + $0x94] sm:$0xf]
      %v5136 = vld [vmem:[%s3461 + $0x9c] sm:$0xf]
      %v5137 = vld [vmem:[%s3461 + $0xa0] sm:$0xf]
      %v5138 = vld [vmem:[%s3461 + $0xa8] sm:$0xf]
      %v5139 = vld [vmem:[%s3461 + $0xac] sm:$0xf]
      %v5140 = vld [vmem:[%s3461 + $0xb4] sm:$0xf]
      %v5141 = vld [vmem:[%s3461 + $0xb8] sm:$0xf]
      %s5142 = scalar_lea.vmem %s3, 192
      %v5143 = vld [vmem:[%s5142] sm:$0xf]
      %v5144 = vld [vmem:[%s5142 + $0x4] sm:$0xf]
      %v5145 = vld [vmem:[%s5142 + $0x8] sm:$0xf]
      %v5146 = vld [vmem:[%s5142 + $0xc] sm:$0xf]
      %v5147 = vld [vmem:[%s5142 + $0x10] sm:$0xf]
      %v5148 = vld [vmem:[%s5142 + $0x14] sm:$0xf]
      %v5149 = vld [vmem:[%s5142 + $0x18] sm:$0xf]
      %v5150 = vld [vmem:[%s5142 + $0x1c] sm:$0xf]
      %v5151 = vld [vmem:[%s5142 + $0x20] sm:$0xf]
      %v5152 = vld [vmem:[%s5142 + $0x24] sm:$0xf]
      %v5153 = vld [vmem:[%s5142 + $0x28] sm:$0xf]
      %v5154 = vld [vmem:[%s5142 + $0x2c] sm:$0xf]
      %v5155 = vld [vmem:[%s5142 + $0x30] sm:$0xf]
      %v5156 = vld [vmem:[%s5142 + $0x34] sm:$0xf]
      %v5157 = vld [vmem:[%s5142 + $0x38] sm:$0xf]
      %v5158 = vld [vmem:[%s5142 + $0x3c] sm:$0xf]
      %v5191 = vunpack.c.l.b16 %v5110
      %v5192 = vunpack.c.l.b16 %v5111
      %v5193 = vunpack.c.l.b16 %v5112
      %v5194 = vunpack.c.l.b16 %v5113
      %v5195 = vunpack.c.l.b16 %v5114
      %v5196 = vunpack.c.l.b16 %v5115
      %v5197 = vunpack.c.l.b16 %v5116
      %v5198 = vunpack.c.l.b16 %v5117
      %v5199 = vunpack.c.l.b16 %v5118
      %v5200 = vunpack.c.l.b16 %v5119
      %v5201 = vunpack.c.l.b16 %v5120
      %v5202 = vunpack.c.l.b16 %v5121
      %v5203 = vunpack.c.l.b16 %v5122
      %v5204 = vunpack.c.l.b16 %v5123
      %v5205 = vunpack.c.l.b16 %v5124
      %v5206 = vunpack.c.l.b16 %v5125
      %v5207 = vunpack.c.l.b16 %v5126
      %v5208 = vunpack.c.l.b16 %v5127
      %v5209 = vunpack.c.l.b16 %v5128
      %v5210 = vunpack.c.l.b16 %v5129
      %v5211 = vunpack.c.l.b16 %v5130
      %v5212 = vunpack.c.l.b16 %v5131
      %v5213 = vunpack.c.l.b16 %v5132
      %v5214 = vunpack.c.l.b16 %v5133
      %v5215 = vunpack.c.l.b16 %v5134
      %v5216 = vunpack.c.l.b16 %v5135
      %v5217 = vunpack.c.l.b16 %v5136
      %v5218 = vunpack.c.l.b16 %v5137
      %v5219 = vunpack.c.l.b16 %v5138
      %v5220 = vunpack.c.l.b16 %v5139
      %v5221 = vunpack.c.l.b16 %v5140
      %v5222 = vunpack.c.l.b16 %v5141
      %v5223 = vpack.c.b16 %v5192, %v5191
      %v5224 = vpack.c.b16 %v5194, %v5193
      %v5225 = vpack.c.b16 %v5196, %v5195
      %v5226 = vpack.c.b16 %v5198, %v5197
      %v5227 = vpack.c.b16 %v5200, %v5199
      %v5228 = vpack.c.b16 %v5202, %v5201
      %v5229 = vpack.c.b16 %v5204, %v5203
      %v5230 = vpack.c.b16 %v5206, %v5205
      %v5231 = vpack.c.b16 %v5208, %v5207
      %v5232 = vpack.c.b16 %v5210, %v5209
      %v5233 = vpack.c.b16 %v5212, %v5211
      %v5234 = vpack.c.b16 %v5214, %v5213
      %v5235 = vpack.c.b16 %v5216, %v5215
      %v5236 = vpack.c.b16 %v5218, %v5217
      %v5237 = vpack.c.b16 %v5220, %v5219
      %v5238 = vpack.c.b16 %v5222, %v5221
      %v5271 = vunpack.c.l.b16 %v5143
      %v5272 = vunpack.c.l.b16 %v5144
      %v5273 = vunpack.c.l.b16 %v5145
      %v5274 = vunpack.c.l.b16 %v5146
      %v5275 = vunpack.c.l.b16 %v5147
      %v5276 = vunpack.c.l.b16 %v5148
      %v5277 = vunpack.c.l.b16 %v5149
      %v5278 = vunpack.c.l.b16 %v5150
      %v5279 = vunpack.c.l.b16 %v5151
      %v5280 = vunpack.c.l.b16 %v5152
      %v5281 = vunpack.c.l.b16 %v5153
      %v5282 = vunpack.c.l.b16 %v5154
      %v5283 = vunpack.c.l.b16 %v5155
      %v5284 = vunpack.c.l.b16 %v5156
      %v5285 = vunpack.c.l.b16 %v5157
      %v5286 = vunpack.c.l.b16 %v5158
      %v5287 = vpack.c.b16 %v5272, %v5271
      %v5288 = vpack.c.b16 %v5274, %v5273
      %v5289 = vpack.c.b16 %v5276, %v5275
      %v5290 = vpack.c.b16 %v5278, %v5277
      %v5291 = vpack.c.b16 %v5280, %v5279
      %v5292 = vpack.c.b16 %v5282, %v5281
      %v5293 = vpack.c.b16 %v5284, %v5283
      %v5294 = vpack.c.b16 %v5286, %v5285
      %5303 = vmatprep.subr.bf16.mxu0 0
      %5304 = vmatpush1.bf16.msra.mxu0 %v5294
      %5305 = vmatprep.subr.bf16.mxu0 0
      %5306 = vmatpush1.bf16.msra.mxu0 %v5293
      %5307 = vmatprep.subr.bf16.mxu0 0
      %5308 = vmatpush1.bf16.msra.mxu0 %v5292
      %5309 = vmatprep.subr.bf16.mxu0 0
      %5310 = vmatpush1.bf16.msra.mxu0 %v5291
      %5311 = vmatprep.subr.bf16.mxu0 0
      %5312 = vmatpush1.bf16.msra.mxu0 %v5290
      %5313 = vmatprep.subr.bf16.mxu0 0
      %5314 = vmatpush1.bf16.msra.mxu0 %v5289
      %5315 = vmatprep.subr.bf16.mxu0 0
      %5316 = vmatpush1.bf16.msra.mxu0 %v5288
      %5317 = vmatprep.subr.bf16.mxu0 0
      %5318 = vmatpush1.bf16.msra.mxu0 %v5287
      %5319 = vmatprep.subr.bf16.mxu0 0
      %5320 = vmatpush2.bf16.msra.mxu0 0
      %5321 = vmatprep.subr.bf16.mxu0 0
      %5322 = vmatpush2.bf16.msra.mxu0 0
      %5323 = vmatprep.subr.bf16.mxu0 0
      %5324 = vmatpush2.bf16.msra.mxu0 0
      %5325 = vmatprep.subr.bf16.mxu0 0
      %5326 = vmatpush2.bf16.msra.mxu0 0
      %5327 = vmatprep.subr.bf16.mxu0 0
      %5328 = vmatpush2.bf16.msra.mxu0 0
      %5329 = vmatprep.subr.bf16.mxu0 0
      %5330 = vmatpush2.bf16.msra.mxu0 0
      %5331 = vmatprep.subr.bf16.mxu0 0
      %5332 = vmatpush2.bf16.msra.mxu0 0
      %5333 = vmatprep.subr.bf16.mxu0 0
      %5334 = vmatpush2.bf16.msra.mxu0 0
      %5335 = vmatprep.mubr.bf16.mxu0 0
      %5336 = vmatmul.mubr.bf16.gmra.mxu0 %v5223
      %v5337 = vpop.f32.mrf.mxu0
      %v5338 = vadd.f32 0.0, %v5337
      %v5339 = vpop.f32.mrf.mxu0
      %v5340 = vpop.f32.mrf.mxu0
      %v5341 = vadd.f32 0.0, %v5340
      %v5342 = vpop.f32.mrf.mxu0
      %5343 = vmatprep.mubr.bf16.mxu0 0
      %5344 = vmatmul.mubr.bf16.gmra.mxu0 %v5224
      %v5345 = vpop.f32.mrf.mxu0
      %v5346 = vadd.f32 0.0, %v5345
      %v5347 = vpop.f32.mrf.mxu0
      %v5348 = vpop.f32.mrf.mxu0
      %v5349 = vadd.f32 0.0, %v5348
      %v5350 = vpop.f32.mrf.mxu0
      %5351 = vmatprep.mubr.bf16.mxu0 0
      %5352 = vmatmul.mubr.bf16.gmra.mxu0 %v5225
      %v5353 = vpop.f32.mrf.mxu0
      %v5354 = vadd.f32 0.0, %v5353
      %v5355 = vpop.f32.mrf.mxu0
      %v5356 = vpop.f32.mrf.mxu0
      %v5357 = vadd.f32 0.0, %v5356
      %v5358 = vpop.f32.mrf.mxu0
      %5359 = vmatprep.mubr.bf16.mxu0 0
      %5360 = vmatmul.mubr.bf16.gmra.mxu0 %v5226
      %v5361 = vpop.f32.mrf.mxu0
      %v5362 = vadd.f32 0.0, %v5361
      %v5363 = vpop.f32.mrf.mxu0
      %v5364 = vpop.f32.mrf.mxu0
      %v5365 = vadd.f32 0.0, %v5364
      %v5366 = vpop.f32.mrf.mxu0
      %5367 = vmatprep.mubr.bf16.mxu0 0
      %5368 = vmatmul.mubr.bf16.gmra.mxu0 %v5227
      %v5369 = vpop.f32.mrf.mxu0
      %v5370 = vadd.f32 0.0, %v5369
      %v5371 = vpop.f32.mrf.mxu0
      %v5372 = vpop.f32.mrf.mxu0
      %v5373 = vadd.f32 0.0, %v5372
      %v5374 = vpop.f32.mrf.mxu0
      %5375 = vmatprep.mubr.bf16.mxu0 0
      %5376 = vmatmul.mubr.bf16.gmra.mxu0 %v5228
      %v5377 = vpop.f32.mrf.mxu0
      %v5378 = vadd.f32 0.0, %v5377
      %v5379 = vpop.f32.mrf.mxu0
      %v5380 = vpop.f32.mrf.mxu0
      %v5381 = vadd.f32 0.0, %v5380
      %v5382 = vpop.f32.mrf.mxu0
      %5383 = vmatprep.mubr.bf16.mxu0 0
      %5384 = vmatmul.mubr.bf16.gmra.mxu0 %v5229
      %v5385 = vpop.f32.mrf.mxu0
      %v5386 = vadd.f32 0.0, %v5385
      %v5387 = vpop.f32.mrf.mxu0
      %v5388 = vpop.f32.mrf.mxu0
      %v5389 = vadd.f32 0.0, %v5388
      %v5390 = vpop.f32.mrf.mxu0
      %5391 = vmatprep.mubr.bf16.mxu0 0
      %5392 = vmatmul.mubr.bf16.gmra.mxu0 %v5230
      %v5393 = vpop.f32.mrf.mxu0
      %v5394 = vadd.f32 0.0, %v5393
      %v5395 = vpop.f32.mrf.mxu0
      %v5396 = vpop.f32.mrf.mxu0
      %v5397 = vadd.f32 0.0, %v5396
      %v5398 = vpop.f32.mrf.mxu0
      %5399 = vmatprep.mubr.bf16.mxu0 0
      %5400 = vmatmul.mubr.bf16.gmra.mxu0 %v5231
      %v5401 = vpop.f32.mrf.mxu0
      %v5402 = vadd.f32 0.0, %v5401
      %v5403 = vpop.f32.mrf.mxu0
      %v5404 = vpop.f32.mrf.mxu0
      %v5405 = vadd.f32 0.0, %v5404
      %v5406 = vpop.f32.mrf.mxu0
      %5407 = vmatprep.mubr.bf16.mxu0 0
      %5408 = vmatmul.mubr.bf16.gmra.mxu0 %v5232
      %v5409 = vpop.f32.mrf.mxu0
      %v5410 = vadd.f32 0.0, %v5409
      %v5411 = vpop.f32.mrf.mxu0
      %v5412 = vpop.f32.mrf.mxu0
      %v5413 = vadd.f32 0.0, %v5412
      %v5414 = vpop.f32.mrf.mxu0
      %5415 = vmatprep.mubr.bf16.mxu0 0
      %5416 = vmatmul.mubr.bf16.gmra.mxu0 %v5233
      %v5417 = vpop.f32.mrf.mxu0
      %v5418 = vadd.f32 0.0, %v5417
      %v5419 = vpop.f32.mrf.mxu0
      %v5420 = vpop.f32.mrf.mxu0
      %v5421 = vadd.f32 0.0, %v5420
      %v5422 = vpop.f32.mrf.mxu0
      %5423 = vmatprep.mubr.bf16.mxu0 0
      %5424 = vmatmul.mubr.bf16.gmra.mxu0 %v5234
      %v5425 = vpop.f32.mrf.mxu0
      %v5426 = vadd.f32 0.0, %v5425
      %v5427 = vpop.f32.mrf.mxu0
      %v5428 = vpop.f32.mrf.mxu0
      %v5429 = vadd.f32 0.0, %v5428
      %v5430 = vpop.f32.mrf.mxu0
      %5431 = vmatprep.mubr.bf16.mxu0 0
      %5432 = vmatmul.mubr.bf16.gmra.mxu0 %v5235
      %v5433 = vpop.f32.mrf.mxu0
      %v5434 = vadd.f32 0.0, %v5433
      %v5435 = vpop.f32.mrf.mxu0
      %v5436 = vpop.f32.mrf.mxu0
      %v5437 = vadd.f32 0.0, %v5436
      %v5438 = vpop.f32.mrf.mxu0
      %5439 = vmatprep.mubr.bf16.mxu0 0
      %5440 = vmatmul.mubr.bf16.gmra.mxu0 %v5236
      %v5441 = vpop.f32.mrf.mxu0
      %v5442 = vadd.f32 0.0, %v5441
      %v5443 = vpop.f32.mrf.mxu0
      %v5444 = vpop.f32.mrf.mxu0
      %v5445 = vadd.f32 0.0, %v5444
      %v5446 = vpop.f32.mrf.mxu0
      %5447 = vmatprep.mubr.bf16.mxu0 0
      %5448 = vmatmul.mubr.bf16.gmra.mxu0 %v5237
      %v5449 = vpop.f32.mrf.mxu0
      %v5450 = vadd.f32 0.0, %v5449
      %v5451 = vpop.f32.mrf.mxu0
      %v5452 = vpop.f32.mrf.mxu0
      %v5453 = vadd.f32 0.0, %v5452
      %v5454 = vpop.f32.mrf.mxu0
      %5455 = vmatprep.mubr.bf16.mxu0 0
      %5456 = vmatmul.mubr.bf16.gmra.mxu0 %v5238
      %v5457 = vpop.f32.mrf.mxu0
      %v5458 = vadd.f32 0.0, %v5457
      %v5459 = vpop.f32.mrf.mxu0
      %v5460 = vpop.f32.mrf.mxu0
      %v5461 = vadd.f32 0.0, %v5460
      %v5462 = vpop.f32.mrf.mxu0
      %5463 = vdwg.mxu0
      %v5464 = vadd.f32 %v5078, %v5338
      %v5465 = vadd.f32 %v5079, %v5341
      %v5466 = vadd.f32 %v5080, %v5346
      %v5467 = vadd.f32 %v5081, %v5349
      %v5468 = vadd.f32 %v5082, %v5354
      %v5469 = vadd.f32 %v5083, %v5357
      %v5470 = vadd.f32 %v5084, %v5362
      %v5471 = vadd.f32 %v5085, %v5365
      %v5472 = vadd.f32 %v5086, %v5370
      %v5473 = vadd.f32 %v5087, %v5373
      %v5474 = vadd.f32 %v5088, %v5378
      %v5475 = vadd.f32 %v5089, %v5381
      %v5476 = vadd.f32 %v5090, %v5386
      %v5477 = vadd.f32 %v5091, %v5389
      %v5478 = vadd.f32 %v5092, %v5394
      %v5479 = vadd.f32 %v5093, %v5397
      %v5480 = vadd.f32 %v5094, %v5402
      %v5481 = vadd.f32 %v5095, %v5405
      %v5482 = vadd.f32 %v5096, %v5410
      %v5483 = vadd.f32 %v5097, %v5413
      %v5484 = vadd.f32 %v5098, %v5418
      %v5485 = vadd.f32 %v5099, %v5421
      %v5486 = vadd.f32 %v5100, %v5426
      %v5487 = vadd.f32 %v5101, %v5429
      %v5488 = vadd.f32 %v5102, %v5434
      %v5489 = vadd.f32 %v5103, %v5437
      %v5490 = vadd.f32 %v5104, %v5442
      %v5491 = vadd.f32 %v5105, %v5445
      %v5492 = vadd.f32 %v5106, %v5450
      %v5493 = vadd.f32 %v5107, %v5453
      %v5494 = vadd.f32 %v5108, %v5458
      %v5495 = vadd.f32 %v5109, %v5461
      %v5496 = vld [vmem:[%s3461] sm:$0xf]
      %v5497 = vld [vmem:[%s3461 + $0x4] sm:$0xf]
      %v5498 = vld [vmem:[%s3461 + $0x8] sm:$0x1]
      %v5499 = vld [vmem:[%s3461 + $0xc] sm:$0xf]
      %v5500 = vld [vmem:[%s3461 + $0x10] sm:$0xf]
      %v5501 = vld [vmem:[%s3461 + $0x14] sm:$0x1]
      %v5502 = vld [vmem:[%s3461 + $0x18] sm:$0xf]
      %v5503 = vld [vmem:[%s3461 + $0x1c] sm:$0xf]
      %v5504 = vld [vmem:[%s3461 + $0x20] sm:$0x1]
      %v5505 = vld [vmem:[%s3461 + $0x24] sm:$0xf]
      %v5506 = vld [vmem:[%s3461 + $0x28] sm:$0xf]
      %v5507 = vld [vmem:[%s3461 + $0x2c] sm:$0x1]
      %v5508 = vld [vmem:[%s3461 + $0x30] sm:$0xf]
      %v5509 = vld [vmem:[%s3461 + $0x34] sm:$0xf]
      %v5510 = vld [vmem:[%s3461 + $0x38] sm:$0x1]
      %v5511 = vld [vmem:[%s3461 + $0x3c] sm:$0xf]
      %v5512 = vld [vmem:[%s3461 + $0x40] sm:$0xf]
      %v5513 = vld [vmem:[%s3461 + $0x44] sm:$0x1]
      %v5514 = vld [vmem:[%s3461 + $0x48] sm:$0xf]
      %v5515 = vld [vmem:[%s3461 + $0x4c] sm:$0xf]
      %v5516 = vld [vmem:[%s3461 + $0x50] sm:$0x1]
      %v5517 = vld [vmem:[%s3461 + $0x54] sm:$0xf]
      %v5518 = vld [vmem:[%s3461 + $0x58] sm:$0xf]
      %v5519 = vld [vmem:[%s3461 + $0x5c] sm:$0x1]
      %v5520 = vld [vmem:[%s3461 + $0x60] sm:$0xf]
      %v5521 = vld [vmem:[%s3461 + $0x64] sm:$0xf]
      %v5522 = vld [vmem:[%s3461 + $0x68] sm:$0x1]
      %v5523 = vld [vmem:[%s3461 + $0x6c] sm:$0xf]
      %v5524 = vld [vmem:[%s3461 + $0x70] sm:$0xf]
      %v5525 = vld [vmem:[%s3461 + $0x74] sm:$0x1]
      %v5526 = vld [vmem:[%s3461 + $0x78] sm:$0xf]
      %v5527 = vld [vmem:[%s3461 + $0x7c] sm:$0xf]
      %v5528 = vld [vmem:[%s3461 + $0x80] sm:$0x1]
      %v5529 = vld [vmem:[%s3461 + $0x84] sm:$0xf]
      %v5530 = vld [vmem:[%s3461 + $0x88] sm:$0xf]
      %v5531 = vld [vmem:[%s3461 + $0x8c] sm:$0x1]
      %v5532 = vld [vmem:[%s3461 + $0x90] sm:$0xf]
      %v5533 = vld [vmem:[%s3461 + $0x94] sm:$0xf]
      %v5534 = vld [vmem:[%s3461 + $0x98] sm:$0x1]
      %v5535 = vld [vmem:[%s3461 + $0x9c] sm:$0xf]
      %v5536 = vld [vmem:[%s3461 + $0xa0] sm:$0xf]
      %v5537 = vld [vmem:[%s3461 + $0xa4] sm:$0x1]
      %v5538 = vld [vmem:[%s3461 + $0xa8] sm:$0xf]
      %v5539 = vld [vmem:[%s3461 + $0xac] sm:$0xf]
      %v5540 = vld [vmem:[%s3461 + $0xb0] sm:$0x1]
      %v5541 = vld [vmem:[%s3461 + $0xb4] sm:$0xf]
      %v5542 = vld [vmem:[%s3461 + $0xb8] sm:$0xf]
      %v5543 = vld [vmem:[%s3461 + $0xbc] sm:$0x1]
      %v5545 = vshrl.u32 %v5496, 16
      %v5547 = vrot.slane %v5545, 4
      %v5548 = vshll.u32 %v5496, 16
      %v5550 = vrot.slane %v5548, 5
      %v5551 = vor.u32 %v5547, %v5550
      %v5552 = vrot.slane %v5551, 4
      %v5554 = vshll.u32 %v5497, 16
      %v5556 = vrot.slane %v5554, 5
      %v5557 = vsel %vm3645, %v5552, %v5556
      %v5558 = vshrl.u32 %v5497, 16
      %v5560 = vrot.slane %v5558, 4
      %v5561 = vor.u32 %v5560, %v5556
      %v5562 = vrot.slane %v5561, 4
      %v5564 = vshll.u32 %v5498, 16
      %v5566 = vrot.slane %v5564, 5
      %v5567 = vsel %vm3645, %v5562, %v5566
      %v5569 = vshrl.u32 %v5499, 16
      %v5571 = vrot.slane %v5569, 4
      %v5572 = vshll.u32 %v5499, 16
      %v5574 = vrot.slane %v5572, 5
      %v5575 = vor.u32 %v5571, %v5574
      %v5576 = vrot.slane %v5575, 4
      %v5578 = vshll.u32 %v5500, 16
      %v5580 = vrot.slane %v5578, 5
      %v5581 = vsel %vm3645, %v5576, %v5580
      %v5582 = vshrl.u32 %v5500, 16
      %v5584 = vrot.slane %v5582, 4
      %v5585 = vor.u32 %v5584, %v5580
      %v5586 = vrot.slane %v5585, 4
      %v5588 = vshll.u32 %v5501, 16
      %v5590 = vrot.slane %v5588, 5
      %v5591 = vsel %vm3645, %v5586, %v5590
      %v5593 = vshrl.u32 %v5502, 16
      %v5595 = vrot.slane %v5593, 4
      %v5596 = vshll.u32 %v5502, 16
      %v5598 = vrot.slane %v5596, 5
      %v5599 = vor.u32 %v5595, %v5598
      %v5600 = vrot.slane %v5599, 4
      %v5602 = vshll.u32 %v5503, 16
      %v5604 = vrot.slane %v5602, 5
      %v5605 = vsel %vm3645, %v5600, %v5604
      %v5606 = vshrl.u32 %v5503, 16
      %v5608 = vrot.slane %v5606, 4
      %v5609 = vor.u32 %v5608, %v5604
      %v5610 = vrot.slane %v5609, 4
      %v5612 = vshll.u32 %v5504, 16
      %v5614 = vrot.slane %v5612, 5
      %v5615 = vsel %vm3645, %v5610, %v5614
      %v5617 = vshrl.u32 %v5505, 16
      %v5619 = vrot.slane %v5617, 4
      %v5620 = vshll.u32 %v5505, 16
      %v5622 = vrot.slane %v5620, 5
      %v5623 = vor.u32 %v5619, %v5622
      %v5624 = vrot.slane %v5623, 4
      %v5626 = vshll.u32 %v5506, 16
      %v5628 = vrot.slane %v5626, 5
      %v5629 = vsel %vm3645, %v5624, %v5628
      %v5630 = vshrl.u32 %v5506, 16
      %v5632 = vrot.slane %v5630, 4
      %v5633 = vor.u32 %v5632, %v5628
      %v5634 = vrot.slane %v5633, 4
      %v5636 = vshll.u32 %v5507, 16
      %v5638 = vrot.slane %v5636, 5
      %v5639 = vsel %vm3645, %v5634, %v5638
      %v5641 = vshrl.u32 %v5508, 16
      %v5643 = vrot.slane %v5641, 4
      %v5644 = vshll.u32 %v5508, 16
      %v5646 = vrot.slane %v5644, 5
      %v5647 = vor.u32 %v5643, %v5646
      %v5648 = vrot.slane %v5647, 4
      %v5650 = vshll.u32 %v5509, 16
      %v5652 = vrot.slane %v5650, 5
      %v5653 = vsel %vm3645, %v5648, %v5652
      %v5654 = vshrl.u32 %v5509, 16
      %v5656 = vrot.slane %v5654, 4
      %v5657 = vor.u32 %v5656, %v5652
      %v5658 = vrot.slane %v5657, 4
      %v5660 = vshll.u32 %v5510, 16
      %v5662 = vrot.slane %v5660, 5
      %v5663 = vsel %vm3645, %v5658, %v5662
      %v5665 = vshrl.u32 %v5511, 16
      %v5667 = vrot.slane %v5665, 4
      %v5668 = vshll.u32 %v5511, 16
      %v5670 = vrot.slane %v5668, 5
      %v5671 = vor.u32 %v5667, %v5670
      %v5672 = vrot.slane %v5671, 4
      %v5674 = vshll.u32 %v5512, 16
      %v5676 = vrot.slane %v5674, 5
      %v5677 = vsel %vm3645, %v5672, %v5676
      %v5678 = vshrl.u32 %v5512, 16
      %v5680 = vrot.slane %v5678, 4
      %v5681 = vor.u32 %v5680, %v5676
      %v5682 = vrot.slane %v5681, 4
      %v5684 = vshll.u32 %v5513, 16
      %v5686 = vrot.slane %v5684, 5
      %v5687 = vsel %vm3645, %v5682, %v5686
      %v5689 = vshrl.u32 %v5514, 16
      %v5691 = vrot.slane %v5689, 4
      %v5692 = vshll.u32 %v5514, 16
      %v5694 = vrot.slane %v5692, 5
      %v5695 = vor.u32 %v5691, %v5694
      %v5696 = vrot.slane %v5695, 4
      %v5698 = vshll.u32 %v5515, 16
      %v5700 = vrot.slane %v5698, 5
      %v5701 = vsel %vm3645, %v5696, %v5700
      %v5702 = vshrl.u32 %v5515, 16
      %v5704 = vrot.slane %v5702, 4
      %v5705 = vor.u32 %v5704, %v5700
      %v5706 = vrot.slane %v5705, 4
      %v5708 = vshll.u32 %v5516, 16
      %v5710 = vrot.slane %v5708, 5
      %v5711 = vsel %vm3645, %v5706, %v5710
      %v5713 = vshrl.u32 %v5517, 16
      %v5715 = vrot.slane %v5713, 4
      %v5716 = vshll.u32 %v5517, 16
      %v5718 = vrot.slane %v5716, 5
      %v5719 = vor.u32 %v5715, %v5718
      %v5720 = vrot.slane %v5719, 4
      %v5722 = vshll.u32 %v5518, 16
      %v5724 = vrot.slane %v5722, 5
      %v5725 = vsel %vm3645, %v5720, %v5724
      %v5726 = vshrl.u32 %v5518, 16
      %v5728 = vrot.slane %v5726, 4
      %v5729 = vor.u32 %v5728, %v5724
      %v5730 = vrot.slane %v5729, 4
      %v5732 = vshll.u32 %v5519, 16
      %v5734 = vrot.slane %v5732, 5
      %v5735 = vsel %vm3645, %v5730, %v5734
      %v5737 = vshrl.u32 %v5520, 16
      %v5739 = vrot.slane %v5737, 4
      %v5740 = vshll.u32 %v5520, 16
      %v5742 = vrot.slane %v5740, 5
      %v5743 = vor.u32 %v5739, %v5742
      %v5744 = vrot.slane %v5743, 4
      %v5746 = vshll.u32 %v5521, 16
      %v5748 = vrot.slane %v5746, 5
      %v5749 = vsel %vm3645, %v5744, %v5748
      %v5750 = vshrl.u32 %v5521, 16
      %v5752 = vrot.slane %v5750, 4
      %v5753 = vor.u32 %v5752, %v5748
      %v5754 = vrot.slane %v5753, 4
      %v5756 = vshll.u32 %v5522, 16
      %v5758 = vrot.slane %v5756, 5
      %v5759 = vsel %vm3645, %v5754, %v5758
      %v5761 = vshrl.u32 %v5523, 16
      %v5763 = vrot.slane %v5761, 4
      %v5764 = vshll.u32 %v5523, 16
      %v5766 = vrot.slane %v5764, 5
      %v5767 = vor.u32 %v5763, %v5766
      %v5768 = vrot.slane %v5767, 4
      %v5770 = vshll.u32 %v5524, 16
      %v5772 = vrot.slane %v5770, 5
      %v5773 = vsel %vm3645, %v5768, %v5772
      %v5774 = vshrl.u32 %v5524, 16
      %v5776 = vrot.slane %v5774, 4
      %v5777 = vor.u32 %v5776, %v5772
      %v5778 = vrot.slane %v5777, 4
      %v5780 = vshll.u32 %v5525, 16
      %v5782 = vrot.slane %v5780, 5
      %v5783 = vsel %vm3645, %v5778, %v5782
      %v5785 = vshrl.u32 %v5526, 16
      %v5787 = vrot.slane %v5785, 4
      %v5788 = vshll.u32 %v5526, 16
      %v5790 = vrot.slane %v5788, 5
      %v5791 = vor.u32 %v5787, %v5790
      %v5792 = vrot.slane %v5791, 4
      %v5794 = vshll.u32 %v5527, 16
      %v5796 = vrot.slane %v5794, 5
      %v5797 = vsel %vm3645, %v5792, %v5796
      %v5798 = vshrl.u32 %v5527, 16
      %v5800 = vrot.slane %v5798, 4
      %v5801 = vor.u32 %v5800, %v5796
      %v5802 = vrot.slane %v5801, 4
      %v5804 = vshll.u32 %v5528, 16
      %v5806 = vrot.slane %v5804, 5
      %v5807 = vsel %vm3645, %v5802, %v5806
      %v5809 = vshrl.u32 %v5529, 16
      %v5811 = vrot.slane %v5809, 4
      %v5812 = vshll.u32 %v5529, 16
      %v5814 = vrot.slane %v5812, 5
      %v5815 = vor.u32 %v5811, %v5814
      %v5816 = vrot.slane %v5815, 4
      %v5818 = vshll.u32 %v5530, 16
      %v5820 = vrot.slane %v5818, 5
      %v5821 = vsel %vm3645, %v5816, %v5820
      %v5822 = vshrl.u32 %v5530, 16
      %v5824 = vrot.slane %v5822, 4
      %v5825 = vor.u32 %v5824, %v5820
      %v5826 = vrot.slane %v5825, 4
      %v5828 = vshll.u32 %v5531, 16
      %v5830 = vrot.slane %v5828, 5
      %v5831 = vsel %vm3645, %v5826, %v5830
      %v5833 = vshrl.u32 %v5532, 16
      %v5835 = vrot.slane %v5833, 4
      %v5836 = vshll.u32 %v5532, 16
      %v5838 = vrot.slane %v5836, 5
      %v5839 = vor.u32 %v5835, %v5838
      %v5840 = vrot.slane %v5839, 4
      %v5842 = vshll.u32 %v5533, 16
      %v5844 = vrot.slane %v5842, 5
      %v5845 = vsel %vm3645, %v5840, %v5844
      %v5846 = vshrl.u32 %v5533, 16
      %v5848 = vrot.slane %v5846, 4
      %v5849 = vor.u32 %v5848, %v5844
      %v5850 = vrot.slane %v5849, 4
      %v5852 = vshll.u32 %v5534, 16
      %v5854 = vrot.slane %v5852, 5
      %v5855 = vsel %vm3645, %v5850, %v5854
      %v5857 = vshrl.u32 %v5535, 16
      %v5859 = vrot.slane %v5857, 4
      %v5860 = vshll.u32 %v5535, 16
      %v5862 = vrot.slane %v5860, 5
      %v5863 = vor.u32 %v5859, %v5862
      %v5864 = vrot.slane %v5863, 4
      %v5866 = vshll.u32 %v5536, 16
      %v5868 = vrot.slane %v5866, 5
      %v5869 = vsel %vm3645, %v5864, %v5868
      %v5870 = vshrl.u32 %v5536, 16
      %v5872 = vrot.slane %v5870, 4
      %v5873 = vor.u32 %v5872, %v5868
      %v5874 = vrot.slane %v5873, 4
      %v5876 = vshll.u32 %v5537, 16
      %v5878 = vrot.slane %v5876, 5
      %v5879 = vsel %vm3645, %v5874, %v5878
      %v5881 = vshrl.u32 %v5538, 16
      %v5883 = vrot.slane %v5881, 4
      %v5884 = vshll.u32 %v5538, 16
      %v5886 = vrot.slane %v5884, 5
      %v5887 = vor.u32 %v5883, %v5886
      %v5888 = vrot.slane %v5887, 4
      %v5890 = vshll.u32 %v5539, 16
      %v5892 = vrot.slane %v5890, 5
      %v5893 = vsel %vm3645, %v5888, %v5892
      %v5894 = vshrl.u32 %v5539, 16
      %v5896 = vrot.slane %v5894, 4
      %v5897 = vor.u32 %v5896, %v5892
      %v5898 = vrot.slane %v5897, 4
      %v5900 = vshll.u32 %v5540, 16
      %v5902 = vrot.slane %v5900, 5
      %v5903 = vsel %vm3645, %v5898, %v5902
      %v5905 = vshrl.u32 %v5541, 16
      %v5907 = vrot.slane %v5905, 4
      %v5908 = vshll.u32 %v5541, 16
      %v5910 = vrot.slane %v5908, 5
      %v5911 = vor.u32 %v5907, %v5910
      %v5912 = vrot.slane %v5911, 4
      %v5914 = vshll.u32 %v5542, 16
      %v5916 = vrot.slane %v5914, 5
      %v5917 = vsel %vm3645, %v5912, %v5916
      %v5918 = vshrl.u32 %v5542, 16
      %v5920 = vrot.slane %v5918, 4
      %v5921 = vor.u32 %v5920, %v5916
      %v5922 = vrot.slane %v5921, 4
      %v5924 = vshll.u32 %v5543, 16
      %v5926 = vrot.slane %v5924, 5
      %v5927 = vsel %vm3645, %v5922, %v5926
      %s5928 = scalar_lea.vmem %s3, 256
      %v5929 = vld [vmem:[%s5928] sm:$0xf]
      %v5930 = vld [vmem:[%s5928 + $0x4] sm:$0xf]
      %v5931 = vld [vmem:[%s5928 + $0x8] sm:$0xf]
      %v5932 = vld [vmem:[%s5928 + $0xc] sm:$0xf]
      %v5933 = vld [vmem:[%s5928 + $0x10] sm:$0xf]
      %v5934 = vld [vmem:[%s5928 + $0x14] sm:$0xf]
      %v5935 = vld [vmem:[%s5928 + $0x18] sm:$0xf]
      %v5936 = vld [vmem:[%s5928 + $0x1c] sm:$0xf]
      %v5937 = vld [vmem:[%s5928 + $0x20] sm:$0xf]
      %v5938 = vld [vmem:[%s5928 + $0x24] sm:$0xf]
      %v5939 = vld [vmem:[%s5928 + $0x28] sm:$0xf]
      %v5940 = vld [vmem:[%s5928 + $0x2c] sm:$0xf]
      %v5941 = vld [vmem:[%s5928 + $0x30] sm:$0xf]
      %v5942 = vld [vmem:[%s5928 + $0x34] sm:$0xf]
      %v5943 = vld [vmem:[%s5928 + $0x38] sm:$0xf]
      %v5944 = vld [vmem:[%s5928 + $0x3c] sm:$0xf]
      %v5945 = vunpack.c.l.b16 %v5557
      %v5946 = vunpack.c.l.b16 %v5567
      %v5947 = vunpack.c.l.b16 %v5581
      %v5948 = vunpack.c.l.b16 %v5591
      %v5949 = vunpack.c.l.b16 %v5605
      %v5950 = vunpack.c.l.b16 %v5615
      %v5951 = vunpack.c.l.b16 %v5629
      %v5952 = vunpack.c.l.b16 %v5639
      %v5953 = vunpack.c.l.b16 %v5653
      %v5954 = vunpack.c.l.b16 %v5663
      %v5955 = vunpack.c.l.b16 %v5677
      %v5956 = vunpack.c.l.b16 %v5687
      %v5957 = vunpack.c.l.b16 %v5701
      %v5958 = vunpack.c.l.b16 %v5711
      %v5959 = vunpack.c.l.b16 %v5725
      %v5960 = vunpack.c.l.b16 %v5735
      %v5961 = vunpack.c.l.b16 %v5749
      %v5962 = vunpack.c.l.b16 %v5759
      %v5963 = vunpack.c.l.b16 %v5773
      %v5964 = vunpack.c.l.b16 %v5783
      %v5965 = vunpack.c.l.b16 %v5797
      %v5966 = vunpack.c.l.b16 %v5807
      %v5967 = vunpack.c.l.b16 %v5821
      %v5968 = vunpack.c.l.b16 %v5831
      %v5969 = vunpack.c.l.b16 %v5845
      %v5970 = vunpack.c.l.b16 %v5855
      %v5971 = vunpack.c.l.b16 %v5869
      %v5972 = vunpack.c.l.b16 %v5879
      %v5973 = vunpack.c.l.b16 %v5893
      %v5974 = vunpack.c.l.b16 %v5903
      %v5975 = vunpack.c.l.b16 %v5917
      %v5976 = vunpack.c.l.b16 %v5927
      %v5977 = vpack.c.b16 %v5946, %v5945
      %v5978 = vpack.c.b16 %v5948, %v5947
      %v5979 = vpack.c.b16 %v5950, %v5949
      %v5980 = vpack.c.b16 %v5952, %v5951
      %v5981 = vpack.c.b16 %v5954, %v5953
      %v5982 = vpack.c.b16 %v5956, %v5955
      %v5983 = vpack.c.b16 %v5958, %v5957
      %v5984 = vpack.c.b16 %v5960, %v5959
      %v5985 = vpack.c.b16 %v5962, %v5961
      %v5986 = vpack.c.b16 %v5964, %v5963
      %v5987 = vpack.c.b16 %v5966, %v5965
      %v5988 = vpack.c.b16 %v5968, %v5967
      %v5989 = vpack.c.b16 %v5970, %v5969
      %v5990 = vpack.c.b16 %v5972, %v5971
      %v5991 = vpack.c.b16 %v5974, %v5973
      %v5992 = vpack.c.b16 %v5976, %v5975
      %v6025 = vunpack.c.l.b16 %v5929
      %v6026 = vunpack.c.l.b16 %v5930
      %v6027 = vunpack.c.l.b16 %v5931
      %v6028 = vunpack.c.l.b16 %v5932
      %v6029 = vunpack.c.l.b16 %v5933
      %v6030 = vunpack.c.l.b16 %v5934
      %v6031 = vunpack.c.l.b16 %v5935
      %v6032 = vunpack.c.l.b16 %v5936
      %v6033 = vunpack.c.l.b16 %v5937
      %v6034 = vunpack.c.l.b16 %v5938
      %v6035 = vunpack.c.l.b16 %v5939
      %v6036 = vunpack.c.l.b16 %v5940
      %v6037 = vunpack.c.l.b16 %v5941
      %v6038 = vunpack.c.l.b16 %v5942
      %v6039 = vunpack.c.l.b16 %v5943
      %v6040 = vunpack.c.l.b16 %v5944
      %v6041 = vpack.c.b16 %v6026, %v6025
      %v6042 = vpack.c.b16 %v6028, %v6027
      %v6043 = vpack.c.b16 %v6030, %v6029
      %v6044 = vpack.c.b16 %v6032, %v6031
      %v6045 = vpack.c.b16 %v6034, %v6033
      %v6046 = vpack.c.b16 %v6036, %v6035
      %v6047 = vpack.c.b16 %v6038, %v6037
      %v6048 = vpack.c.b16 %v6040, %v6039
      %6057 = vmatprep.subr.bf16.mxu0 0
      %6058 = vmatpush1.bf16.msra.mxu0 %v6048
      %6059 = vmatprep.subr.bf16.mxu0 0
      %6060 = vmatpush1.bf16.msra.mxu0 %v6047
      %6061 = vmatprep.subr.bf16.mxu0 0
      %6062 = vmatpush1.bf16.msra.mxu0 %v6046
      %6063 = vmatprep.subr.bf16.mxu0 0
      %6064 = vmatpush1.bf16.msra.mxu0 %v6045
      %6065 = vmatprep.subr.bf16.mxu0 0
      %6066 = vmatpush1.bf16.msra.mxu0 %v6044
      %6067 = vmatprep.subr.bf16.mxu0 0
      %6068 = vmatpush1.bf16.msra.mxu0 %v6043
      %6069 = vmatprep.subr.bf16.mxu0 0
      %6070 = vmatpush1.bf16.msra.mxu0 %v6042
      %6071 = vmatprep.subr.bf16.mxu0 0
      %6072 = vmatpush1.bf16.msra.mxu0 %v6041
      %6073 = vmatprep.subr.bf16.mxu0 0
      %6074 = vmatpush2.bf16.msra.mxu0 0
      %6075 = vmatprep.subr.bf16.mxu0 0
      %6076 = vmatpush2.bf16.msra.mxu0 0
      %6077 = vmatprep.subr.bf16.mxu0 0
      %6078 = vmatpush2.bf16.msra.mxu0 0
      %6079 = vmatprep.subr.bf16.mxu0 0
      %6080 = vmatpush2.bf16.msra.mxu0 0
      %6081 = vmatprep.subr.bf16.mxu0 0
      %6082 = vmatpush2.bf16.msra.mxu0 0
      %6083 = vmatprep.subr.bf16.mxu0 0
      %6084 = vmatpush2.bf16.msra.mxu0 0
      %6085 = vmatprep.subr.bf16.mxu0 0
      %6086 = vmatpush2.bf16.msra.mxu0 0
      %6087 = vmatprep.subr.bf16.mxu0 0
      %6088 = vmatpush2.bf16.msra.mxu0 0
      %6089 = vmatprep.mubr.bf16.mxu0 0
      %6090 = vmatmul.mubr.bf16.gmra.mxu0 %v5977
      %v6091 = vpop.f32.mrf.mxu0
      %v6092 = vadd.f32 0.0, %v6091
      %v6093 = vpop.f32.mrf.mxu0
      %v6094 = vpop.f32.mrf.mxu0
      %v6095 = vadd.f32 0.0, %v6094
      %v6096 = vpop.f32.mrf.mxu0
      %6097 = vmatprep.mubr.bf16.mxu0 0
      %6098 = vmatmul.mubr.bf16.gmra.mxu0 %v5978
      %v6099 = vpop.f32.mrf.mxu0
      %v6100 = vadd.f32 0.0, %v6099
      %v6101 = vpop.f32.mrf.mxu0
      %v6102 = vpop.f32.mrf.mxu0
      %v6103 = vadd.f32 0.0, %v6102
      %v6104 = vpop.f32.mrf.mxu0
      %6105 = vmatprep.mubr.bf16.mxu0 0
      %6106 = vmatmul.mubr.bf16.gmra.mxu0 %v5979
      %v6107 = vpop.f32.mrf.mxu0
      %v6108 = vadd.f32 0.0, %v6107
      %v6109 = vpop.f32.mrf.mxu0
      %v6110 = vpop.f32.mrf.mxu0
      %v6111 = vadd.f32 0.0, %v6110
      %v6112 = vpop.f32.mrf.mxu0
      %6113 = vmatprep.mubr.bf16.mxu0 0
      %6114 = vmatmul.mubr.bf16.gmra.mxu0 %v5980
      %v6115 = vpop.f32.mrf.mxu0
      %v6116 = vadd.f32 0.0, %v6115
      %v6117 = vpop.f32.mrf.mxu0
      %v6118 = vpop.f32.mrf.mxu0
      %v6119 = vadd.f32 0.0, %v6118
      %v6120 = vpop.f32.mrf.mxu0
      %6121 = vmatprep.mubr.bf16.mxu0 0
      %6122 = vmatmul.mubr.bf16.gmra.mxu0 %v5981
      %v6123 = vpop.f32.mrf.mxu0
      %v6124 = vadd.f32 0.0, %v6123
      %v6125 = vpop.f32.mrf.mxu0
      %v6126 = vpop.f32.mrf.mxu0
      %v6127 = vadd.f32 0.0, %v6126
      %v6128 = vpop.f32.mrf.mxu0
      %6129 = vmatprep.mubr.bf16.mxu0 0
      %6130 = vmatmul.mubr.bf16.gmra.mxu0 %v5982
      %v6131 = vpop.f32.mrf.mxu0
      %v6132 = vadd.f32 0.0, %v6131
      %v6133 = vpop.f32.mrf.mxu0
      %v6134 = vpop.f32.mrf.mxu0
      %v6135 = vadd.f32 0.0, %v6134
      %v6136 = vpop.f32.mrf.mxu0
      %6137 = vmatprep.mubr.bf16.mxu0 0
      %6138 = vmatmul.mubr.bf16.gmra.mxu0 %v5983
      %v6139 = vpop.f32.mrf.mxu0
      %v6140 = vadd.f32 0.0, %v6139
      %v6141 = vpop.f32.mrf.mxu0
      %v6142 = vpop.f32.mrf.mxu0
      %v6143 = vadd.f32 0.0, %v6142
      %v6144 = vpop.f32.mrf.mxu0
      %6145 = vmatprep.mubr.bf16.mxu0 0
      %6146 = vmatmul.mubr.bf16.gmra.mxu0 %v5984
      %v6147 = vpop.f32.mrf.mxu0
      %v6148 = vadd.f32 0.0, %v6147
      %v6149 = vpop.f32.mrf.mxu0
      %v6150 = vpop.f32.mrf.mxu0
      %v6151 = vadd.f32 0.0, %v6150
      %v6152 = vpop.f32.mrf.mxu0
      %6153 = vmatprep.mubr.bf16.mxu0 0
      %6154 = vmatmul.mubr.bf16.gmra.mxu0 %v5985
      %v6155 = vpop.f32.mrf.mxu0
      %v6156 = vadd.f32 0.0, %v6155
      %v6157 = vpop.f32.mrf.mxu0
      %v6158 = vpop.f32.mrf.mxu0
      %v6159 = vadd.f32 0.0, %v6158
      %v6160 = vpop.f32.mrf.mxu0
      %6161 = vmatprep.mubr.bf16.mxu0 0
      %6162 = vmatmul.mubr.bf16.gmra.mxu0 %v5986
      %v6163 = vpop.f32.mrf.mxu0
      %v6164 = vadd.f32 0.0, %v6163
      %v6165 = vpop.f32.mrf.mxu0
      %v6166 = vpop.f32.mrf.mxu0
      %v6167 = vadd.f32 0.0, %v6166
      %v6168 = vpop.f32.mrf.mxu0
      %6169 = vmatprep.mubr.bf16.mxu0 0
      %6170 = vmatmul.mubr.bf16.gmra.mxu0 %v5987
      %v6171 = vpop.f32.mrf.mxu0
      %v6172 = vadd.f32 0.0, %v6171
      %v6173 = vpop.f32.mrf.mxu0
      %v6174 = vpop.f32.mrf.mxu0
      %v6175 = vadd.f32 0.0, %v6174
      %v6176 = vpop.f32.mrf.mxu0
      %6177 = vmatprep.mubr.bf16.mxu0 0
      %6178 = vmatmul.mubr.bf16.gmra.mxu0 %v5988
      %v6179 = vpop.f32.mrf.mxu0
      %v6180 = vadd.f32 0.0, %v6179
      %v6181 = vpop.f32.mrf.mxu0
      %v6182 = vpop.f32.mrf.mxu0
      %v6183 = vadd.f32 0.0, %v6182
      %v6184 = vpop.f32.mrf.mxu0
      %6185 = vmatprep.mubr.bf16.mxu0 0
      %6186 = vmatmul.mubr.bf16.gmra.mxu0 %v5989
      %v6187 = vpop.f32.mrf.mxu0
      %v6188 = vadd.f32 0.0, %v6187
      %v6189 = vpop.f32.mrf.mxu0
      %v6190 = vpop.f32.mrf.mxu0
      %v6191 = vadd.f32 0.0, %v6190
      %v6192 = vpop.f32.mrf.mxu0
      %6193 = vmatprep.mubr.bf16.mxu0 0
      %6194 = vmatmul.mubr.bf16.gmra.mxu0 %v5990
      %v6195 = vpop.f32.mrf.mxu0
      %v6196 = vadd.f32 0.0, %v6195
      %v6197 = vpop.f32.mrf.mxu0
      %v6198 = vpop.f32.mrf.mxu0
      %v6199 = vadd.f32 0.0, %v6198
      %v6200 = vpop.f32.mrf.mxu0
      %6201 = vmatprep.mubr.bf16.mxu0 0
      %6202 = vmatmul.mubr.bf16.gmra.mxu0 %v5991
      %v6203 = vpop.f32.mrf.mxu0
      %v6204 = vadd.f32 0.0, %v6203
      %v6205 = vpop.f32.mrf.mxu0
      %v6206 = vpop.f32.mrf.mxu0
      %v6207 = vadd.f32 0.0, %v6206
      %v6208 = vpop.f32.mrf.mxu0
      %6209 = vmatprep.mubr.bf16.mxu0 0
      %6210 = vmatmul.mubr.bf16.gmra.mxu0 %v5992
      %v6211 = vpop.f32.mrf.mxu0
      %v6212 = vadd.f32 0.0, %v6211
      %v6213 = vpop.f32.mrf.mxu0
      %v6214 = vpop.f32.mrf.mxu0
      %v6215 = vadd.f32 0.0, %v6214
      %v6216 = vpop.f32.mrf.mxu0
      %6217 = vdwg.mxu0
      %v6218 = vadd.f32 %v5464, %v6092
      %v6219 = vadd.f32 %v5465, %v6095
      %v6220 = vadd.f32 %v5466, %v6100
      %v6221 = vadd.f32 %v5467, %v6103
      %v6222 = vadd.f32 %v5468, %v6108
      %v6223 = vadd.f32 %v5469, %v6111
      %v6224 = vadd.f32 %v5470, %v6116
      %v6225 = vadd.f32 %v5471, %v6119
      %v6226 = vadd.f32 %v5472, %v6124
      %v6227 = vadd.f32 %v5473, %v6127
      %v6228 = vadd.f32 %v5474, %v6132
      %v6229 = vadd.f32 %v5475, %v6135
      %v6230 = vadd.f32 %v5476, %v6140
      %v6231 = vadd.f32 %v5477, %v6143
      %v6232 = vadd.f32 %v5478, %v6148
      %v6233 = vadd.f32 %v5479, %v6151
      %v6234 = vadd.f32 %v5480, %v6156
      %v6235 = vadd.f32 %v5481, %v6159
      %v6236 = vadd.f32 %v5482, %v6164
      %v6237 = vadd.f32 %v5483, %v6167
      %v6238 = vadd.f32 %v5484, %v6172
      %v6239 = vadd.f32 %v5485, %v6175
      %v6240 = vadd.f32 %v5486, %v6180
      %v6241 = vadd.f32 %v5487, %v6183
      %v6242 = vadd.f32 %v5488, %v6188
      %v6243 = vadd.f32 %v5489, %v6191
      %v6244 = vadd.f32 %v5490, %v6196
      %v6245 = vadd.f32 %v5491, %v6199
      %v6246 = vadd.f32 %v5492, %v6204
      %v6247 = vadd.f32 %v5493, %v6207
      %v6248 = vadd.f32 %v5494, %v6212
      %v6249 = vadd.f32 %v5495, %v6215
      %v6250 = vld [vmem:[%s3461] sm:$0xe]
      %v6251 = vld [vmem:[%s3461 + $0xc] sm:$0xe]
      %v6252 = vld [vmem:[%s3461 + $0x18] sm:$0xe]
      %v6253 = vld [vmem:[%s3461 + $0x24] sm:$0xe]
      %v6254 = vld [vmem:[%s3461 + $0x30] sm:$0xe]
      %v6255 = vld [vmem:[%s3461 + $0x3c] sm:$0xe]
      %v6256 = vld [vmem:[%s3461 + $0x48] sm:$0xe]
      %v6257 = vld [vmem:[%s3461 + $0x54] sm:$0xe]
      %v6258 = vld [vmem:[%s3461 + $0x60] sm:$0xe]
      %v6259 = vld [vmem:[%s3461 + $0x6c] sm:$0xe]
      %v6260 = vld [vmem:[%s3461 + $0x78] sm:$0xe]
      %v6261 = vld [vmem:[%s3461 + $0x84] sm:$0xe]
      %v6262 = vld [vmem:[%s3461 + $0x90] sm:$0xe]
      %v6263 = vld [vmem:[%s3461 + $0x9c] sm:$0xe]
      %v6264 = vld [vmem:[%s3461 + $0xa8] sm:$0xe]
      %v6265 = vld [vmem:[%s3461 + $0xb4] sm:$0xe]
      %v6314 = vrot.slane %v6250, 5
      %v6315 = vrot.slane %v6314, 4
      %v6316 = vrot.slane %v5497, 5
      %v6317 = vsel %vm4675, %v6315, %v6316
      %v6318 = vrot.slane %v6316, 4
      %v6319 = vrot.slane %v5498, 5
      %v6320 = vsel %vm4675, %v6318, %v6319
      %v6321 = vrot.slane %v6251, 5
      %v6322 = vrot.slane %v6321, 4
      %v6323 = vrot.slane %v5500, 5
      %v6324 = vsel %vm4675, %v6322, %v6323
      %v6325 = vrot.slane %v6323, 4
      %v6326 = vrot.slane %v5501, 5
      %v6327 = vsel %vm4675, %v6325, %v6326
      %v6328 = vrot.slane %v6252, 5
      %v6329 = vrot.slane %v6328, 4
      %v6330 = vrot.slane %v5503, 5
      %v6331 = vsel %vm4675, %v6329, %v6330
      %v6332 = vrot.slane %v6330, 4
      %v6333 = vrot.slane %v5504, 5
      %v6334 = vsel %vm4675, %v6332, %v6333
      %v6335 = vrot.slane %v6253, 5
      %v6336 = vrot.slane %v6335, 4
      %v6337 = vrot.slane %v5506, 5
      %v6338 = vsel %vm4675, %v6336, %v6337
      %v6339 = vrot.slane %v6337, 4
      %v6340 = vrot.slane %v5507, 5
      %v6341 = vsel %vm4675, %v6339, %v6340
      %v6342 = vrot.slane %v6254, 5
      %v6343 = vrot.slane %v6342, 4
      %v6344 = vrot.slane %v5509, 5
      %v6345 = vsel %vm4675, %v6343, %v6344
      %v6346 = vrot.slane %v6344, 4
      %v6347 = vrot.slane %v5510, 5
      %v6348 = vsel %vm4675, %v6346, %v6347
      %v6349 = vrot.slane %v6255, 5
      %v6350 = vrot.slane %v6349, 4
      %v6351 = vrot.slane %v5512, 5
      %v6352 = vsel %vm4675, %v6350, %v6351
      %v6353 = vrot.slane %v6351, 4
      %v6354 = vrot.slane %v5513, 5
      %v6355 = vsel %vm4675, %v6353, %v6354
      %v6356 = vrot.slane %v6256, 5
      %v6357 = vrot.slane %v6356, 4
      %v6358 = vrot.slane %v5515, 5
      %v6359 = vsel %vm4675, %v6357, %v6358
      %v6360 = vrot.slane %v6358, 4
      %v6361 = vrot.slane %v5516, 5
      %v6362 = vsel %vm4675, %v6360, %v6361
      %v6363 = vrot.slane %v6257, 5
      %v6364 = vrot.slane %v6363, 4
      %v6365 = vrot.slane %v5518, 5
      %v6366 = vsel %vm4675, %v6364, %v6365
      %v6367 = vrot.slane %v6365, 4
      %v6368 = vrot.slane %v5519, 5
      %v6369 = vsel %vm4675, %v6367, %v6368
      %v6370 = vrot.slane %v6258, 5
      %v6371 = vrot.slane %v6370, 4
      %v6372 = vrot.slane %v5521, 5
      %v6373 = vsel %vm4675, %v6371, %v6372
      %v6374 = vrot.slane %v6372, 4
      %v6375 = vrot.slane %v5522, 5
      %v6376 = vsel %vm4675, %v6374, %v6375
      %v6377 = vrot.slane %v6259, 5
      %v6378 = vrot.slane %v6377, 4
      %v6379 = vrot.slane %v5524, 5
      %v6380 = vsel %vm4675, %v6378, %v6379
      %v6381 = vrot.slane %v6379, 4
      %v6382 = vrot.slane %v5525, 5
      %v6383 = vsel %vm4675, %v6381, %v6382
      %v6384 = vrot.slane %v6260, 5
      %v6385 = vrot.slane %v6384, 4
      %v6386 = vrot.slane %v5527, 5
      %v6387 = vsel %vm4675, %v6385, %v6386
      %v6388 = vrot.slane %v6386, 4
      %v6389 = vrot.slane %v5528, 5
      %v6390 = vsel %vm4675, %v6388, %v6389
      %v6391 = vrot.slane %v6261, 5
      %v6392 = vrot.slane %v6391, 4
      %v6393 = vrot.slane %v5530, 5
      %v6394 = vsel %vm4675, %v6392, %v6393
      %v6395 = vrot.slane %v6393, 4
      %v6396 = vrot.slane %v5531, 5
      %v6397 = vsel %vm4675, %v6395, %v6396
      %v6398 = vrot.slane %v6262, 5
      %v6399 = vrot.slane %v6398, 4
      %v6400 = vrot.slane %v5533, 5
      %v6401 = vsel %vm4675, %v6399, %v6400
      %v6402 = vrot.slane %v6400, 4
      %v6403 = vrot.slane %v5534, 5
      %v6404 = vsel %vm4675, %v6402, %v6403
      %v6405 = vrot.slane %v6263, 5
      %v6406 = vrot.slane %v6405, 4
      %v6407 = vrot.slane %v5536, 5
      %v6408 = vsel %vm4675, %v6406, %v6407
      %v6409 = vrot.slane %v6407, 4
      %v6410 = vrot.slane %v5537, 5
      %v6411 = vsel %vm4675, %v6409, %v6410
      %v6412 = vrot.slane %v6264, 5
      %v6413 = vrot.slane %v6412, 4
      %v6414 = vrot.slane %v5539, 5
      %v6415 = vsel %vm4675, %v6413, %v6414
      %v6416 = vrot.slane %v6414, 4
      %v6417 = vrot.slane %v5540, 5
      %v6418 = vsel %vm4675, %v6416, %v6417
      %v6419 = vrot.slane %v6265, 5
      %v6420 = vrot.slane %v6419, 4
      %v6421 = vrot.slane %v5542, 5
      %v6422 = vsel %vm4675, %v6420, %v6421
      %v6423 = vrot.slane %v6421, 4
      %v6424 = vrot.slane %v5543, 5
      %v6425 = vsel %vm4675, %v6423, %v6424
      %s6426 = scalar_lea.vmem %s3, 320
      %v6427 = vld [vmem:[%s6426] sm:$0xf]
      %v6428 = vld [vmem:[%s6426 + $0x4] sm:$0xf]
      %v6429 = vld [vmem:[%s6426 + $0x8] sm:$0xf]
      %v6430 = vld [vmem:[%s6426 + $0xc] sm:$0xf]
      %v6431 = vld [vmem:[%s6426 + $0x10] sm:$0xf]
      %v6432 = vld [vmem:[%s6426 + $0x14] sm:$0xf]
      %v6433 = vld [vmem:[%s6426 + $0x18] sm:$0xf]
      %v6434 = vld [vmem:[%s6426 + $0x1c] sm:$0xf]
      %v6435 = vld [vmem:[%s6426 + $0x20] sm:$0xf]
      %v6436 = vld [vmem:[%s6426 + $0x24] sm:$0xf]
      %v6437 = vld [vmem:[%s6426 + $0x28] sm:$0xf]
      %v6438 = vld [vmem:[%s6426 + $0x2c] sm:$0xf]
      %v6439 = vld [vmem:[%s6426 + $0x30] sm:$0xf]
      %v6440 = vld [vmem:[%s6426 + $0x34] sm:$0xf]
      %v6441 = vld [vmem:[%s6426 + $0x38] sm:$0xf]
      %v6442 = vld [vmem:[%s6426 + $0x3c] sm:$0xf]
      %v6443 = vunpack.c.l.b16 %v6317
      %v6444 = vunpack.c.l.b16 %v6320
      %v6445 = vunpack.c.l.b16 %v6324
      %v6446 = vunpack.c.l.b16 %v6327
      %v6447 = vunpack.c.l.b16 %v6331
      %v6448 = vunpack.c.l.b16 %v6334
      %v6449 = vunpack.c.l.b16 %v6338
      %v6450 = vunpack.c.l.b16 %v6341
      %v6451 = vunpack.c.l.b16 %v6345
      %v6452 = vunpack.c.l.b16 %v6348
      %v6453 = vunpack.c.l.b16 %v6352
      %v6454 = vunpack.c.l.b16 %v6355
      %v6455 = vunpack.c.l.b16 %v6359
      %v6456 = vunpack.c.l.b16 %v6362
      %v6457 = vunpack.c.l.b16 %v6366
      %v6458 = vunpack.c.l.b16 %v6369
      %v6459 = vunpack.c.l.b16 %v6373
      %v6460 = vunpack.c.l.b16 %v6376
      %v6461 = vunpack.c.l.b16 %v6380
      %v6462 = vunpack.c.l.b16 %v6383
      %v6463 = vunpack.c.l.b16 %v6387
      %v6464 = vunpack.c.l.b16 %v6390
      %v6465 = vunpack.c.l.b16 %v6394
      %v6466 = vunpack.c.l.b16 %v6397
      %v6467 = vunpack.c.l.b16 %v6401
      %v6468 = vunpack.c.l.b16 %v6404
      %v6469 = vunpack.c.l.b16 %v6408
      %v6470 = vunpack.c.l.b16 %v6411
      %v6471 = vunpack.c.l.b16 %v6415
      %v6472 = vunpack.c.l.b16 %v6418
      %v6473 = vunpack.c.l.b16 %v6422
      %v6474 = vunpack.c.l.b16 %v6425
      %v6475 = vpack.c.b16 %v6444, %v6443
      %v6476 = vpack.c.b16 %v6446, %v6445
      %v6477 = vpack.c.b16 %v6448, %v6447
      %v6478 = vpack.c.b16 %v6450, %v6449
      %v6479 = vpack.c.b16 %v6452, %v6451
      %v6480 = vpack.c.b16 %v6454, %v6453
      %v6481 = vpack.c.b16 %v6456, %v6455
      %v6482 = vpack.c.b16 %v6458, %v6457
      %v6483 = vpack.c.b16 %v6460, %v6459
      %v6484 = vpack.c.b16 %v6462, %v6461
      %v6485 = vpack.c.b16 %v6464, %v6463
      %v6486 = vpack.c.b16 %v6466, %v6465
      %v6487 = vpack.c.b16 %v6468, %v6467
      %v6488 = vpack.c.b16 %v6470, %v6469
      %v6489 = vpack.c.b16 %v6472, %v6471
      %v6490 = vpack.c.b16 %v6474, %v6473
      %v6523 = vunpack.c.l.b16 %v6427
      %v6524 = vunpack.c.l.b16 %v6428
      %v6525 = vunpack.c.l.b16 %v6429
      %v6526 = vunpack.c.l.b16 %v6430
      %v6527 = vunpack.c.l.b16 %v6431
      %v6528 = vunpack.c.l.b16 %v6432
      %v6529 = vunpack.c.l.b16 %v6433
      %v6530 = vunpack.c.l.b16 %v6434
      %v6531 = vunpack.c.l.b16 %v6435
      %v6532 = vunpack.c.l.b16 %v6436
      %v6533 = vunpack.c.l.b16 %v6437
      %v6534 = vunpack.c.l.b16 %v6438
      %v6535 = vunpack.c.l.b16 %v6439
      %v6536 = vunpack.c.l.b16 %v6440
      %v6537 = vunpack.c.l.b16 %v6441
      %v6538 = vunpack.c.l.b16 %v6442
      %v6539 = vpack.c.b16 %v6524, %v6523
      %v6540 = vpack.c.b16 %v6526, %v6525
      %v6541 = vpack.c.b16 %v6528, %v6527
      %v6542 = vpack.c.b16 %v6530, %v6529
      %v6543 = vpack.c.b16 %v6532, %v6531
      %v6544 = vpack.c.b16 %v6534, %v6533
      %v6545 = vpack.c.b16 %v6536, %v6535
      %v6546 = vpack.c.b16 %v6538, %v6537
      %6555 = vmatprep.subr.bf16.mxu0 0
      %6556 = vmatpush1.bf16.msra.mxu0 %v6546
      %6557 = vmatprep.subr.bf16.mxu0 0
      %6558 = vmatpush1.bf16.msra.mxu0 %v6545
      %6559 = vmatprep.subr.bf16.mxu0 0
      %6560 = vmatpush1.bf16.msra.mxu0 %v6544
      %6561 = vmatprep.subr.bf16.mxu0 0
      %6562 = vmatpush1.bf16.msra.mxu0 %v6543
      %6563 = vmatprep.subr.bf16.mxu0 0
      %6564 = vmatpush1.bf16.msra.mxu0 %v6542
      %6565 = vmatprep.subr.bf16.mxu0 0
      %6566 = vmatpush1.bf16.msra.mxu0 %v6541
      %6567 = vmatprep.subr.bf16.mxu0 0
      %6568 = vmatpush1.bf16.msra.mxu0 %v6540
      %6569 = vmatprep.subr.bf16.mxu0 0
      %6570 = vmatpush1.bf16.msra.mxu0 %v6539
      %6571 = vmatprep.subr.bf16.mxu0 0
      %6572 = vmatpush2.bf16.msra.mxu0 0
      %6573 = vmatprep.subr.bf16.mxu0 0
      %6574 = vmatpush2.bf16.msra.mxu0 0
      %6575 = vmatprep.subr.bf16.mxu0 0
      %6576 = vmatpush2.bf16.msra.mxu0 0
      %6577 = vmatprep.subr.bf16.mxu0 0
      %6578 = vmatpush2.bf16.msra.mxu0 0
      %6579 = vmatprep.subr.bf16.mxu0 0
      %6580 = vmatpush2.bf16.msra.mxu0 0
      %6581 = vmatprep.subr.bf16.mxu0 0
      %6582 = vmatpush2.bf16.msra.mxu0 0
      %6583 = vmatprep.subr.bf16.mxu0 0
      %6584 = vmatpush2.bf16.msra.mxu0 0
      %6585 = vmatprep.subr.bf16.mxu0 0
      %6586 = vmatpush2.bf16.msra.mxu0 0
      %6587 = vmatprep.mubr.bf16.mxu0 0
      %6588 = vmatmul.mubr.bf16.gmra.mxu0 %v6475
      %v6589 = vpop.f32.mrf.mxu0
      %v6590 = vadd.f32 0.0, %v6589
      %v6591 = vpop.f32.mrf.mxu0
      %v6592 = vpop.f32.mrf.mxu0
      %v6593 = vadd.f32 0.0, %v6592
      %v6594 = vpop.f32.mrf.mxu0
      %6595 = vmatprep.mubr.bf16.mxu0 0
      %6596 = vmatmul.mubr.bf16.gmra.mxu0 %v6476
      %v6597 = vpop.f32.mrf.mxu0
      %v6598 = vadd.f32 0.0, %v6597
      %v6599 = vpop.f32.mrf.mxu0
      %v6600 = vpop.f32.mrf.mxu0
      %v6601 = vadd.f32 0.0, %v6600
      %v6602 = vpop.f32.mrf.mxu0
      %6603 = vmatprep.mubr.bf16.mxu0 0
      %6604 = vmatmul.mubr.bf16.gmra.mxu0 %v6477
      %v6605 = vpop.f32.mrf.mxu0
      %v6606 = vadd.f32 0.0, %v6605
      %v6607 = vpop.f32.mrf.mxu0
      %v6608 = vpop.f32.mrf.mxu0
      %v6609 = vadd.f32 0.0, %v6608
      %v6610 = vpop.f32.mrf.mxu0
      %6611 = vmatprep.mubr.bf16.mxu0 0
      %6612 = vmatmul.mubr.bf16.gmra.mxu0 %v6478
      %v6613 = vpop.f32.mrf.mxu0
      %v6614 = vadd.f32 0.0, %v6613
      %v6615 = vpop.f32.mrf.mxu0
      %v6616 = vpop.f32.mrf.mxu0
      %v6617 = vadd.f32 0.0, %v6616
      %v6618 = vpop.f32.mrf.mxu0
      %6619 = vmatprep.mubr.bf16.mxu0 0
      %6620 = vmatmul.mubr.bf16.gmra.mxu0 %v6479
      %v6621 = vpop.f32.mrf.mxu0
      %v6622 = vadd.f32 0.0, %v6621
      %v6623 = vpop.f32.mrf.mxu0
      %v6624 = vpop.f32.mrf.mxu0
      %v6625 = vadd.f32 0.0, %v6624
      %v6626 = vpop.f32.mrf.mxu0
      %6627 = vmatprep.mubr.bf16.mxu0 0
      %6628 = vmatmul.mubr.bf16.gmra.mxu0 %v6480
      %v6629 = vpop.f32.mrf.mxu0
      %v6630 = vadd.f32 0.0, %v6629
      %v6631 = vpop.f32.mrf.mxu0
      %v6632 = vpop.f32.mrf.mxu0
      %v6633 = vadd.f32 0.0, %v6632
      %v6634 = vpop.f32.mrf.mxu0
      %6635 = vmatprep.mubr.bf16.mxu0 0
      %6636 = vmatmul.mubr.bf16.gmra.mxu0 %v6481
      %v6637 = vpop.f32.mrf.mxu0
      %v6638 = vadd.f32 0.0, %v6637
      %v6639 = vpop.f32.mrf.mxu0
      %v6640 = vpop.f32.mrf.mxu0
      %v6641 = vadd.f32 0.0, %v6640
      %v6642 = vpop.f32.mrf.mxu0
      %6643 = vmatprep.mubr.bf16.mxu0 0
      %6644 = vmatmul.mubr.bf16.gmra.mxu0 %v6482
      %v6645 = vpop.f32.mrf.mxu0
      %v6646 = vadd.f32 0.0, %v6645
      %v6647 = vpop.f32.mrf.mxu0
      %v6648 = vpop.f32.mrf.mxu0
      %v6649 = vadd.f32 0.0, %v6648
      %v6650 = vpop.f32.mrf.mxu0
      %6651 = vmatprep.mubr.bf16.mxu0 0
      %6652 = vmatmul.mubr.bf16.gmra.mxu0 %v6483
      %v6653 = vpop.f32.mrf.mxu0
      %v6654 = vadd.f32 0.0, %v6653
      %v6655 = vpop.f32.mrf.mxu0
      %v6656 = vpop.f32.mrf.mxu0
      %v6657 = vadd.f32 0.0, %v6656
      %v6658 = vpop.f32.mrf.mxu0
      %6659 = vmatprep.mubr.bf16.mxu0 0
      %6660 = vmatmul.mubr.bf16.gmra.mxu0 %v6484
      %v6661 = vpop.f32.mrf.mxu0
      %v6662 = vadd.f32 0.0, %v6661
      %v6663 = vpop.f32.mrf.mxu0
      %v6664 = vpop.f32.mrf.mxu0
      %v6665 = vadd.f32 0.0, %v6664
      %v6666 = vpop.f32.mrf.mxu0
      %6667 = vmatprep.mubr.bf16.mxu0 0
      %6668 = vmatmul.mubr.bf16.gmra.mxu0 %v6485
      %v6669 = vpop.f32.mrf.mxu0
      %v6670 = vadd.f32 0.0, %v6669
      %v6671 = vpop.f32.mrf.mxu0
      %v6672 = vpop.f32.mrf.mxu0
      %v6673 = vadd.f32 0.0, %v6672
      %v6674 = vpop.f32.mrf.mxu0
      %6675 = vmatprep.mubr.bf16.mxu0 0
      %6676 = vmatmul.mubr.bf16.gmra.mxu0 %v6486
      %v6677 = vpop.f32.mrf.mxu0
      %v6678 = vadd.f32 0.0, %v6677
      %v6679 = vpop.f32.mrf.mxu0
      %v6680 = vpop.f32.mrf.mxu0
      %v6681 = vadd.f32 0.0, %v6680
      %v6682 = vpop.f32.mrf.mxu0
      %6683 = vmatprep.mubr.bf16.mxu0 0
      %6684 = vmatmul.mubr.bf16.gmra.mxu0 %v6487
      %v6685 = vpop.f32.mrf.mxu0
      %v6686 = vadd.f32 0.0, %v6685
      %v6687 = vpop.f32.mrf.mxu0
      %v6688 = vpop.f32.mrf.mxu0
      %v6689 = vadd.f32 0.0, %v6688
      %v6690 = vpop.f32.mrf.mxu0
      %6691 = vmatprep.mubr.bf16.mxu0 0
      %6692 = vmatmul.mubr.bf16.gmra.mxu0 %v6488
      %v6693 = vpop.f32.mrf.mxu0
      %v6694 = vadd.f32 0.0, %v6693
      %v6695 = vpop.f32.mrf.mxu0
      %v6696 = vpop.f32.mrf.mxu0
      %v6697 = vadd.f32 0.0, %v6696
      %v6698 = vpop.f32.mrf.mxu0
      %6699 = vmatprep.mubr.bf16.mxu0 0
      %6700 = vmatmul.mubr.bf16.gmra.mxu0 %v6489
      %v6701 = vpop.f32.mrf.mxu0
      %v6702 = vadd.f32 0.0, %v6701
      %v6703 = vpop.f32.mrf.mxu0
      %v6704 = vpop.f32.mrf.mxu0
      %v6705 = vadd.f32 0.0, %v6704
      %v6706 = vpop.f32.mrf.mxu0
      %6707 = vmatprep.mubr.bf16.mxu0 0
      %6708 = vmatmul.mubr.bf16.gmra.mxu0 %v6490
      %v6709 = vpop.f32.mrf.mxu0
      %v6710 = vadd.f32 0.0, %v6709
      %v6711 = vpop.f32.mrf.mxu0
      %v6712 = vpop.f32.mrf.mxu0
      %v6713 = vadd.f32 0.0, %v6712
      %v6714 = vpop.f32.mrf.mxu0
      %6715 = vdwg.mxu0
      %v6716 = vadd.f32 %v6218, %v6590
      %v6717 = vadd.f32 %v6219, %v6593
      %v6718 = vadd.f32 %v6220, %v6598
      %v6719 = vadd.f32 %v6221, %v6601
      %v6720 = vadd.f32 %v6222, %v6606
      %v6721 = vadd.f32 %v6223, %v6609
      %v6722 = vadd.f32 %v6224, %v6614
      %v6723 = vadd.f32 %v6225, %v6617
      %v6724 = vadd.f32 %v6226, %v6622
      %v6725 = vadd.f32 %v6227, %v6625
      %v6726 = vadd.f32 %v6228, %v6630
      %v6727 = vadd.f32 %v6229, %v6633
      %v6728 = vadd.f32 %v6230, %v6638
      %v6729 = vadd.f32 %v6231, %v6641
      %v6730 = vadd.f32 %v6232, %v6646
      %v6731 = vadd.f32 %v6233, %v6649
      %v6732 = vadd.f32 %v6234, %v6654
      %v6733 = vadd.f32 %v6235, %v6657
      %v6734 = vadd.f32 %v6236, %v6662
      %v6735 = vadd.f32 %v6237, %v6665
      %v6736 = vadd.f32 %v6238, %v6670
      %v6737 = vadd.f32 %v6239, %v6673
      %v6738 = vadd.f32 %v6240, %v6678
      %v6739 = vadd.f32 %v6241, %v6681
      %v6740 = vadd.f32 %v6242, %v6686
      %v6741 = vadd.f32 %v6243, %v6689
      %v6742 = vadd.f32 %v6244, %v6694
      %v6743 = vadd.f32 %v6245, %v6697
      %v6744 = vadd.f32 %v6246, %v6702
      %v6745 = vadd.f32 %v6247, %v6705
      %v6746 = vadd.f32 %v6248, %v6710
      %v6747 = vadd.f32 %v6249, %v6713
      %s6748 = scalar_lea.vmem [#allocation2], 24
      %v6749 = vld [vmem:[%s6748] sm:$0xf]
      %v6750 = vld [vmem:[%s6748 + $0x4] sm:$0xf]
      %v6751 = vld [vmem:[%s6748 + $0xc] sm:$0xf]
      %v6752 = vld [vmem:[%s6748 + $0x10] sm:$0xf]
      %v6753 = vld [vmem:[%s6748 + $0x18] sm:$0xf]
      %v6754 = vld [vmem:[%s6748 + $0x1c] sm:$0xf]
      %v6755 = vld [vmem:[%s6748 + $0x24] sm:$0xf]
      %v6756 = vld [vmem:[%s6748 + $0x28] sm:$0xf]
      %v6757 = vld [vmem:[%s6748 + $0x30] sm:$0xf]
      %v6758 = vld [vmem:[%s6748 + $0x34] sm:$0xf]
      %v6759 = vld [vmem:[%s6748 + $0x3c] sm:$0xf]
      %v6760 = vld [vmem:[%s6748 + $0x40] sm:$0xf]
      %v6761 = vld [vmem:[%s6748 + $0x48] sm:$0xf]
      %v6762 = vld [vmem:[%s6748 + $0x4c] sm:$0xf]
      %v6763 = vld [vmem:[%s6748 + $0x54] sm:$0xf]
      %v6764 = vld [vmem:[%s6748 + $0x58] sm:$0xf]
      %v6765 = vld [vmem:[%s6748 + $0x60] sm:$0xf]
      %v6766 = vld [vmem:[%s6748 + $0x64] sm:$0xf]
      %v6767 = vld [vmem:[%s6748 + $0x6c] sm:$0xf]
      %v6768 = vld [vmem:[%s6748 + $0x70] sm:$0xf]
      %v6769 = vld [vmem:[%s6748 + $0x78] sm:$0xf]
      %v6770 = vld [vmem:[%s6748 + $0x7c] sm:$0xf]
      %v6771 = vld [vmem:[%s6748 + $0x84] sm:$0xf]
      %v6772 = vld [vmem:[%s6748 + $0x88] sm:$0xf]
      %v6773 = vld [vmem:[%s6748 + $0x90] sm:$0xf]
      %v6774 = vld [vmem:[%s6748 + $0x94] sm:$0xf]
      %v6775 = vld [vmem:[%s6748 + $0x9c] sm:$0xf]
      %v6776 = vld [vmem:[%s6748 + $0xa0] sm:$0xf]
      %v6777 = vld [vmem:[%s6748 + $0xa8] sm:$0xf]
      %v6778 = vld [vmem:[%s6748 + $0xac] sm:$0xf]
      %v6779 = vld [vmem:[%s6748 + $0xb4] sm:$0xf]
      %v6780 = vld [vmem:[%s6748 + $0xb8] sm:$0xf]
      %s6781 = scalar_lea.vmem %s3, 384
      %v6782 = vld [vmem:[%s6781] sm:$0xf]
      %v6783 = vld [vmem:[%s6781 + $0x4] sm:$0xf]
      %v6784 = vld [vmem:[%s6781 + $0x8] sm:$0xf]
      %v6785 = vld [vmem:[%s6781 + $0xc] sm:$0xf]
      %v6786 = vld [vmem:[%s6781 + $0x10] sm:$0xf]
      %v6787 = vld [vmem:[%s6781 + $0x14] sm:$0xf]
      %v6788 = vld [vmem:[%s6781 + $0x18] sm:$0xf]
      %v6789 = vld [vmem:[%s6781 + $0x1c] sm:$0xf]
      %v6790 = vld [vmem:[%s6781 + $0x20] sm:$0xf]
      %v6791 = vld [vmem:[%s6781 + $0x24] sm:$0xf]
      %v6792 = vld [vmem:[%s6781 + $0x28] sm:$0xf]
      %v6793 = vld [vmem:[%s6781 + $0x2c] sm:$0xf]
      %v6794 = vld [vmem:[%s6781 + $0x30] sm:$0xf]
      %v6795 = vld [vmem:[%s6781 + $0x34] sm:$0xf]
      %v6796 = vld [vmem:[%s6781 + $0x38] sm:$0xf]
      %v6797 = vld [vmem:[%s6781 + $0x3c] sm:$0xf]
      %v6830 = vunpack.c.l.b16 %v6749
      %v6831 = vunpack.c.l.b16 %v6750
      %v6832 = vunpack.c.l.b16 %v6751
      %v6833 = vunpack.c.l.b16 %v6752
      %v6834 = vunpack.c.l.b16 %v6753
      %v6835 = vunpack.c.l.b16 %v6754
      %v6836 = vunpack.c.l.b16 %v6755
      %v6837 = vunpack.c.l.b16 %v6756
      %v6838 = vunpack.c.l.b16 %v6757
      %v6839 = vunpack.c.l.b16 %v6758
      %v6840 = vunpack.c.l.b16 %v6759
      %v6841 = vunpack.c.l.b16 %v6760
      %v6842 = vunpack.c.l.b16 %v6761
      %v6843 = vunpack.c.l.b16 %v6762
      %v6844 = vunpack.c.l.b16 %v6763
      %v6845 = vunpack.c.l.b16 %v6764
      %v6846 = vunpack.c.l.b16 %v6765
      %v6847 = vunpack.c.l.b16 %v6766
      %v6848 = vunpack.c.l.b16 %v6767
      %v6849 = vunpack.c.l.b16 %v6768
      %v6850 = vunpack.c.l.b16 %v6769
      %v6851 = vunpack.c.l.b16 %v6770
      %v6852 = vunpack.c.l.b16 %v6771
      %v6853 = vunpack.c.l.b16 %v6772
      %v6854 = vunpack.c.l.b16 %v6773
      %v6855 = vunpack.c.l.b16 %v6774
      %v6856 = vunpack.c.l.b16 %v6775
      %v6857 = vunpack.c.l.b16 %v6776
      %v6858 = vunpack.c.l.b16 %v6777
      %v6859 = vunpack.c.l.b16 %v6778
      %v6860 = vunpack.c.l.b16 %v6779
      %v6861 = vunpack.c.l.b16 %v6780
      %v6862 = vpack.c.b16 %v6831, %v6830
      %v6863 = vpack.c.b16 %v6833, %v6832
      %v6864 = vpack.c.b16 %v6835, %v6834
      %v6865 = vpack.c.b16 %v6837, %v6836
      %v6866 = vpack.c.b16 %v6839, %v6838
      %v6867 = vpack.c.b16 %v6841, %v6840
      %v6868 = vpack.c.b16 %v6843, %v6842
      %v6869 = vpack.c.b16 %v6845, %v6844
      %v6870 = vpack.c.b16 %v6847, %v6846
      %v6871 = vpack.c.b16 %v6849, %v6848
      %v6872 = vpack.c.b16 %v6851, %v6850
      %v6873 = vpack.c.b16 %v6853, %v6852
      %v6874 = vpack.c.b16 %v6855, %v6854
      %v6875 = vpack.c.b16 %v6857, %v6856
      %v6876 = vpack.c.b16 %v6859, %v6858
      %v6877 = vpack.c.b16 %v6861, %v6860
      %v6910 = vunpack.c.l.b16 %v6782
      %v6911 = vunpack.c.l.b16 %v6783
      %v6912 = vunpack.c.l.b16 %v6784
      %v6913 = vunpack.c.l.b16 %v6785
      %v6914 = vunpack.c.l.b16 %v6786
      %v6915 = vunpack.c.l.b16 %v6787
      %v6916 = vunpack.c.l.b16 %v6788
      %v6917 = vunpack.c.l.b16 %v6789
      %v6918 = vunpack.c.l.b16 %v6790
      %v6919 = vunpack.c.l.b16 %v6791
      %v6920 = vunpack.c.l.b16 %v6792
      %v6921 = vunpack.c.l.b16 %v6793
      %v6922 = vunpack.c.l.b16 %v6794
      %v6923 = vunpack.c.l.b16 %v6795
      %v6924 = vunpack.c.l.b16 %v6796
      %v6925 = vunpack.c.l.b16 %v6797
      %v6926 = vpack.c.b16 %v6911, %v6910
      %v6927 = vpack.c.b16 %v6913, %v6912
      %v6928 = vpack.c.b16 %v6915, %v6914
      %v6929 = vpack.c.b16 %v6917, %v6916
      %v6930 = vpack.c.b16 %v6919, %v6918
      %v6931 = vpack.c.b16 %v6921, %v6920
      %v6932 = vpack.c.b16 %v6923, %v6922
      %v6933 = vpack.c.b16 %v6925, %v6924
      %6942 = vmatprep.subr.bf16.mxu0 0
      %6943 = vmatpush1.bf16.msra.mxu0 %v6933
      %6944 = vmatprep.subr.bf16.mxu0 0
      %6945 = vmatpush1.bf16.msra.mxu0 %v6932
      %6946 = vmatprep.subr.bf16.mxu0 0
      %6947 = vmatpush1.bf16.msra.mxu0 %v6931
      %6948 = vmatprep.subr.bf16.mxu0 0
      %6949 = vmatpush1.bf16.msra.mxu0 %v6930
      %6950 = vmatprep.subr.bf16.mxu0 0
      %6951 = vmatpush1.bf16.msra.mxu0 %v6929
      %6952 = vmatprep.subr.bf16.mxu0 0
      %6953 = vmatpush1.bf16.msra.mxu0 %v6928
      %6954 = vmatprep.subr.bf16.mxu0 0
      %6955 = vmatpush1.bf16.msra.mxu0 %v6927
      %6956 = vmatprep.subr.bf16.mxu0 0
      %6957 = vmatpush1.bf16.msra.mxu0 %v6926
      %6958 = vmatprep.subr.bf16.mxu0 0
      %6959 = vmatpush2.bf16.msra.mxu0 0
      %6960 = vmatprep.subr.bf16.mxu0 0
      %6961 = vmatpush2.bf16.msra.mxu0 0
      %6962 = vmatprep.subr.bf16.mxu0 0
      %6963 = vmatpush2.bf16.msra.mxu0 0
      %6964 = vmatprep.subr.bf16.mxu0 0
      %6965 = vmatpush2.bf16.msra.mxu0 0
      %6966 = vmatprep.subr.bf16.mxu0 0
      %6967 = vmatpush2.bf16.msra.mxu0 0
      %6968 = vmatprep.subr.bf16.mxu0 0
      %6969 = vmatpush2.bf16.msra.mxu0 0
      %6970 = vmatprep.subr.bf16.mxu0 0
      %6971 = vmatpush2.bf16.msra.mxu0 0
      %6972 = vmatprep.subr.bf16.mxu0 0
      %6973 = vmatpush2.bf16.msra.mxu0 0
      %6974 = vmatprep.mubr.bf16.mxu0 0
      %6975 = vmatmul.mubr.bf16.gmra.mxu0 %v6862
      %v6976 = vpop.f32.mrf.mxu0
      %v6977 = vadd.f32 0.0, %v6976
      %v6978 = vpop.f32.mrf.mxu0
      %v6979 = vpop.f32.mrf.mxu0
      %v6980 = vadd.f32 0.0, %v6979
      %v6981 = vpop.f32.mrf.mxu0
      %6982 = vmatprep.mubr.bf16.mxu0 0
      %6983 = vmatmul.mubr.bf16.gmra.mxu0 %v6863
      %v6984 = vpop.f32.mrf.mxu0
      %v6985 = vadd.f32 0.0, %v6984
      %v6986 = vpop.f32.mrf.mxu0
      %v6987 = vpop.f32.mrf.mxu0
      %v6988 = vadd.f32 0.0, %v6987
      %v6989 = vpop.f32.mrf.mxu0
      %6990 = vmatprep.mubr.bf16.mxu0 0
      %6991 = vmatmul.mubr.bf16.gmra.mxu0 %v6864
      %v6992 = vpop.f32.mrf.mxu0
      %v6993 = vadd.f32 0.0, %v6992
      %v6994 = vpop.f32.mrf.mxu0
      %v6995 = vpop.f32.mrf.mxu0
      %v6996 = vadd.f32 0.0, %v6995
      %v6997 = vpop.f32.mrf.mxu0
      %6998 = vmatprep.mubr.bf16.mxu0 0
      %6999 = vmatmul.mubr.bf16.gmra.mxu0 %v6865
      %v7000 = vpop.f32.mrf.mxu0
      %v7001 = vadd.f32 0.0, %v7000
      %v7002 = vpop.f32.mrf.mxu0
      %v7003 = vpop.f32.mrf.mxu0
      %v7004 = vadd.f32 0.0, %v7003
      %v7005 = vpop.f32.mrf.mxu0
      %7006 = vmatprep.mubr.bf16.mxu0 0
      %7007 = vmatmul.mubr.bf16.gmra.mxu0 %v6866
      %v7008 = vpop.f32.mrf.mxu0
      %v7009 = vadd.f32 0.0, %v7008
      %v7010 = vpop.f32.mrf.mxu0
      %v7011 = vpop.f32.mrf.mxu0
      %v7012 = vadd.f32 0.0, %v7011
      %v7013 = vpop.f32.mrf.mxu0
      %7014 = vmatprep.mubr.bf16.mxu0 0
      %7015 = vmatmul.mubr.bf16.gmra.mxu0 %v6867
      %v7016 = vpop.f32.mrf.mxu0
      %v7017 = vadd.f32 0.0, %v7016
      %v7018 = vpop.f32.mrf.mxu0
      %v7019 = vpop.f32.mrf.mxu0
      %v7020 = vadd.f32 0.0, %v7019
      %v7021 = vpop.f32.mrf.mxu0
      %7022 = vmatprep.mubr.bf16.mxu0 0
      %7023 = vmatmul.mubr.bf16.gmra.mxu0 %v6868
      %v7024 = vpop.f32.mrf.mxu0
      %v7025 = vadd.f32 0.0, %v7024
      %v7026 = vpop.f32.mrf.mxu0
      %v7027 = vpop.f32.mrf.mxu0
      %v7028 = vadd.f32 0.0, %v7027
      %v7029 = vpop.f32.mrf.mxu0
      %7030 = vmatprep.mubr.bf16.mxu0 0
      %7031 = vmatmul.mubr.bf16.gmra.mxu0 %v6869
      %v7032 = vpop.f32.mrf.mxu0
      %v7033 = vadd.f32 0.0, %v7032
      %v7034 = vpop.f32.mrf.mxu0
      %v7035 = vpop.f32.mrf.mxu0
      %v7036 = vadd.f32 0.0, %v7035
      %v7037 = vpop.f32.mrf.mxu0
      %7038 = vmatprep.mubr.bf16.mxu0 0
      %7039 = vmatmul.mubr.bf16.gmra.mxu0 %v6870
      %v7040 = vpop.f32.mrf.mxu0
      %v7041 = vadd.f32 0.0, %v7040
      %v7042 = vpop.f32.mrf.mxu0
      %v7043 = vpop.f32.mrf.mxu0
      %v7044 = vadd.f32 0.0, %v7043
      %v7045 = vpop.f32.mrf.mxu0
      %7046 = vmatprep.mubr.bf16.mxu0 0
      %7047 = vmatmul.mubr.bf16.gmra.mxu0 %v6871
      %v7048 = vpop.f32.mrf.mxu0
      %v7049 = vadd.f32 0.0, %v7048
      %v7050 = vpop.f32.mrf.mxu0
      %v7051 = vpop.f32.mrf.mxu0
      %v7052 = vadd.f32 0.0, %v7051
      %v7053 = vpop.f32.mrf.mxu0
      %7054 = vmatprep.mubr.bf16.mxu0 0
      %7055 = vmatmul.mubr.bf16.gmra.mxu0 %v6872
      %v7056 = vpop.f32.mrf.mxu0
      %v7057 = vadd.f32 0.0, %v7056
      %v7058 = vpop.f32.mrf.mxu0
      %v7059 = vpop.f32.mrf.mxu0
      %v7060 = vadd.f32 0.0, %v7059
      %v7061 = vpop.f32.mrf.mxu0
      %7062 = vmatprep.mubr.bf16.mxu0 0
      %7063 = vmatmul.mubr.bf16.gmra.mxu0 %v6873
      %v7064 = vpop.f32.mrf.mxu0
      %v7065 = vadd.f32 0.0, %v7064
      %v7066 = vpop.f32.mrf.mxu0
      %v7067 = vpop.f32.mrf.mxu0
      %v7068 = vadd.f32 0.0, %v7067
      %v7069 = vpop.f32.mrf.mxu0
      %7070 = vmatprep.mubr.bf16.mxu0 0
      %7071 = vmatmul.mubr.bf16.gmra.mxu0 %v6874
      %v7072 = vpop.f32.mrf.mxu0
      %v7073 = vadd.f32 0.0, %v7072
      %v7074 = vpop.f32.mrf.mxu0
      %v7075 = vpop.f32.mrf.mxu0
      %v7076 = vadd.f32 0.0, %v7075
      %v7077 = vpop.f32.mrf.mxu0
      %7078 = vmatprep.mubr.bf16.mxu0 0
      %7079 = vmatmul.mubr.bf16.gmra.mxu0 %v6875
      %v7080 = vpop.f32.mrf.mxu0
      %v7081 = vadd.f32 0.0, %v7080
      %v7082 = vpop.f32.mrf.mxu0
      %v7083 = vpop.f32.mrf.mxu0
      %v7084 = vadd.f32 0.0, %v7083
      %v7085 = vpop.f32.mrf.mxu0
      %7086 = vmatprep.mubr.bf16.mxu0 0
      %7087 = vmatmul.mubr.bf16.gmra.mxu0 %v6876
      %v7088 = vpop.f32.mrf.mxu0
      %v7089 = vadd.f32 0.0, %v7088
      %v7090 = vpop.f32.mrf.mxu0
      %v7091 = vpop.f32.mrf.mxu0
      %v7092 = vadd.f32 0.0, %v7091
      %v7093 = vpop.f32.mrf.mxu0
      %7094 = vmatprep.mubr.bf16.mxu0 0
      %7095 = vmatmul.mubr.bf16.gmra.mxu0 %v6877
      %v7096 = vpop.f32.mrf.mxu0
      %v7097 = vadd.f32 0.0, %v7096
      %v7098 = vpop.f32.mrf.mxu0
      %v7099 = vpop.f32.mrf.mxu0
      %v7100 = vadd.f32 0.0, %v7099
      %v7101 = vpop.f32.mrf.mxu0
      %7102 = vdwg.mxu0
      %v7103 = vadd.f32 %v6716, %v6977
      %v7104 = vadd.f32 %v6717, %v6980
      %v7105 = vadd.f32 %v6718, %v6985
      %v7106 = vadd.f32 %v6719, %v6988
      %v7107 = vadd.f32 %v6720, %v6993
      %v7108 = vadd.f32 %v6721, %v6996
      %v7109 = vadd.f32 %v6722, %v7001
      %v7110 = vadd.f32 %v6723, %v7004
      %v7111 = vadd.f32 %v6724, %v7009
      %v7112 = vadd.f32 %v6725, %v7012
      %v7113 = vadd.f32 %v6726, %v7017
      %v7114 = vadd.f32 %v6727, %v7020
      %v7115 = vadd.f32 %v6728, %v7025
      %v7116 = vadd.f32 %v6729, %v7028
      %v7117 = vadd.f32 %v6730, %v7033
      %v7118 = vadd.f32 %v6731, %v7036
      %v7119 = vadd.f32 %v6732, %v7041
      %v7120 = vadd.f32 %v6733, %v7044
      %v7121 = vadd.f32 %v6734, %v7049
      %v7122 = vadd.f32 %v6735, %v7052
      %v7123 = vadd.f32 %v6736, %v7057
      %v7124 = vadd.f32 %v6737, %v7060
      %v7125 = vadd.f32 %v6738, %v7065
      %v7126 = vadd.f32 %v6739, %v7068
      %v7127 = vadd.f32 %v6740, %v7073
      %v7128 = vadd.f32 %v6741, %v7076
      %v7129 = vadd.f32 %v6742, %v7081
      %v7130 = vadd.f32 %v6743, %v7084
      %v7131 = vadd.f32 %v6744, %v7089
      %v7132 = vadd.f32 %v6745, %v7092
      %v7133 = vadd.f32 %v6746, %v7097
      %v7134 = vadd.f32 %v6747, %v7100
      %v7135 = vld [vmem:[%s6748] sm:$0xf]
      %v7136 = vld [vmem:[%s6748 + $0x4] sm:$0xf]
      %v7137 = vld [vmem:[%s6748 + $0x8] sm:$0x1]
      %v7138 = vld [vmem:[%s6748 + $0xc] sm:$0xf]
      %v7139 = vld [vmem:[%s6748 + $0x10] sm:$0xf]
      %v7140 = vld [vmem:[%s6748 + $0x14] sm:$0x1]
      %v7141 = vld [vmem:[%s6748 + $0x18] sm:$0xf]
      %v7142 = vld [vmem:[%s6748 + $0x1c] sm:$0xf]
      %v7143 = vld [vmem:[%s6748 + $0x20] sm:$0x1]
      %v7144 = vld [vmem:[%s6748 + $0x24] sm:$0xf]
      %v7145 = vld [vmem:[%s6748 + $0x28] sm:$0xf]
      %v7146 = vld [vmem:[%s6748 + $0x2c] sm:$0x1]
      %v7147 = vld [vmem:[%s6748 + $0x30] sm:$0xf]
      %v7148 = vld [vmem:[%s6748 + $0x34] sm:$0xf]
      %v7149 = vld [vmem:[%s6748 + $0x38] sm:$0x1]
      %v7150 = vld [vmem:[%s6748 + $0x3c] sm:$0xf]
      %v7151 = vld [vmem:[%s6748 + $0x40] sm:$0xf]
      %v7152 = vld [vmem:[%s6748 + $0x44] sm:$0x1]
      %v7153 = vld [vmem:[%s6748 + $0x48] sm:$0xf]
      %v7154 = vld [vmem:[%s6748 + $0x4c] sm:$0xf]
      %v7155 = vld [vmem:[%s6748 + $0x50] sm:$0x1]
      %v7156 = vld [vmem:[%s6748 + $0x54] sm:$0xf]
      %v7157 = vld [vmem:[%s6748 + $0x58] sm:$0xf]
      %v7158 = vld [vmem:[%s6748 + $0x5c] sm:$0x1]
      %v7159 = vld [vmem:[%s6748 + $0x60] sm:$0xf]
      %v7160 = vld [vmem:[%s6748 + $0x64] sm:$0xf]
      %v7161 = vld [vmem:[%s6748 + $0x68] sm:$0x1]
      %v7162 = vld [vmem:[%s6748 + $0x6c] sm:$0xf]
      %v7163 = vld [vmem:[%s6748 + $0x70] sm:$0xf]
      %v7164 = vld [vmem:[%s6748 + $0x74] sm:$0x1]
      %v7165 = vld [vmem:[%s6748 + $0x78] sm:$0xf]
      %v7166 = vld [vmem:[%s6748 + $0x7c] sm:$0xf]
      %v7167 = vld [vmem:[%s6748 + $0x80] sm:$0x1]
      %v7168 = vld [vmem:[%s6748 + $0x84] sm:$0xf]
      %v7169 = vld [vmem:[%s6748 + $0x88] sm:$0xf]
      %v7170 = vld [vmem:[%s6748 + $0x8c] sm:$0x1]
      %v7171 = vld [vmem:[%s6748 + $0x90] sm:$0xf]
      %v7172 = vld [vmem:[%s6748 + $0x94] sm:$0xf]
      %v7173 = vld [vmem:[%s6748 + $0x98] sm:$0x1]
      %v7174 = vld [vmem:[%s6748 + $0x9c] sm:$0xf]
      %v7175 = vld [vmem:[%s6748 + $0xa0] sm:$0xf]
      %v7176 = vld [vmem:[%s6748 + $0xa4] sm:$0x1]
      %v7177 = vld [vmem:[%s6748 + $0xa8] sm:$0xf]
      %v7178 = vld [vmem:[%s6748 + $0xac] sm:$0xf]
      %v7179 = vld [vmem:[%s6748 + $0xb0] sm:$0x1]
      %v7180 = vld [vmem:[%s6748 + $0xb4] sm:$0xf]
      %v7181 = vld [vmem:[%s6748 + $0xb8] sm:$0xf]
      %v7182 = vld [vmem:[%s6748 + $0xbc] sm:$0x1]
      %v7184 = vshrl.u32 %v7135, 16
      %v7186 = vrot.slane %v7184, 4
      %v7187 = vshll.u32 %v7135, 16
      %v7189 = vrot.slane %v7187, 5
      %v7190 = vor.u32 %v7186, %v7189
      %v7191 = vrot.slane %v7190, 4
      %v7193 = vshll.u32 %v7136, 16
      %v7195 = vrot.slane %v7193, 5
      %v7196 = vsel %vm3645, %v7191, %v7195
      %v7197 = vshrl.u32 %v7136, 16
      %v7199 = vrot.slane %v7197, 4
      %v7200 = vor.u32 %v7199, %v7195
      %v7201 = vrot.slane %v7200, 4
      %v7203 = vshll.u32 %v7137, 16
      %v7205 = vrot.slane %v7203, 5
      %v7206 = vsel %vm3645, %v7201, %v7205
      %v7208 = vshrl.u32 %v7138, 16
      %v7210 = vrot.slane %v7208, 4
      %v7211 = vshll.u32 %v7138, 16
      %v7213 = vrot.slane %v7211, 5
      %v7214 = vor.u32 %v7210, %v7213
      %v7215 = vrot.slane %v7214, 4
      %v7217 = vshll.u32 %v7139, 16
      %v7219 = vrot.slane %v7217, 5
      %v7220 = vsel %vm3645, %v7215, %v7219
      %v7221 = vshrl.u32 %v7139, 16
      %v7223 = vrot.slane %v7221, 4
      %v7224 = vor.u32 %v7223, %v7219
      %v7225 = vrot.slane %v7224, 4
      %v7227 = vshll.u32 %v7140, 16
      %v7229 = vrot.slane %v7227, 5
      %v7230 = vsel %vm3645, %v7225, %v7229
      %v7232 = vshrl.u32 %v7141, 16
      %v7234 = vrot.slane %v7232, 4
      %v7235 = vshll.u32 %v7141, 16
      %v7237 = vrot.slane %v7235, 5
      %v7238 = vor.u32 %v7234, %v7237
      %v7239 = vrot.slane %v7238, 4
      %v7241 = vshll.u32 %v7142, 16
      %v7243 = vrot.slane %v7241, 5
      %v7244 = vsel %vm3645, %v7239, %v7243
      %v7245 = vshrl.u32 %v7142, 16
      %v7247 = vrot.slane %v7245, 4
      %v7248 = vor.u32 %v7247, %v7243
      %v7249 = vrot.slane %v7248, 4
      %v7251 = vshll.u32 %v7143, 16
      %v7253 = vrot.slane %v7251, 5
      %v7254 = vsel %vm3645, %v7249, %v7253
      %v7256 = vshrl.u32 %v7144, 16
      %v7258 = vrot.slane %v7256, 4
      %v7259 = vshll.u32 %v7144, 16
      %v7261 = vrot.slane %v7259, 5
      %v7262 = vor.u32 %v7258, %v7261
      %v7263 = vrot.slane %v7262, 4
      %v7265 = vshll.u32 %v7145, 16
      %v7267 = vrot.slane %v7265, 5
      %v7268 = vsel %vm3645, %v7263, %v7267
      %v7269 = vshrl.u32 %v7145, 16
      %v7271 = vrot.slane %v7269, 4
      %v7272 = vor.u32 %v7271, %v7267
      %v7273 = vrot.slane %v7272, 4
      %v7275 = vshll.u32 %v7146, 16
      %v7277 = vrot.slane %v7275, 5
      %v7278 = vsel %vm3645, %v7273, %v7277
      %v7280 = vshrl.u32 %v7147, 16
      %v7282 = vrot.slane %v7280, 4
      %v7283 = vshll.u32 %v7147, 16
      %v7285 = vrot.slane %v7283, 5
      %v7286 = vor.u32 %v7282, %v7285
      %v7287 = vrot.slane %v7286, 4
      %v7289 = vshll.u32 %v7148, 16
      %v7291 = vrot.slane %v7289, 5
      %v7292 = vsel %vm3645, %v7287, %v7291
      %v7293 = vshrl.u32 %v7148, 16
      %v7295 = vrot.slane %v7293, 4
      %v7296 = vor.u32 %v7295, %v7291
      %v7297 = vrot.slane %v7296, 4
      %v7299 = vshll.u32 %v7149, 16
      %v7301 = vrot.slane %v7299, 5
      %v7302 = vsel %vm3645, %v7297, %v7301
      %v7304 = vshrl.u32 %v7150, 16
      %v7306 = vrot.slane %v7304, 4
      %v7307 = vshll.u32 %v7150, 16
      %v7309 = vrot.slane %v7307, 5
      %v7310 = vor.u32 %v7306, %v7309
      %v7311 = vrot.slane %v7310, 4
      %v7313 = vshll.u32 %v7151, 16
      %v7315 = vrot.slane %v7313, 5
      %v7316 = vsel %vm3645, %v7311, %v7315
      %v7317 = vshrl.u32 %v7151, 16
      %v7319 = vrot.slane %v7317, 4
      %v7320 = vor.u32 %v7319, %v7315
      %v7321 = vrot.slane %v7320, 4
      %v7323 = vshll.u32 %v7152, 16
      %v7325 = vrot.slane %v7323, 5
      %v7326 = vsel %vm3645, %v7321, %v7325
      %v7328 = vshrl.u32 %v7153, 16
      %v7330 = vrot.slane %v7328, 4
      %v7331 = vshll.u32 %v7153, 16
      %v7333 = vrot.slane %v7331, 5
      %v7334 = vor.u32 %v7330, %v7333
      %v7335 = vrot.slane %v7334, 4
      %v7337 = vshll.u32 %v7154, 16
      %v7339 = vrot.slane %v7337, 5
      %v7340 = vsel %vm3645, %v7335, %v7339
      %v7341 = vshrl.u32 %v7154, 16
      %v7343 = vrot.slane %v7341, 4
      %v7344 = vor.u32 %v7343, %v7339
      %v7345 = vrot.slane %v7344, 4
      %v7347 = vshll.u32 %v7155, 16
      %v7349 = vrot.slane %v7347, 5
      %v7350 = vsel %vm3645, %v7345, %v7349
      %v7352 = vshrl.u32 %v7156, 16
      %v7354 = vrot.slane %v7352, 4
      %v7355 = vshll.u32 %v7156, 16
      %v7357 = vrot.slane %v7355, 5
      %v7358 = vor.u32 %v7354, %v7357
      %v7359 = vrot.slane %v7358, 4
      %v7361 = vshll.u32 %v7157, 16
      %v7363 = vrot.slane %v7361, 5
      %v7364 = vsel %vm3645, %v7359, %v7363
      %v7365 = vshrl.u32 %v7157, 16
      %v7367 = vrot.slane %v7365, 4
      %v7368 = vor.u32 %v7367, %v7363
      %v7369 = vrot.slane %v7368, 4
      %v7371 = vshll.u32 %v7158, 16
      %v7373 = vrot.slane %v7371, 5
      %v7374 = vsel %vm3645, %v7369, %v7373
      %v7376 = vshrl.u32 %v7159, 16
      %v7378 = vrot.slane %v7376, 4
      %v7379 = vshll.u32 %v7159, 16
      %v7381 = vrot.slane %v7379, 5
      %v7382 = vor.u32 %v7378, %v7381
      %v7383 = vrot.slane %v7382, 4
      %v7385 = vshll.u32 %v7160, 16
      %v7387 = vrot.slane %v7385, 5
      %v7388 = vsel %vm3645, %v7383, %v7387
      %v7389 = vshrl.u32 %v7160, 16
      %v7391 = vrot.slane %v7389, 4
      %v7392 = vor.u32 %v7391, %v7387
      %v7393 = vrot.slane %v7392, 4
      %v7395 = vshll.u32 %v7161, 16
      %v7397 = vrot.slane %v7395, 5
      %v7398 = vsel %vm3645, %v7393, %v7397
      %v7400 = vshrl.u32 %v7162, 16
      %v7402 = vrot.slane %v7400, 4
      %v7403 = vshll.u32 %v7162, 16
      %v7405 = vrot.slane %v7403, 5
      %v7406 = vor.u32 %v7402, %v7405
      %v7407 = vrot.slane %v7406, 4
      %v7409 = vshll.u32 %v7163, 16
      %v7411 = vrot.slane %v7409, 5
      %v7412 = vsel %vm3645, %v7407, %v7411
      %v7413 = vshrl.u32 %v7163, 16
      %v7415 = vrot.slane %v7413, 4
      %v7416 = vor.u32 %v7415, %v7411
      %v7417 = vrot.slane %v7416, 4
      %v7419 = vshll.u32 %v7164, 16
      %v7421 = vrot.slane %v7419, 5
      %v7422 = vsel %vm3645, %v7417, %v7421
      %v7424 = vshrl.u32 %v7165, 16
      %v7426 = vrot.slane %v7424, 4
      %v7427 = vshll.u32 %v7165, 16
      %v7429 = vrot.slane %v7427, 5
      %v7430 = vor.u32 %v7426, %v7429
      %v7431 = vrot.slane %v7430, 4
      %v7433 = vshll.u32 %v7166, 16
      %v7435 = vrot.slane %v7433, 5
      %v7436 = vsel %vm3645, %v7431, %v7435
      %v7437 = vshrl.u32 %v7166, 16
      %v7439 = vrot.slane %v7437, 4
      %v7440 = vor.u32 %v7439, %v7435
      %v7441 = vrot.slane %v7440, 4
      %v7443 = vshll.u32 %v7167, 16
      %v7445 = vrot.slane %v7443, 5
      %v7446 = vsel %vm3645, %v7441, %v7445
      %v7448 = vshrl.u32 %v7168, 16
      %v7450 = vrot.slane %v7448, 4
      %v7451 = vshll.u32 %v7168, 16
      %v7453 = vrot.slane %v7451, 5
      %v7454 = vor.u32 %v7450, %v7453
      %v7455 = vrot.slane %v7454, 4
      %v7457 = vshll.u32 %v7169, 16
      %v7459 = vrot.slane %v7457, 5
      %v7460 = vsel %vm3645, %v7455, %v7459
      %v7461 = vshrl.u32 %v7169, 16
      %v7463 = vrot.slane %v7461, 4
      %v7464 = vor.u32 %v7463, %v7459
      %v7465 = vrot.slane %v7464, 4
      %v7467 = vshll.u32 %v7170, 16
      %v7469 = vrot.slane %v7467, 5
      %v7470 = vsel %vm3645, %v7465, %v7469
      %v7472 = vshrl.u32 %v7171, 16
      %v7474 = vrot.slane %v7472, 4
      %v7475 = vshll.u32 %v7171, 16
      %v7477 = vrot.slane %v7475, 5
      %v7478 = vor.u32 %v7474, %v7477
      %v7479 = vrot.slane %v7478, 4
      %v7481 = vshll.u32 %v7172, 16
      %v7483 = vrot.slane %v7481, 5
      %v7484 = vsel %vm3645, %v7479, %v7483
      %v7485 = vshrl.u32 %v7172, 16
      %v7487 = vrot.slane %v7485, 4
      %v7488 = vor.u32 %v7487, %v7483
      %v7489 = vrot.slane %v7488, 4
      %v7491 = vshll.u32 %v7173, 16
      %v7493 = vrot.slane %v7491, 5
      %v7494 = vsel %vm3645, %v7489, %v7493
      %v7496 = vshrl.u32 %v7174, 16
      %v7498 = vrot.slane %v7496, 4
      %v7499 = vshll.u32 %v7174, 16
      %v7501 = vrot.slane %v7499, 5
      %v7502 = vor.u32 %v7498, %v7501
      %v7503 = vrot.slane %v7502, 4
      %v7505 = vshll.u32 %v7175, 16
      %v7507 = vrot.slane %v7505, 5
      %v7508 = vsel %vm3645, %v7503, %v7507
      %v7509 = vshrl.u32 %v7175, 16
      %v7511 = vrot.slane %v7509, 4
      %v7512 = vor.u32 %v7511, %v7507
      %v7513 = vrot.slane %v7512, 4
      %v7515 = vshll.u32 %v7176, 16
      %v7517 = vrot.slane %v7515, 5
      %v7518 = vsel %vm3645, %v7513, %v7517
      %v7520 = vshrl.u32 %v7177, 16
      %v7522 = vrot.slane %v7520, 4
      %v7523 = vshll.u32 %v7177, 16
      %v7525 = vrot.slane %v7523, 5
      %v7526 = vor.u32 %v7522, %v7525
      %v7527 = vrot.slane %v7526, 4
      %v7529 = vshll.u32 %v7178, 16
      %v7531 = vrot.slane %v7529, 5
      %v7532 = vsel %vm3645, %v7527, %v7531
      %v7533 = vshrl.u32 %v7178, 16
      %v7535 = vrot.slane %v7533, 4
      %v7536 = vor.u32 %v7535, %v7531
      %v7537 = vrot.slane %v7536, 4
      %v7539 = vshll.u32 %v7179, 16
      %v7541 = vrot.slane %v7539, 5
      %v7542 = vsel %vm3645, %v7537, %v7541
      %v7544 = vshrl.u32 %v7180, 16
      %v7546 = vrot.slane %v7544, 4
      %v7547 = vshll.u32 %v7180, 16
      %v7549 = vrot.slane %v7547, 5
      %v7550 = vor.u32 %v7546, %v7549
      %v7551 = vrot.slane %v7550, 4
      %v7553 = vshll.u32 %v7181, 16
      %v7555 = vrot.slane %v7553, 5
      %v7556 = vsel %vm3645, %v7551, %v7555
      %v7557 = vshrl.u32 %v7181, 16
      %v7559 = vrot.slane %v7557, 4
      %v7560 = vor.u32 %v7559, %v7555
      %v7561 = vrot.slane %v7560, 4
      %v7563 = vshll.u32 %v7182, 16
      %v7565 = vrot.slane %v7563, 5
      %v7566 = vsel %vm3645, %v7561, %v7565
      %s7567 = scalar_lea.vmem %s3, 448
      %v7568 = vld [vmem:[%s7567] sm:$0xf]
      %v7569 = vld [vmem:[%s7567 + $0x4] sm:$0xf]
      %v7570 = vld [vmem:[%s7567 + $0x8] sm:$0xf]
      %v7571 = vld [vmem:[%s7567 + $0xc] sm:$0xf]
      %v7572 = vld [vmem:[%s7567 + $0x10] sm:$0xf]
      %v7573 = vld [vmem:[%s7567 + $0x14] sm:$0xf]
      %v7574 = vld [vmem:[%s7567 + $0x18] sm:$0xf]
      %v7575 = vld [vmem:[%s7567 + $0x1c] sm:$0xf]
      %v7576 = vld [vmem:[%s7567 + $0x20] sm:$0xf]
      %v7577 = vld [vmem:[%s7567 + $0x24] sm:$0xf]
      %v7578 = vld [vmem:[%s7567 + $0x28] sm:$0xf]
      %v7579 = vld [vmem:[%s7567 + $0x2c] sm:$0xf]
      %v7580 = vld [vmem:[%s7567 + $0x30] sm:$0xf]
      %v7581 = vld [vmem:[%s7567 + $0x34] sm:$0xf]
      %v7582 = vld [vmem:[%s7567 + $0x38] sm:$0xf]
      %v7583 = vld [vmem:[%s7567 + $0x3c] sm:$0xf]
      %v7584 = vunpack.c.l.b16 %v7196
      %v7585 = vunpack.c.l.b16 %v7206
      %v7586 = vunpack.c.l.b16 %v7220
      %v7587 = vunpack.c.l.b16 %v7230
      %v7588 = vunpack.c.l.b16 %v7244
      %v7589 = vunpack.c.l.b16 %v7254
      %v7590 = vunpack.c.l.b16 %v7268
      %v7591 = vunpack.c.l.b16 %v7278
      %v7592 = vunpack.c.l.b16 %v7292
      %v7593 = vunpack.c.l.b16 %v7302
      %v7594 = vunpack.c.l.b16 %v7316
      %v7595 = vunpack.c.l.b16 %v7326
      %v7596 = vunpack.c.l.b16 %v7340
      %v7597 = vunpack.c.l.b16 %v7350
      %v7598 = vunpack.c.l.b16 %v7364
      %v7599 = vunpack.c.l.b16 %v7374
      %v7600 = vunpack.c.l.b16 %v7388
      %v7601 = vunpack.c.l.b16 %v7398
      %v7602 = vunpack.c.l.b16 %v7412
      %v7603 = vunpack.c.l.b16 %v7422
      %v7604 = vunpack.c.l.b16 %v7436
      %v7605 = vunpack.c.l.b16 %v7446
      %v7606 = vunpack.c.l.b16 %v7460
      %v7607 = vunpack.c.l.b16 %v7470
      %v7608 = vunpack.c.l.b16 %v7484
      %v7609 = vunpack.c.l.b16 %v7494
      %v7610 = vunpack.c.l.b16 %v7508
      %v7611 = vunpack.c.l.b16 %v7518
      %v7612 = vunpack.c.l.b16 %v7532
      %v7613 = vunpack.c.l.b16 %v7542
      %v7614 = vunpack.c.l.b16 %v7556
      %v7615 = vunpack.c.l.b16 %v7566
      %v7616 = vpack.c.b16 %v7585, %v7584
      %v7617 = vpack.c.b16 %v7587, %v7586
      %v7618 = vpack.c.b16 %v7589, %v7588
      %v7619 = vpack.c.b16 %v7591, %v7590
      %v7620 = vpack.c.b16 %v7593, %v7592
      %v7621 = vpack.c.b16 %v7595, %v7594
      %v7622 = vpack.c.b16 %v7597, %v7596
      %v7623 = vpack.c.b16 %v7599, %v7598
      %v7624 = vpack.c.b16 %v7601, %v7600
      %v7625 = vpack.c.b16 %v7603, %v7602
      %v7626 = vpack.c.b16 %v7605, %v7604
      %v7627 = vpack.c.b16 %v7607, %v7606
      %v7628 = vpack.c.b16 %v7609, %v7608
      %v7629 = vpack.c.b16 %v7611, %v7610
      %v7630 = vpack.c.b16 %v7613, %v7612
      %v7631 = vpack.c.b16 %v7615, %v7614
      %v7664 = vunpack.c.l.b16 %v7568
      %v7665 = vunpack.c.l.b16 %v7569
      %v7666 = vunpack.c.l.b16 %v7570
      %v7667 = vunpack.c.l.b16 %v7571
      %v7668 = vunpack.c.l.b16 %v7572
      %v7669 = vunpack.c.l.b16 %v7573
      %v7670 = vunpack.c.l.b16 %v7574
      %v7671 = vunpack.c.l.b16 %v7575
      %v7672 = vunpack.c.l.b16 %v7576
      %v7673 = vunpack.c.l.b16 %v7577
      %v7674 = vunpack.c.l.b16 %v7578
      %v7675 = vunpack.c.l.b16 %v7579
      %v7676 = vunpack.c.l.b16 %v7580
      %v7677 = vunpack.c.l.b16 %v7581
      %v7678 = vunpack.c.l.b16 %v7582
      %v7679 = vunpack.c.l.b16 %v7583
      %v7680 = vpack.c.b16 %v7665, %v7664
      %v7681 = vpack.c.b16 %v7667, %v7666
      %v7682 = vpack.c.b16 %v7669, %v7668
      %v7683 = vpack.c.b16 %v7671, %v7670
      %v7684 = vpack.c.b16 %v7673, %v7672
      %v7685 = vpack.c.b16 %v7675, %v7674
      %v7686 = vpack.c.b16 %v7677, %v7676
      %v7687 = vpack.c.b16 %v7679, %v7678
      %7696 = vmatprep.subr.bf16.mxu0 0
      %7697 = vmatpush1.bf16.msra.mxu0 %v7687
      %7698 = vmatprep.subr.bf16.mxu0 0
      %7699 = vmatpush1.bf16.msra.mxu0 %v7686
      %7700 = vmatprep.subr.bf16.mxu0 0
      %7701 = vmatpush1.bf16.msra.mxu0 %v7685
      %7702 = vmatprep.subr.bf16.mxu0 0
      %7703 = vmatpush1.bf16.msra.mxu0 %v7684
      %7704 = vmatprep.subr.bf16.mxu0 0
      %7705 = vmatpush1.bf16.msra.mxu0 %v7683
      %7706 = vmatprep.subr.bf16.mxu0 0
      %7707 = vmatpush1.bf16.msra.mxu0 %v7682
      %7708 = vmatprep.subr.bf16.mxu0 0
      %7709 = vmatpush1.bf16.msra.mxu0 %v7681
      %7710 = vmatprep.subr.bf16.mxu0 0
      %7711 = vmatpush1.bf16.msra.mxu0 %v7680
      %7712 = vmatprep.subr.bf16.mxu0 0
      %7713 = vmatpush2.bf16.msra.mxu0 0
      %7714 = vmatprep.subr.bf16.mxu0 0
      %7715 = vmatpush2.bf16.msra.mxu0 0
      %7716 = vmatprep.subr.bf16.mxu0 0
      %7717 = vmatpush2.bf16.msra.mxu0 0
      %7718 = vmatprep.subr.bf16.mxu0 0
      %7719 = vmatpush2.bf16.msra.mxu0 0
      %7720 = vmatprep.subr.bf16.mxu0 0
      %7721 = vmatpush2.bf16.msra.mxu0 0
      %7722 = vmatprep.subr.bf16.mxu0 0
      %7723 = vmatpush2.bf16.msra.mxu0 0
      %7724 = vmatprep.subr.bf16.mxu0 0
      %7725 = vmatpush2.bf16.msra.mxu0 0
      %7726 = vmatprep.subr.bf16.mxu0 0
      %7727 = vmatpush2.bf16.msra.mxu0 0
      %7728 = vmatprep.mubr.bf16.mxu0 0
      %7729 = vmatmul.mubr.bf16.gmra.mxu0 %v7616
      %v7730 = vpop.f32.mrf.mxu0
      %v7731 = vadd.f32 0.0, %v7730
      %v7732 = vpop.f32.mrf.mxu0
      %v7733 = vpop.f32.mrf.mxu0
      %v7734 = vadd.f32 0.0, %v7733
      %v7735 = vpop.f32.mrf.mxu0
      %7736 = vmatprep.mubr.bf16.mxu0 0
      %7737 = vmatmul.mubr.bf16.gmra.mxu0 %v7617
      %v7738 = vpop.f32.mrf.mxu0
      %v7739 = vadd.f32 0.0, %v7738
      %v7740 = vpop.f32.mrf.mxu0
      %v7741 = vpop.f32.mrf.mxu0
      %v7742 = vadd.f32 0.0, %v7741
      %v7743 = vpop.f32.mrf.mxu0
      %7744 = vmatprep.mubr.bf16.mxu0 0
      %7745 = vmatmul.mubr.bf16.gmra.mxu0 %v7618
      %v7746 = vpop.f32.mrf.mxu0
      %v7747 = vadd.f32 0.0, %v7746
      %v7748 = vpop.f32.mrf.mxu0
      %v7749 = vpop.f32.mrf.mxu0
      %v7750 = vadd.f32 0.0, %v7749
      %v7751 = vpop.f32.mrf.mxu0
      %7752 = vmatprep.mubr.bf16.mxu0 0
      %7753 = vmatmul.mubr.bf16.gmra.mxu0 %v7619
      %v7754 = vpop.f32.mrf.mxu0
      %v7755 = vadd.f32 0.0, %v7754
      %v7756 = vpop.f32.mrf.mxu0
      %v7757 = vpop.f32.mrf.mxu0
      %v7758 = vadd.f32 0.0, %v7757
      %v7759 = vpop.f32.mrf.mxu0
      %7760 = vmatprep.mubr.bf16.mxu0 0
      %7761 = vmatmul.mubr.bf16.gmra.mxu0 %v7620
      %v7762 = vpop.f32.mrf.mxu0
      %v7763 = vadd.f32 0.0, %v7762
      %v7764 = vpop.f32.mrf.mxu0
      %v7765 = vpop.f32.mrf.mxu0
      %v7766 = vadd.f32 0.0, %v7765
      %v7767 = vpop.f32.mrf.mxu0
      %7768 = vmatprep.mubr.bf16.mxu0 0
      %7769 = vmatmul.mubr.bf16.gmra.mxu0 %v7621
      %v7770 = vpop.f32.mrf.mxu0
      %v7771 = vadd.f32 0.0, %v7770
      %v7772 = vpop.f32.mrf.mxu0
      %v7773 = vpop.f32.mrf.mxu0
      %v7774 = vadd.f32 0.0, %v7773
      %v7775 = vpop.f32.mrf.mxu0
      %7776 = vmatprep.mubr.bf16.mxu0 0
      %7777 = vmatmul.mubr.bf16.gmra.mxu0 %v7622
      %v7778 = vpop.f32.mrf.mxu0
      %v7779 = vadd.f32 0.0, %v7778
      %v7780 = vpop.f32.mrf.mxu0
      %v7781 = vpop.f32.mrf.mxu0
      %v7782 = vadd.f32 0.0, %v7781
      %v7783 = vpop.f32.mrf.mxu0
      %7784 = vmatprep.mubr.bf16.mxu0 0
      %7785 = vmatmul.mubr.bf16.gmra.mxu0 %v7623
      %v7786 = vpop.f32.mrf.mxu0
      %v7787 = vadd.f32 0.0, %v7786
      %v7788 = vpop.f32.mrf.mxu0
      %v7789 = vpop.f32.mrf.mxu0
      %v7790 = vadd.f32 0.0, %v7789
      %v7791 = vpop.f32.mrf.mxu0
      %7792 = vmatprep.mubr.bf16.mxu0 0
      %7793 = vmatmul.mubr.bf16.gmra.mxu0 %v7624
      %v7794 = vpop.f32.mrf.mxu0
      %v7795 = vadd.f32 0.0, %v7794
      %v7796 = vpop.f32.mrf.mxu0
      %v7797 = vpop.f32.mrf.mxu0
      %v7798 = vadd.f32 0.0, %v7797
      %v7799 = vpop.f32.mrf.mxu0
      %7800 = vmatprep.mubr.bf16.mxu0 0
      %7801 = vmatmul.mubr.bf16.gmra.mxu0 %v7625
      %v7802 = vpop.f32.mrf.mxu0
      %v7803 = vadd.f32 0.0, %v7802
      %v7804 = vpop.f32.mrf.mxu0
      %v7805 = vpop.f32.mrf.mxu0
      %v7806 = vadd.f32 0.0, %v7805
      %v7807 = vpop.f32.mrf.mxu0
      %7808 = vmatprep.mubr.bf16.mxu0 0
      %7809 = vmatmul.mubr.bf16.gmra.mxu0 %v7626
      %v7810 = vpop.f32.mrf.mxu0
      %v7811 = vadd.f32 0.0, %v7810
      %v7812 = vpop.f32.mrf.mxu0
      %v7813 = vpop.f32.mrf.mxu0
      %v7814 = vadd.f32 0.0, %v7813
      %v7815 = vpop.f32.mrf.mxu0
      %7816 = vmatprep.mubr.bf16.mxu0 0
      %7817 = vmatmul.mubr.bf16.gmra.mxu0 %v7627
      %v7818 = vpop.f32.mrf.mxu0
      %v7819 = vadd.f32 0.0, %v7818
      %v7820 = vpop.f32.mrf.mxu0
      %v7821 = vpop.f32.mrf.mxu0
      %v7822 = vadd.f32 0.0, %v7821
      %v7823 = vpop.f32.mrf.mxu0
      %7824 = vmatprep.mubr.bf16.mxu0 0
      %7825 = vmatmul.mubr.bf16.gmra.mxu0 %v7628
      %v7826 = vpop.f32.mrf.mxu0
      %v7827 = vadd.f32 0.0, %v7826
      %v7828 = vpop.f32.mrf.mxu0
      %v7829 = vpop.f32.mrf.mxu0
      %v7830 = vadd.f32 0.0, %v7829
      %v7831 = vpop.f32.mrf.mxu0
      %7832 = vmatprep.mubr.bf16.mxu0 0
      %7833 = vmatmul.mubr.bf16.gmra.mxu0 %v7629
      %v7834 = vpop.f32.mrf.mxu0
      %v7835 = vadd.f32 0.0, %v7834
      %v7836 = vpop.f32.mrf.mxu0
      %v7837 = vpop.f32.mrf.mxu0
      %v7838 = vadd.f32 0.0, %v7837
      %v7839 = vpop.f32.mrf.mxu0
      %7840 = vmatprep.mubr.bf16.mxu0 0
      %7841 = vmatmul.mubr.bf16.gmra.mxu0 %v7630
      %v7842 = vpop.f32.mrf.mxu0
      %v7843 = vadd.f32 0.0, %v7842
      %v7844 = vpop.f32.mrf.mxu0
      %v7845 = vpop.f32.mrf.mxu0
      %v7846 = vadd.f32 0.0, %v7845
      %v7847 = vpop.f32.mrf.mxu0
      %7848 = vmatprep.mubr.bf16.mxu0 0
      %7849 = vmatmul.mubr.bf16.gmra.mxu0 %v7631
      %v7850 = vpop.f32.mrf.mxu0
      %v7851 = vadd.f32 0.0, %v7850
      %v7852 = vpop.f32.mrf.mxu0
      %v7853 = vpop.f32.mrf.mxu0
      %v7854 = vadd.f32 0.0, %v7853
      %v7855 = vpop.f32.mrf.mxu0
      %7856 = vdwg.mxu0
      %v7857 = vadd.f32 %v7103, %v7731
      %v7858 = vadd.f32 %v7104, %v7734
      %v7859 = vadd.f32 %v7105, %v7739
      %v7860 = vadd.f32 %v7106, %v7742
      %v7861 = vadd.f32 %v7107, %v7747
      %v7862 = vadd.f32 %v7108, %v7750
      %v7863 = vadd.f32 %v7109, %v7755
      %v7864 = vadd.f32 %v7110, %v7758
      %v7865 = vadd.f32 %v7111, %v7763
      %v7866 = vadd.f32 %v7112, %v7766
      %v7867 = vadd.f32 %v7113, %v7771
      %v7868 = vadd.f32 %v7114, %v7774
      %v7869 = vadd.f32 %v7115, %v7779
      %v7870 = vadd.f32 %v7116, %v7782
      %v7871 = vadd.f32 %v7117, %v7787
      %v7872 = vadd.f32 %v7118, %v7790
      %v7873 = vadd.f32 %v7119, %v7795
      %v7874 = vadd.f32 %v7120, %v7798
      %v7875 = vadd.f32 %v7121, %v7803
      %v7876 = vadd.f32 %v7122, %v7806
      %v7877 = vadd.f32 %v7123, %v7811
      %v7878 = vadd.f32 %v7124, %v7814
      %v7879 = vadd.f32 %v7125, %v7819
      %v7880 = vadd.f32 %v7126, %v7822
      %v7881 = vadd.f32 %v7127, %v7827
      %v7882 = vadd.f32 %v7128, %v7830
      %v7883 = vadd.f32 %v7129, %v7835
      %v7884 = vadd.f32 %v7130, %v7838
      %v7885 = vadd.f32 %v7131, %v7843
      %v7886 = vadd.f32 %v7132, %v7846
      %v7887 = vadd.f32 %v7133, %v7851
      %v7888 = vadd.f32 %v7134, %v7854
      %v7889 = vld [vmem:[%s6748] sm:$0xe]
      %v7890 = vld [vmem:[%s6748 + $0xc] sm:$0xe]
      %v7891 = vld [vmem:[%s6748 + $0x18] sm:$0xe]
      %v7892 = vld [vmem:[%s6748 + $0x24] sm:$0xe]
      %v7893 = vld [vmem:[%s6748 + $0x30] sm:$0xe]
      %v7894 = vld [vmem:[%s6748 + $0x3c] sm:$0xe]
      %v7895 = vld [vmem:[%s6748 + $0x48] sm:$0xe]
      %v7896 = vld [vmem:[%s6748 + $0x54] sm:$0xe]
      %v7897 = vld [vmem:[%s6748 + $0x60] sm:$0xe]
      %v7898 = vld [vmem:[%s6748 + $0x6c] sm:$0xe]
      %v7899 = vld [vmem:[%s6748 + $0x78] sm:$0xe]
      %v7900 = vld [vmem:[%s6748 + $0x84] sm:$0xe]
      %v7901 = vld [vmem:[%s6748 + $0x90] sm:$0xe]
      %v7902 = vld [vmem:[%s6748 + $0x9c] sm:$0xe]
      %v7903 = vld [vmem:[%s6748 + $0xa8] sm:$0xe]
      %v7904 = vld [vmem:[%s6748 + $0xb4] sm:$0xe]
      %v7953 = vrot.slane %v7889, 5
      %v7954 = vrot.slane %v7953, 4
      %v7955 = vrot.slane %v7136, 5
      %v7956 = vsel %vm4675, %v7954, %v7955
      %v7957 = vrot.slane %v7955, 4
      %v7958 = vrot.slane %v7137, 5
      %v7959 = vsel %vm4675, %v7957, %v7958
      %v7960 = vrot.slane %v7890, 5
      %v7961 = vrot.slane %v7960, 4
      %v7962 = vrot.slane %v7139, 5
      %v7963 = vsel %vm4675, %v7961, %v7962
      %v7964 = vrot.slane %v7962, 4
      %v7965 = vrot.slane %v7140, 5
      %v7966 = vsel %vm4675, %v7964, %v7965
      %v7967 = vrot.slane %v7891, 5
      %v7968 = vrot.slane %v7967, 4
      %v7969 = vrot.slane %v7142, 5
      %v7970 = vsel %vm4675, %v7968, %v7969
      %v7971 = vrot.slane %v7969, 4
      %v7972 = vrot.slane %v7143, 5
      %v7973 = vsel %vm4675, %v7971, %v7972
      %v7974 = vrot.slane %v7892, 5
      %v7975 = vrot.slane %v7974, 4
      %v7976 = vrot.slane %v7145, 5
      %v7977 = vsel %vm4675, %v7975, %v7976
      %v7978 = vrot.slane %v7976, 4
      %v7979 = vrot.slane %v7146, 5
      %v7980 = vsel %vm4675, %v7978, %v7979
      %v7981 = vrot.slane %v7893, 5
      %v7982 = vrot.slane %v7981, 4
      %v7983 = vrot.slane %v7148, 5
      %v7984 = vsel %vm4675, %v7982, %v7983
      %v7985 = vrot.slane %v7983, 4
      %v7986 = vrot.slane %v7149, 5
      %v7987 = vsel %vm4675, %v7985, %v7986
      %v7988 = vrot.slane %v7894, 5
      %v7989 = vrot.slane %v7988, 4
      %v7990 = vrot.slane %v7151, 5
      %v7991 = vsel %vm4675, %v7989, %v7990
      %v7992 = vrot.slane %v7990, 4
      %v7993 = vrot.slane %v7152, 5
      %v7994 = vsel %vm4675, %v7992, %v7993
      %v7995 = vrot.slane %v7895, 5
      %v7996 = vrot.slane %v7995, 4
      %v7997 = vrot.slane %v7154, 5
      %v7998 = vsel %vm4675, %v7996, %v7997
      %v7999 = vrot.slane %v7997, 4
      %v8000 = vrot.slane %v7155, 5
      %v8001 = vsel %vm4675, %v7999, %v8000
      %v8002 = vrot.slane %v7896, 5
      %v8003 = vrot.slane %v8002, 4
      %v8004 = vrot.slane %v7157, 5
      %v8005 = vsel %vm4675, %v8003, %v8004
      %v8006 = vrot.slane %v8004, 4
      %v8007 = vrot.slane %v7158, 5
      %v8008 = vsel %vm4675, %v8006, %v8007
      %v8009 = vrot.slane %v7897, 5
      %v8010 = vrot.slane %v8009, 4
      %v8011 = vrot.slane %v7160, 5
      %v8012 = vsel %vm4675, %v8010, %v8011
      %v8013 = vrot.slane %v8011, 4
      %v8014 = vrot.slane %v7161, 5
      %v8015 = vsel %vm4675, %v8013, %v8014
      %v8016 = vrot.slane %v7898, 5
      %v8017 = vrot.slane %v8016, 4
      %v8018 = vrot.slane %v7163, 5
      %v8019 = vsel %vm4675, %v8017, %v8018
      %v8020 = vrot.slane %v8018, 4
      %v8021 = vrot.slane %v7164, 5
      %v8022 = vsel %vm4675, %v8020, %v8021
      %v8023 = vrot.slane %v7899, 5
      %v8024 = vrot.slane %v8023, 4
      %v8025 = vrot.slane %v7166, 5
      %v8026 = vsel %vm4675, %v8024, %v8025
      %v8027 = vrot.slane %v8025, 4
      %v8028 = vrot.slane %v7167, 5
      %v8029 = vsel %vm4675, %v8027, %v8028
      %v8030 = vrot.slane %v7900, 5
      %v8031 = vrot.slane %v8030, 4
      %v8032 = vrot.slane %v7169, 5
      %v8033 = vsel %vm4675, %v8031, %v8032
      %v8034 = vrot.slane %v8032, 4
      %v8035 = vrot.slane %v7170, 5
      %v8036 = vsel %vm4675, %v8034, %v8035
      %v8037 = vrot.slane %v7901, 5
      %v8038 = vrot.slane %v8037, 4
      %v8039 = vrot.slane %v7172, 5
      %v8040 = vsel %vm4675, %v8038, %v8039
      %v8041 = vrot.slane %v8039, 4
      %v8042 = vrot.slane %v7173, 5
      %v8043 = vsel %vm4675, %v8041, %v8042
      %v8044 = vrot.slane %v7902, 5
      %v8045 = vrot.slane %v8044, 4
      %v8046 = vrot.slane %v7175, 5
      %v8047 = vsel %vm4675, %v8045, %v8046
      %v8048 = vrot.slane %v8046, 4
      %v8049 = vrot.slane %v7176, 5
      %v8050 = vsel %vm4675, %v8048, %v8049
      %v8051 = vrot.slane %v7903, 5
      %v8052 = vrot.slane %v8051, 4
      %v8053 = vrot.slane %v7178, 5
      %v8054 = vsel %vm4675, %v8052, %v8053
      %v8055 = vrot.slane %v8053, 4
      %v8056 = vrot.slane %v7179, 5
      %v8057 = vsel %vm4675, %v8055, %v8056
      %v8058 = vrot.slane %v7904, 5
      %v8059 = vrot.slane %v8058, 4
      %v8060 = vrot.slane %v7181, 5
      %v8061 = vsel %vm4675, %v8059, %v8060
      %v8062 = vrot.slane %v8060, 4
      %v8063 = vrot.slane %v7182, 5
      %v8064 = vsel %vm4675, %v8062, %v8063
      %s8065 = scalar_lea.vmem %s3, 512
      %v8066 = vld [vmem:[%s8065] sm:$0xf]
      %v8067 = vld [vmem:[%s8065 + $0x4] sm:$0xf]
      %v8068 = vld [vmem:[%s8065 + $0x8] sm:$0xf]
      %v8069 = vld [vmem:[%s8065 + $0xc] sm:$0xf]
      %v8070 = vld [vmem:[%s8065 + $0x10] sm:$0xf]
      %v8071 = vld [vmem:[%s8065 + $0x14] sm:$0xf]
      %v8072 = vld [vmem:[%s8065 + $0x18] sm:$0xf]
      %v8073 = vld [vmem:[%s8065 + $0x1c] sm:$0xf]
      %v8074 = vld [vmem:[%s8065 + $0x20] sm:$0xf]
      %v8075 = vld [vmem:[%s8065 + $0x24] sm:$0xf]
      %v8076 = vld [vmem:[%s8065 + $0x28] sm:$0xf]
      %v8077 = vld [vmem:[%s8065 + $0x2c] sm:$0xf]
      %v8078 = vld [vmem:[%s8065 + $0x30] sm:$0xf]
      %v8079 = vld [vmem:[%s8065 + $0x34] sm:$0xf]
      %v8080 = vld [vmem:[%s8065 + $0x38] sm:$0xf]
      %v8081 = vld [vmem:[%s8065 + $0x3c] sm:$0xf]
      %v8082 = vunpack.c.l.b16 %v7956
      %v8083 = vunpack.c.l.b16 %v7959
      %v8084 = vunpack.c.l.b16 %v7963
      %v8085 = vunpack.c.l.b16 %v7966
      %v8086 = vunpack.c.l.b16 %v7970
      %v8087 = vunpack.c.l.b16 %v7973
      %v8088 = vunpack.c.l.b16 %v7977
      %v8089 = vunpack.c.l.b16 %v7980
      %v8090 = vunpack.c.l.b16 %v7984
      %v8091 = vunpack.c.l.b16 %v7987
      %v8092 = vunpack.c.l.b16 %v7991
      %v8093 = vunpack.c.l.b16 %v7994
      %v8094 = vunpack.c.l.b16 %v7998
      %v8095 = vunpack.c.l.b16 %v8001
      %v8096 = vunpack.c.l.b16 %v8005
      %v8097 = vunpack.c.l.b16 %v8008
      %v8098 = vunpack.c.l.b16 %v8012
      %v8099 = vunpack.c.l.b16 %v8015
      %v8100 = vunpack.c.l.b16 %v8019
      %v8101 = vunpack.c.l.b16 %v8022
      %v8102 = vunpack.c.l.b16 %v8026
      %v8103 = vunpack.c.l.b16 %v8029
      %v8104 = vunpack.c.l.b16 %v8033
      %v8105 = vunpack.c.l.b16 %v8036
      %v8106 = vunpack.c.l.b16 %v8040
      %v8107 = vunpack.c.l.b16 %v8043
      %v8108 = vunpack.c.l.b16 %v8047
      %v8109 = vunpack.c.l.b16 %v8050
      %v8110 = vunpack.c.l.b16 %v8054
      %v8111 = vunpack.c.l.b16 %v8057
      %v8112 = vunpack.c.l.b16 %v8061
      %v8113 = vunpack.c.l.b16 %v8064
      %v8114 = vpack.c.b16 %v8083, %v8082
      %v8115 = vpack.c.b16 %v8085, %v8084
      %v8116 = vpack.c.b16 %v8087, %v8086
      %v8117 = vpack.c.b16 %v8089, %v8088
      %v8118 = vpack.c.b16 %v8091, %v8090
      %v8119 = vpack.c.b16 %v8093, %v8092
      %v8120 = vpack.c.b16 %v8095, %v8094
      %v8121 = vpack.c.b16 %v8097, %v8096
      %v8122 = vpack.c.b16 %v8099, %v8098
      %v8123 = vpack.c.b16 %v8101, %v8100
      %v8124 = vpack.c.b16 %v8103, %v8102
      %v8125 = vpack.c.b16 %v8105, %v8104
      %v8126 = vpack.c.b16 %v8107, %v8106
      %v8127 = vpack.c.b16 %v8109, %v8108
      %v8128 = vpack.c.b16 %v8111, %v8110
      %v8129 = vpack.c.b16 %v8113, %v8112
      %v8162 = vunpack.c.l.b16 %v8066
      %v8163 = vunpack.c.l.b16 %v8067
      %v8164 = vunpack.c.l.b16 %v8068
      %v8165 = vunpack.c.l.b16 %v8069
      %v8166 = vunpack.c.l.b16 %v8070
      %v8167 = vunpack.c.l.b16 %v8071
      %v8168 = vunpack.c.l.b16 %v8072
      %v8169 = vunpack.c.l.b16 %v8073
      %v8170 = vunpack.c.l.b16 %v8074
      %v8171 = vunpack.c.l.b16 %v8075
      %v8172 = vunpack.c.l.b16 %v8076
      %v8173 = vunpack.c.l.b16 %v8077
      %v8174 = vunpack.c.l.b16 %v8078
      %v8175 = vunpack.c.l.b16 %v8079
      %v8176 = vunpack.c.l.b16 %v8080
      %v8177 = vunpack.c.l.b16 %v8081
      %v8178 = vpack.c.b16 %v8163, %v8162
      %v8179 = vpack.c.b16 %v8165, %v8164
      %v8180 = vpack.c.b16 %v8167, %v8166
      %v8181 = vpack.c.b16 %v8169, %v8168
      %v8182 = vpack.c.b16 %v8171, %v8170
      %v8183 = vpack.c.b16 %v8173, %v8172
      %v8184 = vpack.c.b16 %v8175, %v8174
      %v8185 = vpack.c.b16 %v8177, %v8176
      %8194 = vmatprep.subr.bf16.mxu0 0
      %8195 = vmatpush1.bf16.msra.mxu0 %v8185
      %8196 = vmatprep.subr.bf16.mxu0 0
      %8197 = vmatpush1.bf16.msra.mxu0 %v8184
      %8198 = vmatprep.subr.bf16.mxu0 0
      %8199 = vmatpush1.bf16.msra.mxu0 %v8183
      %8200 = vmatprep.subr.bf16.mxu0 0
      %8201 = vmatpush1.bf16.msra.mxu0 %v8182
      %8202 = vmatprep.subr.bf16.mxu0 0
      %8203 = vmatpush1.bf16.msra.mxu0 %v8181
      %8204 = vmatprep.subr.bf16.mxu0 0
      %8205 = vmatpush1.bf16.msra.mxu0 %v8180
      %8206 = vmatprep.subr.bf16.mxu0 0
      %8207 = vmatpush1.bf16.msra.mxu0 %v8179
      %8208 = vmatprep.subr.bf16.mxu0 0
      %8209 = vmatpush1.bf16.msra.mxu0 %v8178
      %8210 = vmatprep.subr.bf16.mxu0 0
      %8211 = vmatpush2.bf16.msra.mxu0 0
      %8212 = vmatprep.subr.bf16.mxu0 0
      %8213 = vmatpush2.bf16.msra.mxu0 0
      %8214 = vmatprep.subr.bf16.mxu0 0
      %8215 = vmatpush2.bf16.msra.mxu0 0
      %8216 = vmatprep.subr.bf16.mxu0 0
      %8217 = vmatpush2.bf16.msra.mxu0 0
      %8218 = vmatprep.subr.bf16.mxu0 0
      %8219 = vmatpush2.bf16.msra.mxu0 0
      %8220 = vmatprep.subr.bf16.mxu0 0
      %8221 = vmatpush2.bf16.msra.mxu0 0
      %8222 = vmatprep.subr.bf16.mxu0 0
      %8223 = vmatpush2.bf16.msra.mxu0 0
      %8224 = vmatprep.subr.bf16.mxu0 0
      %8225 = vmatpush2.bf16.msra.mxu0 0
      %8226 = vmatprep.mubr.bf16.mxu0 0
      %8227 = vmatmul.mubr.bf16.gmra.mxu0 %v8114
      %v8228 = vpop.f32.mrf.mxu0
      %v8229 = vadd.f32 0.0, %v8228
      %v8230 = vpop.f32.mrf.mxu0
      %v8231 = vpop.f32.mrf.mxu0
      %v8232 = vadd.f32 0.0, %v8231
      %v8233 = vpop.f32.mrf.mxu0
      %8234 = vmatprep.mubr.bf16.mxu0 0
      %8235 = vmatmul.mubr.bf16.gmra.mxu0 %v8115
      %v8236 = vpop.f32.mrf.mxu0
      %v8237 = vadd.f32 0.0, %v8236
      %v8238 = vpop.f32.mrf.mxu0
      %v8239 = vpop.f32.mrf.mxu0
      %v8240 = vadd.f32 0.0, %v8239
      %v8241 = vpop.f32.mrf.mxu0
      %8242 = vmatprep.mubr.bf16.mxu0 0
      %8243 = vmatmul.mubr.bf16.gmra.mxu0 %v8116
      %v8244 = vpop.f32.mrf.mxu0
      %v8245 = vadd.f32 0.0, %v8244
      %v8246 = vpop.f32.mrf.mxu0
      %v8247 = vpop.f32.mrf.mxu0
      %v8248 = vadd.f32 0.0, %v8247
      %v8249 = vpop.f32.mrf.mxu0
      %8250 = vmatprep.mubr.bf16.mxu0 0
      %8251 = vmatmul.mubr.bf16.gmra.mxu0 %v8117
      %v8252 = vpop.f32.mrf.mxu0
      %v8253 = vadd.f32 0.0, %v8252
      %v8254 = vpop.f32.mrf.mxu0
      %v8255 = vpop.f32.mrf.mxu0
      %v8256 = vadd.f32 0.0, %v8255
      %v8257 = vpop.f32.mrf.mxu0
      %8258 = vmatprep.mubr.bf16.mxu0 0
      %8259 = vmatmul.mubr.bf16.gmra.mxu0 %v8118
      %v8260 = vpop.f32.mrf.mxu0
      %v8261 = vadd.f32 0.0, %v8260
      %v8262 = vpop.f32.mrf.mxu0
      %v8263 = vpop.f32.mrf.mxu0
      %v8264 = vadd.f32 0.0, %v8263
      %v8265 = vpop.f32.mrf.mxu0
      %8266 = vmatprep.mubr.bf16.mxu0 0
      %8267 = vmatmul.mubr.bf16.gmra.mxu0 %v8119
      %v8268 = vpop.f32.mrf.mxu0
      %v8269 = vadd.f32 0.0, %v8268
      %v8270 = vpop.f32.mrf.mxu0
      %v8271 = vpop.f32.mrf.mxu0
      %v8272 = vadd.f32 0.0, %v8271
      %v8273 = vpop.f32.mrf.mxu0
      %8274 = vmatprep.mubr.bf16.mxu0 0
      %8275 = vmatmul.mubr.bf16.gmra.mxu0 %v8120
      %v8276 = vpop.f32.mrf.mxu0
      %v8277 = vadd.f32 0.0, %v8276
      %v8278 = vpop.f32.mrf.mxu0
      %v8279 = vpop.f32.mrf.mxu0
      %v8280 = vadd.f32 0.0, %v8279
      %v8281 = vpop.f32.mrf.mxu0
      %8282 = vmatprep.mubr.bf16.mxu0 0
      %8283 = vmatmul.mubr.bf16.gmra.mxu0 %v8121
      %v8284 = vpop.f32.mrf.mxu0
      %v8285 = vadd.f32 0.0, %v8284
      %v8286 = vpop.f32.mrf.mxu0
      %v8287 = vpop.f32.mrf.mxu0
      %v8288 = vadd.f32 0.0, %v8287
      %v8289 = vpop.f32.mrf.mxu0
      %8290 = vmatprep.mubr.bf16.mxu0 0
      %8291 = vmatmul.mubr.bf16.gmra.mxu0 %v8122
      %v8292 = vpop.f32.mrf.mxu0
      %v8293 = vadd.f32 0.0, %v8292
      %v8294 = vpop.f32.mrf.mxu0
      %v8295 = vpop.f32.mrf.mxu0
      %v8296 = vadd.f32 0.0, %v8295
      %v8297 = vpop.f32.mrf.mxu0
      %8298 = vmatprep.mubr.bf16.mxu0 0
      %8299 = vmatmul.mubr.bf16.gmra.mxu0 %v8123
      %v8300 = vpop.f32.mrf.mxu0
      %v8301 = vadd.f32 0.0, %v8300
      %v8302 = vpop.f32.mrf.mxu0
      %v8303 = vpop.f32.mrf.mxu0
      %v8304 = vadd.f32 0.0, %v8303
      %v8305 = vpop.f32.mrf.mxu0
      %8306 = vmatprep.mubr.bf16.mxu0 0
      %8307 = vmatmul.mubr.bf16.gmra.mxu0 %v8124
      %v8308 = vpop.f32.mrf.mxu0
      %v8309 = vadd.f32 0.0, %v8308
      %v8310 = vpop.f32.mrf.mxu0
      %v8311 = vpop.f32.mrf.mxu0
      %v8312 = vadd.f32 0.0, %v8311
      %v8313 = vpop.f32.mrf.mxu0
      %8314 = vmatprep.mubr.bf16.mxu0 0
      %8315 = vmatmul.mubr.bf16.gmra.mxu0 %v8125
      %v8316 = vpop.f32.mrf.mxu0
      %v8317 = vadd.f32 0.0, %v8316
      %v8318 = vpop.f32.mrf.mxu0
      %v8319 = vpop.f32.mrf.mxu0
      %v8320 = vadd.f32 0.0, %v8319
      %v8321 = vpop.f32.mrf.mxu0
      %8322 = vmatprep.mubr.bf16.mxu0 0
      %8323 = vmatmul.mubr.bf16.gmra.mxu0 %v8126
      %v8324 = vpop.f32.mrf.mxu0
      %v8325 = vadd.f32 0.0, %v8324
      %v8326 = vpop.f32.mrf.mxu0
      %v8327 = vpop.f32.mrf.mxu0
      %v8328 = vadd.f32 0.0, %v8327
      %v8329 = vpop.f32.mrf.mxu0
      %8330 = vmatprep.mubr.bf16.mxu0 0
      %8331 = vmatmul.mubr.bf16.gmra.mxu0 %v8127
      %v8332 = vpop.f32.mrf.mxu0
      %v8333 = vadd.f32 0.0, %v8332
      %v8334 = vpop.f32.mrf.mxu0
      %v8335 = vpop.f32.mrf.mxu0
      %v8336 = vadd.f32 0.0, %v8335
      %v8337 = vpop.f32.mrf.mxu0
      %8338 = vmatprep.mubr.bf16.mxu0 0
      %8339 = vmatmul.mubr.bf16.gmra.mxu0 %v8128
      %v8340 = vpop.f32.mrf.mxu0
      %v8341 = vadd.f32 0.0, %v8340
      %v8342 = vpop.f32.mrf.mxu0
      %v8343 = vpop.f32.mrf.mxu0
      %v8344 = vadd.f32 0.0, %v8343
      %v8345 = vpop.f32.mrf.mxu0
      %8346 = vmatprep.mubr.bf16.mxu0 0
      %8347 = vmatmul.mubr.bf16.gmra.mxu0 %v8129
      %v8348 = vpop.f32.mrf.mxu0
      %v8349 = vadd.f32 0.0, %v8348
      %v8350 = vpop.f32.mrf.mxu0
      %v8351 = vpop.f32.mrf.mxu0
      %v8352 = vadd.f32 0.0, %v8351
      %v8353 = vpop.f32.mrf.mxu0
      %8354 = vdwg.mxu0
      %v8355 = vadd.f32 %v7857, %v8229
      %v8356 = vadd.f32 %v7858, %v8232
      %v8357 = vadd.f32 %v7859, %v8237
      %v8358 = vadd.f32 %v7860, %v8240
      %v8359 = vadd.f32 %v7861, %v8245
      %v8360 = vadd.f32 %v7862, %v8248
      %v8361 = vadd.f32 %v7863, %v8253
      %v8362 = vadd.f32 %v7864, %v8256
      %v8363 = vadd.f32 %v7865, %v8261
      %v8364 = vadd.f32 %v7866, %v8264
      %v8365 = vadd.f32 %v7867, %v8269
      %v8366 = vadd.f32 %v7868, %v8272
      %v8367 = vadd.f32 %v7869, %v8277
      %v8368 = vadd.f32 %v7870, %v8280
      %v8369 = vadd.f32 %v7871, %v8285
      %v8370 = vadd.f32 %v7872, %v8288
      %v8371 = vadd.f32 %v7873, %v8293
      %v8372 = vadd.f32 %v7874, %v8296
      %v8373 = vadd.f32 %v7875, %v8301
      %v8374 = vadd.f32 %v7876, %v8304
      %v8375 = vadd.f32 %v7877, %v8309
      %v8376 = vadd.f32 %v7878, %v8312
      %v8377 = vadd.f32 %v7879, %v8317
      %v8378 = vadd.f32 %v7880, %v8320
      %v8379 = vadd.f32 %v7881, %v8325
      %v8380 = vadd.f32 %v7882, %v8328
      %v8381 = vadd.f32 %v7883, %v8333
      %v8382 = vadd.f32 %v7884, %v8336
      %v8383 = vadd.f32 %v7885, %v8341
      %v8384 = vadd.f32 %v7886, %v8344
      %v8385 = vadd.f32 %v7887, %v8349
      %v8386 = vadd.f32 %v7888, %v8352
      %v8387 = vld [vmem:[%s1133 + $0x1] sm:$0xff]
      %v8388 = vld [vmem:[%s1133 + $0x9] sm:$0xff]
      %v8389 = vld [vmem:[%s1133 + $0x19] sm:$0xff]
      %v8390 = vld [vmem:[%s1133 + $0x21] sm:$0xff]
      %v8391 = vld [vmem:[%s1133 + $0x31] sm:$0xff]
      %v8392 = vld [vmem:[%s1133 + $0x39] sm:$0xff]
      %v8393 = vld [vmem:[%s1133 + $0x49] sm:$0xff]
      %v8394 = vld [vmem:[%s1133 + $0x51] sm:$0xff]
      %v8395 = vld [vmem:[%s1133 + $0x61] sm:$0xff]
      %v8396 = vld [vmem:[%s1133 + $0x69] sm:$0xff]
      %v8397 = vld [vmem:[%s1133 + $0x79] sm:$0xff]
      %v8398 = vld [vmem:[%s1133 + $0x81] sm:$0xff]
      %v8399 = vld [vmem:[%s1133 + $0x91] sm:$0xff]
      %v8400 = vld [vmem:[%s1133 + $0x99] sm:$0xff]
      %v8401 = vld [vmem:[%s1133 + $0xa9] sm:$0xff]
      %v8402 = vld [vmem:[%s1133 + $0xb1] sm:$0xff]
      %v8403 = vld [vmem:[%s1133 + $0xc1] sm:$0xff]
      %v8404 = vld [vmem:[%s1133 + $0xc9] sm:$0xff]
      %v8405 = vld [vmem:[%s1133 + $0xd9] sm:$0xff]
      %v8406 = vld [vmem:[%s1133 + $0xe1] sm:$0xff]
      %v8407 = vld [vmem:[%s1133 + $0xf1] sm:$0xff]
      %v8408 = vld [vmem:[%s1133 + $0xf9] sm:$0xff]
      %v8409 = vld [vmem:[%s1133 + $0x109] sm:$0xff]
      %v8410 = vld [vmem:[%s1133 + $0x111] sm:$0xff]
      %v8411 = vld [vmem:[%s1133 + $0x121] sm:$0xff]
      %v8412 = vld [vmem:[%s1133 + $0x129] sm:$0xff]
      %v8413 = vld [vmem:[%s1133 + $0x139] sm:$0xff]
      %v8414 = vld [vmem:[%s1133 + $0x141] sm:$0xff]
      %v8415 = vld [vmem:[%s1133 + $0x151] sm:$0xff]
      %v8416 = vld [vmem:[%s1133 + $0x159] sm:$0xff]
      %v8417 = vld [vmem:[%s1133 + $0x169] sm:$0xff]
      %v8418 = vld [vmem:[%s1133 + $0x171] sm:$0xff]
      %v8419 = vld [vmem:[%s4] sm:$0x1]
      %v8421 = vlaneseq
      %v8422 = vshrl.u32 %v8421, 7
      %v8423 = vsub.s32 0, %v8422
      %v8424 = vrot.slane %v8419, %v8423
      %v8426 = vadd.f32 %v8355, %v8424
      %v8427 = vadd.f32 %v8356, %v8424
      %v8428 = vadd.f32 %v8357, %v8424
      %v8429 = vadd.f32 %v8358, %v8424
      %v8430 = vadd.f32 %v8359, %v8424
      %v8431 = vadd.f32 %v8360, %v8424
      %v8432 = vadd.f32 %v8361, %v8424
      %v8433 = vadd.f32 %v8362, %v8424
      %v8434 = vadd.f32 %v8363, %v8424
      %v8435 = vadd.f32 %v8364, %v8424
      %v8436 = vadd.f32 %v8365, %v8424
      %v8437 = vadd.f32 %v8366, %v8424
      %v8438 = vadd.f32 %v8367, %v8424
      %v8439 = vadd.f32 %v8368, %v8424
      %v8440 = vadd.f32 %v8369, %v8424
      %v8441 = vadd.f32 %v8370, %v8424
      %v8442 = vadd.f32 %v8371, %v8424
      %v8443 = vadd.f32 %v8372, %v8424
      %v8444 = vadd.f32 %v8373, %v8424
      %v8445 = vadd.f32 %v8374, %v8424
      %v8446 = vadd.f32 %v8375, %v8424
      %v8447 = vadd.f32 %v8376, %v8424
      %v8448 = vadd.f32 %v8377, %v8424
      %v8449 = vadd.f32 %v8378, %v8424
      %v8450 = vadd.f32 %v8379, %v8424
      %v8451 = vadd.f32 %v8380, %v8424
      %v8452 = vadd.f32 %v8381, %v8424
      %v8453 = vadd.f32 %v8382, %v8424
      %v8454 = vadd.f32 %v8383, %v8424
      %v8455 = vadd.f32 %v8384, %v8424
      %v8456 = vadd.f32 %v8385, %v8424
      %v8457 = vadd.f32 %v8386, %v8424
      %v8458 = vadd.f32 %v8426, %v8387
      %v8459 = vadd.f32 %v8427, %v8388
      %v8460 = vadd.f32 %v8428, %v8389
      %v8461 = vadd.f32 %v8429, %v8390
      %v8462 = vadd.f32 %v8430, %v8391
      %v8463 = vadd.f32 %v8431, %v8392
      %v8464 = vadd.f32 %v8432, %v8393
      %v8465 = vadd.f32 %v8433, %v8394
      %v8466 = vadd.f32 %v8434, %v8395
      %v8467 = vadd.f32 %v8435, %v8396
      %v8468 = vadd.f32 %v8436, %v8397
      %v8469 = vadd.f32 %v8437, %v8398
      %v8470 = vadd.f32 %v8438, %v8399
      %v8471 = vadd.f32 %v8439, %v8400
      %v8472 = vadd.f32 %v8440, %v8401
      %v8473 = vadd.f32 %v8441, %v8402
      %v8474 = vadd.f32 %v8442, %v8403
      %v8475 = vadd.f32 %v8443, %v8404
      %v8476 = vadd.f32 %v8444, %v8405
      %v8477 = vadd.f32 %v8445, %v8406
      %v8478 = vadd.f32 %v8446, %v8407
      %v8479 = vadd.f32 %v8447, %v8408
      %v8480 = vadd.f32 %v8448, %v8409
      %v8481 = vadd.f32 %v8449, %v8410
      %v8482 = vadd.f32 %v8450, %v8411
      %v8483 = vadd.f32 %v8451, %v8412
      %v8484 = vadd.f32 %v8452, %v8413
      %v8485 = vadd.f32 %v8453, %v8414
      %v8486 = vadd.f32 %v8454, %v8415
      %v8487 = vadd.f32 %v8455, %v8416
      %v8488 = vadd.f32 %v8456, %v8417
      %v8489 = vadd.f32 %v8457, %v8418
      %v8490 = vmax.f32 %v8458, 0.0
      %v8491 = vmax.f32 %v8459, 0.0
      %v8492 = vmax.f32 %v8460, 0.0
      %v8493 = vmax.f32 %v8461, 0.0
      %v8494 = vmax.f32 %v8462, 0.0
      %v8495 = vmax.f32 %v8463, 0.0
      %v8496 = vmax.f32 %v8464, 0.0
      %v8497 = vmax.f32 %v8465, 0.0
      %v8498 = vmax.f32 %v8466, 0.0
      %v8499 = vmax.f32 %v8467, 0.0
      %v8500 = vmax.f32 %v8468, 0.0
      %v8501 = vmax.f32 %v8469, 0.0
      %v8502 = vmax.f32 %v8470, 0.0
      %v8503 = vmax.f32 %v8471, 0.0
      %v8504 = vmax.f32 %v8472, 0.0
      %v8505 = vmax.f32 %v8473, 0.0
      %v8506 = vmax.f32 %v8474, 0.0
      %v8507 = vmax.f32 %v8475, 0.0
      %v8508 = vmax.f32 %v8476, 0.0
      %v8509 = vmax.f32 %v8477, 0.0
      %v8510 = vmax.f32 %v8478, 0.0
      %v8511 = vmax.f32 %v8479, 0.0
      %v8512 = vmax.f32 %v8480, 0.0
      %v8513 = vmax.f32 %v8481, 0.0
      %v8514 = vmax.f32 %v8482, 0.0
      %v8515 = vmax.f32 %v8483, 0.0
      %v8516 = vmax.f32 %v8484, 0.0
      %v8517 = vmax.f32 %v8485, 0.0
      %v8518 = vmax.f32 %v8486, 0.0
      %v8519 = vmax.f32 %v8487, 0.0
      %v8520 = vmax.f32 %v8488, 0.0
      %v8521 = vmax.f32 %v8489, 0.0
      %8522 = vst [vmem:[%s224] sm:$0xff] %v8490
      %8523 = vst [vmem:[%s224 + $0x8] sm:$0xff] %v8491
      %8524 = vst [vmem:[%s224 + $0x10] sm:$0xff] %v8492
      %8525 = vst [vmem:[%s224 + $0x18] sm:$0xff] %v8493
      %8526 = vst [vmem:[%s224 + $0x20] sm:$0xff] %v8494
      %8527 = vst [vmem:[%s224 + $0x28] sm:$0xff] %v8495
      %8528 = vst [vmem:[%s224 + $0x30] sm:$0xff] %v8496
      %8529 = vst [vmem:[%s224 + $0x38] sm:$0xff] %v8497
      %8530 = vst [vmem:[%s224 + $0x40] sm:$0xff] %v8498
      %8531 = vst [vmem:[%s224 + $0x48] sm:$0xff] %v8499
      %8532 = vst [vmem:[%s224 + $0x50] sm:$0xff] %v8500
      %8533 = vst [vmem:[%s224 + $0x58] sm:$0xff] %v8501
      %8534 = vst [vmem:[%s224 + $0x60] sm:$0xff] %v8502
      %8535 = vst [vmem:[%s224 + $0x68] sm:$0xff] %v8503
      %8536 = vst [vmem:[%s224 + $0x70] sm:$0xff] %v8504
      %8537 = vst [vmem:[%s224 + $0x78] sm:$0xff] %v8505
      %8538 = vst [vmem:[%s224 + $0x80] sm:$0xff] %v8506
      %8539 = vst [vmem:[%s224 + $0x88] sm:$0xff] %v8507
      %8540 = vst [vmem:[%s224 + $0x90] sm:$0xff] %v8508
      %8541 = vst [vmem:[%s224 + $0x98] sm:$0xff] %v8509
      %8542 = vst [vmem:[%s224 + $0xa0] sm:$0xff] %v8510
      %8543 = vst [vmem:[%s224 + $0xa8] sm:$0xff] %v8511
      %8544 = vst [vmem:[%s224 + $0xb0] sm:$0xff] %v8512
      %8545 = vst [vmem:[%s224 + $0xb8] sm:$0xff] %v8513
      %8546 = vst [vmem:[%s224 + $0xc0] sm:$0xff] %v8514
      %8547 = vst [vmem:[%s224 + $0xc8] sm:$0xff] %v8515
      %8548 = vst [vmem:[%s224 + $0xd0] sm:$0xff] %v8516
      %8549 = vst [vmem:[%s224 + $0xd8] sm:$0xff] %v8517
      %8550 = vst [vmem:[%s224 + $0xe0] sm:$0xff] %v8518
      %8551 = vst [vmem:[%s224 + $0xe8] sm:$0xff] %v8519
      %8552 = vst [vmem:[%s224 + $0xf0] sm:$0xff] %v8520
      %8553 = vst [vmem:[%s224 + $0xf8] sm:$0xff] %v8521
      %p8554 = scmp.lt.s32.totalorder %s16, 1
      %s8555 = scalar_select %p8554, %s16, 1
      %s8556 = smul.addr %s8555, 32
      %s8557 = smul.addr %s8556, 8
      %s8558 = scalar_lea.vmem %s5, %s8557
      // Predicated region
      $region41: #{basic_block_forward.1} parent=39 // pred_check
        %p8559 = pneg %p144
      $region42: #{basic_block_forward.1} parent=39 // pred_check_branch
        %8561 = sbr.rel (%p8559) target = $region44
      $region43: #{basic_block_forward.1} parent=39 // pred_region
        _
      $region44: #{basic_block_forward.1} parent=39 // pred_fallthru
        _
    $region40: #{basic_block_forward.1} parent=5 // pred_fallthru
      _
    %p8562 = scmp.le.s32.totalorder 2, %s11
    // Predicated region
    $region45: #{basic_block_forward.1} parent=5 // pred_check
      %p8563 = pneg %p8562
    $region46: #{basic_block_forward.1} parent=5 // pred_check_branch
      %8565 = sbr.rel (%p8563) target = $region48
    $region47: #{basic_block_forward.1} parent=5 // pred_region
      %s8566 = ssub.s32 %s11, 2
      // Predicated region
      $region49: #{basic_block_forward.1} parent=47 // pred_check
        %p8567 = pneg %p150
      $region50: #{basic_block_forward.1} parent=47 // pred_check_branch
        %8569 = sbr.rel (%p8567) target = $region52
      $region51: #{basic_block_forward.1} parent=47 // pred_region
        %p8570 = scmp.lt.s32.totalorder %s17, 1
        %s8571 = scalar_select %p8570, %s17, 1
        %s8572 = smul.addr %s8571, 32
        %s8573 = smul.addr %s8572, 8
        %s8574 = scalar_lea.vmem %s5, %s8573
      $region52: #{basic_block_forward.1} parent=47 // pred_fallthru
        _
    $region48: #{basic_block_forward.1} parent=5 // pred_fallthru
      _
  $region6: #{basic_block_forward.1} parent=0 // loop_footer
    %s15 = sadd.s32 1, %s11
  $region7: #{basic_block_forward.1} parent=0 // loop_footer_branch
    %10 = sbr.rel target = $region3
  $region8: #{basic_block_forward.1} parent=0 // loop_exit
    _

</llo_original>
